<compile_context>
chip_gen: v7x
topology: tpu7x:2x2x1
jax: 0.10.0
libtpu: 0.0.40
codegen_flags: <defaults>
</compile_context>

<pallas_src>
import functools

import jax
import jax.numpy as jnp
from jax.experimental import pallas as pl
from jax.experimental.pallas import tpu as pltpu

# ---- small, TPU-friendly config consistent with the module ----
B = 2
NUM_PATCHES = 128          # must equal CHANNEL_DIM for the reference forward to be well-defined
NUM_CHANNELS = 64
CHANNEL_DIM = 128
TOKEN_DIM = 64
HIDDEN_DIM = 4 * CHANNEL_DIM
NUM_CLASSES = 10
PADDED_CLASSES = 128       # lane-dense output; sliced to NUM_CLASSES in the wrapper
NUM_BLOCKS = 2
LN_EPS = 1e-5

assert CHANNEL_DIM == NUM_PATCHES, (
    "reference MLPMixer applies MLPBlock(num_patches, token_dim) along the channel "
    "axis; its forward is only well-defined when channel_dim == num_patches")

# ---- packed-parameter slab layout (all indices static Python ints) ----
SQ_EMB = 0
def SQ_W1A(i): return 1 + 2 * i          # token-MLP fc1, padded to (128,128)
def SQ_W2A(i): return 2 + 2 * i          # token-MLP fc2, padded to (128,128)
SQ_HEAD = 1 + 2 * NUM_BLOCKS             # head weight, padded to (128,128)
N_SQ = SQ_HEAD + 1

VEC_EMB_B = 0
def VEC_BLK(i): return 1 + 7 * i         # g1, be1, b1a(pad), b2a, g2, be2, b2b
VEC_HEAD = 1 + 7 * NUM_BLOCKS            # hg, hbe, hb(pad)
N_VEC = VEC_HEAD + 3


# ---------------- in-kernel math helpers ----------------
def _gelu(x):
  # tanh-approx GELU (EUP tanh -> its own VLIW slot).
  # TODO(synk): nn.GELU() default is exact erf-GELU; tanh approx differs by <~1e-3.
  c = 0.7978845608028654  # sqrt(2/pi)
  return 0.5 * x * (1.0 + jnp.tanh(c * (x + 0.044715 * x * x * x)))


def _layernorm(x, gamma, beta):
  mu = jnp.mean(x, axis=-1, keepdims=True)
  var = jnp.mean(jnp.square(x - mu), axis=-1, keepdims=True)
  return (x - mu) * jax.lax.rsqrt(var + LN_EPS) * gamma + beta


# ---------------- fused kernel ----------------
def mixer_fused_kernel(x_ref, sq_ref, w1b_ref, w2b_ref, b1b_ref, vec_ref, o_ref,
                       *, bps, hc):
  # Embedding: (rows, 128-padded NC) @ (128, C) -> (rows, C); bf16 MXU, f32 acc.
  h = jnp.dot(x_ref[...], sq_ref[SQ_EMB],
              preferred_element_type=jnp.float32) + vec_ref[VEC_EMB_B]

  for blk in range(NUM_BLOCKS):
    vb = VEC_BLK(blk)

    # LayerNorm(channel_dim) + MLPBlock(num_patches, token_dim) applied along the
    # last dim, as in the reference (token dim zero-padded to 128 lanes; padded
    # hidden units are exactly zero so they contribute nothing).
    y = _layernorm(h, vec_ref[vb + 0], vec_ref[vb + 1])
    y = _gelu(jnp.dot(y.astype(jnp.bfloat16), sq_ref[SQ_W1A(blk)],
                      preferred_element_type=jnp.float32) + vec_ref[vb + 2])
    y = jnp.dot(y.astype(jnp.bfloat16), sq_ref[SQ_W2A(blk)],
                preferred_element_type=jnp.float32) + vec_ref[vb + 3]
    # TODO(synk): nn.Dropout(0.1) is stochastic in train mode; identity here (eval).

    # LayerNorm(channel_dim) + MLPBlock(channel_dim, 4*channel_dim), chunked over
    # the 512-wide hidden dim; accumulator starts from residual + fc2 bias so `h`
    # is dead during the chunk loop (cuts pinned vregs).
    y = _layernorm(y, vec_ref[vb + 4], vec_ref[vb + 5])
    yb = y.astype(jnp.bfloat16)
    acc = h + vec_ref[vb + 6]
    for j in range(HIDDEN_DIM // hc):
      c0 = j * hc
      hid = _gelu(jnp.dot(yb, w1b_ref[blk, :, c0:c0 + hc],
                          preferred_element_type=jnp.float32)
                  + b1b_ref[blk, c0:c0 + hc])
      acc = acc + jnp.dot(hid.astype(jnp.bfloat16), w2b_ref[blk, c0:c0 + hc, :],
                          preferred_element_type=jnp.float32)
    h = acc

  # Head: per-batch mean over patches, LN, Linear (128-lane-padded classes).
  means = [jnp.mean(h[b * NUM_PATCHES:(b + 1) * NUM_PATCHES, :],
                    axis=0, keepdims=True) for b in range(bps)]
  hm = means[0] if bps == 1 else jnp.concatenate(means, axis=0)      # (bps, C)
  ym = _layernorm(hm, vec_ref[VEC_HEAD + 0], vec_ref[VEC_HEAD + 1])
  logits = jnp.dot(ym.astype(jnp.bfloat16), sq_ref[SQ_HEAD],
                   preferred_element_type=jnp.float32) + vec_ref[VEC_HEAD + 2]
  for b in range(bps):
    o_ref[b] = logits[b:b + 1, :]


# ---------------- parameter packing ----------------
def _pack_params(params):
  """Pack all module params into 5 slabs (plus x) with exact-zero padding."""
  (emb_w, emb_b), blocks, (hg, hbe, hw, hb) = params

  sq = jnp.zeros((N_SQ, CHANNEL_DIM, CHANNEL_DIM), jnp.float32)
  sq = sq.at[SQ_EMB, :NUM_CHANNELS, :].set(emb_w)
  vec = jnp.zeros((N_VEC, CHANNEL_DIM), jnp.float32)
  vec = vec.at[VEC_EMB_B].set(emb_b[0])

  w1b_all, w2b_all, b1b_all = [], [], []
  for i, (g1, be1, w1a, b1a, w2a, b2a, g2, be2, w1b, b1b, w2b, b2b) in enumerate(blocks):
    sq = sq.at[SQ_W1A(i), :, :TOKEN_DIM].set(w1a)      # padded cols stay exactly 0
    sq = sq.at[SQ_W2A(i), :TOKEN_DIM, :].set(w2a)      # padded rows stay exactly 0
    base = VEC_BLK(i)
    vec = vec.at[base + 0].set(g1[0])
    vec = vec.at[base + 1].set(be1[0])
    vec = vec.at[base + 2, :TOKEN_DIM].set(b1a[0])     # padded bias stays exactly 0
    vec = vec.at[base + 3].set(b2a[0])
    vec = vec.at[base + 4].set(g2[0])
    vec = vec.at[base + 5].set(be2[0])
    vec = vec.at[base + 6].set(b2b[0])
    w1b_all.append(w1b)
    w2b_all.append(w2b)
    b1b_all.append(b1b[0])

  sq = sq.at[SQ_HEAD, :, :NUM_CLASSES].set(hw)
  vec = vec.at[VEC_HEAD + 0].set(hg[0])
  vec = vec.at[VEC_HEAD + 1].set(hbe[0])
  vec = vec.at[VEC_HEAD + 2, :NUM_CLASSES].set(hb[0])

  return (sq.astype(jnp.bfloat16),
          jnp.stack(w1b_all).astype(jnp.bfloat16),     # (NB, C, H)
          jnp.stack(w2b_all).astype(jnp.bfloat16),     # (NB, H, C)
          jnp.stack(b1b_all),                          # (NB, H) f32
          vec)                                         # (N_VEC, C) f32


# ---------------- per-chip plan & cost ----------------
def _tpu_plan():
  kind = ""
  try:
    kind = jax.devices()[0].device_kind.lower()
  except Exception:
    pass
  single_tc = ("lite" in kind) or ("v5e" in kind) or ("v6" in kind)
  multi_tc = (not single_tc) and any(t in kind for t in ("v7", "v5p", "v4"))
  # multi-TC (v7x): one batch element per grid step, shared across TensorCores;
  # single-TC (v5e/v6e, default): fuse the whole batch into one grid step.
  bps = 1 if multi_tc else B
  # 256-wide hidden chunks for the 2x256x256 MXUs (v6e/v7x); 128 on v5e.
  is_v5e = ("v5 lite" in kind) or ("v5e" in kind)
  hc = 128 if is_v5e else 256
  return bps, hc


def _cost_estimate():
  rows = B * NUM_PATCHES
  macs = rows * CHANNEL_DIM * CHANNEL_DIM                                  # embedding (padded)
  macs += rows * NUM_BLOCKS * (2 * CHANNEL_DIM * CHANNEL_DIM               # token MLP (padded)
                               + 2 * CHANNEL_DIM * HIDDEN_DIM)             # channel MLP
  macs += B * CHANNEL_DIM * PADDED_CLASSES                                 # head
  transcendentals = rows * NUM_BLOCKS * (CHANNEL_DIM + HIDDEN_DIM)
  bytes_accessed = (rows * CHANNEL_DIM * 2
                    + N_SQ * CHANNEL_DIM * CHANNEL_DIM * 2
                    + 2 * NUM_BLOCKS * CHANNEL_DIM * HIDDEN_DIM * 2
                    + NUM_BLOCKS * HIDDEN_DIM * 4
                    + N_VEC * CHANNEL_DIM * 4
                    + B * PADDED_CLASSES * 4)
  return pl.CostEstimate(flops=2 * macs, transcendentals=transcendentals,
                         bytes_accessed=bytes_accessed)


# ---------------- pallas_call wrapper ----------------
def build_mixer_forward():
  bps, hc = _tpu_plan()
  assert B % bps == 0 and HIDDEN_DIM % hc == 0
  grid_steps = B // bps
  rows = bps * NUM_PATCHES

  kernel = functools.partial(mixer_fused_kernel, bps=bps, hc=hc)

  call = pl.pallas_call(
      kernel,
      out_shape=jax.ShapeDtypeStruct((B, 1, PADDED_CLASSES), jnp.float32),
      grid=(grid_steps,),
      in_specs=[
          pl.BlockSpec((rows, CHANNEL_DIM), lambda g: (g, 0)),
          # Weight slabs: constant block index across the grid (fetched once).
          pl.BlockSpec((N_SQ, CHANNEL_DIM, CHANNEL_DIM), lambda g: (0, 0, 0)),
          pl.BlockSpec((NUM_BLOCKS, CHANNEL_DIM, HIDDEN_DIM), lambda g: (0, 0, 0)),
          pl.BlockSpec((NUM_BLOCKS, HIDDEN_DIM, CHANNEL_DIM), lambda g: (0, 0, 0)),
          pl.BlockSpec((NUM_BLOCKS, HIDDEN_DIM), lambda g: (0, 0)),
          pl.BlockSpec((N_VEC, CHANNEL_DIM), lambda g: (0, 0)),
      ],
      out_specs=pl.BlockSpec((bps, 1, PADDED_CLASSES), lambda g: (g, 0, 0)),
      compiler_params=pltpu.CompilerParams(dimension_semantics=("parallel",)),
      cost_estimate=_cost_estimate(),
  )

  @jax.jit
  def forward(x, params):
    sq, w1b_all, w2b_all, b1b_all, vec = _pack_params(params)
    # bf16 x, zero-padded from 64 to 128 channels (emb_w rows 64.. are zero too).
    xf = x.reshape(B * NUM_PATCHES, NUM_CHANNELS).astype(jnp.bfloat16)
    xp = jnp.zeros((B * NUM_PATCHES, CHANNEL_DIM), jnp.bfloat16)
    xp = xp.at[:, :NUM_CHANNELS].set(xf)
    out = call(xp, sq, w1b_all, w2b_all, b1b_all, vec)
    return out.reshape(B, PADDED_CLASSES)[:, :NUM_CLASSES]

  return forward


# ---------------- parameter init (deterministic, synthetic) ----------------
def init_params(key):
  def linear(k, fan_in, fan_out):
    kw, kb = jax.random.split(k)
    w = jax.random.normal(kw, (fan_in, fan_out), jnp.float32) * 0.02  # stored as (in, out) = W.T
    b = jax.random.normal(kb, (1, fan_out), jnp.float32) * 0.02
    return w, b

  def ln(k, dim):
    kg, kb = jax.random.split(k)
    g = 1.0 + 0.1 * jax.random.normal(kg, (1, dim), jnp.float32)
    b = 0.1 * jax.random.normal(kb, (1, dim), jnp.float32)
    return g, b

  keys = jax.random.split(key, 3 + NUM_BLOCKS)
  emb_w, emb_b = linear(keys[0], NUM_CHANNELS, CHANNEL_DIM)

  blocks = []
  for bidx in range(NUM_BLOCKS):
    k1, k2, k3, k4, k5, k6 = jax.random.split(keys[3 + bidx], 6)
    g1, be1 = ln(k5, CHANNEL_DIM)
    w1a, b1a = linear(k1, NUM_PATCHES, TOKEN_DIM)        # MLPBlock(num_patches, token_dim).fc1
    w2a, b2a = linear(k2, TOKEN_DIM, NUM_PATCHES)        # .fc2
    g2, be2 = ln(k6, CHANNEL_DIM)
    w1b, b1b = linear(k3, CHANNEL_DIM, HIDDEN_DIM)       # MLPBlock(channel_dim, 4*channel_dim).fc1
    w2b, b2b = linear(k4, HIDDEN_DIM, CHANNEL_DIM)       # .fc2
    blocks.append((g1, be1, w1a, b1a, w2a, b2a, g2, be2, w1b, b1b, w2b, b2b))

  hg, hbe = ln(keys[2], CHANNEL_DIM)
  head_w, head_b = linear(keys[1], CHANNEL_DIM, NUM_CLASSES)
  return (emb_w, emb_b), blocks, (hg, hbe, head_w, head_b)


# ---------------- pure-JAX f32 reference ----------------
def _ln_ref(x, g, b):
  mu = jnp.mean(x, axis=-1, keepdims=True)
  var = jnp.mean(jnp.square(x - mu), axis=-1, keepdims=True)
  return (x - mu) * jax.lax.rsqrt(var + LN_EPS) * g + b


def ref_forward(x, params, approximate):
  (emb_w, emb_b), blocks, (hg, hbe, hw, hb) = params
  h = x @ emb_w + emb_b
  for (g1, be1, w1a, b1a, w2a, b2a, g2, be2, w1b, b1b, w2b, b2b) in blocks:
    y = _ln_ref(h, g1, be1)
    y = jax.nn.gelu(y @ w1a + b1a, approximate=approximate)
    y = y @ w2a + b2a
    y = _ln_ref(y, g2, be2)
    y = jax.nn.gelu(y @ w1b + b1b, approximate=approximate)
    y = y @ w2b + b2b
    h = h + y
  hm = jnp.mean(h, axis=1)
  hm = _ln_ref(hm, hg, hbe)
  return hm @ hw + hb


if __name__ == "__main__":
  key = jax.random.PRNGKey(0)
  kx, kp = jax.random.split(key)
  x = jax.random.normal(kx, (B, NUM_PATCHES, NUM_CHANNELS), jnp.float32)
  params = init_params(kp)

  forward = build_mixer_forward()
  out = jax.block_until_ready(forward(x, params))
  assert out.shape == (B, NUM_CLASSES)
  assert bool(jnp.all(jnp.isfinite(out)))

  # Tight check vs an f32 reference that matches the kernel's tanh-GELU
  # (remaining error is only the bf16 MXU operands).
  ref_tanh = ref_forward(x, params, approximate=True)
  err = float(jnp.max(jnp.abs(out - ref_tanh)))
  assert err < 3e-2, f"max abs diff vs f32 tanh-GELU reference too large: {err}"

  # Loose sanity check vs the exact erf-GELU (nn.GELU default) reference.
  ref_erf = ref_forward(x, params, approximate=False)
  err_erf = float(jnp.max(jnp.abs(out - ref_erf)))
  assert err_erf < 1e-1, f"max abs diff vs erf-GELU reference too large: {err_erf}"

  print("KERNEL_OK")
</pallas_src>

<mosaic_0001>
module attributes {stable_mosaic.version = 11 : i64} {
  func.func @mixer_fused_kernel(%arg0: i32, %arg1: memref<256x128xbf16, #tpu.memory_space<vmem>>, %arg2: memref<6x128x128xbf16, #tpu.memory_space<vmem>>, %arg3: memref<2x128x512xbf16, #tpu.memory_space<vmem>>, %arg4: memref<2x512x128xbf16, #tpu.memory_space<vmem>>, %arg5: memref<2x512xf32, #tpu.memory_space<vmem>>, %arg6: memref<18x128xf32, #tpu.memory_space<vmem>>, %arg7: memref<2x1x128xf32, #tpu.memory_space<vmem>>) attributes {dimension_semantics = [#tpu.dimension_semantics<parallel>], iteration_bounds = array<i64: 1>, scalar_prefetch = 0 : i64, scratch_operands = 0 : i64, tpu.core_type = #tpu.core_type<tc>, window_params = [{transform_indices = @transform_0, window_bounds = array<i64: 256, 128>}, {pipeline_mode = #tpu.pipeline_mode<synchronous>, transform_indices = @transform_1, window_bounds = array<i64: 6, 128, 128>}, {pipeline_mode = #tpu.pipeline_mode<synchronous>, transform_indices = @transform_2, window_bounds = array<i64: 2, 128, 512>}, {pipeline_mode = #tpu.pipeline_mode<synchronous>, transform_indices = @transform_3, window_bounds = array<i64: 2, 512, 128>}, {pipeline_mode = #tpu.pipeline_mode<synchronous>, transform_indices = @transform_4, window_bounds = array<i64: 2, 512>}, {pipeline_mode = #tpu.pipeline_mode<synchronous>, transform_indices = @transform_5, window_bounds = array<i64: 18, 128>}, {transform_indices = @transform_6, window_bounds = array<i64: 2, 1, 128>}]} {
    %c0 = arith.constant 0 : index
    %c0_0 = arith.constant 0 : index
    %0 = vector.load %arg1[%c0, %c0_0] : memref<256x128xbf16, #tpu.memory_space<vmem>>, vector<256x128xbf16>
    %c0_1 = arith.constant 0 : index
    %c0_2 = arith.constant 0 : index
    %c0_3 = arith.constant 0 : index
    %1 = vector.load %arg2[%c0_1, %c0_2, %c0_3] : memref<6x128x128xbf16, #tpu.memory_space<vmem>>, vector<1x128x128xbf16>
    %2 = vector.shape_cast %1 : vector<1x128x128xbf16> to vector<128x128xbf16>
    %cst = arith.constant dense<0.000000e+00> : vector<256x128xf32>
    %3 = tpu.matmul %0, %2, %cst {dimension_numbers = #tpu.dot_dimension_numbers<[1], [0], [0], [1], [0, 0, 1, 1], [], []>} : vector<256x128xbf16>, vector<128x128xbf16>, vector<256x128xf32> -> vector<256x128xf32>
    %c0_4 = arith.constant 0 : index
    %c0_5 = arith.constant 0 : index
    %4 = vector.load %arg6[%c0_4, %c0_5] : memref<18x128xf32, #tpu.memory_space<vmem>>, vector<1x128xf32>
    %5 = vector.shape_cast %4 : vector<1x128xf32> to vector<128xf32>
    %6 = vector.shape_cast %5 : vector<128xf32> to vector<1x128xf32>
    %7 = vector.broadcast %6 : vector<1x128xf32> to vector<256x128xf32>
    %8 = arith.addf %3, %7 : vector<256x128xf32>
    %c1 = arith.constant 1 : index
    %c0_6 = arith.constant 0 : index
    %9 = vector.load %arg6[%c1, %c0_6] : memref<18x128xf32, #tpu.memory_space<vmem>>, vector<1x128xf32>
    %10 = vector.shape_cast %9 : vector<1x128xf32> to vector<128xf32>
    %c2 = arith.constant 2 : index
    %c0_7 = arith.constant 0 : index
    %11 = vector.load %arg6[%c2, %c0_7] : memref<18x128xf32, #tpu.memory_space<vmem>>, vector<1x128xf32>
    %12 = vector.shape_cast %11 : vector<1x128xf32> to vector<128xf32>
    %cst_8 = arith.constant dense<0.000000e+00> : vector<256xf32>
    %13 = vector.multi_reduction <add>, %8, %cst_8 [1] : vector<256x128xf32> to vector<256xf32>
    %14 = vector.shape_cast %13 : vector<256xf32> to vector<256x1xf32>
    %cst_9 = arith.constant 1.280000e+02 : f32
    %15 = vector.broadcast %cst_9 : f32 to vector<256x1xf32>
    %16 = arith.divf %14, %15 : vector<256x1xf32>
    %17 = vector.broadcast %16 : vector<256x1xf32> to vector<256x128xf32>
    %18 = arith.subf %8, %17 : vector<256x128xf32>
    %19 = arith.mulf %18, %18 : vector<256x128xf32>
    %cst_10 = arith.constant dense<0.000000e+00> : vector<256xf32>
    %20 = vector.multi_reduction <add>, %19, %cst_10 [1] : vector<256x128xf32> to vector<256xf32>
    %21 = vector.shape_cast %20 : vector<256xf32> to vector<256x1xf32>
    %cst_11 = arith.constant 1.280000e+02 : f32
    %22 = vector.broadcast %cst_11 : f32 to vector<256x1xf32>
    %23 = arith.divf %21, %22 : vector<256x1xf32>
    %24 = vector.broadcast %16 : vector<256x1xf32> to vector<256x128xf32>
    %25 = arith.subf %8, %24 : vector<256x128xf32>
    %cst_12 = arith.constant 9.99999974E-6 : f32
    %26 = vector.broadcast %cst_12 : f32 to vector<256x1xf32>
    %27 = arith.addf %23, %26 : vector<256x1xf32>
    %28 = math.rsqrt %27 : vector<256x1xf32>
    %29 = vector.broadcast %28 : vector<256x1xf32> to vector<256x128xf32>
    %30 = arith.mulf %25, %29 : vector<256x128xf32>
    %31 = vector.shape_cast %10 : vector<128xf32> to vector<1x128xf32>
    %32 = vector.broadcast %31 : vector<1x128xf32> to vector<256x128xf32>
    %33 = arith.mulf %30, %32 : vector<256x128xf32>
    %34 = vector.shape_cast %12 : vector<128xf32> to vector<1x128xf32>
    %35 = vector.broadcast %34 : vector<1x128xf32> to vector<256x128xf32>
    %36 = arith.addf %33, %35 : vector<256x128xf32>
    %37 = arith.truncf %36 : vector<256x128xf32> to vector<256x128xbf16>
    %c1_13 = arith.constant 1 : index
    %c0_14 = arith.constant 0 : index
    %c0_15 = arith.constant 0 : index
    %38 = vector.load %arg2[%c1_13, %c0_14, %c0_15] : memref<6x128x128xbf16, #tpu.memory_space<vmem>>, vector<1x128x128xbf16>
    %39 = vector.shape_cast %38 : vector<1x128x128xbf16> to vector<128x128xbf16>
    %cst_16 = arith.constant dense<0.000000e+00> : vector<256x128xf32>
    %40 = tpu.matmul %37, %39, %cst_16 {dimension_numbers = #tpu.dot_dimension_numbers<[1], [0], [0], [1], [0, 0, 1, 1], [], []>} : vector<256x128xbf16>, vector<128x128xbf16>, vector<256x128xf32> -> vector<256x128xf32>
    %c3 = arith.constant 3 : index
    %c0_17 = arith.constant 0 : index
    %41 = vector.load %arg6[%c3, %c0_17] : memref<18x128xf32, #tpu.memory_space<vmem>>, vector<1x128xf32>
    %42 = vector.shape_cast %41 : vector<1x128xf32> to vector<128xf32>
    %43 = vector.shape_cast %42 : vector<128xf32> to vector<1x128xf32>
    %44 = vector.broadcast %43 : vector<1x128xf32> to vector<256x128xf32>
    %45 = arith.addf %40, %44 : vector<256x128xf32>
    %cst_18 = arith.constant 5.000000e-01 : f32
    %46 = vector.broadcast %cst_18 : f32 to vector<256x128xf32>
    %47 = arith.mulf %46, %45 : vector<256x128xf32>
    %cst_19 = arith.constant 4.471500e-02 : f32
    %48 = vector.broadcast %cst_19 : f32 to vector<256x128xf32>
    %49 = arith.mulf %48, %45 : vector<256x128xf32>
    %50 = arith.mulf %49, %45 : vector<256x128xf32>
    %51 = arith.mulf %50, %45 : vector<256x128xf32>
    %52 = arith.addf %45, %51 : vector<256x128xf32>
    %cst_20 = arith.constant 0.797884583 : f32
    %53 = vector.broadcast %cst_20 : f32 to vector<256x128xf32>
    %54 = arith.mulf %53, %52 : vector<256x128xf32>
    %55 = math.tanh %54 : vector<256x128xf32>
    %cst_21 = arith.constant 1.000000e+00 : f32
    %56 = vector.broadcast %cst_21 : f32 to vector<256x128xf32>
    %57 = arith.addf %56, %55 : vector<256x128xf32>
    %58 = arith.mulf %47, %57 : vector<256x128xf32>
    %59 = arith.truncf %58 : vector<256x128xf32> to vector<256x128xbf16>
    %c2_22 = arith.constant 2 : index
    %c0_23 = arith.constant 0 : index
    %c0_24 = arith.constant 0 : index
    %60 = vector.load %arg2[%c2_22, %c0_23, %c0_24] : memref<6x128x128xbf16, #tpu.memory_space<vmem>>, vector<1x128x128xbf16>
    %61 = vector.shape_cast %60 : vector<1x128x128xbf16> to vector<128x128xbf16>
    %cst_25 = arith.constant dense<0.000000e+00> : vector<256x128xf32>
    %62 = tpu.matmul %59, %61, %cst_25 {dimension_numbers = #tpu.dot_dimension_numbers<[1], [0], [0], [1], [0, 0, 1, 1], [], []>} : vector<256x128xbf16>, vector<128x128xbf16>, vector<256x128xf32> -> vector<256x128xf32>
    %c4 = arith.constant 4 : index
    %c0_26 = arith.constant 0 : index
    %63 = vector.load %arg6[%c4, %c0_26] : memref<18x128xf32, #tpu.memory_space<vmem>>, vector<1x128xf32>
    %64 = vector.shape_cast %63 : vector<1x128xf32> to vector<128xf32>
    %65 = vector.shape_cast %64 : vector<128xf32> to vector<1x128xf32>
    %66 = vector.broadcast %65 : vector<1x128xf32> to vector<256x128xf32>
    %67 = arith.addf %62, %66 : vector<256x128xf32>
    %c5 = arith.constant 5 : index
    %c0_27 = arith.constant 0 : index
    %68 = vector.load %arg6[%c5, %c0_27] : memref<18x128xf32, #tpu.memory_space<vmem>>, vector<1x128xf32>
    %69 = vector.shape_cast %68 : vector<1x128xf32> to vector<128xf32>
    %c6 = arith.constant 6 : index
    %c0_28 = arith.constant 0 : index
    %70 = vector.load %arg6[%c6, %c0_28] : memref<18x128xf32, #tpu.memory_space<vmem>>, vector<1x128xf32>
    %71 = vector.shape_cast %70 : vector<1x128xf32> to vector<128xf32>
    %cst_29 = arith.constant dense<0.000000e+00> : vector<256xf32>
    %72 = vector.multi_reduction <add>, %67, %cst_29 [1] : vector<256x128xf32> to vector<256xf32>
    %73 = vector.shape_cast %72 : vector<256xf32> to vector<256x1xf32>
    %cst_30 = arith.constant 1.280000e+02 : f32
    %74 = vector.broadcast %cst_30 : f32 to vector<256x1xf32>
    %75 = arith.divf %73, %74 : vector<256x1xf32>
    %76 = vector.broadcast %75 : vector<256x1xf32> to vector<256x128xf32>
    %77 = arith.subf %67, %76 : vector<256x128xf32>
    %78 = arith.mulf %77, %77 : vector<256x128xf32>
    %cst_31 = arith.constant dense<0.000000e+00> : vector<256xf32>
    %79 = vector.multi_reduction <add>, %78, %cst_31 [1] : vector<256x128xf32> to vector<256xf32>
    %80 = vector.shape_cast %79 : vector<256xf32> to vector<256x1xf32>
    %cst_32 = arith.constant 1.280000e+02 : f32
    %81 = vector.broadcast %cst_32 : f32 to vector<256x1xf32>
    %82 = arith.divf %80, %81 : vector<256x1xf32>
    %83 = vector.broadcast %75 : vector<256x1xf32> to vector<256x128xf32>
    %84 = arith.subf %67, %83 : vector<256x128xf32>
    %cst_33 = arith.constant 9.99999974E-6 : f32
    %85 = vector.broadcast %cst_33 : f32 to vector<256x1xf32>
    %86 = arith.addf %82, %85 : vector<256x1xf32>
    %87 = math.rsqrt %86 : vector<256x1xf32>
    %88 = vector.broadcast %87 : vector<256x1xf32> to vector<256x128xf32>
    %89 = arith.mulf %84, %88 : vector<256x128xf32>
    %90 = vector.shape_cast %69 : vector<128xf32> to vector<1x128xf32>
    %91 = vector.broadcast %90 : vector<1x128xf32> to vector<256x128xf32>
    %92 = arith.mulf %89, %91 : vector<256x128xf32>
    %93 = vector.shape_cast %71 : vector<128xf32> to vector<1x128xf32>
    %94 = vector.broadcast %93 : vector<1x128xf32> to vector<256x128xf32>
    %95 = arith.addf %92, %94 : vector<256x128xf32>
    %96 = arith.truncf %95 : vector<256x128xf32> to vector<256x128xbf16>
    %c7 = arith.constant 7 : index
    %c0_34 = arith.constant 0 : index
    %97 = vector.load %arg6[%c7, %c0_34] : memref<18x128xf32, #tpu.memory_space<vmem>>, vector<1x128xf32>
    %98 = vector.shape_cast %97 : vector<1x128xf32> to vector<128xf32>
    %99 = vector.shape_cast %98 : vector<128xf32> to vector<1x128xf32>
    %100 = vector.broadcast %99 : vector<1x128xf32> to vector<256x128xf32>
    %101 = arith.addf %8, %100 : vector<256x128xf32>
    %c0_35 = arith.constant 0 : index
    %c0_36 = arith.constant 0 : index
    %c0_37 = arith.constant 0 : index
    %102 = vector.load %arg3[%c0_35, %c0_36, %c0_37] : memref<2x128x512xbf16, #tpu.memory_space<vmem>>, vector<1x128x256xbf16>
    %103 = vector.shape_cast %102 : vector<1x128x256xbf16> to vector<128x256xbf16>
    %cst_38 = arith.constant dense<0.000000e+00> : vector<256x256xf32>
    %104 = tpu.matmul %96, %103, %cst_38 {dimension_numbers = #tpu.dot_dimension_numbers<[1], [0], [0], [1], [0, 0, 1, 1], [], []>} : vector<256x128xbf16>, vector<128x256xbf16>, vector<256x256xf32> -> vector<256x256xf32>
    %c0_39 = arith.constant 0 : index
    %c0_40 = arith.constant 0 : index
    %105 = vector.load %arg5[%c0_39, %c0_40] : memref<2x512xf32, #tpu.memory_space<vmem>>, vector<1x256xf32>
    %106 = vector.shape_cast %105 : vector<1x256xf32> to vector<256xf32>
    %107 = vector.shape_cast %106 : vector<256xf32> to vector<1x256xf32>
    %108 = vector.broadcast %107 : vector<1x256xf32> to vector<256x256xf32>
    %109 = arith.addf %104, %108 : vector<256x256xf32>
    %cst_41 = arith.constant 5.000000e-01 : f32
    %110 = vector.broadcast %cst_41 : f32 to vector<256x256xf32>
    %111 = arith.mulf %110, %109 : vector<256x256xf32>
    %cst_42 = arith.constant 4.471500e-02 : f32
    %112 = vector.broadcast %cst_42 : f32 to vector<256x256xf32>
    %113 = arith.mulf %112, %109 : vector<256x256xf32>
    %114 = arith.mulf %113, %109 : vector<256x256xf32>
    %115 = arith.mulf %114, %109 : vector<256x256xf32>
    %116 = arith.addf %109, %115 : vector<256x256xf32>
    %cst_43 = arith.constant 0.797884583 : f32
    %117 = vector.broadcast %cst_43 : f32 to vector<256x256xf32>
    %118 = arith.mulf %117, %116 : vector<256x256xf32>
    %119 = math.tanh %118 : vector<256x256xf32>
    %cst_44 = arith.constant 1.000000e+00 : f32
    %120 = vector.broadcast %cst_44 : f32 to vector<256x256xf32>
    %121 = arith.addf %120, %119 : vector<256x256xf32>
    %122 = arith.mulf %111, %121 : vector<256x256xf32>
    %123 = arith.truncf %122 : vector<256x256xf32> to vector<256x256xbf16>
    %c0_45 = arith.constant 0 : index
    %c0_46 = arith.constant 0 : index
    %c0_47 = arith.constant 0 : index
    %124 = vector.load %arg4[%c0_45, %c0_46, %c0_47] : memref<2x512x128xbf16, #tpu.memory_space<vmem>>, vector<1x256x128xbf16>
    %125 = vector.shape_cast %124 : vector<1x256x128xbf16> to vector<256x128xbf16>
    %cst_48 = arith.constant dense<0.000000e+00> : vector<256x128xf32>
    %126 = tpu.matmul %123, %125, %cst_48 {dimension_numbers = #tpu.dot_dimension_numbers<[1], [0], [0], [1], [0, 0, 1, 1], [], []>} : vector<256x256xbf16>, vector<256x128xbf16>, vector<256x128xf32> -> vector<256x128xf32>
    %127 = arith.addf %101, %126 : vector<256x128xf32>
    %c0_49 = arith.constant 0 : index
    %c0_50 = arith.constant 0 : index
    %c256 = arith.constant 256 : index
    %128 = vector.load %arg3[%c0_49, %c0_50, %c256] : memref<2x128x512xbf16, #tpu.memory_space<vmem>>, vector<1x128x256xbf16>
    %129 = vector.shape_cast %128 : vector<1x128x256xbf16> to vector<128x256xbf16>
    %cst_51 = arith.constant dense<0.000000e+00> : vector<256x256xf32>
    %130 = tpu.matmul %96, %129, %cst_51 {dimension_numbers = #tpu.dot_dimension_numbers<[1], [0], [0], [1], [0, 0, 1, 1], [], []>} : vector<256x128xbf16>, vector<128x256xbf16>, vector<256x256xf32> -> vector<256x256xf32>
    %c0_52 = arith.constant 0 : index
    %c256_53 = arith.constant 256 : index
    %131 = vector.load %arg5[%c0_52, %c256_53] : memref<2x512xf32, #tpu.memory_space<vmem>>, vector<1x256xf32>
    %132 = vector.shape_cast %131 : vector<1x256xf32> to vector<256xf32>
    %133 = vector.shape_cast %132 : vector<256xf32> to vector<1x256xf32>
    %134 = vector.broadcast %133 : vector<1x256xf32> to vector<256x256xf32>
    %135 = arith.addf %130, %134 : vector<256x256xf32>
    %cst_54 = arith.constant 5.000000e-01 : f32
    %136 = vector.broadcast %cst_54 : f32 to vector<256x256xf32>
    %137 = arith.mulf %136, %135 : vector<256x256xf32>
    %cst_55 = arith.constant 4.471500e-02 : f32
    %138 = vector.broadcast %cst_55 : f32 to vector<256x256xf32>
    %139 = arith.mulf %138, %135 : vector<256x256xf32>
    %140 = arith.mulf %139, %135 : vector<256x256xf32>
    %141 = arith.mulf %140, %135 : vector<256x256xf32>
    %142 = arith.addf %135, %141 : vector<256x256xf32>
    %cst_56 = arith.constant 0.797884583 : f32
    %143 = vector.broadcast %cst_56 : f32 to vector<256x256xf32>
    %144 = arith.mulf %143, %142 : vector<256x256xf32>
    %145 = math.tanh %144 : vector<256x256xf32>
    %cst_57 = arith.constant 1.000000e+00 : f32
    %146 = vector.broadcast %cst_57 : f32 to vector<256x256xf32>
    %147 = arith.addf %146, %145 : vector<256x256xf32>
    %148 = arith.mulf %137, %147 : vector<256x256xf32>
    %149 = arith.truncf %148 : vector<256x256xf32> to vector<256x256xbf16>
    %c0_58 = arith.constant 0 : index
    %c256_59 = arith.constant 256 : index
    %c0_60 = arith.constant 0 : index
    %150 = vector.load %arg4[%c0_58, %c256_59, %c0_60] : memref<2x512x128xbf16, #tpu.memory_space<vmem>>, vector<1x256x128xbf16>
    %151 = vector.shape_cast %150 : vector<1x256x128xbf16> to vector<256x128xbf16>
    %cst_61 = arith.constant dense<0.000000e+00> : vector<256x128xf32>
    %152 = tpu.matmul %149, %151, %cst_61 {dimension_numbers = #tpu.dot_dimension_numbers<[1], [0], [0], [1], [0, 0, 1, 1], [], []>} : vector<256x256xbf16>, vector<256x128xbf16>, vector<256x128xf32> -> vector<256x128xf32>
    %153 = arith.addf %127, %152 : vector<256x128xf32>
    %c8 = arith.constant 8 : index
    %c0_62 = arith.constant 0 : index
    %154 = vector.load %arg6[%c8, %c0_62] : memref<18x128xf32, #tpu.memory_space<vmem>>, vector<1x128xf32>
    %155 = vector.shape_cast %154 : vector<1x128xf32> to vector<128xf32>
    %c9 = arith.constant 9 : index
    %c0_63 = arith.constant 0 : index
    %156 = vector.load %arg6[%c9, %c0_63] : memref<18x128xf32, #tpu.memory_space<vmem>>, vector<1x128xf32>
    %157 = vector.shape_cast %156 : vector<1x128xf32> to vector<128xf32>
    %cst_64 = arith.constant dense<0.000000e+00> : vector<256xf32>
    %158 = vector.multi_reduction <add>, %153, %cst_64 [1] : vector<256x128xf32> to vector<256xf32>
    %159 = vector.shape_cast %158 : vector<256xf32> to vector<256x1xf32>
    %cst_65 = arith.constant 1.280000e+02 : f32
    %160 = vector.broadcast %cst_65 : f32 to vector<256x1xf32>
    %161 = arith.divf %159, %160 : vector<256x1xf32>
    %162 = vector.broadcast %161 : vector<256x1xf32> to vector<256x128xf32>
    %163 = arith.subf %153, %162 : vector<256x128xf32>
    %164 = arith.mulf %163, %163 : vector<256x128xf32>
    %cst_66 = arith.constant dense<0.000000e+00> : vector<256xf32>
    %165 = vector.multi_reduction <add>, %164, %cst_66 [1] : vector<256x128xf32> to vector<256xf32>
    %166 = vector.shape_cast %165 : vector<256xf32> to vector<256x1xf32>
    %cst_67 = arith.constant 1.280000e+02 : f32
    %167 = vector.broadcast %cst_67 : f32 to vector<256x1xf32>
    %168 = arith.divf %166, %167 : vector<256x1xf32>
    %169 = vector.broadcast %161 : vector<256x1xf32> to vector<256x128xf32>
    %170 = arith.subf %153, %169 : vector<256x128xf32>
    %cst_68 = arith.constant 9.99999974E-6 : f32
    %171 = vector.broadcast %cst_68 : f32 to vector<256x1xf32>
    %172 = arith.addf %168, %171 : vector<256x1xf32>
    %173 = math.rsqrt %172 : vector<256x1xf32>
    %174 = vector.broadcast %173 : vector<256x1xf32> to vector<256x128xf32>
    %175 = arith.mulf %170, %174 : vector<256x128xf32>
    %176 = vector.shape_cast %155 : vector<128xf32> to vector<1x128xf32>
    %177 = vector.broadcast %176 : vector<1x128xf32> to vector<256x128xf32>
    %178 = arith.mulf %175, %177 : vector<256x128xf32>
    %179 = vector.shape_cast %157 : vector<128xf32> to vector<1x128xf32>
    %180 = vector.broadcast %179 : vector<1x128xf32> to vector<256x128xf32>
    %181 = arith.addf %178, %180 : vector<256x128xf32>
    %182 = arith.truncf %181 : vector<256x128xf32> to vector<256x128xbf16>
    %c3_69 = arith.constant 3 : index
    %c0_70 = arith.constant 0 : index
    %c0_71 = arith.constant 0 : index
    %183 = vector.load %arg2[%c3_69, %c0_70, %c0_71] : memref<6x128x128xbf16, #tpu.memory_space<vmem>>, vector<1x128x128xbf16>
    %184 = vector.shape_cast %183 : vector<1x128x128xbf16> to vector<128x128xbf16>
    %cst_72 = arith.constant dense<0.000000e+00> : vector<256x128xf32>
    %185 = tpu.matmul %182, %184, %cst_72 {dimension_numbers = #tpu.dot_dimension_numbers<[1], [0], [0], [1], [0, 0, 1, 1], [], []>} : vector<256x128xbf16>, vector<128x128xbf16>, vector<256x128xf32> -> vector<256x128xf32>
    %c10 = arith.constant 10 : index
    %c0_73 = arith.constant 0 : index
    %186 = vector.load %arg6[%c10, %c0_73] : memref<18x128xf32, #tpu.memory_space<vmem>>, vector<1x128xf32>
    %187 = vector.shape_cast %186 : vector<1x128xf32> to vector<128xf32>
    %188 = vector.shape_cast %187 : vector<128xf32> to vector<1x128xf32>
    %189 = vector.broadcast %188 : vector<1x128xf32> to vector<256x128xf32>
    %190 = arith.addf %185, %189 : vector<256x128xf32>
    %cst_74 = arith.constant 5.000000e-01 : f32
    %191 = vector.broadcast %cst_74 : f32 to vector<256x128xf32>
    %192 = arith.mulf %191, %190 : vector<256x128xf32>
    %cst_75 = arith.constant 4.471500e-02 : f32
    %193 = vector.broadcast %cst_75 : f32 to vector<256x128xf32>
    %194 = arith.mulf %193, %190 : vector<256x128xf32>
    %195 = arith.mulf %194, %190 : vector<256x128xf32>
    %196 = arith.mulf %195, %190 : vector<256x128xf32>
    %197 = arith.addf %190, %196 : vector<256x128xf32>
    %cst_76 = arith.constant 0.797884583 : f32
    %198 = vector.broadcast %cst_76 : f32 to vector<256x128xf32>
    %199 = arith.mulf %198, %197 : vector<256x128xf32>
    %200 = math.tanh %199 : vector<256x128xf32>
    %cst_77 = arith.constant 1.000000e+00 : f32
    %201 = vector.broadcast %cst_77 : f32 to vector<256x128xf32>
    %202 = arith.addf %201, %200 : vector<256x128xf32>
    %203 = arith.mulf %192, %202 : vector<256x128xf32>
    %204 = arith.truncf %203 : vector<256x128xf32> to vector<256x128xbf16>
    %c4_78 = arith.constant 4 : index
    %c0_79 = arith.constant 0 : index
    %c0_80 = arith.constant 0 : index
    %205 = vector.load %arg2[%c4_78, %c0_79, %c0_80] : memref<6x128x128xbf16, #tpu.memory_space<vmem>>, vector<1x128x128xbf16>
    %206 = vector.shape_cast %205 : vector<1x128x128xbf16> to vector<128x128xbf16>
    %cst_81 = arith.constant dense<0.000000e+00> : vector<256x128xf32>
    %207 = tpu.matmul %204, %206, %cst_81 {dimension_numbers = #tpu.dot_dimension_numbers<[1], [0], [0], [1], [0, 0, 1, 1], [], []>} : vector<256x128xbf16>, vector<128x128xbf16>, vector<256x128xf32> -> vector<256x128xf32>
    %c11 = arith.constant 11 : index
    %c0_82 = arith.constant 0 : index
    %208 = vector.load %arg6[%c11, %c0_82] : memref<18x128xf32, #tpu.memory_space<vmem>>, vector<1x128xf32>
    %209 = vector.shape_cast %208 : vector<1x128xf32> to vector<128xf32>
    %210 = vector.shape_cast %209 : vector<128xf32> to vector<1x128xf32>
    %211 = vector.broadcast %210 : vector<1x128xf32> to vector<256x128xf32>
    %212 = arith.addf %207, %211 : vector<256x128xf32>
    %c12 = arith.constant 12 : index
    %c0_83 = arith.constant 0 : index
    %213 = vector.load %arg6[%c12, %c0_83] : memref<18x128xf32, #tpu.memory_space<vmem>>, vector<1x128xf32>
    %214 = vector.shape_cast %213 : vector<1x128xf32> to vector<128xf32>
    %c13 = arith.constant 13 : index
    %c0_84 = arith.constant 0 : index
    %215 = vector.load %arg6[%c13, %c0_84] : memref<18x128xf32, #tpu.memory_space<vmem>>, vector<1x128xf32>
    %216 = vector.shape_cast %215 : vector<1x128xf32> to vector<128xf32>
    %cst_85 = arith.constant dense<0.000000e+00> : vector<256xf32>
    %217 = vector.multi_reduction <add>, %212, %cst_85 [1] : vector<256x128xf32> to vector<256xf32>
    %218 = vector.shape_cast %217 : vector<256xf32> to vector<256x1xf32>
    %cst_86 = arith.constant 1.280000e+02 : f32
    %219 = vector.broadcast %cst_86 : f32 to vector<256x1xf32>
    %220 = arith.divf %218, %219 : vector<256x1xf32>
    %221 = vector.broadcast %220 : vector<256x1xf32> to vector<256x128xf32>
    %222 = arith.subf %212, %221 : vector<256x128xf32>
    %223 = arith.mulf %222, %222 : vector<256x128xf32>
    %cst_87 = arith.constant dense<0.000000e+00> : vector<256xf32>
    %224 = vector.multi_reduction <add>, %223, %cst_87 [1] : vector<256x128xf32> to vector<256xf32>
    %225 = vector.shape_cast %224 : vector<256xf32> to vector<256x1xf32>
    %cst_88 = arith.constant 1.280000e+02 : f32
    %226 = vector.broadcast %cst_88 : f32 to vector<256x1xf32>
    %227 = arith.divf %225, %226 : vector<256x1xf32>
    %228 = vector.broadcast %220 : vector<256x1xf32> to vector<256x128xf32>
    %229 = arith.subf %212, %228 : vector<256x128xf32>
    %cst_89 = arith.constant 9.99999974E-6 : f32
    %230 = vector.broadcast %cst_89 : f32 to vector<256x1xf32>
    %231 = arith.addf %227, %230 : vector<256x1xf32>
    %232 = math.rsqrt %231 : vector<256x1xf32>
    %233 = vector.broadcast %232 : vector<256x1xf32> to vector<256x128xf32>
    %234 = arith.mulf %229, %233 : vector<256x128xf32>
    %235 = vector.shape_cast %214 : vector<128xf32> to vector<1x128xf32>
    %236 = vector.broadcast %235 : vector<1x128xf32> to vector<256x128xf32>
    %237 = arith.mulf %234, %236 : vector<256x128xf32>
    %238 = vector.shape_cast %216 : vector<128xf32> to vector<1x128xf32>
    %239 = vector.broadcast %238 : vector<1x128xf32> to vector<256x128xf32>
    %240 = arith.addf %237, %239 : vector<256x128xf32>
    %241 = arith.truncf %240 : vector<256x128xf32> to vector<256x128xbf16>
    %c14 = arith.constant 14 : index
    %c0_90 = arith.constant 0 : index
    %242 = vector.load %arg6[%c14, %c0_90] : memref<18x128xf32, #tpu.memory_space<vmem>>, vector<1x128xf32>
    %243 = vector.shape_cast %242 : vector<1x128xf32> to vector<128xf32>
    %244 = vector.shape_cast %243 : vector<128xf32> to vector<1x128xf32>
    %245 = vector.broadcast %244 : vector<1x128xf32> to vector<256x128xf32>
    %246 = arith.addf %153, %245 : vector<256x128xf32>
    %c1_91 = arith.constant 1 : index
    %c0_92 = arith.constant 0 : index
    %c0_93 = arith.constant 0 : index
    %247 = vector.load %arg3[%c1_91, %c0_92, %c0_93] : memref<2x128x512xbf16, #tpu.memory_space<vmem>>, vector<1x128x256xbf16>
    %248 = vector.shape_cast %247 : vector<1x128x256xbf16> to vector<128x256xbf16>
    %cst_94 = arith.constant dense<0.000000e+00> : vector<256x256xf32>
    %249 = tpu.matmul %241, %248, %cst_94 {dimension_numbers = #tpu.dot_dimension_numbers<[1], [0], [0], [1], [0, 0, 1, 1], [], []>} : vector<256x128xbf16>, vector<128x256xbf16>, vector<256x256xf32> -> vector<256x256xf32>
    %c1_95 = arith.constant 1 : index
    %c0_96 = arith.constant 0 : index
    %250 = vector.load %arg5[%c1_95, %c0_96] : memref<2x512xf32, #tpu.memory_space<vmem>>, vector<1x256xf32>
    %251 = vector.shape_cast %250 : vector<1x256xf32> to vector<256xf32>
    %252 = vector.shape_cast %251 : vector<256xf32> to vector<1x256xf32>
    %253 = vector.broadcast %252 : vector<1x256xf32> to vector<256x256xf32>
    %254 = arith.addf %249, %253 : vector<256x256xf32>
    %cst_97 = arith.constant 5.000000e-01 : f32
    %255 = vector.broadcast %cst_97 : f32 to vector<256x256xf32>
    %256 = arith.mulf %255, %254 : vector<256x256xf32>
    %cst_98 = arith.constant 4.471500e-02 : f32
    %257 = vector.broadcast %cst_98 : f32 to vector<256x256xf32>
    %258 = arith.mulf %257, %254 : vector<256x256xf32>
    %259 = arith.mulf %258, %254 : vector<256x256xf32>
    %260 = arith.mulf %259, %254 : vector<256x256xf32>
    %261 = arith.addf %254, %260 : vector<256x256xf32>
    %cst_99 = arith.constant 0.797884583 : f32
    %262 = vector.broadcast %cst_99 : f32 to vector<256x256xf32>
    %263 = arith.mulf %262, %261 : vector<256x256xf32>
    %264 = math.tanh %263 : vector<256x256xf32>
    %cst_100 = arith.constant 1.000000e+00 : f32
    %265 = vector.broadcast %cst_100 : f32 to vector<256x256xf32>
    %266 = arith.addf %265, %264 : vector<256x256xf32>
    %267 = arith.mulf %256, %266 : vector<256x256xf32>
    %268 = arith.truncf %267 : vector<256x256xf32> to vector<256x256xbf16>
    %c1_101 = arith.constant 1 : index
    %c0_102 = arith.constant 0 : index
    %c0_103 = arith.constant 0 : index
    %269 = vector.load %arg4[%c1_101, %c0_102, %c0_103] : memref<2x512x128xbf16, #tpu.memory_space<vmem>>, vector<1x256x128xbf16>
    %270 = vector.shape_cast %269 : vector<1x256x128xbf16> to vector<256x128xbf16>
    %cst_104 = arith.constant dense<0.000000e+00> : vector<256x128xf32>
    %271 = tpu.matmul %268, %270, %cst_104 {dimension_numbers = #tpu.dot_dimension_numbers<[1], [0], [0], [1], [0, 0, 1, 1], [], []>} : vector<256x256xbf16>, vector<256x128xbf16>, vector<256x128xf32> -> vector<256x128xf32>
    %272 = arith.addf %246, %271 : vector<256x128xf32>
    %c1_105 = arith.constant 1 : index
    %c0_106 = arith.constant 0 : index
    %c256_107 = arith.constant 256 : index
    %273 = vector.load %arg3[%c1_105, %c0_106, %c256_107] : memref<2x128x512xbf16, #tpu.memory_space<vmem>>, vector<1x128x256xbf16>
    %274 = vector.shape_cast %273 : vector<1x128x256xbf16> to vector<128x256xbf16>
    %cst_108 = arith.constant dense<0.000000e+00> : vector<256x256xf32>
    %275 = tpu.matmul %241, %274, %cst_108 {dimension_numbers = #tpu.dot_dimension_numbers<[1], [0], [0], [1], [0, 0, 1, 1], [], []>} : vector<256x128xbf16>, vector<128x256xbf16>, vector<256x256xf32> -> vector<256x256xf32>
    %c1_109 = arith.constant 1 : index
    %c256_110 = arith.constant 256 : index
    %276 = vector.load %arg5[%c1_109, %c256_110] : memref<2x512xf32, #tpu.memory_space<vmem>>, vector<1x256xf32>
    %277 = vector.shape_cast %276 : vector<1x256xf32> to vector<256xf32>
    %278 = vector.shape_cast %277 : vector<256xf32> to vector<1x256xf32>
    %279 = vector.broadcast %278 : vector<1x256xf32> to vector<256x256xf32>
    %280 = arith.addf %275, %279 : vector<256x256xf32>
    %cst_111 = arith.constant 5.000000e-01 : f32
    %281 = vector.broadcast %cst_111 : f32 to vector<256x256xf32>
    %282 = arith.mulf %281, %280 : vector<256x256xf32>
    %cst_112 = arith.constant 4.471500e-02 : f32
    %283 = vector.broadcast %cst_112 : f32 to vector<256x256xf32>
    %284 = arith.mulf %283, %280 : vector<256x256xf32>
    %285 = arith.mulf %284, %280 : vector<256x256xf32>
    %286 = arith.mulf %285, %280 : vector<256x256xf32>
    %287 = arith.addf %280, %286 : vector<256x256xf32>
    %cst_113 = arith.constant 0.797884583 : f32
    %288 = vector.broadcast %cst_113 : f32 to vector<256x256xf32>
    %289 = arith.mulf %288, %287 : vector<256x256xf32>
    %290 = math.tanh %289 : vector<256x256xf32>
    %cst_114 = arith.constant 1.000000e+00 : f32
    %291 = vector.broadcast %cst_114 : f32 to vector<256x256xf32>
    %292 = arith.addf %291, %290 : vector<256x256xf32>
    %293 = arith.mulf %282, %292 : vector<256x256xf32>
    %294 = arith.truncf %293 : vector<256x256xf32> to vector<256x256xbf16>
    %c1_115 = arith.constant 1 : index
    %c256_116 = arith.constant 256 : index
    %c0_117 = arith.constant 0 : index
    %295 = vector.load %arg4[%c1_115, %c256_116, %c0_117] : memref<2x512x128xbf16, #tpu.memory_space<vmem>>, vector<1x256x128xbf16>
    %296 = vector.shape_cast %295 : vector<1x256x128xbf16> to vector<256x128xbf16>
    %cst_118 = arith.constant dense<0.000000e+00> : vector<256x128xf32>
    %297 = tpu.matmul %294, %296, %cst_118 {dimension_numbers = #tpu.dot_dimension_numbers<[1], [0], [0], [1], [0, 0, 1, 1], [], []>} : vector<256x256xbf16>, vector<256x128xbf16>, vector<256x128xf32> -> vector<256x128xf32>
    %298 = arith.addf %272, %297 : vector<256x128xf32>
    %299 = vector.extract_strided_slice %298 {offsets = [0, 0], sizes = [128, 128], strides = [1, 1]} : vector<256x128xf32> to vector<128x128xf32>
    %cst_119 = arith.constant dense<0.000000e+00> : vector<128xf32>
    %300 = vector.multi_reduction <add>, %299, %cst_119 [0] : vector<128x128xf32> to vector<128xf32>
    %301 = vector.shape_cast %300 : vector<128xf32> to vector<1x128xf32>
    %cst_120 = arith.constant 1.280000e+02 : f32
    %302 = vector.broadcast %cst_120 : f32 to vector<1x128xf32>
    %303 = arith.divf %301, %302 : vector<1x128xf32>
    %304 = vector.extract_strided_slice %298 {offsets = [128, 0], sizes = [128, 128], strides = [1, 1]} : vector<256x128xf32> to vector<128x128xf32>
    %cst_121 = arith.constant dense<0.000000e+00> : vector<128xf32>
    %305 = vector.multi_reduction <add>, %304, %cst_121 [0] : vector<128x128xf32> to vector<128xf32>
    %306 = vector.shape_cast %305 : vector<128xf32> to vector<1x128xf32>
    %cst_122 = arith.constant 1.280000e+02 : f32
    %307 = vector.broadcast %cst_122 : f32 to vector<1x128xf32>
    %308 = arith.divf %306, %307 : vector<1x128xf32>
    %309 = tpu.concatenate %303, %308 in 0 : vector<1x128xf32>, vector<1x128xf32> -> vector<2x128xf32>
    %c15 = arith.constant 15 : index
    %c0_123 = arith.constant 0 : index
    %310 = vector.load %arg6[%c15, %c0_123] : memref<18x128xf32, #tpu.memory_space<vmem>>, vector<1x128xf32>
    %311 = vector.shape_cast %310 : vector<1x128xf32> to vector<128xf32>
    %c16 = arith.constant 16 : index
    %c0_124 = arith.constant 0 : index
    %312 = vector.load %arg6[%c16, %c0_124] : memref<18x128xf32, #tpu.memory_space<vmem>>, vector<1x128xf32>
    %313 = vector.shape_cast %312 : vector<1x128xf32> to vector<128xf32>
    %cst_125 = arith.constant dense<0.000000e+00> : vector<2xf32>
    %314 = vector.multi_reduction <add>, %309, %cst_125 [1] : vector<2x128xf32> to vector<2xf32>
    %315 = vector.shape_cast %314 : vector<2xf32> to vector<2x1xf32>
    %cst_126 = arith.constant 1.280000e+02 : f32
    %316 = vector.broadcast %cst_126 : f32 to vector<2x1xf32>
    %317 = arith.divf %315, %316 : vector<2x1xf32>
    %318 = vector.broadcast %317 : vector<2x1xf32> to vector<2x128xf32>
    %319 = arith.subf %309, %318 : vector<2x128xf32>
    %320 = arith.mulf %319, %319 : vector<2x128xf32>
    %cst_127 = arith.constant dense<0.000000e+00> : vector<2xf32>
    %321 = vector.multi_reduction <add>, %320, %cst_127 [1] : vector<2x128xf32> to vector<2xf32>
    %322 = vector.shape_cast %321 : vector<2xf32> to vector<2x1xf32>
    %cst_128 = arith.constant 1.280000e+02 : f32
    %323 = vector.broadcast %cst_128 : f32 to vector<2x1xf32>
    %324 = arith.divf %322, %323 : vector<2x1xf32>
    %325 = vector.broadcast %317 : vector<2x1xf32> to vector<2x128xf32>
    %326 = arith.subf %309, %325 : vector<2x128xf32>
    %cst_129 = arith.constant 9.99999974E-6 : f32
    %327 = vector.broadcast %cst_129 : f32 to vector<2x1xf32>
    %328 = arith.addf %324, %327 : vector<2x1xf32>
    %329 = math.rsqrt %328 : vector<2x1xf32>
    %330 = vector.broadcast %329 : vector<2x1xf32> to vector<2x128xf32>
    %331 = arith.mulf %326, %330 : vector<2x128xf32>
    %332 = vector.shape_cast %311 : vector<128xf32> to vector<1x128xf32>
    %333 = vector.broadcast %332 : vector<1x128xf32> to vector<2x128xf32>
    %334 = arith.mulf %331, %333 : vector<2x128xf32>
    %335 = vector.shape_cast %313 : vector<128xf32> to vector<1x128xf32>
    %336 = vector.broadcast %335 : vector<1x128xf32> to vector<2x128xf32>
    %337 = arith.addf %334, %336 : vector<2x128xf32>
    %338 = arith.truncf %337 : vector<2x128xf32> to vector<2x128xbf16>
    %c5_130 = arith.constant 5 : index
    %c0_131 = arith.constant 0 : index
    %c0_132 = arith.constant 0 : index
    %339 = vector.load %arg2[%c5_130, %c0_131, %c0_132] : memref<6x128x128xbf16, #tpu.memory_space<vmem>>, vector<1x128x128xbf16>
    %340 = vector.shape_cast %339 : vector<1x128x128xbf16> to vector<128x128xbf16>
    %cst_133 = arith.constant dense<0.000000e+00> : vector<2x128xf32>
    %341 = tpu.matmul %338, %340, %cst_133 {dimension_numbers = #tpu.dot_dimension_numbers<[1], [0], [0], [1], [0, 0, 1, 1], [], []>} : vector<2x128xbf16>, vector<128x128xbf16>, vector<2x128xf32> -> vector<2x128xf32>
    %c17 = arith.constant 17 : index
    %c0_134 = arith.constant 0 : index
    %342 = vector.load %arg6[%c17, %c0_134] : memref<18x128xf32, #tpu.memory_space<vmem>>, vector<1x128xf32>
    %343 = vector.shape_cast %342 : vector<1x128xf32> to vector<128xf32>
    %344 = vector.shape_cast %343 : vector<128xf32> to vector<1x128xf32>
    %345 = vector.broadcast %344 : vector<1x128xf32> to vector<2x128xf32>
    %346 = arith.addf %341, %345 : vector<2x128xf32>
    %347 = vector.extract_strided_slice %346 {offsets = [0, 0], sizes = [1, 128], strides = [1, 1]} : vector<2x128xf32> to vector<1x128xf32>
    %c0_135 = arith.constant 0 : index
    %c0_136 = arith.constant 0 : index
    %c0_137 = arith.constant 0 : index
    %348 = vector.load %arg7[%c0_135, %c0_136, %c0_137] : memref<2x1x128xf32, #tpu.memory_space<vmem>>, vector<1x1x128xf32>
    %349 = vector.shape_cast %348 : vector<1x1x128xf32> to vector<1x128xf32>
    %350 = vector.shape_cast %347 : vector<1x128xf32> to vector<1x1x128xf32>
    tpu.vector_store %arg7[%c0_135, %c0_136, %c0_137], %350 {strides = array<i32>} : memref<2x1x128xf32, #tpu.memory_space<vmem>>, vector<1x1x128xf32>,
    %351 = vector.extract_strided_slice %346 {offsets = [1, 0], sizes = [1, 128], strides = [1, 1]} : vector<2x128xf32> to vector<1x128xf32>
    %c1_138 = arith.constant 1 : index
    %c0_139 = arith.constant 0 : index
    %c0_140 = arith.constant 0 : index
    %352 = vector.load %arg7[%c1_138, %c0_139, %c0_140] : memref<2x1x128xf32, #tpu.memory_space<vmem>>, vector<1x1x128xf32>
    %353 = vector.shape_cast %352 : vector<1x1x128xf32> to vector<1x128xf32>
    %354 = vector.shape_cast %351 : vector<1x128xf32> to vector<1x1x128xf32>
    tpu.vector_store %arg7[%c1_138, %c0_139, %c0_140], %354 {strides = array<i32>} : memref<2x1x128xf32, #tpu.memory_space<vmem>>, vector<1x1x128xf32>,
    return
  }
  func.func @transform_0(%arg0: i32) -> (i32, i32) {
    %c0_i32 = arith.constant 0 : i32
    %c0_i32_0 = arith.constant 0 : i32
    return %arg0, %c0_i32 : i32, i32
  }
  func.func @transform_1(%arg0: i32) -> (i32, i32, i32) {
    %c0_i32 = arith.constant 0 : i32
    %c0_i32_0 = arith.constant 0 : i32
    %c0_i32_1 = arith.constant 0 : i32
    %c0_i32_2 = arith.constant 0 : i32
    return %c0_i32, %c0_i32_0, %c0_i32_1 : i32, i32, i32
  }
  func.func @transform_2(%arg0: i32) -> (i32, i32, i32) {
    %c0_i32 = arith.constant 0 : i32
    %c0_i32_0 = arith.constant 0 : i32
    %c0_i32_1 = arith.constant 0 : i32
    %c0_i32_2 = arith.constant 0 : i32
    return %c0_i32, %c0_i32_0, %c0_i32_1 : i32, i32, i32
  }
  func.func @transform_3(%arg0: i32) -> (i32, i32, i32) {
    %c0_i32 = arith.constant 0 : i32
    %c0_i32_0 = arith.constant 0 : i32
    %c0_i32_1 = arith.constant 0 : i32
    %c0_i32_2 = arith.constant 0 : i32
    return %c0_i32, %c0_i32_0, %c0_i32_1 : i32, i32, i32
  }
  func.func @transform_4(%arg0: i32) -> (i32, i32) {
    %c0_i32 = arith.constant 0 : i32
    %c0_i32_0 = arith.constant 0 : i32
    %c0_i32_1 = arith.constant 0 : i32
    return %c0_i32, %c0_i32_0 : i32, i32
  }
  func.func @transform_5(%arg0: i32) -> (i32, i32) {
    %c0_i32 = arith.constant 0 : i32
    %c0_i32_0 = arith.constant 0 : i32
    %c0_i32_1 = arith.constant 0 : i32
    return %c0_i32, %c0_i32_0 : i32, i32
  }
  func.func @transform_6(%arg0: i32) -> (i32, i32, i32) {
    %c0_i32 = arith.constant 0 : i32
    %c0_i32_0 = arith.constant 0 : i32
    %c0_i32_1 = arith.constant 0 : i32
    return %arg0, %c0_i32, %c0_i32_0 : i32, i32, i32
  }
}

</mosaic_0001>

<llo_original>
// kernel: forward.1
$region0: #{forward.1}
  #allocation0 [shape = 'u32[]', space=smem, size = 0x4, offset = 0x4, fixed_abs, tag = 'smem constant byte address 0x4 - core index']
  #allocation1 [shape = 'u32[144,128]{1,0:T(1,128)}', space=vmem, size = 0x12000, scoped, tag = 'internal scratch']
  %s0 = inlined_call_operand.vmem [shape: bf16[256,128], index: 0, kind: input, shape index: {}]
  %s1 = inlined_call_operand.vmem [shape: bf16[6,128,128], index: 1, kind: input, shape index: {}]
  %s2 = inlined_call_operand.vmem [shape: bf16[2,128,512], index: 2, kind: input, shape index: {}]
  %s3 = inlined_call_operand.vmem [shape: bf16[2,512,128], index: 3, kind: input, shape index: {}]
  %s4 = inlined_call_operand.vmem [shape: f32[2,512], index: 4, kind: input, shape index: {}]
  %s5 = inlined_call_operand.vmem [shape: f32[18,128], index: 5, kind: input, shape index: {}]
  %s6 = inlined_call_operand.hbm [shape: f32[2,1,128], index: 6, kind: output, shape index: {}]
  %s7 = sld [smem:[#allocation0]]
  $region34: #{forward.1} parent=0
    _
  %s9 = ssub.s32 1, %s7
  %s10 = scalar_select 0, %s9, %s7
  $region1: #{forward.1} parent=0
    #allocation2 [shape = 'u8[1024]{0}', space=vmem, size = 0x400, scoped, tag = 'output window, operand 0, single buffered']
    #allocation3 [shape = 's32[1]{0}', space=sflag, size = 0x4, scoped, tag = 'scoped memory for forward.1']
    %11 = vsyncpa [#allocation3], 0
    // Predicated region
    $region2: #{forward.1} parent=1 // pred_check
      _
    $region3: #{forward.1} parent=1 // pred_check_branch
      %13 = sbr.rel (0) target = $region5
    $region4: #{forward.1} parent=1 // pred_region
      _
    $region5: #{forward.1} parent=1 // pred_fallthru
      _
    // Predicated region
    $region6: #{forward.1} parent=1 // pred_check
      _
    $region7: #{forward.1} parent=1 // pred_check_branch
      %15 = sbr.rel (0) target = $region9
    $region8: #{forward.1} parent=1 // pred_region
      _
    $region9: #{forward.1} parent=1 // pred_fallthru
      _
    // Predicated region
    $region10: #{forward.1} parent=1 // pred_check
      _
    $region11: #{forward.1} parent=1 // pred_check_branch
      %17 = sbr.rel (0) target = $region13
    $region12: #{forward.1} parent=1 // pred_region
      _
    $region13: #{forward.1} parent=1 // pred_fallthru
      _
    // Predicated region
    $region14: #{forward.1} parent=1 // pred_check
      _
    $region15: #{forward.1} parent=1 // pred_check_branch
      %19 = sbr.rel (0) target = $region17
    $region16: #{forward.1} parent=1 // pred_region
      _
    $region17: #{forward.1} parent=1 // pred_fallthru
      _
    // Predicated region
    $region18: #{forward.1} parent=1 // pred_check
      _
    $region19: #{forward.1} parent=1 // pred_check_branch
      %21 = sbr.rel (0) target = $region21
    $region20: #{forward.1} parent=1 // pred_region
      _
    $region21: #{forward.1} parent=1 // pred_fallthru
      _
    // Predicated region
    $region22: #{forward.1} parent=1 // pred_check
      _
    $region23: #{forward.1} parent=1 // pred_check_branch
      %23 = sbr.rel (0) target = $region25
    $region24: #{forward.1} parent=1 // pred_region
      _
    $region25: #{forward.1} parent=1 // pred_fallthru
      _
    %v25 = vld [vmem:[%s0] sm:$0xf]
    %v26 = vld [vmem:[%s0 + $0x4] sm:$0xf]
    %v27 = vld [vmem:[%s0 + $0x8] sm:$0xf]
    %v28 = vld [vmem:[%s0 + $0xc] sm:$0xf]
    %v29 = vld [vmem:[%s0 + $0x10] sm:$0xf]
    %v30 = vld [vmem:[%s0 + $0x14] sm:$0xf]
    %v31 = vld [vmem:[%s0 + $0x18] sm:$0xf]
    %v32 = vld [vmem:[%s0 + $0x1c] sm:$0xf]
    %v33 = vld [vmem:[%s0 + $0x20] sm:$0xf]
    %v34 = vld [vmem:[%s0 + $0x24] sm:$0xf]
    %v35 = vld [vmem:[%s0 + $0x28] sm:$0xf]
    %v36 = vld [vmem:[%s0 + $0x2c] sm:$0xf]
    %v37 = vld [vmem:[%s0 + $0x30] sm:$0xf]
    %v38 = vld [vmem:[%s0 + $0x34] sm:$0xf]
    %v39 = vld [vmem:[%s0 + $0x38] sm:$0xf]
    %v40 = vld [vmem:[%s0 + $0x3c] sm:$0xf]
    %v41 = vld [vmem:[%s0 + $0x40] sm:$0xf]
    %v42 = vld [vmem:[%s0 + $0x44] sm:$0xf]
    %v43 = vld [vmem:[%s0 + $0x48] sm:$0xf]
    %v44 = vld [vmem:[%s0 + $0x4c] sm:$0xf]
    %v45 = vld [vmem:[%s0 + $0x50] sm:$0xf]
    %v46 = vld [vmem:[%s0 + $0x54] sm:$0xf]
    %v47 = vld [vmem:[%s0 + $0x58] sm:$0xf]
    %v48 = vld [vmem:[%s0 + $0x5c] sm:$0xf]
    %v49 = vld [vmem:[%s0 + $0x60] sm:$0xf]
    %v50 = vld [vmem:[%s0 + $0x64] sm:$0xf]
    %v51 = vld [vmem:[%s0 + $0x68] sm:$0xf]
    %v52 = vld [vmem:[%s0 + $0x6c] sm:$0xf]
    %v53 = vld [vmem:[%s0 + $0x70] sm:$0xf]
    %v54 = vld [vmem:[%s0 + $0x74] sm:$0xf]
    %v55 = vld [vmem:[%s0 + $0x78] sm:$0xf]
    %v56 = vld [vmem:[%s0 + $0x7c] sm:$0xf]
    %v57 = vld [vmem:[%s1] sm:$0xf]
    %v58 = vld [vmem:[%s1 + $0x4] sm:$0xf]
    %v59 = vld [vmem:[%s1 + $0x8] sm:$0xf]
    %v60 = vld [vmem:[%s1 + $0xc] sm:$0xf]
    %v61 = vld [vmem:[%s1 + $0x10] sm:$0xf]
    %v62 = vld [vmem:[%s1 + $0x14] sm:$0xf]
    %v63 = vld [vmem:[%s1 + $0x18] sm:$0xf]
    %v64 = vld [vmem:[%s1 + $0x1c] sm:$0xf]
    %v65 = vld [vmem:[%s1 + $0x20] sm:$0xf]
    %v66 = vld [vmem:[%s1 + $0x24] sm:$0xf]
    %v67 = vld [vmem:[%s1 + $0x28] sm:$0xf]
    %v68 = vld [vmem:[%s1 + $0x2c] sm:$0xf]
    %v69 = vld [vmem:[%s1 + $0x30] sm:$0xf]
    %v70 = vld [vmem:[%s1 + $0x34] sm:$0xf]
    %v71 = vld [vmem:[%s1 + $0x38] sm:$0xf]
    %v72 = vld [vmem:[%s1 + $0x3c] sm:$0xf]
    %v73 = vld [vmem:[%s5] sm:$0x1]
    %v74 = vlaneseq
    %v75 = vshrl.u32 %v74, 7
    %v76 = vsub.s32 0, %v75
    %v77 = vrot.slane %v73, %v76
    %v110 = vunpack.c.l.b16 %v25
    %v111 = vunpack.c.l.b16 %v26
    %v112 = vunpack.c.l.b16 %v27
    %v113 = vunpack.c.l.b16 %v28
    %v114 = vunpack.c.l.b16 %v29
    %v115 = vunpack.c.l.b16 %v30
    %v116 = vunpack.c.l.b16 %v31
    %v117 = vunpack.c.l.b16 %v32
    %v118 = vunpack.c.l.b16 %v33
    %v119 = vunpack.c.l.b16 %v34
    %v120 = vunpack.c.l.b16 %v35
    %v121 = vunpack.c.l.b16 %v36
    %v122 = vunpack.c.l.b16 %v37
    %v123 = vunpack.c.l.b16 %v38
    %v124 = vunpack.c.l.b16 %v39
    %v125 = vunpack.c.l.b16 %v40
    %v126 = vunpack.c.l.b16 %v41
    %v127 = vunpack.c.l.b16 %v42
    %v128 = vunpack.c.l.b16 %v43
    %v129 = vunpack.c.l.b16 %v44
    %v130 = vunpack.c.l.b16 %v45
    %v131 = vunpack.c.l.b16 %v46
    %v132 = vunpack.c.l.b16 %v47
    %v133 = vunpack.c.l.b16 %v48
    %v134 = vunpack.c.l.b16 %v49
    %v135 = vunpack.c.l.b16 %v50
    %v136 = vunpack.c.l.b16 %v51
    %v137 = vunpack.c.l.b16 %v52
    %v138 = vunpack.c.l.b16 %v53
    %v139 = vunpack.c.l.b16 %v54
    %v140 = vunpack.c.l.b16 %v55
    %v141 = vunpack.c.l.b16 %v56
    %v142 = vpack.c.b16 %v111, %v110
    %v143 = vpack.c.b16 %v113, %v112
    %v144 = vpack.c.b16 %v115, %v114
    %v145 = vpack.c.b16 %v117, %v116
    %v146 = vpack.c.b16 %v119, %v118
    %v147 = vpack.c.b16 %v121, %v120
    %v148 = vpack.c.b16 %v123, %v122
    %v149 = vpack.c.b16 %v125, %v124
    %v150 = vpack.c.b16 %v127, %v126
    %v151 = vpack.c.b16 %v129, %v128
    %v152 = vpack.c.b16 %v131, %v130
    %v153 = vpack.c.b16 %v133, %v132
    %v154 = vpack.c.b16 %v135, %v134
    %v155 = vpack.c.b16 %v137, %v136
    %v156 = vpack.c.b16 %v139, %v138
    %v157 = vpack.c.b16 %v141, %v140
    %v190 = vunpack.c.l.b16 %v57
    %v191 = vunpack.c.l.b16 %v58
    %v192 = vunpack.c.l.b16 %v59
    %v193 = vunpack.c.l.b16 %v60
    %v194 = vunpack.c.l.b16 %v61
    %v195 = vunpack.c.l.b16 %v62
    %v196 = vunpack.c.l.b16 %v63
    %v197 = vunpack.c.l.b16 %v64
    %v198 = vunpack.c.l.b16 %v65
    %v199 = vunpack.c.l.b16 %v66
    %v200 = vunpack.c.l.b16 %v67
    %v201 = vunpack.c.l.b16 %v68
    %v202 = vunpack.c.l.b16 %v69
    %v203 = vunpack.c.l.b16 %v70
    %v204 = vunpack.c.l.b16 %v71
    %v205 = vunpack.c.l.b16 %v72
    %v206 = vpack.c.b16 %v191, %v190
    %v207 = vpack.c.b16 %v193, %v192
    %v208 = vpack.c.b16 %v195, %v194
    %v209 = vpack.c.b16 %v197, %v196
    %v210 = vpack.c.b16 %v199, %v198
    %v211 = vpack.c.b16 %v201, %v200
    %v212 = vpack.c.b16 %v203, %v202
    %v213 = vpack.c.b16 %v205, %v204
    %222 = vmatprep.subr.bf16.mxu0 0
    %223 = vmatpush1.bf16.msra.mxu0 %v206
    %224 = vmatprep.subr.bf16.mxu0 0
    %225 = vmatpush1.bf16.msra.mxu0 %v207
    %226 = vmatprep.subr.bf16.mxu0 0
    %227 = vmatpush1.bf16.msra.mxu0 %v208
    %228 = vmatprep.subr.bf16.mxu0 0
    %229 = vmatpush1.bf16.msra.mxu0 %v209
    %230 = vmatprep.subr.bf16.mxu0 0
    %231 = vmatpush1.bf16.msra.mxu0 %v210
    %232 = vmatprep.subr.bf16.mxu0 0
    %233 = vmatpush1.bf16.msra.mxu0 %v211
    %234 = vmatprep.subr.bf16.mxu0 0
    %235 = vmatpush1.bf16.msra.mxu0 %v212
    %236 = vmatprep.subr.bf16.mxu0 0
    %237 = vmatpush1.bf16.msra.mxu0 %v213
    %238 = vmatprep.subr.bf16.mxu0 0
    %239 = vmatpush1.bf16.msra.mxu0 0
    %240 = vmatprep.subr.bf16.mxu0 0
    %241 = vmatpush1.bf16.msra.mxu0 0
    %242 = vmatprep.subr.bf16.mxu0 0
    %243 = vmatpush1.bf16.msra.mxu0 0
    %244 = vmatprep.subr.bf16.mxu0 0
    %245 = vmatpush1.bf16.msra.mxu0 0
    %246 = vmatprep.subr.bf16.mxu0 0
    %247 = vmatpush1.bf16.msra.mxu0 0
    %248 = vmatprep.subr.bf16.mxu0 0
    %249 = vmatpush1.bf16.msra.mxu0 0
    %250 = vmatprep.subr.bf16.mxu0 0
    %251 = vmatpush1.bf16.msra.mxu0 0
    %252 = vmatprep.subr.bf16.mxu0 0
    %253 = vmatpush1.bf16.msra.mxu0 0
    %254 = vmatprep.mubr.bf16.mxu0 0
    %255 = vmatmul.mubr.bf16.gmra.mrb[0].mxu0 %v142
    %v256 = vpop.f32.mrb[0].mxu0
    %v257 = vadd.f32 %v77, %v256
    %v258 = vpop.f32.mrb[0].mxu0
    %v259 = vpop.f32.mrb[0].mxu0
    %v260 = vadd.f32 %v77, %v259
    %v261 = vpop.f32.mrb[0].mxu0
    %262 = vmatprep.mubr.bf16.mxu0 0
    %263 = vmatmul.mubr.bf16.gmra.mrb[0].mxu0 %v143
    %v264 = vpop.f32.mrb[0].mxu0
    %v265 = vadd.f32 %v77, %v264
    %v266 = vpop.f32.mrb[0].mxu0
    %v267 = vpop.f32.mrb[0].mxu0
    %v268 = vadd.f32 %v77, %v267
    %v269 = vpop.f32.mrb[0].mxu0
    %270 = vmatprep.mubr.bf16.mxu0 0
    %271 = vmatmul.mubr.bf16.gmra.mrb[0].mxu0 %v144
    %v272 = vpop.f32.mrb[0].mxu0
    %v273 = vadd.f32 %v77, %v272
    %v274 = vpop.f32.mrb[0].mxu0
    %v275 = vpop.f32.mrb[0].mxu0
    %v276 = vadd.f32 %v77, %v275
    %v277 = vpop.f32.mrb[0].mxu0
    %278 = vmatprep.mubr.bf16.mxu0 0
    %279 = vmatmul.mubr.bf16.gmra.mrb[0].mxu0 %v145
    %v280 = vpop.f32.mrb[0].mxu0
    %v281 = vadd.f32 %v77, %v280
    %v282 = vpop.f32.mrb[0].mxu0
    %v283 = vpop.f32.mrb[0].mxu0
    %v284 = vadd.f32 %v77, %v283
    %v285 = vpop.f32.mrb[0].mxu0
    %286 = vmatprep.mubr.bf16.mxu0 0
    %287 = vmatmul.mubr.bf16.gmra.mrb[0].mxu0 %v146
    %v288 = vpop.f32.mrb[0].mxu0
    %v289 = vadd.f32 %v77, %v288
    %v290 = vpop.f32.mrb[0].mxu0
    %v291 = vpop.f32.mrb[0].mxu0
    %v292 = vadd.f32 %v77, %v291
    %v293 = vpop.f32.mrb[0].mxu0
    %294 = vmatprep.mubr.bf16.mxu0 0
    %295 = vmatmul.mubr.bf16.gmra.mrb[0].mxu0 %v147
    %v296 = vpop.f32.mrb[0].mxu0
    %v297 = vadd.f32 %v77, %v296
    %v298 = vpop.f32.mrb[0].mxu0
    %v299 = vpop.f32.mrb[0].mxu0
    %v300 = vadd.f32 %v77, %v299
    %v301 = vpop.f32.mrb[0].mxu0
    %302 = vmatprep.mubr.bf16.mxu0 0
    %303 = vmatmul.mubr.bf16.gmra.mrb[0].mxu0 %v148
    %v304 = vpop.f32.mrb[0].mxu0
    %v305 = vadd.f32 %v77, %v304
    %v306 = vpop.f32.mrb[0].mxu0
    %v307 = vpop.f32.mrb[0].mxu0
    %v308 = vadd.f32 %v77, %v307
    %v309 = vpop.f32.mrb[0].mxu0
    %310 = vmatprep.mubr.bf16.mxu0 0
    %311 = vmatmul.mubr.bf16.gmra.mrb[0].mxu0 %v149
    %v312 = vpop.f32.mrb[0].mxu0
    %v313 = vadd.f32 %v77, %v312
    %v314 = vpop.f32.mrb[0].mxu0
    %v315 = vpop.f32.mrb[0].mxu0
    %v316 = vadd.f32 %v77, %v315
    %v317 = vpop.f32.mrb[0].mxu0
    %318 = vmatprep.mubr.bf16.mxu0 0
    %319 = vmatmul.mubr.bf16.gmra.mrb[0].mxu0 %v150
    %v320 = vpop.f32.mrb[0].mxu0
    %v321 = vadd.f32 %v77, %v320
    %v322 = vpop.f32.mrb[0].mxu0
    %v323 = vpop.f32.mrb[0].mxu0
    %v324 = vadd.f32 %v77, %v323
    %v325 = vpop.f32.mrb[0].mxu0
    %326 = vmatprep.mubr.bf16.mxu0 0
    %327 = vmatmul.mubr.bf16.gmra.mrb[0].mxu0 %v151
    %v328 = vpop.f32.mrb[0].mxu0
    %v329 = vadd.f32 %v77, %v328
    %v330 = vpop.f32.mrb[0].mxu0
    %v331 = vpop.f32.mrb[0].mxu0
    %v332 = vadd.f32 %v77, %v331
    %v333 = vpop.f32.mrb[0].mxu0
    %334 = vmatprep.mubr.bf16.mxu0 0
    %335 = vmatmul.mubr.bf16.gmra.mrb[0].mxu0 %v152
    %v336 = vpop.f32.mrb[0].mxu0
    %v337 = vadd.f32 %v77, %v336
    %v338 = vpop.f32.mrb[0].mxu0
    %v339 = vpop.f32.mrb[0].mxu0
    %v340 = vadd.f32 %v77, %v339
    %v341 = vpop.f32.mrb[0].mxu0
    %342 = vmatprep.mubr.bf16.mxu0 0
    %343 = vmatmul.mubr.bf16.gmra.mrb[0].mxu0 %v153
    %v344 = vpop.f32.mrb[0].mxu0
    %v345 = vadd.f32 %v77, %v344
    %v346 = vpop.f32.mrb[0].mxu0
    %v347 = vpop.f32.mrb[0].mxu0
    %v348 = vadd.f32 %v77, %v347
    %v349 = vpop.f32.mrb[0].mxu0
    %350 = vmatprep.mubr.bf16.mxu0 0
    %351 = vmatmul.mubr.bf16.gmra.mrb[0].mxu0 %v154
    %v352 = vpop.f32.mrb[0].mxu0
    %v353 = vadd.f32 %v77, %v352
    %v354 = vpop.f32.mrb[0].mxu0
    %v355 = vpop.f32.mrb[0].mxu0
    %v356 = vadd.f32 %v77, %v355
    %v357 = vpop.f32.mrb[0].mxu0
    %358 = vmatprep.mubr.bf16.mxu0 0
    %359 = vmatmul.mubr.bf16.gmra.mrb[0].mxu0 %v155
    %v360 = vpop.f32.mrb[0].mxu0
    %v361 = vadd.f32 %v77, %v360
    %v362 = vpop.f32.mrb[0].mxu0
    %v363 = vpop.f32.mrb[0].mxu0
    %v364 = vadd.f32 %v77, %v363
    %v365 = vpop.f32.mrb[0].mxu0
    %366 = vmatprep.mubr.bf16.mxu0 0
    %367 = vmatmul.mubr.bf16.gmra.mrb[0].mxu0 %v156
    %v368 = vpop.f32.mrb[0].mxu0
    %v369 = vadd.f32 %v77, %v368
    %v370 = vpop.f32.mrb[0].mxu0
    %v371 = vpop.f32.mrb[0].mxu0
    %v372 = vadd.f32 %v77, %v371
    %v373 = vpop.f32.mrb[0].mxu0
    %374 = vmatprep.mubr.bf16.mxu0 0
    %375 = vmatmul.mubr.bf16.gmra.mrb[0].mxu0 %v157
    %v376 = vpop.f32.mrb[0].mxu0
    %v377 = vadd.f32 %v77, %v376
    %v378 = vpop.f32.mrb[0].mxu0
    %v379 = vpop.f32.mrb[0].mxu0
    %v380 = vadd.f32 %v77, %v379
    %v381 = vpop.f32.mrb[0].mxu0
    %382 = vdwg.mxu0
    %v383 = vld [vmem:[%s5 + $0x1] sm:$0x1]
    %v384 = vld [vmem:[%s5 + $0x2] sm:$0x1]
    %385 = vadd.xlane.f32.xlu0 %v257
    %v386 = vpop.xlane.xlu0 %385
    %387 = vadd.xlane.f32.xlu0 %v260
    %v388 = vpop.xlane.xlu0 %387
    %389 = vadd.xlane.f32.xlu0 %v265
    %v390 = vpop.xlane.xlu0 %389
    %391 = vadd.xlane.f32.xlu0 %v268
    %v392 = vpop.xlane.xlu0 %391
    %393 = vadd.xlane.f32.xlu0 %v273
    %v394 = vpop.xlane.xlu0 %393
    %395 = vadd.xlane.f32.xlu0 %v276
    %v396 = vpop.xlane.xlu0 %395
    %397 = vadd.xlane.f32.xlu0 %v281
    %v398 = vpop.xlane.xlu0 %397
    %399 = vadd.xlane.f32.xlu0 %v284
    %v400 = vpop.xlane.xlu0 %399
    %401 = vadd.xlane.f32.xlu0 %v289
    %v402 = vpop.xlane.xlu0 %401
    %403 = vadd.xlane.f32.xlu0 %v292
    %v404 = vpop.xlane.xlu0 %403
    %405 = vadd.xlane.f32.xlu0 %v297
    %v406 = vpop.xlane.xlu0 %405
    %407 = vadd.xlane.f32.xlu0 %v300
    %v408 = vpop.xlane.xlu0 %407
    %409 = vadd.xlane.f32.xlu0 %v305
    %v410 = vpop.xlane.xlu0 %409
    %411 = vadd.xlane.f32.xlu0 %v308
    %v412 = vpop.xlane.xlu0 %411
    %413 = vadd.xlane.f32.xlu0 %v313
    %v414 = vpop.xlane.xlu0 %413
    %415 = vadd.xlane.f32.xlu0 %v316
    %v416 = vpop.xlane.xlu0 %415
    %417 = vadd.xlane.f32.xlu0 %v321
    %v418 = vpop.xlane.xlu0 %417
    %419 = vadd.xlane.f32.xlu0 %v324
    %v420 = vpop.xlane.xlu0 %419
    %421 = vadd.xlane.f32.xlu0 %v329
    %v422 = vpop.xlane.xlu0 %421
    %423 = vadd.xlane.f32.xlu0 %v332
    %v424 = vpop.xlane.xlu0 %423
    %425 = vadd.xlane.f32.xlu0 %v337
    %v426 = vpop.xlane.xlu0 %425
    %427 = vadd.xlane.f32.xlu0 %v340
    %v428 = vpop.xlane.xlu0 %427
    %429 = vadd.xlane.f32.xlu0 %v345
    %v430 = vpop.xlane.xlu0 %429
    %431 = vadd.xlane.f32.xlu0 %v348
    %v432 = vpop.xlane.xlu0 %431
    %433 = vadd.xlane.f32.xlu0 %v353
    %v434 = vpop.xlane.xlu0 %433
    %435 = vadd.xlane.f32.xlu0 %v356
    %v436 = vpop.xlane.xlu0 %435
    %437 = vadd.xlane.f32.xlu0 %v361
    %v438 = vpop.xlane.xlu0 %437
    %439 = vadd.xlane.f32.xlu0 %v364
    %v440 = vpop.xlane.xlu0 %439
    %441 = vadd.xlane.f32.xlu0 %v369
    %v442 = vpop.xlane.xlu0 %441
    %443 = vadd.xlane.f32.xlu0 %v372
    %v444 = vpop.xlane.xlu0 %443
    %445 = vadd.xlane.f32.xlu0 %v377
    %v446 = vpop.xlane.xlu0 %445
    %447 = vadd.xlane.f32.xlu0 %v380
    %v448 = vpop.xlane.xlu0 %447
    %v449 = vrcp.pop 128.0
    %v450 = vmul.f32 %v386, %v449
    %v451 = vmul.f32 %v388, %v449
    %v452 = vmul.f32 %v390, %v449
    %v453 = vmul.f32 %v392, %v449
    %v454 = vmul.f32 %v394, %v449
    %v455 = vmul.f32 %v396, %v449
    %v456 = vmul.f32 %v398, %v449
    %v457 = vmul.f32 %v400, %v449
    %v458 = vmul.f32 %v402, %v449
    %v459 = vmul.f32 %v404, %v449
    %v460 = vmul.f32 %v406, %v449
    %v461 = vmul.f32 %v408, %v449
    %v462 = vmul.f32 %v410, %v449
    %v463 = vmul.f32 %v412, %v449
    %v464 = vmul.f32 %v414, %v449
    %v465 = vmul.f32 %v416, %v449
    %v466 = vmul.f32 %v418, %v449
    %v467 = vmul.f32 %v420, %v449
    %v468 = vmul.f32 %v422, %v449
    %v469 = vmul.f32 %v424, %v449
    %v470 = vmul.f32 %v426, %v449
    %v471 = vmul.f32 %v428, %v449
    %v472 = vmul.f32 %v430, %v449
    %v473 = vmul.f32 %v432, %v449
    %v474 = vmul.f32 %v434, %v449
    %v475 = vmul.f32 %v436, %v449
    %v476 = vmul.f32 %v438, %v449
    %v477 = vmul.f32 %v440, %v449
    %v478 = vmul.f32 %v442, %v449
    %v479 = vmul.f32 %v444, %v449
    %v480 = vmul.f32 %v446, %v449
    %v481 = vmul.f32 %v448, %v449
    %v482 = vsub.f32 %v257, %v450
    %v483 = vsub.f32 %v260, %v451
    %v484 = vsub.f32 %v265, %v452
    %v485 = vsub.f32 %v268, %v453
    %v486 = vsub.f32 %v273, %v454
    %v487 = vsub.f32 %v276, %v455
    %v488 = vsub.f32 %v281, %v456
    %v489 = vsub.f32 %v284, %v457
    %v490 = vsub.f32 %v289, %v458
    %v491 = vsub.f32 %v292, %v459
    %v492 = vsub.f32 %v297, %v460
    %v493 = vsub.f32 %v300, %v461
    %v494 = vsub.f32 %v305, %v462
    %v495 = vsub.f32 %v308, %v463
    %v496 = vsub.f32 %v313, %v464
    %v497 = vsub.f32 %v316, %v465
    %v498 = vsub.f32 %v321, %v466
    %v499 = vsub.f32 %v324, %v467
    %v500 = vsub.f32 %v329, %v468
    %v501 = vsub.f32 %v332, %v469
    %v502 = vsub.f32 %v337, %v470
    %v503 = vsub.f32 %v340, %v471
    %v504 = vsub.f32 %v345, %v472
    %v505 = vsub.f32 %v348, %v473
    %v506 = vsub.f32 %v353, %v474
    %v507 = vsub.f32 %v356, %v475
    %v508 = vsub.f32 %v361, %v476
    %v509 = vsub.f32 %v364, %v477
    %v510 = vsub.f32 %v369, %v478
    %v511 = vsub.f32 %v372, %v479
    %v512 = vsub.f32 %v377, %v480
    %v513 = vsub.f32 %v380, %v481
    %v514 = vmul.f32 %v482, %v482
    %v515 = vmul.f32 %v483, %v483
    %v516 = vmul.f32 %v484, %v484
    %v517 = vmul.f32 %v485, %v485
    %v518 = vmul.f32 %v486, %v486
    %v519 = vmul.f32 %v487, %v487
    %v520 = vmul.f32 %v488, %v488
    %v521 = vmul.f32 %v489, %v489
    %v522 = vmul.f32 %v490, %v490
    %v523 = vmul.f32 %v491, %v491
    %v524 = vmul.f32 %v492, %v492
    %v525 = vmul.f32 %v493, %v493
    %v526 = vmul.f32 %v494, %v494
    %v527 = vmul.f32 %v495, %v495
    %v528 = vmul.f32 %v496, %v496
    %v529 = vmul.f32 %v497, %v497
    %v530 = vmul.f32 %v498, %v498
    %v531 = vmul.f32 %v499, %v499
    %v532 = vmul.f32 %v500, %v500
    %v533 = vmul.f32 %v501, %v501
    %v534 = vmul.f32 %v502, %v502
    %v535 = vmul.f32 %v503, %v503
    %v536 = vmul.f32 %v504, %v504
    %v537 = vmul.f32 %v505, %v505
    %v538 = vmul.f32 %v506, %v506
    %v539 = vmul.f32 %v507, %v507
    %v540 = vmul.f32 %v508, %v508
    %v541 = vmul.f32 %v509, %v509
    %v542 = vmul.f32 %v510, %v510
    %v543 = vmul.f32 %v511, %v511
    %v544 = vmul.f32 %v512, %v512
    %v545 = vmul.f32 %v513, %v513
    %546 = vadd.xlane.f32.xlu0 %v514
    %v547 = vpop.xlane.xlu0 %546
    %548 = vadd.xlane.f32.xlu0 %v515
    %v549 = vpop.xlane.xlu0 %548
    %550 = vadd.xlane.f32.xlu0 %v516
    %v551 = vpop.xlane.xlu0 %550
    %552 = vadd.xlane.f32.xlu0 %v517
    %v553 = vpop.xlane.xlu0 %552
    %554 = vadd.xlane.f32.xlu0 %v518
    %v555 = vpop.xlane.xlu0 %554
    %556 = vadd.xlane.f32.xlu0 %v519
    %v557 = vpop.xlane.xlu0 %556
    %558 = vadd.xlane.f32.xlu0 %v520
    %v559 = vpop.xlane.xlu0 %558
    %560 = vadd.xlane.f32.xlu0 %v521
    %v561 = vpop.xlane.xlu0 %560
    %562 = vadd.xlane.f32.xlu0 %v522
    %v563 = vpop.xlane.xlu0 %562
    %564 = vadd.xlane.f32.xlu0 %v523
    %v565 = vpop.xlane.xlu0 %564
    %566 = vadd.xlane.f32.xlu0 %v524
    %v567 = vpop.xlane.xlu0 %566
    %568 = vadd.xlane.f32.xlu0 %v525
    %v569 = vpop.xlane.xlu0 %568
    %570 = vadd.xlane.f32.xlu0 %v526
    %v571 = vpop.xlane.xlu0 %570
    %572 = vadd.xlane.f32.xlu0 %v527
    %v573 = vpop.xlane.xlu0 %572
    %574 = vadd.xlane.f32.xlu0 %v528
    %v575 = vpop.xlane.xlu0 %574
    %576 = vadd.xlane.f32.xlu0 %v529
    %v577 = vpop.xlane.xlu0 %576
    %578 = vadd.xlane.f32.xlu0 %v530
    %v579 = vpop.xlane.xlu0 %578
    %580 = vadd.xlane.f32.xlu0 %v531
    %v581 = vpop.xlane.xlu0 %580
    %582 = vadd.xlane.f32.xlu0 %v532
    %v583 = vpop.xlane.xlu0 %582
    %584 = vadd.xlane.f32.xlu0 %v533
    %v585 = vpop.xlane.xlu0 %584
    %586 = vadd.xlane.f32.xlu0 %v534
    %v587 = vpop.xlane.xlu0 %586
    %588 = vadd.xlane.f32.xlu0 %v535
    %v589 = vpop.xlane.xlu0 %588
    %590 = vadd.xlane.f32.xlu0 %v536
    %v591 = vpop.xlane.xlu0 %590
    %592 = vadd.xlane.f32.xlu0 %v537
    %v593 = vpop.xlane.xlu0 %592
    %594 = vadd.xlane.f32.xlu0 %v538
    %v595 = vpop.xlane.xlu0 %594
    %596 = vadd.xlane.f32.xlu0 %v539
    %v597 = vpop.xlane.xlu0 %596
    %598 = vadd.xlane.f32.xlu0 %v540
    %v599 = vpop.xlane.xlu0 %598
    %600 = vadd.xlane.f32.xlu0 %v541
    %v601 = vpop.xlane.xlu0 %600
    %602 = vadd.xlane.f32.xlu0 %v542
    %v603 = vpop.xlane.xlu0 %602
    %604 = vadd.xlane.f32.xlu0 %v543
    %v605 = vpop.xlane.xlu0 %604
    %606 = vadd.xlane.f32.xlu0 %v544
    %v607 = vpop.xlane.xlu0 %606
    %608 = vadd.xlane.f32.xlu0 %v545
    %v609 = vpop.xlane.xlu0 %608
    %v610 = vmul.f32 %v547, %v449
    %v611 = vmul.f32 %v549, %v449
    %v612 = vmul.f32 %v551, %v449
    %v613 = vmul.f32 %v553, %v449
    %v614 = vmul.f32 %v555, %v449
    %v615 = vmul.f32 %v557, %v449
    %v616 = vmul.f32 %v559, %v449
    %v617 = vmul.f32 %v561, %v449
    %v618 = vmul.f32 %v563, %v449
    %v619 = vmul.f32 %v565, %v449
    %v620 = vmul.f32 %v567, %v449
    %v621 = vmul.f32 %v569, %v449
    %v622 = vmul.f32 %v571, %v449
    %v623 = vmul.f32 %v573, %v449
    %v624 = vmul.f32 %v575, %v449
    %v625 = vmul.f32 %v577, %v449
    %v626 = vmul.f32 %v579, %v449
    %v627 = vmul.f32 %v581, %v449
    %v628 = vmul.f32 %v583, %v449
    %v629 = vmul.f32 %v585, %v449
    %v630 = vmul.f32 %v587, %v449
    %v631 = vmul.f32 %v589, %v449
    %v632 = vmul.f32 %v591, %v449
    %v633 = vmul.f32 %v593, %v449
    %v634 = vmul.f32 %v595, %v449
    %v635 = vmul.f32 %v597, %v449
    %v636 = vmul.f32 %v599, %v449
    %v637 = vmul.f32 %v601, %v449
    %v638 = vmul.f32 %v603, %v449
    %v639 = vmul.f32 %v605, %v449
    %v640 = vmul.f32 %v607, %v449
    %v641 = vmul.f32 %v609, %v449
    %v642 = vadd.f32 %v610, 1e-05
    %v643 = vadd.f32 %v611, 1e-05
    %v644 = vadd.f32 %v612, 1e-05
    %v645 = vadd.f32 %v613, 1e-05
    %v646 = vadd.f32 %v614, 1e-05
    %v647 = vadd.f32 %v615, 1e-05
    %v648 = vadd.f32 %v616, 1e-05
    %v649 = vadd.f32 %v617, 1e-05
    %v650 = vadd.f32 %v618, 1e-05
    %v651 = vadd.f32 %v619, 1e-05
    %v652 = vadd.f32 %v620, 1e-05
    %v653 = vadd.f32 %v621, 1e-05
    %v654 = vadd.f32 %v622, 1e-05
    %v655 = vadd.f32 %v623, 1e-05
    %v656 = vadd.f32 %v624, 1e-05
    %v657 = vadd.f32 %v625, 1e-05
    %v658 = vadd.f32 %v626, 1e-05
    %v659 = vadd.f32 %v627, 1e-05
    %v660 = vadd.f32 %v628, 1e-05
    %v661 = vadd.f32 %v629, 1e-05
    %v662 = vadd.f32 %v630, 1e-05
    %v663 = vadd.f32 %v631, 1e-05
    %v664 = vadd.f32 %v632, 1e-05
    %v665 = vadd.f32 %v633, 1e-05
    %v666 = vadd.f32 %v634, 1e-05
    %v667 = vadd.f32 %v635, 1e-05
    %v668 = vadd.f32 %v636, 1e-05
    %v669 = vadd.f32 %v637, 1e-05
    %v670 = vadd.f32 %v638, 1e-05
    %v671 = vadd.f32 %v639, 1e-05
    %v672 = vadd.f32 %v640, 1e-05
    %v673 = vadd.f32 %v641, 1e-05
    %v674 = vrsqrt.pop %v642
    %v675 = vrsqrt.pop %v643
    %v676 = vrsqrt.pop %v644
    %v677 = vrsqrt.pop %v645
    %v678 = vrsqrt.pop %v646
    %v679 = vrsqrt.pop %v647
    %v680 = vrsqrt.pop %v648
    %v681 = vrsqrt.pop %v649
    %v682 = vrsqrt.pop %v650
    %v683 = vrsqrt.pop %v651
    %v684 = vrsqrt.pop %v652
    %v685 = vrsqrt.pop %v653
    %v686 = vrsqrt.pop %v654
    %v687 = vrsqrt.pop %v655
    %v688 = vrsqrt.pop %v656
    %v689 = vrsqrt.pop %v657
    %v690 = vrsqrt.pop %v658
    %v691 = vrsqrt.pop %v659
    %v692 = vrsqrt.pop %v660
    %v693 = vrsqrt.pop %v661
    %v694 = vrsqrt.pop %v662
    %v695 = vrsqrt.pop %v663
    %v696 = vrsqrt.pop %v664
    %v697 = vrsqrt.pop %v665
    %v698 = vrsqrt.pop %v666
    %v699 = vrsqrt.pop %v667
    %v700 = vrsqrt.pop %v668
    %v701 = vrsqrt.pop %v669
    %v702 = vrsqrt.pop %v670
    %v703 = vrsqrt.pop %v671
    %v704 = vrsqrt.pop %v672
    %v705 = vrsqrt.pop %v673
    %v706 = vmul.f32 %v482, %v674
    %v707 = vmul.f32 %v483, %v675
    %v708 = vmul.f32 %v484, %v676
    %v709 = vmul.f32 %v485, %v677
    %v710 = vmul.f32 %v486, %v678
    %v711 = vmul.f32 %v487, %v679
    %v712 = vmul.f32 %v488, %v680
    %v713 = vmul.f32 %v489, %v681
    %v714 = vmul.f32 %v490, %v682
    %v715 = vmul.f32 %v491, %v683
    %v716 = vmul.f32 %v492, %v684
    %v717 = vmul.f32 %v493, %v685
    %v718 = vmul.f32 %v494, %v686
    %v719 = vmul.f32 %v495, %v687
    %v720 = vmul.f32 %v496, %v688
    %v721 = vmul.f32 %v497, %v689
    %v722 = vmul.f32 %v498, %v690
    %v723 = vmul.f32 %v499, %v691
    %v724 = vmul.f32 %v500, %v692
    %v725 = vmul.f32 %v501, %v693
    %v726 = vmul.f32 %v502, %v694
    %v727 = vmul.f32 %v503, %v695
    %v728 = vmul.f32 %v504, %v696
    %v729 = vmul.f32 %v505, %v697
    %v730 = vmul.f32 %v506, %v698
    %v731 = vmul.f32 %v507, %v699
    %v732 = vmul.f32 %v508, %v700
    %v733 = vmul.f32 %v509, %v701
    %v734 = vmul.f32 %v510, %v702
    %v735 = vmul.f32 %v511, %v703
    %v736 = vmul.f32 %v512, %v704
    %v737 = vmul.f32 %v513, %v705
    %v738 = vlaneseq
    %v739 = vshrl.u32 %v738, 7
    %v740 = vsub.s32 0, %v739
    %v741 = vrot.slane %v383, %v740
    %v742 = vmul.f32 %v706, %v741
    %v743 = vmul.f32 %v707, %v741
    %v744 = vmul.f32 %v708, %v741
    %v745 = vmul.f32 %v709, %v741
    %v746 = vmul.f32 %v710, %v741
    %v747 = vmul.f32 %v711, %v741
    %v748 = vmul.f32 %v712, %v741
    %v749 = vmul.f32 %v713, %v741
    %v750 = vmul.f32 %v714, %v741
    %v751 = vmul.f32 %v715, %v741
    %v752 = vmul.f32 %v716, %v741
    %v753 = vmul.f32 %v717, %v741
    %v754 = vmul.f32 %v718, %v741
    %v755 = vmul.f32 %v719, %v741
    %v756 = vmul.f32 %v720, %v741
    %v757 = vmul.f32 %v721, %v741
    %v758 = vmul.f32 %v722, %v741
    %v759 = vmul.f32 %v723, %v741
    %v760 = vmul.f32 %v724, %v741
    %v761 = vmul.f32 %v725, %v741
    %v762 = vmul.f32 %v726, %v741
    %v763 = vmul.f32 %v727, %v741
    %v764 = vmul.f32 %v728, %v741
    %v765 = vmul.f32 %v729, %v741
    %v766 = vmul.f32 %v730, %v741
    %v767 = vmul.f32 %v731, %v741
    %v768 = vmul.f32 %v732, %v741
    %v769 = vmul.f32 %v733, %v741
    %v770 = vmul.f32 %v734, %v741
    %v771 = vmul.f32 %v735, %v741
    %v772 = vmul.f32 %v736, %v741
    %v773 = vmul.f32 %v737, %v741
    %v774 = vlaneseq
    %v775 = vshrl.u32 %v774, 7
    %v776 = vsub.s32 0, %v775
    %v777 = vrot.slane %v384, %v776
    %v778 = vadd.f32 %v742, %v777
    %v779 = vadd.f32 %v743, %v777
    %v780 = vadd.f32 %v744, %v777
    %v781 = vadd.f32 %v745, %v777
    %v782 = vadd.f32 %v746, %v777
    %v783 = vadd.f32 %v747, %v777
    %v784 = vadd.f32 %v748, %v777
    %v785 = vadd.f32 %v749, %v777
    %v786 = vadd.f32 %v750, %v777
    %v787 = vadd.f32 %v751, %v777
    %v788 = vadd.f32 %v752, %v777
    %v789 = vadd.f32 %v753, %v777
    %v790 = vadd.f32 %v754, %v777
    %v791 = vadd.f32 %v755, %v777
    %v792 = vadd.f32 %v756, %v777
    %v793 = vadd.f32 %v757, %v777
    %v794 = vadd.f32 %v758, %v777
    %v795 = vadd.f32 %v759, %v777
    %v796 = vadd.f32 %v760, %v777
    %v797 = vadd.f32 %v761, %v777
    %v798 = vadd.f32 %v762, %v777
    %v799 = vadd.f32 %v763, %v777
    %v800 = vadd.f32 %v764, %v777
    %v801 = vadd.f32 %v765, %v777
    %v802 = vadd.f32 %v766, %v777
    %v803 = vadd.f32 %v767, %v777
    %v804 = vadd.f32 %v768, %v777
    %v805 = vadd.f32 %v769, %v777
    %v806 = vadd.f32 %v770, %v777
    %v807 = vadd.f32 %v771, %v777
    %v808 = vadd.f32 %v772, %v777
    %v809 = vadd.f32 %v773, %v777
    %v810 = vpack.c.bf16 %v779, %v778
    %v811 = vpack.c.bf16 %v781, %v780
    %v812 = vpack.c.bf16 %v783, %v782
    %v813 = vpack.c.bf16 %v785, %v784
    %v814 = vpack.c.bf16 %v787, %v786
    %v815 = vpack.c.bf16 %v789, %v788
    %v816 = vpack.c.bf16 %v791, %v790
    %v817 = vpack.c.bf16 %v793, %v792
    %v818 = vpack.c.bf16 %v795, %v794
    %v819 = vpack.c.bf16 %v797, %v796
    %v820 = vpack.c.bf16 %v799, %v798
    %v821 = vpack.c.bf16 %v801, %v800
    %v822 = vpack.c.bf16 %v803, %v802
    %v823 = vpack.c.bf16 %v805, %v804
    %v824 = vpack.c.bf16 %v807, %v806
    %v825 = vpack.c.bf16 %v809, %v808
    %s826 = scalar_lea.vmem %s1, 64
    %v827 = vld [vmem:[%s826] sm:$0xf]
    %v828 = vld [vmem:[%s826 + $0x4] sm:$0xf]
    %v829 = vld [vmem:[%s826 + $0x8] sm:$0xf]
    %v830 = vld [vmem:[%s826 + $0xc] sm:$0xf]
    %v831 = vld [vmem:[%s826 + $0x10] sm:$0xf]
    %v832 = vld [vmem:[%s826 + $0x14] sm:$0xf]
    %v833 = vld [vmem:[%s826 + $0x18] sm:$0xf]
    %v834 = vld [vmem:[%s826 + $0x1c] sm:$0xf]
    %v835 = vld [vmem:[%s826 + $0x20] sm:$0xf]
    %v836 = vld [vmem:[%s826 + $0x24] sm:$0xf]
    %v837 = vld [vmem:[%s826 + $0x28] sm:$0xf]
    %v838 = vld [vmem:[%s826 + $0x2c] sm:$0xf]
    %v839 = vld [vmem:[%s826 + $0x30] sm:$0xf]
    %v840 = vld [vmem:[%s826 + $0x34] sm:$0xf]
    %v841 = vld [vmem:[%s826 + $0x38] sm:$0xf]
    %v842 = vld [vmem:[%s826 + $0x3c] sm:$0xf]
    %v843 = vld [vmem:[%s5 + $0x3] sm:$0x1]
    %v844 = vlaneseq
    %v845 = vshrl.u32 %v844, 7
    %v846 = vsub.s32 0, %v845
    %v847 = vrot.slane %v843, %v846
    %v864 = vunpack.c.l.b16 %v827
    %v865 = vunpack.c.l.b16 %v828
    %v866 = vunpack.c.l.b16 %v829
    %v867 = vunpack.c.l.b16 %v830
    %v868 = vunpack.c.l.b16 %v831
    %v869 = vunpack.c.l.b16 %v832
    %v870 = vunpack.c.l.b16 %v833
    %v871 = vunpack.c.l.b16 %v834
    %v872 = vunpack.c.l.b16 %v835
    %v873 = vunpack.c.l.b16 %v836
    %v874 = vunpack.c.l.b16 %v837
    %v875 = vunpack.c.l.b16 %v838
    %v876 = vunpack.c.l.b16 %v839
    %v877 = vunpack.c.l.b16 %v840
    %v878 = vunpack.c.l.b16 %v841
    %v879 = vunpack.c.l.b16 %v842
    %v880 = vpack.c.b16 %v865, %v864
    %v881 = vpack.c.b16 %v867, %v866
    %v882 = vpack.c.b16 %v869, %v868
    %v883 = vpack.c.b16 %v871, %v870
    %v884 = vpack.c.b16 %v873, %v872
    %v885 = vpack.c.b16 %v875, %v874
    %v886 = vpack.c.b16 %v877, %v876
    %v887 = vpack.c.b16 %v879, %v878
    %896 = vmatprep.subr.bf16.mxu0 0
    %897 = vmatpush1.bf16.msra.mxu0 %v880
    %898 = vmatprep.subr.bf16.mxu0 0
    %899 = vmatpush1.bf16.msra.mxu0 %v881
    %900 = vmatprep.subr.bf16.mxu0 0
    %901 = vmatpush1.bf16.msra.mxu0 %v882
    %902 = vmatprep.subr.bf16.mxu0 0
    %903 = vmatpush1.bf16.msra.mxu0 %v883
    %904 = vmatprep.subr.bf16.mxu0 0
    %905 = vmatpush1.bf16.msra.mxu0 %v884
    %906 = vmatprep.subr.bf16.mxu0 0
    %907 = vmatpush1.bf16.msra.mxu0 %v885
    %908 = vmatprep.subr.bf16.mxu0 0
    %909 = vmatpush1.bf16.msra.mxu0 %v886
    %910 = vmatprep.subr.bf16.mxu0 0
    %911 = vmatpush1.bf16.msra.mxu0 %v887
    %912 = vmatprep.subr.bf16.mxu0 0
    %913 = vmatpush1.bf16.msra.mxu0 0
    %914 = vmatprep.subr.bf16.mxu0 0
    %915 = vmatpush1.bf16.msra.mxu0 0
    %916 = vmatprep.subr.bf16.mxu0 0
    %917 = vmatpush1.bf16.msra.mxu0 0
    %918 = vmatprep.subr.bf16.mxu0 0
    %919 = vmatpush1.bf16.msra.mxu0 0
    %920 = vmatprep.subr.bf16.mxu0 0
    %921 = vmatpush1.bf16.msra.mxu0 0
    %922 = vmatprep.subr.bf16.mxu0 0
    %923 = vmatpush1.bf16.msra.mxu0 0
    %924 = vmatprep.subr.bf16.mxu0 0
    %925 = vmatpush1.bf16.msra.mxu0 0
    %926 = vmatprep.subr.bf16.mxu0 0
    %927 = vmatpush1.bf16.msra.mxu0 0
    %928 = vmatprep.mubr.bf16.mxu0 0
    %929 = vmatmul.mubr.bf16.gmra.mrb[0].mxu0 %v810
    %v930 = vpop.f32.mrb[0].mxu0
    %v931 = vadd.f32 %v847, %v930
    %v932 = vpop.f32.mrb[0].mxu0
    %v933 = vpop.f32.mrb[0].mxu0
    %v934 = vadd.f32 %v847, %v933
    %v935 = vpop.f32.mrb[0].mxu0
    %936 = vmatprep.mubr.bf16.mxu0 0
    %937 = vmatmul.mubr.bf16.gmra.mrb[0].mxu0 %v811
    %v938 = vpop.f32.mrb[0].mxu0
    %v939 = vadd.f32 %v847, %v938
    %v940 = vpop.f32.mrb[0].mxu0
    %v941 = vpop.f32.mrb[0].mxu0
    %v942 = vadd.f32 %v847, %v941
    %v943 = vpop.f32.mrb[0].mxu0
    %944 = vmatprep.mubr.bf16.mxu0 0
    %945 = vmatmul.mubr.bf16.gmra.mrb[0].mxu0 %v812
    %v946 = vpop.f32.mrb[0].mxu0
    %v947 = vadd.f32 %v847, %v946
    %v948 = vpop.f32.mrb[0].mxu0
    %v949 = vpop.f32.mrb[0].mxu0
    %v950 = vadd.f32 %v847, %v949
    %v951 = vpop.f32.mrb[0].mxu0
    %952 = vmatprep.mubr.bf16.mxu0 0
    %953 = vmatmul.mubr.bf16.gmra.mrb[0].mxu0 %v813
    %v954 = vpop.f32.mrb[0].mxu0
    %v955 = vadd.f32 %v847, %v954
    %v956 = vpop.f32.mrb[0].mxu0
    %v957 = vpop.f32.mrb[0].mxu0
    %v958 = vadd.f32 %v847, %v957
    %v959 = vpop.f32.mrb[0].mxu0
    %960 = vmatprep.mubr.bf16.mxu0 0
    %961 = vmatmul.mubr.bf16.gmra.mrb[0].mxu0 %v814
    %v962 = vpop.f32.mrb[0].mxu0
    %v963 = vadd.f32 %v847, %v962
    %v964 = vpop.f32.mrb[0].mxu0
    %v965 = vpop.f32.mrb[0].mxu0
    %v966 = vadd.f32 %v847, %v965
    %v967 = vpop.f32.mrb[0].mxu0
    %968 = vmatprep.mubr.bf16.mxu0 0
    %969 = vmatmul.mubr.bf16.gmra.mrb[0].mxu0 %v815
    %v970 = vpop.f32.mrb[0].mxu0
    %v971 = vadd.f32 %v847, %v970
    %v972 = vpop.f32.mrb[0].mxu0
    %v973 = vpop.f32.mrb[0].mxu0
    %v974 = vadd.f32 %v847, %v973
    %v975 = vpop.f32.mrb[0].mxu0
    %976 = vmatprep.mubr.bf16.mxu0 0
    %977 = vmatmul.mubr.bf16.gmra.mrb[0].mxu0 %v816
    %v978 = vpop.f32.mrb[0].mxu0
    %v979 = vadd.f32 %v847, %v978
    %v980 = vpop.f32.mrb[0].mxu0
    %v981 = vpop.f32.mrb[0].mxu0
    %v982 = vadd.f32 %v847, %v981
    %v983 = vpop.f32.mrb[0].mxu0
    %984 = vmatprep.mubr.bf16.mxu0 0
    %985 = vmatmul.mubr.bf16.gmra.mrb[0].mxu0 %v817
    %v986 = vpop.f32.mrb[0].mxu0
    %v987 = vadd.f32 %v847, %v986
    %v988 = vpop.f32.mrb[0].mxu0
    %v989 = vpop.f32.mrb[0].mxu0
    %v990 = vadd.f32 %v847, %v989
    %v991 = vpop.f32.mrb[0].mxu0
    %992 = vmatprep.mubr.bf16.mxu0 0
    %993 = vmatmul.mubr.bf16.gmra.mrb[0].mxu0 %v818
    %v994 = vpop.f32.mrb[0].mxu0
    %v995 = vadd.f32 %v847, %v994
    %v996 = vpop.f32.mrb[0].mxu0
    %v997 = vpop.f32.mrb[0].mxu0
    %v998 = vadd.f32 %v847, %v997
    %v999 = vpop.f32.mrb[0].mxu0
    %1000 = vmatprep.mubr.bf16.mxu0 0
    %1001 = vmatmul.mubr.bf16.gmra.mrb[0].mxu0 %v819
    %v1002 = vpop.f32.mrb[0].mxu0
    %v1003 = vadd.f32 %v847, %v1002
    %v1004 = vpop.f32.mrb[0].mxu0
    %v1005 = vpop.f32.mrb[0].mxu0
    %v1006 = vadd.f32 %v847, %v1005
    %v1007 = vpop.f32.mrb[0].mxu0
    %1008 = vmatprep.mubr.bf16.mxu0 0
    %1009 = vmatmul.mubr.bf16.gmra.mrb[0].mxu0 %v820
    %v1010 = vpop.f32.mrb[0].mxu0
    %v1011 = vadd.f32 %v847, %v1010
    %v1012 = vpop.f32.mrb[0].mxu0
    %v1013 = vpop.f32.mrb[0].mxu0
    %v1014 = vadd.f32 %v847, %v1013
    %v1015 = vpop.f32.mrb[0].mxu0
    %1016 = vmatprep.mubr.bf16.mxu0 0
    %1017 = vmatmul.mubr.bf16.gmra.mrb[0].mxu0 %v821
    %v1018 = vpop.f32.mrb[0].mxu0
    %v1019 = vadd.f32 %v847, %v1018
    %v1020 = vpop.f32.mrb[0].mxu0
    %v1021 = vpop.f32.mrb[0].mxu0
    %v1022 = vadd.f32 %v847, %v1021
    %v1023 = vpop.f32.mrb[0].mxu0
    %1024 = vmatprep.mubr.bf16.mxu0 0
    %1025 = vmatmul.mubr.bf16.gmra.mrb[0].mxu0 %v822
    %v1026 = vpop.f32.mrb[0].mxu0
    %v1027 = vadd.f32 %v847, %v1026
    %v1028 = vpop.f32.mrb[0].mxu0
    %v1029 = vpop.f32.mrb[0].mxu0
    %v1030 = vadd.f32 %v847, %v1029
    %v1031 = vpop.f32.mrb[0].mxu0
    %1032 = vmatprep.mubr.bf16.mxu0 0
    %1033 = vmatmul.mubr.bf16.gmra.mrb[0].mxu0 %v823
    %v1034 = vpop.f32.mrb[0].mxu0
    %v1035 = vadd.f32 %v847, %v1034
    %v1036 = vpop.f32.mrb[0].mxu0
    %v1037 = vpop.f32.mrb[0].mxu0
    %v1038 = vadd.f32 %v847, %v1037
    %v1039 = vpop.f32.mrb[0].mxu0
    %1040 = vmatprep.mubr.bf16.mxu0 0
    %1041 = vmatmul.mubr.bf16.gmra.mrb[0].mxu0 %v824
    %v1042 = vpop.f32.mrb[0].mxu0
    %v1043 = vadd.f32 %v847, %v1042
    %v1044 = vpop.f32.mrb[0].mxu0
    %v1045 = vpop.f32.mrb[0].mxu0
    %v1046 = vadd.f32 %v847, %v1045
    %v1047 = vpop.f32.mrb[0].mxu0
    %1048 = vmatprep.mubr.bf16.mxu0 0
    %1049 = vmatmul.mubr.bf16.gmra.mrb[0].mxu0 %v825
    %v1050 = vpop.f32.mrb[0].mxu0
    %v1051 = vadd.f32 %v847, %v1050
    %v1052 = vpop.f32.mrb[0].mxu0
    %v1053 = vpop.f32.mrb[0].mxu0
    %v1054 = vadd.f32 %v847, %v1053
    %v1055 = vpop.f32.mrb[0].mxu0
    %1056 = vdwg.mxu0
    %v1057 = vmul.f32 %v931, 0.5
    %v1058 = vmul.f32 %v934, 0.5
    %v1059 = vmul.f32 %v939, 0.5
    %v1060 = vmul.f32 %v942, 0.5
    %v1061 = vmul.f32 %v947, 0.5
    %v1062 = vmul.f32 %v950, 0.5
    %v1063 = vmul.f32 %v955, 0.5
    %v1064 = vmul.f32 %v958, 0.5
    %v1065 = vmul.f32 %v963, 0.5
    %v1066 = vmul.f32 %v966, 0.5
    %v1067 = vmul.f32 %v971, 0.5
    %v1068 = vmul.f32 %v974, 0.5
    %v1069 = vmul.f32 %v979, 0.5
    %v1070 = vmul.f32 %v982, 0.5
    %v1071 = vmul.f32 %v987, 0.5
    %v1072 = vmul.f32 %v990, 0.5
    %v1073 = vmul.f32 %v995, 0.5
    %v1074 = vmul.f32 %v998, 0.5
    %v1075 = vmul.f32 %v1003, 0.5
    %v1076 = vmul.f32 %v1006, 0.5
    %v1077 = vmul.f32 %v1011, 0.5
    %v1078 = vmul.f32 %v1014, 0.5
    %v1079 = vmul.f32 %v1019, 0.5
    %v1080 = vmul.f32 %v1022, 0.5
    %v1081 = vmul.f32 %v1027, 0.5
    %v1082 = vmul.f32 %v1030, 0.5
    %v1083 = vmul.f32 %v1035, 0.5
    %v1084 = vmul.f32 %v1038, 0.5
    %v1085 = vmul.f32 %v1043, 0.5
    %v1086 = vmul.f32 %v1046, 0.5
    %v1087 = vmul.f32 %v1051, 0.5
    %v1088 = vmul.f32 %v1054, 0.5
    %v1089 = vmul.f32 %v931, 0.044715
    %v1090 = vmul.f32 %v934, 0.044715
    %v1091 = vmul.f32 %v939, 0.044715
    %v1092 = vmul.f32 %v942, 0.044715
    %v1093 = vmul.f32 %v947, 0.044715
    %v1094 = vmul.f32 %v950, 0.044715
    %v1095 = vmul.f32 %v955, 0.044715
    %v1096 = vmul.f32 %v958, 0.044715
    %v1097 = vmul.f32 %v963, 0.044715
    %v1098 = vmul.f32 %v966, 0.044715
    %v1099 = vmul.f32 %v971, 0.044715
    %v1100 = vmul.f32 %v974, 0.044715
    %v1101 = vmul.f32 %v979, 0.044715
    %v1102 = vmul.f32 %v982, 0.044715
    %v1103 = vmul.f32 %v987, 0.044715
    %v1104 = vmul.f32 %v990, 0.044715
    %v1105 = vmul.f32 %v995, 0.044715
    %v1106 = vmul.f32 %v998, 0.044715
    %v1107 = vmul.f32 %v1003, 0.044715
    %v1108 = vmul.f32 %v1006, 0.044715
    %v1109 = vmul.f32 %v1011, 0.044715
    %v1110 = vmul.f32 %v1014, 0.044715
    %v1111 = vmul.f32 %v1019, 0.044715
    %v1112 = vmul.f32 %v1022, 0.044715
    %v1113 = vmul.f32 %v1027, 0.044715
    %v1114 = vmul.f32 %v1030, 0.044715
    %v1115 = vmul.f32 %v1035, 0.044715
    %v1116 = vmul.f32 %v1038, 0.044715
    %v1117 = vmul.f32 %v1043, 0.044715
    %v1118 = vmul.f32 %v1046, 0.044715
    %v1119 = vmul.f32 %v1051, 0.044715
    %v1120 = vmul.f32 %v1054, 0.044715
    %v1121 = vmul.f32 %v1089, %v931
    %v1122 = vmul.f32 %v1090, %v934
    %v1123 = vmul.f32 %v1091, %v939
    %v1124 = vmul.f32 %v1092, %v942
    %v1125 = vmul.f32 %v1093, %v947
    %v1126 = vmul.f32 %v1094, %v950
    %v1127 = vmul.f32 %v1095, %v955
    %v1128 = vmul.f32 %v1096, %v958
    %v1129 = vmul.f32 %v1097, %v963
    %v1130 = vmul.f32 %v1098, %v966
    %v1131 = vmul.f32 %v1099, %v971
    %v1132 = vmul.f32 %v1100, %v974
    %v1133 = vmul.f32 %v1101, %v979
    %v1134 = vmul.f32 %v1102, %v982
    %v1135 = vmul.f32 %v1103, %v987
    %v1136 = vmul.f32 %v1104, %v990
    %v1137 = vmul.f32 %v1105, %v995
    %v1138 = vmul.f32 %v1106, %v998
    %v1139 = vmul.f32 %v1107, %v1003
    %v1140 = vmul.f32 %v1108, %v1006
    %v1141 = vmul.f32 %v1109, %v1011
    %v1142 = vmul.f32 %v1110, %v1014
    %v1143 = vmul.f32 %v1111, %v1019
    %v1144 = vmul.f32 %v1112, %v1022
    %v1145 = vmul.f32 %v1113, %v1027
    %v1146 = vmul.f32 %v1114, %v1030
    %v1147 = vmul.f32 %v1115, %v1035
    %v1148 = vmul.f32 %v1116, %v1038
    %v1149 = vmul.f32 %v1117, %v1043
    %v1150 = vmul.f32 %v1118, %v1046
    %v1151 = vmul.f32 %v1119, %v1051
    %v1152 = vmul.f32 %v1120, %v1054
    %v1153 = vmul.f32 %v1121, %v931
    %v1154 = vmul.f32 %v1122, %v934
    %v1155 = vmul.f32 %v1123, %v939
    %v1156 = vmul.f32 %v1124, %v942
    %v1157 = vmul.f32 %v1125, %v947
    %v1158 = vmul.f32 %v1126, %v950
    %v1159 = vmul.f32 %v1127, %v955
    %v1160 = vmul.f32 %v1128, %v958
    %v1161 = vmul.f32 %v1129, %v963
    %v1162 = vmul.f32 %v1130, %v966
    %v1163 = vmul.f32 %v1131, %v971
    %v1164 = vmul.f32 %v1132, %v974
    %v1165 = vmul.f32 %v1133, %v979
    %v1166 = vmul.f32 %v1134, %v982
    %v1167 = vmul.f32 %v1135, %v987
    %v1168 = vmul.f32 %v1136, %v990
    %v1169 = vmul.f32 %v1137, %v995
    %v1170 = vmul.f32 %v1138, %v998
    %v1171 = vmul.f32 %v1139, %v1003
    %v1172 = vmul.f32 %v1140, %v1006
    %v1173 = vmul.f32 %v1141, %v1011
    %v1174 = vmul.f32 %v1142, %v1014
    %v1175 = vmul.f32 %v1143, %v1019
    %v1176 = vmul.f32 %v1144, %v1022
    %v1177 = vmul.f32 %v1145, %v1027
    %v1178 = vmul.f32 %v1146, %v1030
    %v1179 = vmul.f32 %v1147, %v1035
    %v1180 = vmul.f32 %v1148, %v1038
    %v1181 = vmul.f32 %v1149, %v1043
    %v1182 = vmul.f32 %v1150, %v1046
    %v1183 = vmul.f32 %v1151, %v1051
    %v1184 = vmul.f32 %v1152, %v1054
    %v1185 = vadd.f32 %v931, %v1153
    %v1186 = vadd.f32 %v934, %v1154
    %v1187 = vadd.f32 %v939, %v1155
    %v1188 = vadd.f32 %v942, %v1156
    %v1189 = vadd.f32 %v947, %v1157
    %v1190 = vadd.f32 %v950, %v1158
    %v1191 = vadd.f32 %v955, %v1159
    %v1192 = vadd.f32 %v958, %v1160
    %v1193 = vadd.f32 %v963, %v1161
    %v1194 = vadd.f32 %v966, %v1162
    %v1195 = vadd.f32 %v971, %v1163
    %v1196 = vadd.f32 %v974, %v1164
    %v1197 = vadd.f32 %v979, %v1165
    %v1198 = vadd.f32 %v982, %v1166
    %v1199 = vadd.f32 %v987, %v1167
    %v1200 = vadd.f32 %v990, %v1168
    %v1201 = vadd.f32 %v995, %v1169
    %v1202 = vadd.f32 %v998, %v1170
    %v1203 = vadd.f32 %v1003, %v1171
    %v1204 = vadd.f32 %v1006, %v1172
    %v1205 = vadd.f32 %v1011, %v1173
    %v1206 = vadd.f32 %v1014, %v1174
    %v1207 = vadd.f32 %v1019, %v1175
    %v1208 = vadd.f32 %v1022, %v1176
    %v1209 = vadd.f32 %v1027, %v1177
    %v1210 = vadd.f32 %v1030, %v1178
    %v1211 = vadd.f32 %v1035, %v1179
    %v1212 = vadd.f32 %v1038, %v1180
    %v1213 = vadd.f32 %v1043, %v1181
    %v1214 = vadd.f32 %v1046, %v1182
    %v1215 = vadd.f32 %v1051, %v1183
    %v1216 = vadd.f32 %v1054, %v1184
    %v1217 = vmul.f32 %v1185, 0.7978846
    %v1218 = vmul.f32 %v1186, 0.7978846
    %v1219 = vmul.f32 %v1187, 0.7978846
    %v1220 = vmul.f32 %v1188, 0.7978846
    %v1221 = vmul.f32 %v1189, 0.7978846
    %v1222 = vmul.f32 %v1190, 0.7978846
    %v1223 = vmul.f32 %v1191, 0.7978846
    %v1224 = vmul.f32 %v1192, 0.7978846
    %v1225 = vmul.f32 %v1193, 0.7978846
    %v1226 = vmul.f32 %v1194, 0.7978846
    %v1227 = vmul.f32 %v1195, 0.7978846
    %v1228 = vmul.f32 %v1196, 0.7978846
    %v1229 = vmul.f32 %v1197, 0.7978846
    %v1230 = vmul.f32 %v1198, 0.7978846
    %v1231 = vmul.f32 %v1199, 0.7978846
    %v1232 = vmul.f32 %v1200, 0.7978846
    %v1233 = vmul.f32 %v1201, 0.7978846
    %v1234 = vmul.f32 %v1202, 0.7978846
    %v1235 = vmul.f32 %v1203, 0.7978846
    %v1236 = vmul.f32 %v1204, 0.7978846
    %v1237 = vmul.f32 %v1205, 0.7978846
    %v1238 = vmul.f32 %v1206, 0.7978846
    %v1239 = vmul.f32 %v1207, 0.7978846
    %v1240 = vmul.f32 %v1208, 0.7978846
    %v1241 = vmul.f32 %v1209, 0.7978846
    %v1242 = vmul.f32 %v1210, 0.7978846
    %v1243 = vmul.f32 %v1211, 0.7978846
    %v1244 = vmul.f32 %v1212, 0.7978846
    %v1245 = vmul.f32 %v1213, 0.7978846
    %v1246 = vmul.f32 %v1214, 0.7978846
    %v1247 = vmul.f32 %v1215, 0.7978846
    %v1248 = vmul.f32 %v1216, 0.7978846
    %v1249 = vtanh.pop %v1217
    %v1250 = vtanh.pop %v1218
    %v1251 = vtanh.pop %v1219
    %v1252 = vtanh.pop %v1220
    %v1253 = vtanh.pop %v1221
    %v1254 = vtanh.pop %v1222
    %v1255 = vtanh.pop %v1223
    %v1256 = vtanh.pop %v1224
    %v1257 = vtanh.pop %v1225
    %v1258 = vtanh.pop %v1226
    %v1259 = vtanh.pop %v1227
    %v1260 = vtanh.pop %v1228
    %v1261 = vtanh.pop %v1229
    %v1262 = vtanh.pop %v1230
    %v1263 = vtanh.pop %v1231
    %v1264 = vtanh.pop %v1232
    %v1265 = vtanh.pop %v1233
    %v1266 = vtanh.pop %v1234
    %v1267 = vtanh.pop %v1235
    %v1268 = vtanh.pop %v1236
    %v1269 = vtanh.pop %v1237
    %v1270 = vtanh.pop %v1238
    %v1271 = vtanh.pop %v1239
    %v1272 = vtanh.pop %v1240
    %v1273 = vtanh.pop %v1241
    %v1274 = vtanh.pop %v1242
    %v1275 = vtanh.pop %v1243
    %v1276 = vtanh.pop %v1244
    %v1277 = vtanh.pop %v1245
    %v1278 = vtanh.pop %v1246
    %v1279 = vtanh.pop %v1247
    %v1280 = vtanh.pop %v1248
    %v1281 = vadd.f32 %v1249, 1.0
    %v1282 = vadd.f32 %v1250, 1.0
    %v1283 = vadd.f32 %v1251, 1.0
    %v1284 = vadd.f32 %v1252, 1.0
    %v1285 = vadd.f32 %v1253, 1.0
    %v1286 = vadd.f32 %v1254, 1.0
    %v1287 = vadd.f32 %v1255, 1.0
    %v1288 = vadd.f32 %v1256, 1.0
    %v1289 = vadd.f32 %v1257, 1.0
    %v1290 = vadd.f32 %v1258, 1.0
    %v1291 = vadd.f32 %v1259, 1.0
    %v1292 = vadd.f32 %v1260, 1.0
    %v1293 = vadd.f32 %v1261, 1.0
    %v1294 = vadd.f32 %v1262, 1.0
    %v1295 = vadd.f32 %v1263, 1.0
    %v1296 = vadd.f32 %v1264, 1.0
    %v1297 = vadd.f32 %v1265, 1.0
    %v1298 = vadd.f32 %v1266, 1.0
    %v1299 = vadd.f32 %v1267, 1.0
    %v1300 = vadd.f32 %v1268, 1.0
    %v1301 = vadd.f32 %v1269, 1.0
    %v1302 = vadd.f32 %v1270, 1.0
    %v1303 = vadd.f32 %v1271, 1.0
    %v1304 = vadd.f32 %v1272, 1.0
    %v1305 = vadd.f32 %v1273, 1.0
    %v1306 = vadd.f32 %v1274, 1.0
    %v1307 = vadd.f32 %v1275, 1.0
    %v1308 = vadd.f32 %v1276, 1.0
    %v1309 = vadd.f32 %v1277, 1.0
    %v1310 = vadd.f32 %v1278, 1.0
    %v1311 = vadd.f32 %v1279, 1.0
    %v1312 = vadd.f32 %v1280, 1.0
    %v1313 = vmul.f32 %v1057, %v1281
    %v1314 = vmul.f32 %v1058, %v1282
    %v1315 = vmul.f32 %v1059, %v1283
    %v1316 = vmul.f32 %v1060, %v1284
    %v1317 = vmul.f32 %v1061, %v1285
    %v1318 = vmul.f32 %v1062, %v1286
    %v1319 = vmul.f32 %v1063, %v1287
    %v1320 = vmul.f32 %v1064, %v1288
    %v1321 = vmul.f32 %v1065, %v1289
    %v1322 = vmul.f32 %v1066, %v1290
    %v1323 = vmul.f32 %v1067, %v1291
    %v1324 = vmul.f32 %v1068, %v1292
    %v1325 = vmul.f32 %v1069, %v1293
    %v1326 = vmul.f32 %v1070, %v1294
    %v1327 = vmul.f32 %v1071, %v1295
    %v1328 = vmul.f32 %v1072, %v1296
    %v1329 = vmul.f32 %v1073, %v1297
    %v1330 = vmul.f32 %v1074, %v1298
    %v1331 = vmul.f32 %v1075, %v1299
    %v1332 = vmul.f32 %v1076, %v1300
    %v1333 = vmul.f32 %v1077, %v1301
    %v1334 = vmul.f32 %v1078, %v1302
    %v1335 = vmul.f32 %v1079, %v1303
    %v1336 = vmul.f32 %v1080, %v1304
    %v1337 = vmul.f32 %v1081, %v1305
    %v1338 = vmul.f32 %v1082, %v1306
    %v1339 = vmul.f32 %v1083, %v1307
    %v1340 = vmul.f32 %v1084, %v1308
    %v1341 = vmul.f32 %v1085, %v1309
    %v1342 = vmul.f32 %v1086, %v1310
    %v1343 = vmul.f32 %v1087, %v1311
    %v1344 = vmul.f32 %v1088, %v1312
    %v1345 = vpack.c.bf16 %v1314, %v1313
    %v1346 = vpack.c.bf16 %v1316, %v1315
    %v1347 = vpack.c.bf16 %v1318, %v1317
    %v1348 = vpack.c.bf16 %v1320, %v1319
    %v1349 = vpack.c.bf16 %v1322, %v1321
    %v1350 = vpack.c.bf16 %v1324, %v1323
    %v1351 = vpack.c.bf16 %v1326, %v1325
    %v1352 = vpack.c.bf16 %v1328, %v1327
    %v1353 = vpack.c.bf16 %v1330, %v1329
    %v1354 = vpack.c.bf16 %v1332, %v1331
    %v1355 = vpack.c.bf16 %v1334, %v1333
    %v1356 = vpack.c.bf16 %v1336, %v1335
    %v1357 = vpack.c.bf16 %v1338, %v1337
    %v1358 = vpack.c.bf16 %v1340, %v1339
    %v1359 = vpack.c.bf16 %v1342, %v1341
    %v1360 = vpack.c.bf16 %v1344, %v1343
    %s1361 = scalar_lea.vmem %s1, 128
    %v1362 = vld [vmem:[%s1361] sm:$0xf]
    %v1363 = vld [vmem:[%s1361 + $0x4] sm:$0xf]
    %v1364 = vld [vmem:[%s1361 + $0x8] sm:$0xf]
    %v1365 = vld [vmem:[%s1361 + $0xc] sm:$0xf]
    %v1366 = vld [vmem:[%s1361 + $0x10] sm:$0xf]
    %v1367 = vld [vmem:[%s1361 + $0x14] sm:$0xf]
    %v1368 = vld [vmem:[%s1361 + $0x18] sm:$0xf]
    %v1369 = vld [vmem:[%s1361 + $0x1c] sm:$0xf]
    %v1370 = vld [vmem:[%s1361 + $0x20] sm:$0xf]
    %v1371 = vld [vmem:[%s1361 + $0x24] sm:$0xf]
    %v1372 = vld [vmem:[%s1361 + $0x28] sm:$0xf]
    %v1373 = vld [vmem:[%s1361 + $0x2c] sm:$0xf]
    %v1374 = vld [vmem:[%s1361 + $0x30] sm:$0xf]
    %v1375 = vld [vmem:[%s1361 + $0x34] sm:$0xf]
    %v1376 = vld [vmem:[%s1361 + $0x38] sm:$0xf]
    %v1377 = vld [vmem:[%s1361 + $0x3c] sm:$0xf]
    %v1378 = vld [vmem:[%s5 + $0x4] sm:$0x1]
    %v1379 = vlaneseq
    %v1380 = vshrl.u32 %v1379, 7
    %v1381 = vsub.s32 0, %v1380
    %v1382 = vrot.slane %v1378, %v1381
    %v1399 = vunpack.c.l.b16 %v1362
    %v1400 = vunpack.c.l.b16 %v1363
    %v1401 = vunpack.c.l.b16 %v1364
    %v1402 = vunpack.c.l.b16 %v1365
    %v1403 = vunpack.c.l.b16 %v1366
    %v1404 = vunpack.c.l.b16 %v1367
    %v1405 = vunpack.c.l.b16 %v1368
    %v1406 = vunpack.c.l.b16 %v1369
    %v1407 = vunpack.c.l.b16 %v1370
    %v1408 = vunpack.c.l.b16 %v1371
    %v1409 = vunpack.c.l.b16 %v1372
    %v1410 = vunpack.c.l.b16 %v1373
    %v1411 = vunpack.c.l.b16 %v1374
    %v1412 = vunpack.c.l.b16 %v1375
    %v1413 = vunpack.c.l.b16 %v1376
    %v1414 = vunpack.c.l.b16 %v1377
    %v1415 = vpack.c.b16 %v1400, %v1399
    %v1416 = vpack.c.b16 %v1402, %v1401
    %v1417 = vpack.c.b16 %v1404, %v1403
    %v1418 = vpack.c.b16 %v1406, %v1405
    %v1419 = vpack.c.b16 %v1408, %v1407
    %v1420 = vpack.c.b16 %v1410, %v1409
    %v1421 = vpack.c.b16 %v1412, %v1411
    %v1422 = vpack.c.b16 %v1414, %v1413
    %1431 = vmatprep.subr.bf16.mxu0 0
    %1432 = vmatpush1.bf16.msra.mxu0 %v1415
    %1433 = vmatprep.subr.bf16.mxu0 0
    %1434 = vmatpush1.bf16.msra.mxu0 %v1416
    %1435 = vmatprep.subr.bf16.mxu0 0
    %1436 = vmatpush1.bf16.msra.mxu0 %v1417
    %1437 = vmatprep.subr.bf16.mxu0 0
    %1438 = vmatpush1.bf16.msra.mxu0 %v1418
    %1439 = vmatprep.subr.bf16.mxu0 0
    %1440 = vmatpush1.bf16.msra.mxu0 %v1419
    %1441 = vmatprep.subr.bf16.mxu0 0
    %1442 = vmatpush1.bf16.msra.mxu0 %v1420
    %1443 = vmatprep.subr.bf16.mxu0 0
    %1444 = vmatpush1.bf16.msra.mxu0 %v1421
    %1445 = vmatprep.subr.bf16.mxu0 0
    %1446 = vmatpush1.bf16.msra.mxu0 %v1422
    %1447 = vmatprep.subr.bf16.mxu0 0
    %1448 = vmatpush1.bf16.msra.mxu0 0
    %1449 = vmatprep.subr.bf16.mxu0 0
    %1450 = vmatpush1.bf16.msra.mxu0 0
    %1451 = vmatprep.subr.bf16.mxu0 0
    %1452 = vmatpush1.bf16.msra.mxu0 0
    %1453 = vmatprep.subr.bf16.mxu0 0
    %1454 = vmatpush1.bf16.msra.mxu0 0
    %1455 = vmatprep.subr.bf16.mxu0 0
    %1456 = vmatpush1.bf16.msra.mxu0 0
    %1457 = vmatprep.subr.bf16.mxu0 0
    %1458 = vmatpush1.bf16.msra.mxu0 0
    %1459 = vmatprep.subr.bf16.mxu0 0
    %1460 = vmatpush1.bf16.msra.mxu0 0
    %1461 = vmatprep.subr.bf16.mxu0 0
    %1462 = vmatpush1.bf16.msra.mxu0 0
    %1463 = vmatprep.mubr.bf16.mxu0 0
    %1464 = vmatmul.mubr.bf16.gmra.mrb[0].mxu0 %v1345
    %v1465 = vpop.f32.mrb[0].mxu0
    %v1466 = vadd.f32 %v1382, %v1465
    %v1467 = vpop.f32.mrb[0].mxu0
    %v1468 = vpop.f32.mrb[0].mxu0
    %v1469 = vadd.f32 %v1382, %v1468
    %v1470 = vpop.f32.mrb[0].mxu0
    %1471 = vmatprep.mubr.bf16.mxu0 0
    %1472 = vmatmul.mubr.bf16.gmra.mrb[0].mxu0 %v1346
    %v1473 = vpop.f32.mrb[0].mxu0
    %v1474 = vadd.f32 %v1382, %v1473
    %v1475 = vpop.f32.mrb[0].mxu0
    %v1476 = vpop.f32.mrb[0].mxu0
    %v1477 = vadd.f32 %v1382, %v1476
    %v1478 = vpop.f32.mrb[0].mxu0
    %1479 = vmatprep.mubr.bf16.mxu0 0
    %1480 = vmatmul.mubr.bf16.gmra.mrb[0].mxu0 %v1347
    %v1481 = vpop.f32.mrb[0].mxu0
    %v1482 = vadd.f32 %v1382, %v1481
    %v1483 = vpop.f32.mrb[0].mxu0
    %v1484 = vpop.f32.mrb[0].mxu0
    %v1485 = vadd.f32 %v1382, %v1484
    %v1486 = vpop.f32.mrb[0].mxu0
    %1487 = vmatprep.mubr.bf16.mxu0 0
    %1488 = vmatmul.mubr.bf16.gmra.mrb[0].mxu0 %v1348
    %v1489 = vpop.f32.mrb[0].mxu0
    %v1490 = vadd.f32 %v1382, %v1489
    %v1491 = vpop.f32.mrb[0].mxu0
    %v1492 = vpop.f32.mrb[0].mxu0
    %v1493 = vadd.f32 %v1382, %v1492
    %v1494 = vpop.f32.mrb[0].mxu0
    %1495 = vmatprep.mubr.bf16.mxu0 0
    %1496 = vmatmul.mubr.bf16.gmra.mrb[0].mxu0 %v1349
    %v1497 = vpop.f32.mrb[0].mxu0
    %v1498 = vadd.f32 %v1382, %v1497
    %v1499 = vpop.f32.mrb[0].mxu0
    %v1500 = vpop.f32.mrb[0].mxu0
    %v1501 = vadd.f32 %v1382, %v1500
    %v1502 = vpop.f32.mrb[0].mxu0
    %1503 = vmatprep.mubr.bf16.mxu0 0
    %1504 = vmatmul.mubr.bf16.gmra.mrb[0].mxu0 %v1350
    %v1505 = vpop.f32.mrb[0].mxu0
    %v1506 = vadd.f32 %v1382, %v1505
    %v1507 = vpop.f32.mrb[0].mxu0
    %v1508 = vpop.f32.mrb[0].mxu0
    %v1509 = vadd.f32 %v1382, %v1508
    %v1510 = vpop.f32.mrb[0].mxu0
    %1511 = vmatprep.mubr.bf16.mxu0 0
    %1512 = vmatmul.mubr.bf16.gmra.mrb[0].mxu0 %v1351
    %v1513 = vpop.f32.mrb[0].mxu0
    %v1514 = vadd.f32 %v1382, %v1513
    %v1515 = vpop.f32.mrb[0].mxu0
    %v1516 = vpop.f32.mrb[0].mxu0
    %v1517 = vadd.f32 %v1382, %v1516
    %v1518 = vpop.f32.mrb[0].mxu0
    %1519 = vmatprep.mubr.bf16.mxu0 0
    %1520 = vmatmul.mubr.bf16.gmra.mrb[0].mxu0 %v1352
    %v1521 = vpop.f32.mrb[0].mxu0
    %v1522 = vadd.f32 %v1382, %v1521
    %v1523 = vpop.f32.mrb[0].mxu0
    %v1524 = vpop.f32.mrb[0].mxu0
    %v1525 = vadd.f32 %v1382, %v1524
    %v1526 = vpop.f32.mrb[0].mxu0
    %1527 = vmatprep.mubr.bf16.mxu0 0
    %1528 = vmatmul.mubr.bf16.gmra.mrb[0].mxu0 %v1353
    %v1529 = vpop.f32.mrb[0].mxu0
    %v1530 = vadd.f32 %v1382, %v1529
    %v1531 = vpop.f32.mrb[0].mxu0
    %v1532 = vpop.f32.mrb[0].mxu0
    %v1533 = vadd.f32 %v1382, %v1532
    %v1534 = vpop.f32.mrb[0].mxu0
    %1535 = vmatprep.mubr.bf16.mxu0 0
    %1536 = vmatmul.mubr.bf16.gmra.mrb[0].mxu0 %v1354
    %v1537 = vpop.f32.mrb[0].mxu0
    %v1538 = vadd.f32 %v1382, %v1537
    %v1539 = vpop.f32.mrb[0].mxu0
    %v1540 = vpop.f32.mrb[0].mxu0
    %v1541 = vadd.f32 %v1382, %v1540
    %v1542 = vpop.f32.mrb[0].mxu0
    %1543 = vmatprep.mubr.bf16.mxu0 0
    %1544 = vmatmul.mubr.bf16.gmra.mrb[0].mxu0 %v1355
    %v1545 = vpop.f32.mrb[0].mxu0
    %v1546 = vadd.f32 %v1382, %v1545
    %v1547 = vpop.f32.mrb[0].mxu0
    %v1548 = vpop.f32.mrb[0].mxu0
    %v1549 = vadd.f32 %v1382, %v1548
    %v1550 = vpop.f32.mrb[0].mxu0
    %1551 = vmatprep.mubr.bf16.mxu0 0
    %1552 = vmatmul.mubr.bf16.gmra.mrb[0].mxu0 %v1356
    %v1553 = vpop.f32.mrb[0].mxu0
    %v1554 = vadd.f32 %v1382, %v1553
    %v1555 = vpop.f32.mrb[0].mxu0
    %v1556 = vpop.f32.mrb[0].mxu0
    %v1557 = vadd.f32 %v1382, %v1556
    %v1558 = vpop.f32.mrb[0].mxu0
    %1559 = vmatprep.mubr.bf16.mxu0 0
    %1560 = vmatmul.mubr.bf16.gmra.mrb[0].mxu0 %v1357
    %v1561 = vpop.f32.mrb[0].mxu0
    %v1562 = vadd.f32 %v1382, %v1561
    %v1563 = vpop.f32.mrb[0].mxu0
    %v1564 = vpop.f32.mrb[0].mxu0
    %v1565 = vadd.f32 %v1382, %v1564
    %v1566 = vpop.f32.mrb[0].mxu0
    %1567 = vmatprep.mubr.bf16.mxu0 0
    %1568 = vmatmul.mubr.bf16.gmra.mrb[0].mxu0 %v1358
    %v1569 = vpop.f32.mrb[0].mxu0
    %v1570 = vadd.f32 %v1382, %v1569
    %v1571 = vpop.f32.mrb[0].mxu0
    %v1572 = vpop.f32.mrb[0].mxu0
    %v1573 = vadd.f32 %v1382, %v1572
    %v1574 = vpop.f32.mrb[0].mxu0
    %1575 = vmatprep.mubr.bf16.mxu0 0
    %1576 = vmatmul.mubr.bf16.gmra.mrb[0].mxu0 %v1359
    %v1577 = vpop.f32.mrb[0].mxu0
    %v1578 = vadd.f32 %v1382, %v1577
    %v1579 = vpop.f32.mrb[0].mxu0
    %v1580 = vpop.f32.mrb[0].mxu0
    %v1581 = vadd.f32 %v1382, %v1580
    %v1582 = vpop.f32.mrb[0].mxu0
    %1583 = vmatprep.mubr.bf16.mxu0 0
    %1584 = vmatmul.mubr.bf16.gmra.mrb[0].mxu0 %v1360
    %v1585 = vpop.f32.mrb[0].mxu0
    %v1586 = vadd.f32 %v1382, %v1585
    %v1587 = vpop.f32.mrb[0].mxu0
    %v1588 = vpop.f32.mrb[0].mxu0
    %v1589 = vadd.f32 %v1382, %v1588
    %v1590 = vpop.f32.mrb[0].mxu0
    %1591 = vdwg.mxu0
    %v1592 = vld [vmem:[%s5 + $0x5] sm:$0x1]
    %v1593 = vld [vmem:[%s5 + $0x6] sm:$0x1]
    %1594 = vadd.xlane.f32.xlu0 %v1466
    %v1595 = vpop.xlane.xlu0 %1594
    %1596 = vadd.xlane.f32.xlu0 %v1469
    %v1597 = vpop.xlane.xlu0 %1596
    %1598 = vadd.xlane.f32.xlu0 %v1474
    %v1599 = vpop.xlane.xlu0 %1598
    %1600 = vadd.xlane.f32.xlu0 %v1477
    %v1601 = vpop.xlane.xlu0 %1600
    %1602 = vadd.xlane.f32.xlu0 %v1482
    %v1603 = vpop.xlane.xlu0 %1602
    %1604 = vadd.xlane.f32.xlu0 %v1485
    %v1605 = vpop.xlane.xlu0 %1604
    %1606 = vadd.xlane.f32.xlu0 %v1490
    %v1607 = vpop.xlane.xlu0 %1606
    %1608 = vadd.xlane.f32.xlu0 %v1493
    %v1609 = vpop.xlane.xlu0 %1608
    %1610 = vadd.xlane.f32.xlu0 %v1498
    %v1611 = vpop.xlane.xlu0 %1610
    %1612 = vadd.xlane.f32.xlu0 %v1501
    %v1613 = vpop.xlane.xlu0 %1612
    %1614 = vadd.xlane.f32.xlu0 %v1506
    %v1615 = vpop.xlane.xlu0 %1614
    %1616 = vadd.xlane.f32.xlu0 %v1509
    %v1617 = vpop.xlane.xlu0 %1616
    %1618 = vadd.xlane.f32.xlu0 %v1514
    %v1619 = vpop.xlane.xlu0 %1618
    %1620 = vadd.xlane.f32.xlu0 %v1517
    %v1621 = vpop.xlane.xlu0 %1620
    %1622 = vadd.xlane.f32.xlu0 %v1522
    %v1623 = vpop.xlane.xlu0 %1622
    %1624 = vadd.xlane.f32.xlu0 %v1525
    %v1625 = vpop.xlane.xlu0 %1624
    %1626 = vadd.xlane.f32.xlu0 %v1530
    %v1627 = vpop.xlane.xlu0 %1626
    %1628 = vadd.xlane.f32.xlu0 %v1533
    %v1629 = vpop.xlane.xlu0 %1628
    %1630 = vadd.xlane.f32.xlu0 %v1538
    %v1631 = vpop.xlane.xlu0 %1630
    %1632 = vadd.xlane.f32.xlu0 %v1541
    %v1633 = vpop.xlane.xlu0 %1632
    %1634 = vadd.xlane.f32.xlu0 %v1546
    %v1635 = vpop.xlane.xlu0 %1634
    %1636 = vadd.xlane.f32.xlu0 %v1549
    %v1637 = vpop.xlane.xlu0 %1636
    %1638 = vadd.xlane.f32.xlu0 %v1554
    %v1639 = vpop.xlane.xlu0 %1638
    %1640 = vadd.xlane.f32.xlu0 %v1557
    %v1641 = vpop.xlane.xlu0 %1640
    %1642 = vadd.xlane.f32.xlu0 %v1562
    %v1643 = vpop.xlane.xlu0 %1642
    %1644 = vadd.xlane.f32.xlu0 %v1565
    %v1645 = vpop.xlane.xlu0 %1644
    %1646 = vadd.xlane.f32.xlu0 %v1570
    %v1647 = vpop.xlane.xlu0 %1646
    %1648 = vadd.xlane.f32.xlu0 %v1573
    %v1649 = vpop.xlane.xlu0 %1648
    %1650 = vadd.xlane.f32.xlu0 %v1578
    %v1651 = vpop.xlane.xlu0 %1650
    %1652 = vadd.xlane.f32.xlu0 %v1581
    %v1653 = vpop.xlane.xlu0 %1652
    %1654 = vadd.xlane.f32.xlu0 %v1586
    %v1655 = vpop.xlane.xlu0 %1654
    %1656 = vadd.xlane.f32.xlu0 %v1589
    %v1657 = vpop.xlane.xlu0 %1656
    %v1658 = vmul.f32 %v1595, %v449
    %v1659 = vmul.f32 %v1597, %v449
    %v1660 = vmul.f32 %v1599, %v449
    %v1661 = vmul.f32 %v1601, %v449
    %v1662 = vmul.f32 %v1603, %v449
    %v1663 = vmul.f32 %v1605, %v449
    %v1664 = vmul.f32 %v1607, %v449
    %v1665 = vmul.f32 %v1609, %v449
    %v1666 = vmul.f32 %v1611, %v449
    %v1667 = vmul.f32 %v1613, %v449
    %v1668 = vmul.f32 %v1615, %v449
    %v1669 = vmul.f32 %v1617, %v449
    %v1670 = vmul.f32 %v1619, %v449
    %v1671 = vmul.f32 %v1621, %v449
    %v1672 = vmul.f32 %v1623, %v449
    %v1673 = vmul.f32 %v1625, %v449
    %v1674 = vmul.f32 %v1627, %v449
    %v1675 = vmul.f32 %v1629, %v449
    %v1676 = vmul.f32 %v1631, %v449
    %v1677 = vmul.f32 %v1633, %v449
    %v1678 = vmul.f32 %v1635, %v449
    %v1679 = vmul.f32 %v1637, %v449
    %v1680 = vmul.f32 %v1639, %v449
    %v1681 = vmul.f32 %v1641, %v449
    %v1682 = vmul.f32 %v1643, %v449
    %v1683 = vmul.f32 %v1645, %v449
    %v1684 = vmul.f32 %v1647, %v449
    %v1685 = vmul.f32 %v1649, %v449
    %v1686 = vmul.f32 %v1651, %v449
    %v1687 = vmul.f32 %v1653, %v449
    %v1688 = vmul.f32 %v1655, %v449
    %v1689 = vmul.f32 %v1657, %v449
    %v1690 = vsub.f32 %v1466, %v1658
    %v1691 = vsub.f32 %v1469, %v1659
    %v1692 = vsub.f32 %v1474, %v1660
    %v1693 = vsub.f32 %v1477, %v1661
    %v1694 = vsub.f32 %v1482, %v1662
    %v1695 = vsub.f32 %v1485, %v1663
    %v1696 = vsub.f32 %v1490, %v1664
    %v1697 = vsub.f32 %v1493, %v1665
    %v1698 = vsub.f32 %v1498, %v1666
    %v1699 = vsub.f32 %v1501, %v1667
    %v1700 = vsub.f32 %v1506, %v1668
    %v1701 = vsub.f32 %v1509, %v1669
    %v1702 = vsub.f32 %v1514, %v1670
    %v1703 = vsub.f32 %v1517, %v1671
    %v1704 = vsub.f32 %v1522, %v1672
    %v1705 = vsub.f32 %v1525, %v1673
    %v1706 = vsub.f32 %v1530, %v1674
    %v1707 = vsub.f32 %v1533, %v1675
    %v1708 = vsub.f32 %v1538, %v1676
    %v1709 = vsub.f32 %v1541, %v1677
    %v1710 = vsub.f32 %v1546, %v1678
    %v1711 = vsub.f32 %v1549, %v1679
    %v1712 = vsub.f32 %v1554, %v1680
    %v1713 = vsub.f32 %v1557, %v1681
    %v1714 = vsub.f32 %v1562, %v1682
    %v1715 = vsub.f32 %v1565, %v1683
    %v1716 = vsub.f32 %v1570, %v1684
    %v1717 = vsub.f32 %v1573, %v1685
    %v1718 = vsub.f32 %v1578, %v1686
    %v1719 = vsub.f32 %v1581, %v1687
    %v1720 = vsub.f32 %v1586, %v1688
    %v1721 = vsub.f32 %v1589, %v1689
    %v1722 = vmul.f32 %v1690, %v1690
    %v1723 = vmul.f32 %v1691, %v1691
    %v1724 = vmul.f32 %v1692, %v1692
    %v1725 = vmul.f32 %v1693, %v1693
    %v1726 = vmul.f32 %v1694, %v1694
    %v1727 = vmul.f32 %v1695, %v1695
    %v1728 = vmul.f32 %v1696, %v1696
    %v1729 = vmul.f32 %v1697, %v1697
    %v1730 = vmul.f32 %v1698, %v1698
    %v1731 = vmul.f32 %v1699, %v1699
    %v1732 = vmul.f32 %v1700, %v1700
    %v1733 = vmul.f32 %v1701, %v1701
    %v1734 = vmul.f32 %v1702, %v1702
    %v1735 = vmul.f32 %v1703, %v1703
    %v1736 = vmul.f32 %v1704, %v1704
    %v1737 = vmul.f32 %v1705, %v1705
    %v1738 = vmul.f32 %v1706, %v1706
    %v1739 = vmul.f32 %v1707, %v1707
    %v1740 = vmul.f32 %v1708, %v1708
    %v1741 = vmul.f32 %v1709, %v1709
    %v1742 = vmul.f32 %v1710, %v1710
    %v1743 = vmul.f32 %v1711, %v1711
    %v1744 = vmul.f32 %v1712, %v1712
    %v1745 = vmul.f32 %v1713, %v1713
    %v1746 = vmul.f32 %v1714, %v1714
    %v1747 = vmul.f32 %v1715, %v1715
    %v1748 = vmul.f32 %v1716, %v1716
    %v1749 = vmul.f32 %v1717, %v1717
    %v1750 = vmul.f32 %v1718, %v1718
    %v1751 = vmul.f32 %v1719, %v1719
    %v1752 = vmul.f32 %v1720, %v1720
    %v1753 = vmul.f32 %v1721, %v1721
    %1754 = vadd.xlane.f32.xlu0 %v1722
    %v1755 = vpop.xlane.xlu0 %1754
    %1756 = vadd.xlane.f32.xlu0 %v1723
    %v1757 = vpop.xlane.xlu0 %1756
    %1758 = vadd.xlane.f32.xlu0 %v1724
    %v1759 = vpop.xlane.xlu0 %1758
    %1760 = vadd.xlane.f32.xlu0 %v1725
    %v1761 = vpop.xlane.xlu0 %1760
    %1762 = vadd.xlane.f32.xlu0 %v1726
    %v1763 = vpop.xlane.xlu0 %1762
    %1764 = vadd.xlane.f32.xlu0 %v1727
    %v1765 = vpop.xlane.xlu0 %1764
    %1766 = vadd.xlane.f32.xlu0 %v1728
    %v1767 = vpop.xlane.xlu0 %1766
    %1768 = vadd.xlane.f32.xlu0 %v1729
    %v1769 = vpop.xlane.xlu0 %1768
    %1770 = vadd.xlane.f32.xlu0 %v1730
    %v1771 = vpop.xlane.xlu0 %1770
    %1772 = vadd.xlane.f32.xlu0 %v1731
    %v1773 = vpop.xlane.xlu0 %1772
    %1774 = vadd.xlane.f32.xlu0 %v1732
    %v1775 = vpop.xlane.xlu0 %1774
    %1776 = vadd.xlane.f32.xlu0 %v1733
    %v1777 = vpop.xlane.xlu0 %1776
    %1778 = vadd.xlane.f32.xlu0 %v1734
    %v1779 = vpop.xlane.xlu0 %1778
    %1780 = vadd.xlane.f32.xlu0 %v1735
    %v1781 = vpop.xlane.xlu0 %1780
    %1782 = vadd.xlane.f32.xlu0 %v1736
    %v1783 = vpop.xlane.xlu0 %1782
    %1784 = vadd.xlane.f32.xlu0 %v1737
    %v1785 = vpop.xlane.xlu0 %1784
    %1786 = vadd.xlane.f32.xlu0 %v1738
    %v1787 = vpop.xlane.xlu0 %1786
    %1788 = vadd.xlane.f32.xlu0 %v1739
    %v1789 = vpop.xlane.xlu0 %1788
    %1790 = vadd.xlane.f32.xlu0 %v1740
    %v1791 = vpop.xlane.xlu0 %1790
    %1792 = vadd.xlane.f32.xlu0 %v1741
    %v1793 = vpop.xlane.xlu0 %1792
    %1794 = vadd.xlane.f32.xlu0 %v1742
    %v1795 = vpop.xlane.xlu0 %1794
    %1796 = vadd.xlane.f32.xlu0 %v1743
    %v1797 = vpop.xlane.xlu0 %1796
    %1798 = vadd.xlane.f32.xlu0 %v1744
    %v1799 = vpop.xlane.xlu0 %1798
    %1800 = vadd.xlane.f32.xlu0 %v1745
    %v1801 = vpop.xlane.xlu0 %1800
    %1802 = vadd.xlane.f32.xlu0 %v1746
    %v1803 = vpop.xlane.xlu0 %1802
    %1804 = vadd.xlane.f32.xlu0 %v1747
    %v1805 = vpop.xlane.xlu0 %1804
    %1806 = vadd.xlane.f32.xlu0 %v1748
    %v1807 = vpop.xlane.xlu0 %1806
    %1808 = vadd.xlane.f32.xlu0 %v1749
    %v1809 = vpop.xlane.xlu0 %1808
    %1810 = vadd.xlane.f32.xlu0 %v1750
    %v1811 = vpop.xlane.xlu0 %1810
    %1812 = vadd.xlane.f32.xlu0 %v1751
    %v1813 = vpop.xlane.xlu0 %1812
    %1814 = vadd.xlane.f32.xlu0 %v1752
    %v1815 = vpop.xlane.xlu0 %1814
    %1816 = vadd.xlane.f32.xlu0 %v1753
    %v1817 = vpop.xlane.xlu0 %1816
    %v1818 = vmul.f32 %v1755, %v449
    %v1819 = vmul.f32 %v1757, %v449
    %v1820 = vmul.f32 %v1759, %v449
    %v1821 = vmul.f32 %v1761, %v449
    %v1822 = vmul.f32 %v1763, %v449
    %v1823 = vmul.f32 %v1765, %v449
    %v1824 = vmul.f32 %v1767, %v449
    %v1825 = vmul.f32 %v1769, %v449
    %v1826 = vmul.f32 %v1771, %v449
    %v1827 = vmul.f32 %v1773, %v449
    %v1828 = vmul.f32 %v1775, %v449
    %v1829 = vmul.f32 %v1777, %v449
    %v1830 = vmul.f32 %v1779, %v449
    %v1831 = vmul.f32 %v1781, %v449
    %v1832 = vmul.f32 %v1783, %v449
    %v1833 = vmul.f32 %v1785, %v449
    %v1834 = vmul.f32 %v1787, %v449
    %v1835 = vmul.f32 %v1789, %v449
    %v1836 = vmul.f32 %v1791, %v449
    %v1837 = vmul.f32 %v1793, %v449
    %v1838 = vmul.f32 %v1795, %v449
    %v1839 = vmul.f32 %v1797, %v449
    %v1840 = vmul.f32 %v1799, %v449
    %v1841 = vmul.f32 %v1801, %v449
    %v1842 = vmul.f32 %v1803, %v449
    %v1843 = vmul.f32 %v1805, %v449
    %v1844 = vmul.f32 %v1807, %v449
    %v1845 = vmul.f32 %v1809, %v449
    %v1846 = vmul.f32 %v1811, %v449
    %v1847 = vmul.f32 %v1813, %v449
    %v1848 = vmul.f32 %v1815, %v449
    %v1849 = vmul.f32 %v1817, %v449
    %v1850 = vadd.f32 %v1818, 1e-05
    %v1851 = vadd.f32 %v1819, 1e-05
    %v1852 = vadd.f32 %v1820, 1e-05
    %v1853 = vadd.f32 %v1821, 1e-05
    %v1854 = vadd.f32 %v1822, 1e-05
    %v1855 = vadd.f32 %v1823, 1e-05
    %v1856 = vadd.f32 %v1824, 1e-05
    %v1857 = vadd.f32 %v1825, 1e-05
    %v1858 = vadd.f32 %v1826, 1e-05
    %v1859 = vadd.f32 %v1827, 1e-05
    %v1860 = vadd.f32 %v1828, 1e-05
    %v1861 = vadd.f32 %v1829, 1e-05
    %v1862 = vadd.f32 %v1830, 1e-05
    %v1863 = vadd.f32 %v1831, 1e-05
    %v1864 = vadd.f32 %v1832, 1e-05
    %v1865 = vadd.f32 %v1833, 1e-05
    %v1866 = vadd.f32 %v1834, 1e-05
    %v1867 = vadd.f32 %v1835, 1e-05
    %v1868 = vadd.f32 %v1836, 1e-05
    %v1869 = vadd.f32 %v1837, 1e-05
    %v1870 = vadd.f32 %v1838, 1e-05
    %v1871 = vadd.f32 %v1839, 1e-05
    %v1872 = vadd.f32 %v1840, 1e-05
    %v1873 = vadd.f32 %v1841, 1e-05
    %v1874 = vadd.f32 %v1842, 1e-05
    %v1875 = vadd.f32 %v1843, 1e-05
    %v1876 = vadd.f32 %v1844, 1e-05
    %v1877 = vadd.f32 %v1845, 1e-05
    %v1878 = vadd.f32 %v1846, 1e-05
    %v1879 = vadd.f32 %v1847, 1e-05
    %v1880 = vadd.f32 %v1848, 1e-05
    %v1881 = vadd.f32 %v1849, 1e-05
    %v1882 = vrsqrt.pop %v1850
    %v1883 = vrsqrt.pop %v1851
    %v1884 = vrsqrt.pop %v1852
    %v1885 = vrsqrt.pop %v1853
    %v1886 = vrsqrt.pop %v1854
    %v1887 = vrsqrt.pop %v1855
    %v1888 = vrsqrt.pop %v1856
    %v1889 = vrsqrt.pop %v1857
    %v1890 = vrsqrt.pop %v1858
    %v1891 = vrsqrt.pop %v1859
    %v1892 = vrsqrt.pop %v1860
    %v1893 = vrsqrt.pop %v1861
    %v1894 = vrsqrt.pop %v1862
    %v1895 = vrsqrt.pop %v1863
    %v1896 = vrsqrt.pop %v1864
    %v1897 = vrsqrt.pop %v1865
    %v1898 = vrsqrt.pop %v1866
    %v1899 = vrsqrt.pop %v1867
    %v1900 = vrsqrt.pop %v1868
    %v1901 = vrsqrt.pop %v1869
    %v1902 = vrsqrt.pop %v1870
    %v1903 = vrsqrt.pop %v1871
    %v1904 = vrsqrt.pop %v1872
    %v1905 = vrsqrt.pop %v1873
    %v1906 = vrsqrt.pop %v1874
    %v1907 = vrsqrt.pop %v1875
    %v1908 = vrsqrt.pop %v1876
    %v1909 = vrsqrt.pop %v1877
    %v1910 = vrsqrt.pop %v1878
    %v1911 = vrsqrt.pop %v1879
    %v1912 = vrsqrt.pop %v1880
    %v1913 = vrsqrt.pop %v1881
    %v1914 = vmul.f32 %v1690, %v1882
    %v1915 = vmul.f32 %v1691, %v1883
    %v1916 = vmul.f32 %v1692, %v1884
    %v1917 = vmul.f32 %v1693, %v1885
    %v1918 = vmul.f32 %v1694, %v1886
    %v1919 = vmul.f32 %v1695, %v1887
    %v1920 = vmul.f32 %v1696, %v1888
    %v1921 = vmul.f32 %v1697, %v1889
    %v1922 = vmul.f32 %v1698, %v1890
    %v1923 = vmul.f32 %v1699, %v1891
    %v1924 = vmul.f32 %v1700, %v1892
    %v1925 = vmul.f32 %v1701, %v1893
    %v1926 = vmul.f32 %v1702, %v1894
    %v1927 = vmul.f32 %v1703, %v1895
    %v1928 = vmul.f32 %v1704, %v1896
    %v1929 = vmul.f32 %v1705, %v1897
    %v1930 = vmul.f32 %v1706, %v1898
    %v1931 = vmul.f32 %v1707, %v1899
    %v1932 = vmul.f32 %v1708, %v1900
    %v1933 = vmul.f32 %v1709, %v1901
    %v1934 = vmul.f32 %v1710, %v1902
    %v1935 = vmul.f32 %v1711, %v1903
    %v1936 = vmul.f32 %v1712, %v1904
    %v1937 = vmul.f32 %v1713, %v1905
    %v1938 = vmul.f32 %v1714, %v1906
    %v1939 = vmul.f32 %v1715, %v1907
    %v1940 = vmul.f32 %v1716, %v1908
    %v1941 = vmul.f32 %v1717, %v1909
    %v1942 = vmul.f32 %v1718, %v1910
    %v1943 = vmul.f32 %v1719, %v1911
    %v1944 = vmul.f32 %v1720, %v1912
    %v1945 = vmul.f32 %v1721, %v1913
    %v1946 = vlaneseq
    %v1947 = vshrl.u32 %v1946, 7
    %v1948 = vsub.s32 0, %v1947
    %v1949 = vrot.slane %v1592, %v1948
    %v1950 = vmul.f32 %v1914, %v1949
    %v1951 = vmul.f32 %v1915, %v1949
    %v1952 = vmul.f32 %v1916, %v1949
    %v1953 = vmul.f32 %v1917, %v1949
    %v1954 = vmul.f32 %v1918, %v1949
    %v1955 = vmul.f32 %v1919, %v1949
    %v1956 = vmul.f32 %v1920, %v1949
    %v1957 = vmul.f32 %v1921, %v1949
    %v1958 = vmul.f32 %v1922, %v1949
    %v1959 = vmul.f32 %v1923, %v1949
    %v1960 = vmul.f32 %v1924, %v1949
    %v1961 = vmul.f32 %v1925, %v1949
    %v1962 = vmul.f32 %v1926, %v1949
    %v1963 = vmul.f32 %v1927, %v1949
    %v1964 = vmul.f32 %v1928, %v1949
    %v1965 = vmul.f32 %v1929, %v1949
    %v1966 = vmul.f32 %v1930, %v1949
    %v1967 = vmul.f32 %v1931, %v1949
    %v1968 = vmul.f32 %v1932, %v1949
    %v1969 = vmul.f32 %v1933, %v1949
    %v1970 = vmul.f32 %v1934, %v1949
    %v1971 = vmul.f32 %v1935, %v1949
    %v1972 = vmul.f32 %v1936, %v1949
    %v1973 = vmul.f32 %v1937, %v1949
    %v1974 = vmul.f32 %v1938, %v1949
    %v1975 = vmul.f32 %v1939, %v1949
    %v1976 = vmul.f32 %v1940, %v1949
    %v1977 = vmul.f32 %v1941, %v1949
    %v1978 = vmul.f32 %v1942, %v1949
    %v1979 = vmul.f32 %v1943, %v1949
    %v1980 = vmul.f32 %v1944, %v1949
    %v1981 = vmul.f32 %v1945, %v1949
    %v1982 = vlaneseq
    %v1983 = vshrl.u32 %v1982, 7
    %v1984 = vsub.s32 0, %v1983
    %v1985 = vrot.slane %v1593, %v1984
    %v1986 = vadd.f32 %v1950, %v1985
    %v1987 = vadd.f32 %v1951, %v1985
    %v1988 = vadd.f32 %v1952, %v1985
    %v1989 = vadd.f32 %v1953, %v1985
    %v1990 = vadd.f32 %v1954, %v1985
    %v1991 = vadd.f32 %v1955, %v1985
    %v1992 = vadd.f32 %v1956, %v1985
    %v1993 = vadd.f32 %v1957, %v1985
    %v1994 = vadd.f32 %v1958, %v1985
    %v1995 = vadd.f32 %v1959, %v1985
    %v1996 = vadd.f32 %v1960, %v1985
    %v1997 = vadd.f32 %v1961, %v1985
    %v1998 = vadd.f32 %v1962, %v1985
    %v1999 = vadd.f32 %v1963, %v1985
    %v2000 = vadd.f32 %v1964, %v1985
    %v2001 = vadd.f32 %v1965, %v1985
    %v2002 = vadd.f32 %v1966, %v1985
    %v2003 = vadd.f32 %v1967, %v1985
    %v2004 = vadd.f32 %v1968, %v1985
    %v2005 = vadd.f32 %v1969, %v1985
    %v2006 = vadd.f32 %v1970, %v1985
    %v2007 = vadd.f32 %v1971, %v1985
    %v2008 = vadd.f32 %v1972, %v1985
    %v2009 = vadd.f32 %v1973, %v1985
    %v2010 = vadd.f32 %v1974, %v1985
    %v2011 = vadd.f32 %v1975, %v1985
    %v2012 = vadd.f32 %v1976, %v1985
    %v2013 = vadd.f32 %v1977, %v1985
    %v2014 = vadd.f32 %v1978, %v1985
    %v2015 = vadd.f32 %v1979, %v1985
    %v2016 = vadd.f32 %v1980, %v1985
    %v2017 = vadd.f32 %v1981, %v1985
    %v2018 = vpack.c.bf16 %v1987, %v1986
    %v2019 = vpack.c.bf16 %v1989, %v1988
    %v2020 = vpack.c.bf16 %v1991, %v1990
    %v2021 = vpack.c.bf16 %v1993, %v1992
    %v2022 = vpack.c.bf16 %v1995, %v1994
    %v2023 = vpack.c.bf16 %v1997, %v1996
    %v2024 = vpack.c.bf16 %v1999, %v1998
    %v2025 = vpack.c.bf16 %v2001, %v2000
    %v2026 = vpack.c.bf16 %v2003, %v2002
    %v2027 = vpack.c.bf16 %v2005, %v2004
    %v2028 = vpack.c.bf16 %v2007, %v2006
    %v2029 = vpack.c.bf16 %v2009, %v2008
    %v2030 = vpack.c.bf16 %v2011, %v2010
    %v2031 = vpack.c.bf16 %v2013, %v2012
    %v2032 = vpack.c.bf16 %v2015, %v2014
    %v2033 = vpack.c.bf16 %v2017, %v2016
    %v2034 = vld [vmem:[%s5 + $0x7] sm:$0x1]
    %v2035 = vlaneseq
    %v2036 = vshrl.u32 %v2035, 7
    %v2037 = vsub.s32 0, %v2036
    %v2038 = vrot.slane %v2034, %v2037
    %v2039 = vadd.f32 %v257, %v2038
    %v2040 = vadd.f32 %v260, %v2038
    %v2041 = vadd.f32 %v265, %v2038
    %v2042 = vadd.f32 %v268, %v2038
    %v2043 = vadd.f32 %v273, %v2038
    %v2044 = vadd.f32 %v276, %v2038
    %v2045 = vadd.f32 %v281, %v2038
    %v2046 = vadd.f32 %v284, %v2038
    %v2047 = vadd.f32 %v289, %v2038
    %v2048 = vadd.f32 %v292, %v2038
    %v2049 = vadd.f32 %v297, %v2038
    %v2050 = vadd.f32 %v300, %v2038
    %v2051 = vadd.f32 %v305, %v2038
    %v2052 = vadd.f32 %v308, %v2038
    %v2053 = vadd.f32 %v313, %v2038
    %v2054 = vadd.f32 %v316, %v2038
    %v2055 = vadd.f32 %v321, %v2038
    %v2056 = vadd.f32 %v324, %v2038
    %v2057 = vadd.f32 %v329, %v2038
    %v2058 = vadd.f32 %v332, %v2038
    %v2059 = vadd.f32 %v337, %v2038
    %v2060 = vadd.f32 %v340, %v2038
    %v2061 = vadd.f32 %v345, %v2038
    %v2062 = vadd.f32 %v348, %v2038
    %v2063 = vadd.f32 %v353, %v2038
    %v2064 = vadd.f32 %v356, %v2038
    %v2065 = vadd.f32 %v361, %v2038
    %v2066 = vadd.f32 %v364, %v2038
    %v2067 = vadd.f32 %v369, %v2038
    %v2068 = vadd.f32 %v372, %v2038
    %v2069 = vadd.f32 %v377, %v2038
    %v2070 = vadd.f32 %v380, %v2038
    %v2071 = vld [vmem:[%s2] sm:$0xff]
    %v2072 = vld [vmem:[%s2 + $0x10] sm:$0xff]
    %v2073 = vld [vmem:[%s2 + $0x20] sm:$0xff]
    %v2074 = vld [vmem:[%s2 + $0x30] sm:$0xff]
    %v2075 = vld [vmem:[%s2 + $0x40] sm:$0xff]
    %v2076 = vld [vmem:[%s2 + $0x50] sm:$0xff]
    %v2077 = vld [vmem:[%s2 + $0x60] sm:$0xff]
    %v2078 = vld [vmem:[%s2 + $0x70] sm:$0xff]
    %v2079 = vld [vmem:[%s2 + $0x80] sm:$0xff]
    %v2080 = vld [vmem:[%s2 + $0x90] sm:$0xff]
    %v2081 = vld [vmem:[%s2 + $0xa0] sm:$0xff]
    %v2082 = vld [vmem:[%s2 + $0xb0] sm:$0xff]
    %v2083 = vld [vmem:[%s2 + $0xc0] sm:$0xff]
    %v2084 = vld [vmem:[%s2 + $0xd0] sm:$0xff]
    %v2085 = vld [vmem:[%s2 + $0xe0] sm:$0xff]
    %v2086 = vld [vmem:[%s2 + $0xf0] sm:$0xff]
    %v2087 = vld [vmem:[%s4] ss:$2 sm:$0x3]
    %v2089 = vlaneseq
    %v2090 = vshrl.u32 %v2089, 7
    %v2091 = vsub.s32 0, %v2090
    %v2092 = vrot.slane %v2087, %v2091
    %v2093 = vlaneseq
    %v2094 = vshrl.u32 %v2093, 7
    %v2095 = vsub.s32 1, %v2094
    %v2096 = vrot.slane %v2087, %v2095
    %v2115 = vunpack.c.l.b16 %v2071
    %v2116 = vunpack.c.h.b16 %v2071
    %v2117 = vunpack.c.l.b16 %v2072
    %v2118 = vunpack.c.h.b16 %v2072
    %v2119 = vunpack.c.l.b16 %v2073
    %v2120 = vunpack.c.h.b16 %v2073
    %v2121 = vunpack.c.l.b16 %v2074
    %v2122 = vunpack.c.h.b16 %v2074
    %v2123 = vunpack.c.l.b16 %v2075
    %v2124 = vunpack.c.h.b16 %v2075
    %v2125 = vunpack.c.l.b16 %v2076
    %v2126 = vunpack.c.h.b16 %v2076
    %v2127 = vunpack.c.l.b16 %v2077
    %v2128 = vunpack.c.h.b16 %v2077
    %v2129 = vunpack.c.l.b16 %v2078
    %v2130 = vunpack.c.h.b16 %v2078
    %v2131 = vunpack.c.l.b16 %v2079
    %v2132 = vunpack.c.h.b16 %v2079
    %v2133 = vunpack.c.l.b16 %v2080
    %v2134 = vunpack.c.h.b16 %v2080
    %v2135 = vunpack.c.l.b16 %v2081
    %v2136 = vunpack.c.h.b16 %v2081
    %v2137 = vunpack.c.l.b16 %v2082
    %v2138 = vunpack.c.h.b16 %v2082
    %v2139 = vunpack.c.l.b16 %v2083
    %v2140 = vunpack.c.h.b16 %v2083
    %v2141 = vunpack.c.l.b16 %v2084
    %v2142 = vunpack.c.h.b16 %v2084
    %v2143 = vunpack.c.l.b16 %v2085
    %v2144 = vunpack.c.h.b16 %v2085
    %v2145 = vunpack.c.l.b16 %v2086
    %v2146 = vunpack.c.h.b16 %v2086
    %v2147 = vpack.c.b16 %v2117, %v2115
    %v2148 = vpack.c.b16 %v2118, %v2116
    %v2149 = vpack.c.b16 %v2121, %v2119
    %v2150 = vpack.c.b16 %v2122, %v2120
    %v2151 = vpack.c.b16 %v2125, %v2123
    %v2152 = vpack.c.b16 %v2126, %v2124
    %v2153 = vpack.c.b16 %v2129, %v2127
    %v2154 = vpack.c.b16 %v2130, %v2128
    %v2155 = vpack.c.b16 %v2133, %v2131
    %v2156 = vpack.c.b16 %v2134, %v2132
    %v2157 = vpack.c.b16 %v2137, %v2135
    %v2158 = vpack.c.b16 %v2138, %v2136
    %v2159 = vpack.c.b16 %v2141, %v2139
    %v2160 = vpack.c.b16 %v2142, %v2140
    %v2161 = vpack.c.b16 %v2145, %v2143
    %v2162 = vpack.c.b16 %v2146, %v2144
    %2179 = vmatprep.subr.bf16.mxu0 %v2148
    %2180 = vmatpush1.bf16.msra.mxu0 %v2147
    %2181 = vmatprep.subr.bf16.mxu0 %v2150
    %2182 = vmatpush1.bf16.msra.mxu0 %v2149
    %2183 = vmatprep.subr.bf16.mxu0 %v2152
    %2184 = vmatpush1.bf16.msra.mxu0 %v2151
    %2185 = vmatprep.subr.bf16.mxu0 %v2154
    %2186 = vmatpush1.bf16.msra.mxu0 %v2153
    %2187 = vmatprep.subr.bf16.mxu0 %v2156
    %2188 = vmatpush1.bf16.msra.mxu0 %v2155
    %2189 = vmatprep.subr.bf16.mxu0 %v2158
    %2190 = vmatpush1.bf16.msra.mxu0 %v2157
    %2191 = vmatprep.subr.bf16.mxu0 %v2160
    %2192 = vmatpush1.bf16.msra.mxu0 %v2159
    %2193 = vmatprep.subr.bf16.mxu0 %v2162
    %2194 = vmatpush1.bf16.msra.mxu0 %v2161
    %2195 = vmatprep.subr.bf16.mxu0 0
    %2196 = vmatpush1.bf16.msra.mxu0 0
    %2197 = vmatprep.subr.bf16.mxu0 0
    %2198 = vmatpush1.bf16.msra.mxu0 0
    %2199 = vmatprep.subr.bf16.mxu0 0
    %2200 = vmatpush1.bf16.msra.mxu0 0
    %2201 = vmatprep.subr.bf16.mxu0 0
    %2202 = vmatpush1.bf16.msra.mxu0 0
    %2203 = vmatprep.subr.bf16.mxu0 0
    %2204 = vmatpush1.bf16.msra.mxu0 0
    %2205 = vmatprep.subr.bf16.mxu0 0
    %2206 = vmatpush1.bf16.msra.mxu0 0
    %2207 = vmatprep.subr.bf16.mxu0 0
    %2208 = vmatpush1.bf16.msra.mxu0 0
    %2209 = vmatprep.subr.bf16.mxu0 0
    %2210 = vmatpush1.bf16.msra.mxu0 0
    %2211 = vmatprep.mubr.bf16.mxu0 0
    %2212 = vmatmul.mubr.bf16.gmra.mrb[0].mxu0 %v2018
    %v2213 = vpop.f32.mrb[0].mxu0
    %v2214 = vadd.f32 %v2092, %v2213
    %v2215 = vpop.f32.mrb[0].mxu0
    %v2216 = vadd.f32 %v2096, %v2215
    %v2217 = vpop.f32.mrb[0].mxu0
    %v2218 = vadd.f32 %v2092, %v2217
    %v2219 = vpop.f32.mrb[0].mxu0
    %v2220 = vadd.f32 %v2096, %v2219
    %2221 = vmatprep.mubr.bf16.mxu0 0
    %2222 = vmatmul.mubr.bf16.gmra.mrb[0].mxu0 %v2019
    %v2223 = vpop.f32.mrb[0].mxu0
    %v2224 = vadd.f32 %v2092, %v2223
    %v2225 = vpop.f32.mrb[0].mxu0
    %v2226 = vadd.f32 %v2096, %v2225
    %v2227 = vpop.f32.mrb[0].mxu0
    %v2228 = vadd.f32 %v2092, %v2227
    %v2229 = vpop.f32.mrb[0].mxu0
    %v2230 = vadd.f32 %v2096, %v2229
    %2231 = vmatprep.mubr.bf16.mxu0 0
    %2232 = vmatmul.mubr.bf16.gmra.mrb[0].mxu0 %v2020
    %v2233 = vpop.f32.mrb[0].mxu0
    %v2234 = vadd.f32 %v2092, %v2233
    %v2235 = vpop.f32.mrb[0].mxu0
    %v2236 = vadd.f32 %v2096, %v2235
    %v2237 = vpop.f32.mrb[0].mxu0
    %v2238 = vadd.f32 %v2092, %v2237
    %v2239 = vpop.f32.mrb[0].mxu0
    %v2240 = vadd.f32 %v2096, %v2239
    %2241 = vmatprep.mubr.bf16.mxu0 0
    %2242 = vmatmul.mubr.bf16.gmra.mrb[0].mxu0 %v2021
    %v2243 = vpop.f32.mrb[0].mxu0
    %v2244 = vadd.f32 %v2092, %v2243
    %v2245 = vpop.f32.mrb[0].mxu0
    %v2246 = vadd.f32 %v2096, %v2245
    %v2247 = vpop.f32.mrb[0].mxu0
    %v2248 = vadd.f32 %v2092, %v2247
    %v2249 = vpop.f32.mrb[0].mxu0
    %v2250 = vadd.f32 %v2096, %v2249
    %2251 = vmatprep.mubr.bf16.mxu0 0
    %2252 = vmatmul.mubr.bf16.gmra.mrb[0].mxu0 %v2022
    %v2253 = vpop.f32.mrb[0].mxu0
    %v2254 = vadd.f32 %v2092, %v2253
    %v2255 = vpop.f32.mrb[0].mxu0
    %v2256 = vadd.f32 %v2096, %v2255
    %v2257 = vpop.f32.mrb[0].mxu0
    %v2258 = vadd.f32 %v2092, %v2257
    %v2259 = vpop.f32.mrb[0].mxu0
    %v2260 = vadd.f32 %v2096, %v2259
    %2261 = vmatprep.mubr.bf16.mxu0 0
    %2262 = vmatmul.mubr.bf16.gmra.mrb[0].mxu0 %v2023
    %v2263 = vpop.f32.mrb[0].mxu0
    %v2264 = vadd.f32 %v2092, %v2263
    %v2265 = vpop.f32.mrb[0].mxu0
    %v2266 = vadd.f32 %v2096, %v2265
    %v2267 = vpop.f32.mrb[0].mxu0
    %v2268 = vadd.f32 %v2092, %v2267
    %v2269 = vpop.f32.mrb[0].mxu0
    %v2270 = vadd.f32 %v2096, %v2269
    %2271 = vmatprep.mubr.bf16.mxu0 0
    %2272 = vmatmul.mubr.bf16.gmra.mrb[0].mxu0 %v2024
    %v2273 = vpop.f32.mrb[0].mxu0
    %v2274 = vadd.f32 %v2092, %v2273
    %v2275 = vpop.f32.mrb[0].mxu0
    %v2276 = vadd.f32 %v2096, %v2275
    %v2277 = vpop.f32.mrb[0].mxu0
    %v2278 = vadd.f32 %v2092, %v2277
    %v2279 = vpop.f32.mrb[0].mxu0
    %v2280 = vadd.f32 %v2096, %v2279
    %2281 = vmatprep.mubr.bf16.mxu0 0
    %2282 = vmatmul.mubr.bf16.gmra.mrb[0].mxu0 %v2025
    %v2283 = vpop.f32.mrb[0].mxu0
    %v2284 = vadd.f32 %v2092, %v2283
    %v2285 = vpop.f32.mrb[0].mxu0
    %v2286 = vadd.f32 %v2096, %v2285
    %v2287 = vpop.f32.mrb[0].mxu0
    %v2288 = vadd.f32 %v2092, %v2287
    %v2289 = vpop.f32.mrb[0].mxu0
    %v2290 = vadd.f32 %v2096, %v2289
    %2291 = vmatprep.mubr.bf16.mxu0 0
    %2292 = vmatmul.mubr.bf16.gmra.mrb[0].mxu0 %v2026
    %v2293 = vpop.f32.mrb[0].mxu0
    %v2294 = vadd.f32 %v2092, %v2293
    %v2295 = vpop.f32.mrb[0].mxu0
    %v2296 = vadd.f32 %v2096, %v2295
    %v2297 = vpop.f32.mrb[0].mxu0
    %v2298 = vadd.f32 %v2092, %v2297
    %v2299 = vpop.f32.mrb[0].mxu0
    %v2300 = vadd.f32 %v2096, %v2299
    %2301 = vmatprep.mubr.bf16.mxu0 0
    %2302 = vmatmul.mubr.bf16.gmra.mrb[0].mxu0 %v2027
    %v2303 = vpop.f32.mrb[0].mxu0
    %v2304 = vadd.f32 %v2092, %v2303
    %v2305 = vpop.f32.mrb[0].mxu0
    %v2306 = vadd.f32 %v2096, %v2305
    %v2307 = vpop.f32.mrb[0].mxu0
    %v2308 = vadd.f32 %v2092, %v2307
    %v2309 = vpop.f32.mrb[0].mxu0
    %v2310 = vadd.f32 %v2096, %v2309
    %2311 = vmatprep.mubr.bf16.mxu0 0
    %2312 = vmatmul.mubr.bf16.gmra.mrb[0].mxu0 %v2028
    %v2313 = vpop.f32.mrb[0].mxu0
    %v2314 = vadd.f32 %v2092, %v2313
    %v2315 = vpop.f32.mrb[0].mxu0
    %v2316 = vadd.f32 %v2096, %v2315
    %v2317 = vpop.f32.mrb[0].mxu0
    %v2318 = vadd.f32 %v2092, %v2317
    %v2319 = vpop.f32.mrb[0].mxu0
    %v2320 = vadd.f32 %v2096, %v2319
    %2321 = vmatprep.mubr.bf16.mxu0 0
    %2322 = vmatmul.mubr.bf16.gmra.mrb[0].mxu0 %v2029
    %v2323 = vpop.f32.mrb[0].mxu0
    %v2324 = vadd.f32 %v2092, %v2323
    %v2325 = vpop.f32.mrb[0].mxu0
    %v2326 = vadd.f32 %v2096, %v2325
    %v2327 = vpop.f32.mrb[0].mxu0
    %v2328 = vadd.f32 %v2092, %v2327
    %v2329 = vpop.f32.mrb[0].mxu0
    %v2330 = vadd.f32 %v2096, %v2329
    %2331 = vmatprep.mubr.bf16.mxu0 0
    %2332 = vmatmul.mubr.bf16.gmra.mrb[0].mxu0 %v2030
    %v2333 = vpop.f32.mrb[0].mxu0
    %v2334 = vadd.f32 %v2092, %v2333
    %v2335 = vpop.f32.mrb[0].mxu0
    %v2336 = vadd.f32 %v2096, %v2335
    %v2337 = vpop.f32.mrb[0].mxu0
    %v2338 = vadd.f32 %v2092, %v2337
    %v2339 = vpop.f32.mrb[0].mxu0
    %v2340 = vadd.f32 %v2096, %v2339
    %2341 = vmatprep.mubr.bf16.mxu0 0
    %2342 = vmatmul.mubr.bf16.gmra.mrb[0].mxu0 %v2031
    %v2343 = vpop.f32.mrb[0].mxu0
    %v2344 = vadd.f32 %v2092, %v2343
    %v2345 = vpop.f32.mrb[0].mxu0
    %v2346 = vadd.f32 %v2096, %v2345
    %v2347 = vpop.f32.mrb[0].mxu0
    %v2348 = vadd.f32 %v2092, %v2347
    %v2349 = vpop.f32.mrb[0].mxu0
    %v2350 = vadd.f32 %v2096, %v2349
    %2351 = vmatprep.mubr.bf16.mxu0 0
    %2352 = vmatmul.mubr.bf16.gmra.mrb[0].mxu0 %v2032
    %v2353 = vpop.f32.mrb[0].mxu0
    %v2354 = vadd.f32 %v2092, %v2353
    %v2355 = vpop.f32.mrb[0].mxu0
    %v2356 = vadd.f32 %v2096, %v2355
    %v2357 = vpop.f32.mrb[0].mxu0
    %v2358 = vadd.f32 %v2092, %v2357
    %v2359 = vpop.f32.mrb[0].mxu0
    %v2360 = vadd.f32 %v2096, %v2359
    %2361 = vmatprep.mubr.bf16.mxu0 0
    %2362 = vmatmul.mubr.bf16.gmra.mrb[0].mxu0 %v2033
    %v2363 = vpop.f32.mrb[0].mxu0
    %v2364 = vadd.f32 %v2092, %v2363
    %v2365 = vpop.f32.mrb[0].mxu0
    %v2366 = vadd.f32 %v2096, %v2365
    %v2367 = vpop.f32.mrb[0].mxu0
    %v2368 = vadd.f32 %v2092, %v2367
    %v2369 = vpop.f32.mrb[0].mxu0
    %v2370 = vadd.f32 %v2096, %v2369
    %2371 = vdwg.mxu0
    %v2372 = vmul.f32 %v2214, 0.5
    %v2373 = vmul.f32 %v2216, 0.5
    %v2374 = vmul.f32 %v2218, 0.5
    %v2375 = vmul.f32 %v2220, 0.5
    %v2376 = vmul.f32 %v2224, 0.5
    %v2377 = vmul.f32 %v2226, 0.5
    %v2378 = vmul.f32 %v2228, 0.5
    %v2379 = vmul.f32 %v2230, 0.5
    %v2380 = vmul.f32 %v2234, 0.5
    %v2381 = vmul.f32 %v2236, 0.5
    %v2382 = vmul.f32 %v2238, 0.5
    %v2383 = vmul.f32 %v2240, 0.5
    %v2384 = vmul.f32 %v2244, 0.5
    %v2385 = vmul.f32 %v2246, 0.5
    %v2386 = vmul.f32 %v2248, 0.5
    %v2387 = vmul.f32 %v2250, 0.5
    %v2388 = vmul.f32 %v2254, 0.5
    %v2389 = vmul.f32 %v2256, 0.5
    %v2390 = vmul.f32 %v2258, 0.5
    %v2391 = vmul.f32 %v2260, 0.5
    %v2392 = vmul.f32 %v2264, 0.5
    %v2393 = vmul.f32 %v2266, 0.5
    %v2394 = vmul.f32 %v2268, 0.5
    %v2395 = vmul.f32 %v2270, 0.5
    %v2396 = vmul.f32 %v2274, 0.5
    %v2397 = vmul.f32 %v2276, 0.5
    %v2398 = vmul.f32 %v2278, 0.5
    %v2399 = vmul.f32 %v2280, 0.5
    %v2400 = vmul.f32 %v2284, 0.5
    %v2401 = vmul.f32 %v2286, 0.5
    %v2402 = vmul.f32 %v2288, 0.5
    %v2403 = vmul.f32 %v2290, 0.5
    %v2404 = vmul.f32 %v2294, 0.5
    %v2405 = vmul.f32 %v2296, 0.5
    %v2406 = vmul.f32 %v2298, 0.5
    %v2407 = vmul.f32 %v2300, 0.5
    %v2408 = vmul.f32 %v2304, 0.5
    %v2409 = vmul.f32 %v2306, 0.5
    %v2410 = vmul.f32 %v2308, 0.5
    %v2411 = vmul.f32 %v2310, 0.5
    %v2412 = vmul.f32 %v2314, 0.5
    %v2413 = vmul.f32 %v2316, 0.5
    %v2414 = vmul.f32 %v2318, 0.5
    %v2415 = vmul.f32 %v2320, 0.5
    %v2416 = vmul.f32 %v2324, 0.5
    %v2417 = vmul.f32 %v2326, 0.5
    %v2418 = vmul.f32 %v2328, 0.5
    %v2419 = vmul.f32 %v2330, 0.5
    %v2420 = vmul.f32 %v2334, 0.5
    %v2421 = vmul.f32 %v2336, 0.5
    %v2422 = vmul.f32 %v2338, 0.5
    %v2423 = vmul.f32 %v2340, 0.5
    %v2424 = vmul.f32 %v2344, 0.5
    %v2425 = vmul.f32 %v2346, 0.5
    %v2426 = vmul.f32 %v2348, 0.5
    %v2427 = vmul.f32 %v2350, 0.5
    %v2428 = vmul.f32 %v2354, 0.5
    %v2429 = vmul.f32 %v2356, 0.5
    %v2430 = vmul.f32 %v2358, 0.5
    %v2431 = vmul.f32 %v2360, 0.5
    %v2432 = vmul.f32 %v2364, 0.5
    %v2433 = vmul.f32 %v2366, 0.5
    %v2434 = vmul.f32 %v2368, 0.5
    %v2435 = vmul.f32 %v2370, 0.5
    %v2436 = vmul.f32 %v2214, 0.044715
    %v2437 = vmul.f32 %v2216, 0.044715
    %v2438 = vmul.f32 %v2218, 0.044715
    %v2439 = vmul.f32 %v2220, 0.044715
    %v2440 = vmul.f32 %v2224, 0.044715
    %v2441 = vmul.f32 %v2226, 0.044715
    %v2442 = vmul.f32 %v2228, 0.044715
    %v2443 = vmul.f32 %v2230, 0.044715
    %v2444 = vmul.f32 %v2234, 0.044715
    %v2445 = vmul.f32 %v2236, 0.044715
    %v2446 = vmul.f32 %v2238, 0.044715
    %v2447 = vmul.f32 %v2240, 0.044715
    %v2448 = vmul.f32 %v2244, 0.044715
    %v2449 = vmul.f32 %v2246, 0.044715
    %v2450 = vmul.f32 %v2248, 0.044715
    %v2451 = vmul.f32 %v2250, 0.044715
    %v2452 = vmul.f32 %v2254, 0.044715
    %v2453 = vmul.f32 %v2256, 0.044715
    %v2454 = vmul.f32 %v2258, 0.044715
    %v2455 = vmul.f32 %v2260, 0.044715
    %v2456 = vmul.f32 %v2264, 0.044715
    %v2457 = vmul.f32 %v2266, 0.044715
    %v2458 = vmul.f32 %v2268, 0.044715
    %v2459 = vmul.f32 %v2270, 0.044715
    %v2460 = vmul.f32 %v2274, 0.044715
    %v2461 = vmul.f32 %v2276, 0.044715
    %v2462 = vmul.f32 %v2278, 0.044715
    %v2463 = vmul.f32 %v2280, 0.044715
    %v2464 = vmul.f32 %v2284, 0.044715
    %v2465 = vmul.f32 %v2286, 0.044715
    %v2466 = vmul.f32 %v2288, 0.044715
    %v2467 = vmul.f32 %v2290, 0.044715
    %v2468 = vmul.f32 %v2294, 0.044715
    %v2469 = vmul.f32 %v2296, 0.044715
    %v2470 = vmul.f32 %v2298, 0.044715
    %v2471 = vmul.f32 %v2300, 0.044715
    %v2472 = vmul.f32 %v2304, 0.044715
    %v2473 = vmul.f32 %v2306, 0.044715
    %v2474 = vmul.f32 %v2308, 0.044715
    %v2475 = vmul.f32 %v2310, 0.044715
    %v2476 = vmul.f32 %v2314, 0.044715
    %v2477 = vmul.f32 %v2316, 0.044715
    %v2478 = vmul.f32 %v2318, 0.044715
    %v2479 = vmul.f32 %v2320, 0.044715
    %v2480 = vmul.f32 %v2324, 0.044715
    %v2481 = vmul.f32 %v2326, 0.044715
    %v2482 = vmul.f32 %v2328, 0.044715
    %v2483 = vmul.f32 %v2330, 0.044715
    %v2484 = vmul.f32 %v2334, 0.044715
    %v2485 = vmul.f32 %v2336, 0.044715
    %v2486 = vmul.f32 %v2338, 0.044715
    %v2487 = vmul.f32 %v2340, 0.044715
    %v2488 = vmul.f32 %v2344, 0.044715
    %v2489 = vmul.f32 %v2346, 0.044715
    %v2490 = vmul.f32 %v2348, 0.044715
    %v2491 = vmul.f32 %v2350, 0.044715
    %v2492 = vmul.f32 %v2354, 0.044715
    %v2493 = vmul.f32 %v2356, 0.044715
    %v2494 = vmul.f32 %v2358, 0.044715
    %v2495 = vmul.f32 %v2360, 0.044715
    %v2496 = vmul.f32 %v2364, 0.044715
    %v2497 = vmul.f32 %v2366, 0.044715
    %v2498 = vmul.f32 %v2368, 0.044715
    %v2499 = vmul.f32 %v2370, 0.044715
    %v2500 = vmul.f32 %v2436, %v2214
    %v2501 = vmul.f32 %v2437, %v2216
    %v2502 = vmul.f32 %v2438, %v2218
    %v2503 = vmul.f32 %v2439, %v2220
    %v2504 = vmul.f32 %v2440, %v2224
    %v2505 = vmul.f32 %v2441, %v2226
    %v2506 = vmul.f32 %v2442, %v2228
    %v2507 = vmul.f32 %v2443, %v2230
    %v2508 = vmul.f32 %v2444, %v2234
    %v2509 = vmul.f32 %v2445, %v2236
    %v2510 = vmul.f32 %v2446, %v2238
    %v2511 = vmul.f32 %v2447, %v2240
    %v2512 = vmul.f32 %v2448, %v2244
    %v2513 = vmul.f32 %v2449, %v2246
    %v2514 = vmul.f32 %v2450, %v2248
    %v2515 = vmul.f32 %v2451, %v2250
    %v2516 = vmul.f32 %v2452, %v2254
    %v2517 = vmul.f32 %v2453, %v2256
    %v2518 = vmul.f32 %v2454, %v2258
    %v2519 = vmul.f32 %v2455, %v2260
    %v2520 = vmul.f32 %v2456, %v2264
    %v2521 = vmul.f32 %v2457, %v2266
    %v2522 = vmul.f32 %v2458, %v2268
    %v2523 = vmul.f32 %v2459, %v2270
    %v2524 = vmul.f32 %v2460, %v2274
    %v2525 = vmul.f32 %v2461, %v2276
    %v2526 = vmul.f32 %v2462, %v2278
    %v2527 = vmul.f32 %v2463, %v2280
    %v2528 = vmul.f32 %v2464, %v2284
    %v2529 = vmul.f32 %v2465, %v2286
    %v2530 = vmul.f32 %v2466, %v2288
    %v2531 = vmul.f32 %v2467, %v2290
    %v2532 = vmul.f32 %v2468, %v2294
    %v2533 = vmul.f32 %v2469, %v2296
    %v2534 = vmul.f32 %v2470, %v2298
    %v2535 = vmul.f32 %v2471, %v2300
    %v2536 = vmul.f32 %v2472, %v2304
    %v2537 = vmul.f32 %v2473, %v2306
    %v2538 = vmul.f32 %v2474, %v2308
    %v2539 = vmul.f32 %v2475, %v2310
    %v2540 = vmul.f32 %v2476, %v2314
    %v2541 = vmul.f32 %v2477, %v2316
    %v2542 = vmul.f32 %v2478, %v2318
    %v2543 = vmul.f32 %v2479, %v2320
    %v2544 = vmul.f32 %v2480, %v2324
    %v2545 = vmul.f32 %v2481, %v2326
    %v2546 = vmul.f32 %v2482, %v2328
    %v2547 = vmul.f32 %v2483, %v2330
    %v2548 = vmul.f32 %v2484, %v2334
    %v2549 = vmul.f32 %v2485, %v2336
    %v2550 = vmul.f32 %v2486, %v2338
    %v2551 = vmul.f32 %v2487, %v2340
    %v2552 = vmul.f32 %v2488, %v2344
    %v2553 = vmul.f32 %v2489, %v2346
    %v2554 = vmul.f32 %v2490, %v2348
    %v2555 = vmul.f32 %v2491, %v2350
    %v2556 = vmul.f32 %v2492, %v2354
    %v2557 = vmul.f32 %v2493, %v2356
    %v2558 = vmul.f32 %v2494, %v2358
    %v2559 = vmul.f32 %v2495, %v2360
    %v2560 = vmul.f32 %v2496, %v2364
    %v2561 = vmul.f32 %v2497, %v2366
    %v2562 = vmul.f32 %v2498, %v2368
    %v2563 = vmul.f32 %v2499, %v2370
    %v2564 = vmul.f32 %v2500, %v2214
    %v2565 = vmul.f32 %v2501, %v2216
    %v2566 = vmul.f32 %v2502, %v2218
    %v2567 = vmul.f32 %v2503, %v2220
    %v2568 = vmul.f32 %v2504, %v2224
    %v2569 = vmul.f32 %v2505, %v2226
    %v2570 = vmul.f32 %v2506, %v2228
    %v2571 = vmul.f32 %v2507, %v2230
    %v2572 = vmul.f32 %v2508, %v2234
    %v2573 = vmul.f32 %v2509, %v2236
    %v2574 = vmul.f32 %v2510, %v2238
    %v2575 = vmul.f32 %v2511, %v2240
    %v2576 = vmul.f32 %v2512, %v2244
    %v2577 = vmul.f32 %v2513, %v2246
    %v2578 = vmul.f32 %v2514, %v2248
    %v2579 = vmul.f32 %v2515, %v2250
    %v2580 = vmul.f32 %v2516, %v2254
    %v2581 = vmul.f32 %v2517, %v2256
    %v2582 = vmul.f32 %v2518, %v2258
    %v2583 = vmul.f32 %v2519, %v2260
    %v2584 = vmul.f32 %v2520, %v2264
    %v2585 = vmul.f32 %v2521, %v2266
    %v2586 = vmul.f32 %v2522, %v2268
    %v2587 = vmul.f32 %v2523, %v2270
    %v2588 = vmul.f32 %v2524, %v2274
    %v2589 = vmul.f32 %v2525, %v2276
    %v2590 = vmul.f32 %v2526, %v2278
    %v2591 = vmul.f32 %v2527, %v2280
    %v2592 = vmul.f32 %v2528, %v2284
    %v2593 = vmul.f32 %v2529, %v2286
    %v2594 = vmul.f32 %v2530, %v2288
    %v2595 = vmul.f32 %v2531, %v2290
    %v2596 = vmul.f32 %v2532, %v2294
    %v2597 = vmul.f32 %v2533, %v2296
    %v2598 = vmul.f32 %v2534, %v2298
    %v2599 = vmul.f32 %v2535, %v2300
    %v2600 = vmul.f32 %v2536, %v2304
    %v2601 = vmul.f32 %v2537, %v2306
    %v2602 = vmul.f32 %v2538, %v2308
    %v2603 = vmul.f32 %v2539, %v2310
    %v2604 = vmul.f32 %v2540, %v2314
    %v2605 = vmul.f32 %v2541, %v2316
    %v2606 = vmul.f32 %v2542, %v2318
    %v2607 = vmul.f32 %v2543, %v2320
    %v2608 = vmul.f32 %v2544, %v2324
    %v2609 = vmul.f32 %v2545, %v2326
    %v2610 = vmul.f32 %v2546, %v2328
    %v2611 = vmul.f32 %v2547, %v2330
    %v2612 = vmul.f32 %v2548, %v2334
    %v2613 = vmul.f32 %v2549, %v2336
    %v2614 = vmul.f32 %v2550, %v2338
    %v2615 = vmul.f32 %v2551, %v2340
    %v2616 = vmul.f32 %v2552, %v2344
    %v2617 = vmul.f32 %v2553, %v2346
    %v2618 = vmul.f32 %v2554, %v2348
    %v2619 = vmul.f32 %v2555, %v2350
    %v2620 = vmul.f32 %v2556, %v2354
    %v2621 = vmul.f32 %v2557, %v2356
    %v2622 = vmul.f32 %v2558, %v2358
    %v2623 = vmul.f32 %v2559, %v2360
    %v2624 = vmul.f32 %v2560, %v2364
    %v2625 = vmul.f32 %v2561, %v2366
    %v2626 = vmul.f32 %v2562, %v2368
    %v2627 = vmul.f32 %v2563, %v2370
    %v2628 = vadd.f32 %v2214, %v2564
    %v2629 = vadd.f32 %v2216, %v2565
    %v2630 = vadd.f32 %v2218, %v2566
    %v2631 = vadd.f32 %v2220, %v2567
    %v2632 = vadd.f32 %v2224, %v2568
    %v2633 = vadd.f32 %v2226, %v2569
    %v2634 = vadd.f32 %v2228, %v2570
    %v2635 = vadd.f32 %v2230, %v2571
    %v2636 = vadd.f32 %v2234, %v2572
    %v2637 = vadd.f32 %v2236, %v2573
    %v2638 = vadd.f32 %v2238, %v2574
    %v2639 = vadd.f32 %v2240, %v2575
    %v2640 = vadd.f32 %v2244, %v2576
    %v2641 = vadd.f32 %v2246, %v2577
    %v2642 = vadd.f32 %v2248, %v2578
    %v2643 = vadd.f32 %v2250, %v2579
    %v2644 = vadd.f32 %v2254, %v2580
    %v2645 = vadd.f32 %v2256, %v2581
    %v2646 = vadd.f32 %v2258, %v2582
    %v2647 = vadd.f32 %v2260, %v2583
    %v2648 = vadd.f32 %v2264, %v2584
    %v2649 = vadd.f32 %v2266, %v2585
    %v2650 = vadd.f32 %v2268, %v2586
    %v2651 = vadd.f32 %v2270, %v2587
    %v2652 = vadd.f32 %v2274, %v2588
    %v2653 = vadd.f32 %v2276, %v2589
    %v2654 = vadd.f32 %v2278, %v2590
    %v2655 = vadd.f32 %v2280, %v2591
    %v2656 = vadd.f32 %v2284, %v2592
    %v2657 = vadd.f32 %v2286, %v2593
    %v2658 = vadd.f32 %v2288, %v2594
    %v2659 = vadd.f32 %v2290, %v2595
    %v2660 = vadd.f32 %v2294, %v2596
    %v2661 = vadd.f32 %v2296, %v2597
    %v2662 = vadd.f32 %v2298, %v2598
    %v2663 = vadd.f32 %v2300, %v2599
    %v2664 = vadd.f32 %v2304, %v2600
    %v2665 = vadd.f32 %v2306, %v2601
    %v2666 = vadd.f32 %v2308, %v2602
    %v2667 = vadd.f32 %v2310, %v2603
    %v2668 = vadd.f32 %v2314, %v2604
    %v2669 = vadd.f32 %v2316, %v2605
    %v2670 = vadd.f32 %v2318, %v2606
    %v2671 = vadd.f32 %v2320, %v2607
    %v2672 = vadd.f32 %v2324, %v2608
    %v2673 = vadd.f32 %v2326, %v2609
    %v2674 = vadd.f32 %v2328, %v2610
    %v2675 = vadd.f32 %v2330, %v2611
    %v2676 = vadd.f32 %v2334, %v2612
    %v2677 = vadd.f32 %v2336, %v2613
    %v2678 = vadd.f32 %v2338, %v2614
    %v2679 = vadd.f32 %v2340, %v2615
    %v2680 = vadd.f32 %v2344, %v2616
    %v2681 = vadd.f32 %v2346, %v2617
    %v2682 = vadd.f32 %v2348, %v2618
    %v2683 = vadd.f32 %v2350, %v2619
    %v2684 = vadd.f32 %v2354, %v2620
    %v2685 = vadd.f32 %v2356, %v2621
    %v2686 = vadd.f32 %v2358, %v2622
    %v2687 = vadd.f32 %v2360, %v2623
    %v2688 = vadd.f32 %v2364, %v2624
    %v2689 = vadd.f32 %v2366, %v2625
    %v2690 = vadd.f32 %v2368, %v2626
    %v2691 = vadd.f32 %v2370, %v2627
    %v2692 = vmul.f32 %v2628, 0.7978846
    %v2693 = vmul.f32 %v2629, 0.7978846
    %v2694 = vmul.f32 %v2630, 0.7978846
    %v2695 = vmul.f32 %v2631, 0.7978846
    %v2696 = vmul.f32 %v2632, 0.7978846
    %v2697 = vmul.f32 %v2633, 0.7978846
    %v2698 = vmul.f32 %v2634, 0.7978846
    %v2699 = vmul.f32 %v2635, 0.7978846
    %v2700 = vmul.f32 %v2636, 0.7978846
    %v2701 = vmul.f32 %v2637, 0.7978846
    %v2702 = vmul.f32 %v2638, 0.7978846
    %v2703 = vmul.f32 %v2639, 0.7978846
    %v2704 = vmul.f32 %v2640, 0.7978846
    %v2705 = vmul.f32 %v2641, 0.7978846
    %v2706 = vmul.f32 %v2642, 0.7978846
    %v2707 = vmul.f32 %v2643, 0.7978846
    %v2708 = vmul.f32 %v2644, 0.7978846
    %v2709 = vmul.f32 %v2645, 0.7978846
    %v2710 = vmul.f32 %v2646, 0.7978846
    %v2711 = vmul.f32 %v2647, 0.7978846
    %v2712 = vmul.f32 %v2648, 0.7978846
    %v2713 = vmul.f32 %v2649, 0.7978846
    %v2714 = vmul.f32 %v2650, 0.7978846
    %v2715 = vmul.f32 %v2651, 0.7978846
    %v2716 = vmul.f32 %v2652, 0.7978846
    %v2717 = vmul.f32 %v2653, 0.7978846
    %v2718 = vmul.f32 %v2654, 0.7978846
    %v2719 = vmul.f32 %v2655, 0.7978846
    %v2720 = vmul.f32 %v2656, 0.7978846
    %v2721 = vmul.f32 %v2657, 0.7978846
    %v2722 = vmul.f32 %v2658, 0.7978846
    %v2723 = vmul.f32 %v2659, 0.7978846
    %v2724 = vmul.f32 %v2660, 0.7978846
    %v2725 = vmul.f32 %v2661, 0.7978846
    %v2726 = vmul.f32 %v2662, 0.7978846
    %v2727 = vmul.f32 %v2663, 0.7978846
    %v2728 = vmul.f32 %v2664, 0.7978846
    %v2729 = vmul.f32 %v2665, 0.7978846
    %v2730 = vmul.f32 %v2666, 0.7978846
    %v2731 = vmul.f32 %v2667, 0.7978846
    %v2732 = vmul.f32 %v2668, 0.7978846
    %v2733 = vmul.f32 %v2669, 0.7978846
    %v2734 = vmul.f32 %v2670, 0.7978846
    %v2735 = vmul.f32 %v2671, 0.7978846
    %v2736 = vmul.f32 %v2672, 0.7978846
    %v2737 = vmul.f32 %v2673, 0.7978846
    %v2738 = vmul.f32 %v2674, 0.7978846
    %v2739 = vmul.f32 %v2675, 0.7978846
    %v2740 = vmul.f32 %v2676, 0.7978846
    %v2741 = vmul.f32 %v2677, 0.7978846
    %v2742 = vmul.f32 %v2678, 0.7978846
    %v2743 = vmul.f32 %v2679, 0.7978846
    %v2744 = vmul.f32 %v2680, 0.7978846
    %v2745 = vmul.f32 %v2681, 0.7978846
    %v2746 = vmul.f32 %v2682, 0.7978846
    %v2747 = vmul.f32 %v2683, 0.7978846
    %v2748 = vmul.f32 %v2684, 0.7978846
    %v2749 = vmul.f32 %v2685, 0.7978846
    %v2750 = vmul.f32 %v2686, 0.7978846
    %v2751 = vmul.f32 %v2687, 0.7978846
    %v2752 = vmul.f32 %v2688, 0.7978846
    %v2753 = vmul.f32 %v2689, 0.7978846
    %v2754 = vmul.f32 %v2690, 0.7978846
    %v2755 = vmul.f32 %v2691, 0.7978846
    %v2756 = vtanh.pop %v2692
    %v2757 = vtanh.pop %v2693
    %v2758 = vtanh.pop %v2694
    %v2759 = vtanh.pop %v2695
    %v2760 = vtanh.pop %v2696
    %v2761 = vtanh.pop %v2697
    %v2762 = vtanh.pop %v2698
    %v2763 = vtanh.pop %v2699
    %v2764 = vtanh.pop %v2700
    %v2765 = vtanh.pop %v2701
    %v2766 = vtanh.pop %v2702
    %v2767 = vtanh.pop %v2703
    %v2768 = vtanh.pop %v2704
    %v2769 = vtanh.pop %v2705
    %v2770 = vtanh.pop %v2706
    %v2771 = vtanh.pop %v2707
    %v2772 = vtanh.pop %v2708
    %v2773 = vtanh.pop %v2709
    %v2774 = vtanh.pop %v2710
    %v2775 = vtanh.pop %v2711
    %v2776 = vtanh.pop %v2712
    %v2777 = vtanh.pop %v2713
    %v2778 = vtanh.pop %v2714
    %v2779 = vtanh.pop %v2715
    %v2780 = vtanh.pop %v2716
    %v2781 = vtanh.pop %v2717
    %v2782 = vtanh.pop %v2718
    %v2783 = vtanh.pop %v2719
    %v2784 = vtanh.pop %v2720
    %v2785 = vtanh.pop %v2721
    %v2786 = vtanh.pop %v2722
    %v2787 = vtanh.pop %v2723
    %v2788 = vtanh.pop %v2724
    %v2789 = vtanh.pop %v2725
    %v2790 = vtanh.pop %v2726
    %v2791 = vtanh.pop %v2727
    %v2792 = vtanh.pop %v2728
    %v2793 = vtanh.pop %v2729
    %v2794 = vtanh.pop %v2730
    %v2795 = vtanh.pop %v2731
    %v2796 = vtanh.pop %v2732
    %v2797 = vtanh.pop %v2733
    %v2798 = vtanh.pop %v2734
    %v2799 = vtanh.pop %v2735
    %v2800 = vtanh.pop %v2736
    %v2801 = vtanh.pop %v2737
    %v2802 = vtanh.pop %v2738
    %v2803 = vtanh.pop %v2739
    %v2804 = vtanh.pop %v2740
    %v2805 = vtanh.pop %v2741
    %v2806 = vtanh.pop %v2742
    %v2807 = vtanh.pop %v2743
    %v2808 = vtanh.pop %v2744
    %v2809 = vtanh.pop %v2745
    %v2810 = vtanh.pop %v2746
    %v2811 = vtanh.pop %v2747
    %v2812 = vtanh.pop %v2748
    %v2813 = vtanh.pop %v2749
    %v2814 = vtanh.pop %v2750
    %v2815 = vtanh.pop %v2751
    %v2816 = vtanh.pop %v2752
    %v2817 = vtanh.pop %v2753
    %v2818 = vtanh.pop %v2754
    %v2819 = vtanh.pop %v2755
    %v2820 = vadd.f32 %v2756, 1.0
    %v2821 = vadd.f32 %v2757, 1.0
    %v2822 = vadd.f32 %v2758, 1.0
    %v2823 = vadd.f32 %v2759, 1.0
    %v2824 = vadd.f32 %v2760, 1.0
    %v2825 = vadd.f32 %v2761, 1.0
    %v2826 = vadd.f32 %v2762, 1.0
    %v2827 = vadd.f32 %v2763, 1.0
    %v2828 = vadd.f32 %v2764, 1.0
    %v2829 = vadd.f32 %v2765, 1.0
    %v2830 = vadd.f32 %v2766, 1.0
    %v2831 = vadd.f32 %v2767, 1.0
    %v2832 = vadd.f32 %v2768, 1.0
    %v2833 = vadd.f32 %v2769, 1.0
    %v2834 = vadd.f32 %v2770, 1.0
    %v2835 = vadd.f32 %v2771, 1.0
    %v2836 = vadd.f32 %v2772, 1.0
    %v2837 = vadd.f32 %v2773, 1.0
    %v2838 = vadd.f32 %v2774, 1.0
    %v2839 = vadd.f32 %v2775, 1.0
    %v2840 = vadd.f32 %v2776, 1.0
    %v2841 = vadd.f32 %v2777, 1.0
    %v2842 = vadd.f32 %v2778, 1.0
    %v2843 = vadd.f32 %v2779, 1.0
    %v2844 = vadd.f32 %v2780, 1.0
    %v2845 = vadd.f32 %v2781, 1.0
    %v2846 = vadd.f32 %v2782, 1.0
    %v2847 = vadd.f32 %v2783, 1.0
    %v2848 = vadd.f32 %v2784, 1.0
    %v2849 = vadd.f32 %v2785, 1.0
    %v2850 = vadd.f32 %v2786, 1.0
    %v2851 = vadd.f32 %v2787, 1.0
    %v2852 = vadd.f32 %v2788, 1.0
    %v2853 = vadd.f32 %v2789, 1.0
    %v2854 = vadd.f32 %v2790, 1.0
    %v2855 = vadd.f32 %v2791, 1.0
    %v2856 = vadd.f32 %v2792, 1.0
    %v2857 = vadd.f32 %v2793, 1.0
    %v2858 = vadd.f32 %v2794, 1.0
    %v2859 = vadd.f32 %v2795, 1.0
    %v2860 = vadd.f32 %v2796, 1.0
    %v2861 = vadd.f32 %v2797, 1.0
    %v2862 = vadd.f32 %v2798, 1.0
    %v2863 = vadd.f32 %v2799, 1.0
    %v2864 = vadd.f32 %v2800, 1.0
    %v2865 = vadd.f32 %v2801, 1.0
    %v2866 = vadd.f32 %v2802, 1.0
    %v2867 = vadd.f32 %v2803, 1.0
    %v2868 = vadd.f32 %v2804, 1.0
    %v2869 = vadd.f32 %v2805, 1.0
    %v2870 = vadd.f32 %v2806, 1.0
    %v2871 = vadd.f32 %v2807, 1.0
    %v2872 = vadd.f32 %v2808, 1.0
    %v2873 = vadd.f32 %v2809, 1.0
    %v2874 = vadd.f32 %v2810, 1.0
    %v2875 = vadd.f32 %v2811, 1.0
    %v2876 = vadd.f32 %v2812, 1.0
    %v2877 = vadd.f32 %v2813, 1.0
    %v2878 = vadd.f32 %v2814, 1.0
    %v2879 = vadd.f32 %v2815, 1.0
    %v2880 = vadd.f32 %v2816, 1.0
    %v2881 = vadd.f32 %v2817, 1.0
    %v2882 = vadd.f32 %v2818, 1.0
    %v2883 = vadd.f32 %v2819, 1.0
    %v2884 = vmul.f32 %v2372, %v2820
    %v2885 = vmul.f32 %v2373, %v2821
    %v2886 = vmul.f32 %v2374, %v2822
    %v2887 = vmul.f32 %v2375, %v2823
    %v2888 = vmul.f32 %v2376, %v2824
    %v2889 = vmul.f32 %v2377, %v2825
    %v2890 = vmul.f32 %v2378, %v2826
    %v2891 = vmul.f32 %v2379, %v2827
    %v2892 = vmul.f32 %v2380, %v2828
    %v2893 = vmul.f32 %v2381, %v2829
    %v2894 = vmul.f32 %v2382, %v2830
    %v2895 = vmul.f32 %v2383, %v2831
    %v2896 = vmul.f32 %v2384, %v2832
    %v2897 = vmul.f32 %v2385, %v2833
    %v2898 = vmul.f32 %v2386, %v2834
    %v2899 = vmul.f32 %v2387, %v2835
    %v2900 = vmul.f32 %v2388, %v2836
    %v2901 = vmul.f32 %v2389, %v2837
    %v2902 = vmul.f32 %v2390, %v2838
    %v2903 = vmul.f32 %v2391, %v2839
    %v2904 = vmul.f32 %v2392, %v2840
    %v2905 = vmul.f32 %v2393, %v2841
    %v2906 = vmul.f32 %v2394, %v2842
    %v2907 = vmul.f32 %v2395, %v2843
    %v2908 = vmul.f32 %v2396, %v2844
    %v2909 = vmul.f32 %v2397, %v2845
    %v2910 = vmul.f32 %v2398, %v2846
    %v2911 = vmul.f32 %v2399, %v2847
    %v2912 = vmul.f32 %v2400, %v2848
    %v2913 = vmul.f32 %v2401, %v2849
    %v2914 = vmul.f32 %v2402, %v2850
    %v2915 = vmul.f32 %v2403, %v2851
    %v2916 = vmul.f32 %v2404, %v2852
    %v2917 = vmul.f32 %v2405, %v2853
    %v2918 = vmul.f32 %v2406, %v2854
    %v2919 = vmul.f32 %v2407, %v2855
    %v2920 = vmul.f32 %v2408, %v2856
    %v2921 = vmul.f32 %v2409, %v2857
    %v2922 = vmul.f32 %v2410, %v2858
    %v2923 = vmul.f32 %v2411, %v2859
    %v2924 = vmul.f32 %v2412, %v2860
    %v2925 = vmul.f32 %v2413, %v2861
    %v2926 = vmul.f32 %v2414, %v2862
    %v2927 = vmul.f32 %v2415, %v2863
    %v2928 = vmul.f32 %v2416, %v2864
    %v2929 = vmul.f32 %v2417, %v2865
    %v2930 = vmul.f32 %v2418, %v2866
    %v2931 = vmul.f32 %v2419, %v2867
    %v2932 = vmul.f32 %v2420, %v2868
    %v2933 = vmul.f32 %v2421, %v2869
    %v2934 = vmul.f32 %v2422, %v2870
    %v2935 = vmul.f32 %v2423, %v2871
    %v2936 = vmul.f32 %v2424, %v2872
    %v2937 = vmul.f32 %v2425, %v2873
    %v2938 = vmul.f32 %v2426, %v2874
    %v2939 = vmul.f32 %v2427, %v2875
    %v2940 = vmul.f32 %v2428, %v2876
    %v2941 = vmul.f32 %v2429, %v2877
    %v2942 = vmul.f32 %v2430, %v2878
    %v2943 = vmul.f32 %v2431, %v2879
    %v2944 = vmul.f32 %v2432, %v2880
    %v2945 = vmul.f32 %v2433, %v2881
    %v2946 = vmul.f32 %v2434, %v2882
    %v2947 = vmul.f32 %v2435, %v2883
    %v2948 = vpack.c.bf16 %v2886, %v2884
    %v2949 = vpack.c.bf16 %v2887, %v2885
    %v2950 = vpack.c.bf16 %v2890, %v2888
    %v2951 = vpack.c.bf16 %v2891, %v2889
    %v2952 = vpack.c.bf16 %v2894, %v2892
    %v2953 = vpack.c.bf16 %v2895, %v2893
    %v2954 = vpack.c.bf16 %v2898, %v2896
    %v2955 = vpack.c.bf16 %v2899, %v2897
    %v2956 = vpack.c.bf16 %v2902, %v2900
    %v2957 = vpack.c.bf16 %v2903, %v2901
    %v2958 = vpack.c.bf16 %v2906, %v2904
    %v2959 = vpack.c.bf16 %v2907, %v2905
    %v2960 = vpack.c.bf16 %v2910, %v2908
    %v2961 = vpack.c.bf16 %v2911, %v2909
    %v2962 = vpack.c.bf16 %v2914, %v2912
    %v2963 = vpack.c.bf16 %v2915, %v2913
    %v2964 = vpack.c.bf16 %v2918, %v2916
    %v2965 = vpack.c.bf16 %v2919, %v2917
    %v2966 = vpack.c.bf16 %v2922, %v2920
    %v2967 = vpack.c.bf16 %v2923, %v2921
    %v2968 = vpack.c.bf16 %v2926, %v2924
    %v2969 = vpack.c.bf16 %v2927, %v2925
    %v2970 = vpack.c.bf16 %v2930, %v2928
    %v2971 = vpack.c.bf16 %v2931, %v2929
    %v2972 = vpack.c.bf16 %v2934, %v2932
    %v2973 = vpack.c.bf16 %v2935, %v2933
    %v2974 = vpack.c.bf16 %v2938, %v2936
    %v2975 = vpack.c.bf16 %v2939, %v2937
    %v2976 = vpack.c.bf16 %v2942, %v2940
    %v2977 = vpack.c.bf16 %v2943, %v2941
    %v2978 = vpack.c.bf16 %v2946, %v2944
    %v2979 = vpack.c.bf16 %v2947, %v2945
    %v2980 = vld [vmem:[%s3] sm:$0xf]
    %v2981 = vld [vmem:[%s3 + $0x4] sm:$0xf]
    %v2982 = vld [vmem:[%s3 + $0x8] sm:$0xf]
    %v2983 = vld [vmem:[%s3 + $0xc] sm:$0xf]
    %v2984 = vld [vmem:[%s3 + $0x10] sm:$0xf]
    %v2985 = vld [vmem:[%s3 + $0x14] sm:$0xf]
    %v2986 = vld [vmem:[%s3 + $0x18] sm:$0xf]
    %v2987 = vld [vmem:[%s3 + $0x1c] sm:$0xf]
    %v2988 = vld [vmem:[%s3 + $0x20] sm:$0xf]
    %v2989 = vld [vmem:[%s3 + $0x24] sm:$0xf]
    %v2990 = vld [vmem:[%s3 + $0x28] sm:$0xf]
    %v2991 = vld [vmem:[%s3 + $0x2c] sm:$0xf]
    %v2992 = vld [vmem:[%s3 + $0x30] sm:$0xf]
    %v2993 = vld [vmem:[%s3 + $0x34] sm:$0xf]
    %v2994 = vld [vmem:[%s3 + $0x38] sm:$0xf]
    %v2995 = vld [vmem:[%s3 + $0x3c] sm:$0xf]
    %v2996 = vld [vmem:[%s3 + $0x40] sm:$0xf]
    %v2997 = vld [vmem:[%s3 + $0x44] sm:$0xf]
    %v2998 = vld [vmem:[%s3 + $0x48] sm:$0xf]
    %v2999 = vld [vmem:[%s3 + $0x4c] sm:$0xf]
    %v3000 = vld [vmem:[%s3 + $0x50] sm:$0xf]
    %v3001 = vld [vmem:[%s3 + $0x54] sm:$0xf]
    %v3002 = vld [vmem:[%s3 + $0x58] sm:$0xf]
    %v3003 = vld [vmem:[%s3 + $0x5c] sm:$0xf]
    %v3004 = vld [vmem:[%s3 + $0x60] sm:$0xf]
    %v3005 = vld [vmem:[%s3 + $0x64] sm:$0xf]
    %v3006 = vld [vmem:[%s3 + $0x68] sm:$0xf]
    %v3007 = vld [vmem:[%s3 + $0x6c] sm:$0xf]
    %v3008 = vld [vmem:[%s3 + $0x70] sm:$0xf]
    %v3009 = vld [vmem:[%s3 + $0x74] sm:$0xf]
    %v3010 = vld [vmem:[%s3 + $0x78] sm:$0xf]
    %v3011 = vld [vmem:[%s3 + $0x7c] sm:$0xf]
    %v3044 = vunpack.c.l.b16 %v2980
    %v3045 = vunpack.c.l.b16 %v2981
    %v3046 = vunpack.c.l.b16 %v2982
    %v3047 = vunpack.c.l.b16 %v2983
    %v3048 = vunpack.c.l.b16 %v2984
    %v3049 = vunpack.c.l.b16 %v2985
    %v3050 = vunpack.c.l.b16 %v2986
    %v3051 = vunpack.c.l.b16 %v2987
    %v3052 = vunpack.c.l.b16 %v2988
    %v3053 = vunpack.c.l.b16 %v2989
    %v3054 = vunpack.c.l.b16 %v2990
    %v3055 = vunpack.c.l.b16 %v2991
    %v3056 = vunpack.c.l.b16 %v2992
    %v3057 = vunpack.c.l.b16 %v2993
    %v3058 = vunpack.c.l.b16 %v2994
    %v3059 = vunpack.c.l.b16 %v2995
    %v3060 = vunpack.c.l.b16 %v2996
    %v3061 = vunpack.c.l.b16 %v2997
    %v3062 = vunpack.c.l.b16 %v2998
    %v3063 = vunpack.c.l.b16 %v2999
    %v3064 = vunpack.c.l.b16 %v3000
    %v3065 = vunpack.c.l.b16 %v3001
    %v3066 = vunpack.c.l.b16 %v3002
    %v3067 = vunpack.c.l.b16 %v3003
    %v3068 = vunpack.c.l.b16 %v3004
    %v3069 = vunpack.c.l.b16 %v3005
    %v3070 = vunpack.c.l.b16 %v3006
    %v3071 = vunpack.c.l.b16 %v3007
    %v3072 = vunpack.c.l.b16 %v3008
    %v3073 = vunpack.c.l.b16 %v3009
    %v3074 = vunpack.c.l.b16 %v3010
    %v3075 = vunpack.c.l.b16 %v3011
    %v3076 = vpack.c.b16 %v3045, %v3044
    %v3077 = vpack.c.b16 %v3047, %v3046
    %v3078 = vpack.c.b16 %v3049, %v3048
    %v3079 = vpack.c.b16 %v3051, %v3050
    %v3080 = vpack.c.b16 %v3053, %v3052
    %v3081 = vpack.c.b16 %v3055, %v3054
    %v3082 = vpack.c.b16 %v3057, %v3056
    %v3083 = vpack.c.b16 %v3059, %v3058
    %v3084 = vpack.c.b16 %v3061, %v3060
    %v3085 = vpack.c.b16 %v3063, %v3062
    %v3086 = vpack.c.b16 %v3065, %v3064
    %v3087 = vpack.c.b16 %v3067, %v3066
    %v3088 = vpack.c.b16 %v3069, %v3068
    %v3089 = vpack.c.b16 %v3071, %v3070
    %v3090 = vpack.c.b16 %v3073, %v3072
    %v3091 = vpack.c.b16 %v3075, %v3074
    %3108 = vmatprep.subr.bf16.mxu0 0
    %3109 = vmatpush1.bf16.msra.mxu0 %v3076
    %3110 = vmatprep.subr.bf16.mxu0 0
    %3111 = vmatpush1.bf16.msra.mxu0 %v3077
    %3112 = vmatprep.subr.bf16.mxu0 0
    %3113 = vmatpush1.bf16.msra.mxu0 %v3078
    %3114 = vmatprep.subr.bf16.mxu0 0
    %3115 = vmatpush1.bf16.msra.mxu0 %v3079
    %3116 = vmatprep.subr.bf16.mxu0 0
    %3117 = vmatpush1.bf16.msra.mxu0 %v3080
    %3118 = vmatprep.subr.bf16.mxu0 0
    %3119 = vmatpush1.bf16.msra.mxu0 %v3081
    %3120 = vmatprep.subr.bf16.mxu0 0
    %3121 = vmatpush1.bf16.msra.mxu0 %v3082
    %3122 = vmatprep.subr.bf16.mxu0 0
    %3123 = vmatpush1.bf16.msra.mxu0 %v3083
    %3124 = vmatprep.subr.bf16.mxu0 0
    %3125 = vmatpush1.bf16.msra.mxu0 %v3084
    %3126 = vmatprep.subr.bf16.mxu0 0
    %3127 = vmatpush1.bf16.msra.mxu0 %v3085
    %3128 = vmatprep.subr.bf16.mxu0 0
    %3129 = vmatpush1.bf16.msra.mxu0 %v3086
    %3130 = vmatprep.subr.bf16.mxu0 0
    %3131 = vmatpush1.bf16.msra.mxu0 %v3087
    %3132 = vmatprep.subr.bf16.mxu0 0
    %3133 = vmatpush1.bf16.msra.mxu0 %v3088
    %3134 = vmatprep.subr.bf16.mxu0 0
    %3135 = vmatpush1.bf16.msra.mxu0 %v3089
    %3136 = vmatprep.subr.bf16.mxu0 0
    %3137 = vmatpush1.bf16.msra.mxu0 %v3090
    %3138 = vmatprep.subr.bf16.mxu0 0
    %3139 = vmatpush1.bf16.msra.mxu0 %v3091
    %3140 = vmatprep.mubr.bf16.mxu0 %v2949
    %3141 = vmatmul.mubr.bf16.gmra.mrb[0].mxu0 %v2948
    %v3142 = vpop.f32.mrb[0].mxu0
    %v3143 = vadd.f32 0.0, %v3142
    %v3144 = vpop.f32.mrb[0].mxu0
    %v3145 = vpop.f32.mrb[0].mxu0
    %v3146 = vadd.f32 0.0, %v3145
    %v3147 = vpop.f32.mrb[0].mxu0
    %3148 = vmatprep.mubr.bf16.mxu0 %v2951
    %3149 = vmatmul.mubr.bf16.gmra.mrb[0].mxu0 %v2950
    %v3150 = vpop.f32.mrb[0].mxu0
    %v3151 = vadd.f32 0.0, %v3150
    %v3152 = vpop.f32.mrb[0].mxu0
    %v3153 = vpop.f32.mrb[0].mxu0
    %v3154 = vadd.f32 0.0, %v3153
    %v3155 = vpop.f32.mrb[0].mxu0
    %3156 = vmatprep.mubr.bf16.mxu0 %v2953
    %3157 = vmatmul.mubr.bf16.gmra.mrb[0].mxu0 %v2952
    %v3158 = vpop.f32.mrb[0].mxu0
    %v3159 = vadd.f32 0.0, %v3158
    %v3160 = vpop.f32.mrb[0].mxu0
    %v3161 = vpop.f32.mrb[0].mxu0
    %v3162 = vadd.f32 0.0, %v3161
    %v3163 = vpop.f32.mrb[0].mxu0
    %3164 = vmatprep.mubr.bf16.mxu0 %v2955
    %3165 = vmatmul.mubr.bf16.gmra.mrb[0].mxu0 %v2954
    %v3166 = vpop.f32.mrb[0].mxu0
    %v3167 = vadd.f32 0.0, %v3166
    %v3168 = vpop.f32.mrb[0].mxu0
    %v3169 = vpop.f32.mrb[0].mxu0
    %v3170 = vadd.f32 0.0, %v3169
    %v3171 = vpop.f32.mrb[0].mxu0
    %3172 = vmatprep.mubr.bf16.mxu0 %v2957
    %3173 = vmatmul.mubr.bf16.gmra.mrb[0].mxu0 %v2956
    %v3174 = vpop.f32.mrb[0].mxu0
    %v3175 = vadd.f32 0.0, %v3174
    %v3176 = vpop.f32.mrb[0].mxu0
    %v3177 = vpop.f32.mrb[0].mxu0
    %v3178 = vadd.f32 0.0, %v3177
    %v3179 = vpop.f32.mrb[0].mxu0
    %3180 = vmatprep.mubr.bf16.mxu0 %v2959
    %3181 = vmatmul.mubr.bf16.gmra.mrb[0].mxu0 %v2958
    %v3182 = vpop.f32.mrb[0].mxu0
    %v3183 = vadd.f32 0.0, %v3182
    %v3184 = vpop.f32.mrb[0].mxu0
    %v3185 = vpop.f32.mrb[0].mxu0
    %v3186 = vadd.f32 0.0, %v3185
    %v3187 = vpop.f32.mrb[0].mxu0
    %3188 = vmatprep.mubr.bf16.mxu0 %v2961
    %3189 = vmatmul.mubr.bf16.gmra.mrb[0].mxu0 %v2960
    %v3190 = vpop.f32.mrb[0].mxu0
    %v3191 = vadd.f32 0.0, %v3190
    %v3192 = vpop.f32.mrb[0].mxu0
    %v3193 = vpop.f32.mrb[0].mxu0
    %v3194 = vadd.f32 0.0, %v3193
    %v3195 = vpop.f32.mrb[0].mxu0
    %3196 = vmatprep.mubr.bf16.mxu0 %v2963
    %3197 = vmatmul.mubr.bf16.gmra.mrb[0].mxu0 %v2962
    %v3198 = vpop.f32.mrb[0].mxu0
    %v3199 = vadd.f32 0.0, %v3198
    %v3200 = vpop.f32.mrb[0].mxu0
    %v3201 = vpop.f32.mrb[0].mxu0
    %v3202 = vadd.f32 0.0, %v3201
    %v3203 = vpop.f32.mrb[0].mxu0
    %3204 = vmatprep.mubr.bf16.mxu0 %v2965
    %3205 = vmatmul.mubr.bf16.gmra.mrb[0].mxu0 %v2964
    %v3206 = vpop.f32.mrb[0].mxu0
    %v3207 = vadd.f32 0.0, %v3206
    %v3208 = vpop.f32.mrb[0].mxu0
    %v3209 = vpop.f32.mrb[0].mxu0
    %v3210 = vadd.f32 0.0, %v3209
    %v3211 = vpop.f32.mrb[0].mxu0
    %3212 = vmatprep.mubr.bf16.mxu0 %v2967
    %3213 = vmatmul.mubr.bf16.gmra.mrb[0].mxu0 %v2966
    %v3214 = vpop.f32.mrb[0].mxu0
    %v3215 = vadd.f32 0.0, %v3214
    %v3216 = vpop.f32.mrb[0].mxu0
    %v3217 = vpop.f32.mrb[0].mxu0
    %v3218 = vadd.f32 0.0, %v3217
    %v3219 = vpop.f32.mrb[0].mxu0
    %3220 = vmatprep.mubr.bf16.mxu0 %v2969
    %3221 = vmatmul.mubr.bf16.gmra.mrb[0].mxu0 %v2968
    %v3222 = vpop.f32.mrb[0].mxu0
    %v3223 = vadd.f32 0.0, %v3222
    %v3224 = vpop.f32.mrb[0].mxu0
    %v3225 = vpop.f32.mrb[0].mxu0
    %v3226 = vadd.f32 0.0, %v3225
    %v3227 = vpop.f32.mrb[0].mxu0
    %3228 = vmatprep.mubr.bf16.mxu0 %v2971
    %3229 = vmatmul.mubr.bf16.gmra.mrb[0].mxu0 %v2970
    %v3230 = vpop.f32.mrb[0].mxu0
    %v3231 = vadd.f32 0.0, %v3230
    %v3232 = vpop.f32.mrb[0].mxu0
    %v3233 = vpop.f32.mrb[0].mxu0
    %v3234 = vadd.f32 0.0, %v3233
    %v3235 = vpop.f32.mrb[0].mxu0
    %3236 = vmatprep.mubr.bf16.mxu0 %v2973
    %3237 = vmatmul.mubr.bf16.gmra.mrb[0].mxu0 %v2972
    %v3238 = vpop.f32.mrb[0].mxu0
    %v3239 = vadd.f32 0.0, %v3238
    %v3240 = vpop.f32.mrb[0].mxu0
    %v3241 = vpop.f32.mrb[0].mxu0
    %v3242 = vadd.f32 0.0, %v3241
    %v3243 = vpop.f32.mrb[0].mxu0
    %3244 = vmatprep.mubr.bf16.mxu0 %v2975
    %3245 = vmatmul.mubr.bf16.gmra.mrb[0].mxu0 %v2974
    %v3246 = vpop.f32.mrb[0].mxu0
    %v3247 = vadd.f32 0.0, %v3246
    %v3248 = vpop.f32.mrb[0].mxu0
    %v3249 = vpop.f32.mrb[0].mxu0
    %v3250 = vadd.f32 0.0, %v3249
    %v3251 = vpop.f32.mrb[0].mxu0
    %3252 = vmatprep.mubr.bf16.mxu0 %v2977
    %3253 = vmatmul.mubr.bf16.gmra.mrb[0].mxu0 %v2976
    %v3254 = vpop.f32.mrb[0].mxu0
    %v3255 = vadd.f32 0.0, %v3254
    %v3256 = vpop.f32.mrb[0].mxu0
    %v3257 = vpop.f32.mrb[0].mxu0
    %v3258 = vadd.f32 0.0, %v3257
    %v3259 = vpop.f32.mrb[0].mxu0
    %3260 = vmatprep.mubr.bf16.mxu0 %v2979
    %3261 = vmatmul.mubr.bf16.gmra.mrb[0].mxu0 %v2978
    %v3262 = vpop.f32.mrb[0].mxu0
    %v3263 = vadd.f32 0.0, %v3262
    %v3264 = vpop.f32.mrb[0].mxu0
    %v3265 = vpop.f32.mrb[0].mxu0
    %v3266 = vadd.f32 0.0, %v3265
    %v3267 = vpop.f32.mrb[0].mxu0
    %3268 = vdwg.mxu0
    %v3269 = vadd.f32 %v2039, %v3143
    %v3270 = vadd.f32 %v2040, %v3146
    %v3271 = vadd.f32 %v2041, %v3151
    %v3272 = vadd.f32 %v2042, %v3154
    %v3273 = vadd.f32 %v2043, %v3159
    %v3274 = vadd.f32 %v2044, %v3162
    %v3275 = vadd.f32 %v2045, %v3167
    %v3276 = vadd.f32 %v2046, %v3170
    %v3277 = vadd.f32 %v2047, %v3175
    %v3278 = vadd.f32 %v2048, %v3178
    %v3279 = vadd.f32 %v2049, %v3183
    %v3280 = vadd.f32 %v2050, %v3186
    %v3281 = vadd.f32 %v2051, %v3191
    %v3282 = vadd.f32 %v2052, %v3194
    %v3283 = vadd.f32 %v2053, %v3199
    %v3284 = vadd.f32 %v2054, %v3202
    %v3285 = vadd.f32 %v2055, %v3207
    %v3286 = vadd.f32 %v2056, %v3210
    %v3287 = vadd.f32 %v2057, %v3215
    %v3288 = vadd.f32 %v2058, %v3218
    %v3289 = vadd.f32 %v2059, %v3223
    %v3290 = vadd.f32 %v2060, %v3226
    %v3291 = vadd.f32 %v2061, %v3231
    %v3292 = vadd.f32 %v2062, %v3234
    %v3293 = vadd.f32 %v2063, %v3239
    %v3294 = vadd.f32 %v2064, %v3242
    %v3295 = vadd.f32 %v2065, %v3247
    %v3296 = vadd.f32 %v2066, %v3250
    %v3297 = vadd.f32 %v2067, %v3255
    %v3298 = vadd.f32 %v2068, %v3258
    %v3299 = vadd.f32 %v2069, %v3263
    %v3300 = vadd.f32 %v2070, %v3266
    %v3301 = vld [vmem:[%s2 + $0x8] sm:$0xff]
    %v3302 = vld [vmem:[%s2 + $0x18] sm:$0xff]
    %v3303 = vld [vmem:[%s2 + $0x28] sm:$0xff]
    %v3304 = vld [vmem:[%s2 + $0x38] sm:$0xff]
    %v3305 = vld [vmem:[%s2 + $0x48] sm:$0xff]
    %v3306 = vld [vmem:[%s2 + $0x58] sm:$0xff]
    %v3307 = vld [vmem:[%s2 + $0x68] sm:$0xff]
    %v3308 = vld [vmem:[%s2 + $0x78] sm:$0xff]
    %v3309 = vld [vmem:[%s2 + $0x88] sm:$0xff]
    %v3310 = vld [vmem:[%s2 + $0x98] sm:$0xff]
    %v3311 = vld [vmem:[%s2 + $0xa8] sm:$0xff]
    %v3312 = vld [vmem:[%s2 + $0xb8] sm:$0xff]
    %v3313 = vld [vmem:[%s2 + $0xc8] sm:$0xff]
    %v3314 = vld [vmem:[%s2 + $0xd8] sm:$0xff]
    %v3315 = vld [vmem:[%s2 + $0xe8] sm:$0xff]
    %v3316 = vld [vmem:[%s2 + $0xf8] sm:$0xff]
    %s3317 = scalar_lea.vmem %s4, 4
    %v3318 = vld [vmem:[%s3317] ss:$2 sm:$0x3]
    %v3320 = vlaneseq
    %v3321 = vshrl.u32 %v3320, 7
    %v3322 = vsub.s32 0, %v3321
    %v3323 = vrot.slane %v3318, %v3322
    %v3324 = vlaneseq
    %v3325 = vshrl.u32 %v3324, 7
    %v3326 = vsub.s32 1, %v3325
    %v3327 = vrot.slane %v3318, %v3326
    %v3346 = vunpack.c.l.b16 %v3301
    %v3347 = vunpack.c.h.b16 %v3301
    %v3348 = vunpack.c.l.b16 %v3302
    %v3349 = vunpack.c.h.b16 %v3302
    %v3350 = vunpack.c.l.b16 %v3303
    %v3351 = vunpack.c.h.b16 %v3303
    %v3352 = vunpack.c.l.b16 %v3304
    %v3353 = vunpack.c.h.b16 %v3304
    %v3354 = vunpack.c.l.b16 %v3305
    %v3355 = vunpack.c.h.b16 %v3305
    %v3356 = vunpack.c.l.b16 %v3306
    %v3357 = vunpack.c.h.b16 %v3306
    %v3358 = vunpack.c.l.b16 %v3307
    %v3359 = vunpack.c.h.b16 %v3307
    %v3360 = vunpack.c.l.b16 %v3308
    %v3361 = vunpack.c.h.b16 %v3308
    %v3362 = vunpack.c.l.b16 %v3309
    %v3363 = vunpack.c.h.b16 %v3309
    %v3364 = vunpack.c.l.b16 %v3310
    %v3365 = vunpack.c.h.b16 %v3310
    %v3366 = vunpack.c.l.b16 %v3311
    %v3367 = vunpack.c.h.b16 %v3311
    %v3368 = vunpack.c.l.b16 %v3312
    %v3369 = vunpack.c.h.b16 %v3312
    %v3370 = vunpack.c.l.b16 %v3313
    %v3371 = vunpack.c.h.b16 %v3313
    %v3372 = vunpack.c.l.b16 %v3314
    %v3373 = vunpack.c.h.b16 %v3314
    %v3374 = vunpack.c.l.b16 %v3315
    %v3375 = vunpack.c.h.b16 %v3315
    %v3376 = vunpack.c.l.b16 %v3316
    %v3377 = vunpack.c.h.b16 %v3316
    %v3378 = vpack.c.b16 %v3348, %v3346
    %v3379 = vpack.c.b16 %v3349, %v3347
    %v3380 = vpack.c.b16 %v3352, %v3350
    %v3381 = vpack.c.b16 %v3353, %v3351
    %v3382 = vpack.c.b16 %v3356, %v3354
    %v3383 = vpack.c.b16 %v3357, %v3355
    %v3384 = vpack.c.b16 %v3360, %v3358
    %v3385 = vpack.c.b16 %v3361, %v3359
    %v3386 = vpack.c.b16 %v3364, %v3362
    %v3387 = vpack.c.b16 %v3365, %v3363
    %v3388 = vpack.c.b16 %v3368, %v3366
    %v3389 = vpack.c.b16 %v3369, %v3367
    %v3390 = vpack.c.b16 %v3372, %v3370
    %v3391 = vpack.c.b16 %v3373, %v3371
    %v3392 = vpack.c.b16 %v3376, %v3374
    %v3393 = vpack.c.b16 %v3377, %v3375
    %3410 = vmatprep.subr.bf16.mxu0 %v3379
    %3411 = vmatpush1.bf16.msra.mxu0 %v3378
    %3412 = vmatprep.subr.bf16.mxu0 %v3381
    %3413 = vmatpush1.bf16.msra.mxu0 %v3380
    %3414 = vmatprep.subr.bf16.mxu0 %v3383
    %3415 = vmatpush1.bf16.msra.mxu0 %v3382
    %3416 = vmatprep.subr.bf16.mxu0 %v3385
    %3417 = vmatpush1.bf16.msra.mxu0 %v3384
    %3418 = vmatprep.subr.bf16.mxu0 %v3387
    %3419 = vmatpush1.bf16.msra.mxu0 %v3386
    %3420 = vmatprep.subr.bf16.mxu0 %v3389
    %3421 = vmatpush1.bf16.msra.mxu0 %v3388
    %3422 = vmatprep.subr.bf16.mxu0 %v3391
    %3423 = vmatpush1.bf16.msra.mxu0 %v3390
    %3424 = vmatprep.subr.bf16.mxu0 %v3393
    %3425 = vmatpush1.bf16.msra.mxu0 %v3392
    %3426 = vmatprep.subr.bf16.mxu0 0
    %3427 = vmatpush1.bf16.msra.mxu0 0
    %3428 = vmatprep.subr.bf16.mxu0 0
    %3429 = vmatpush1.bf16.msra.mxu0 0
    %3430 = vmatprep.subr.bf16.mxu0 0
    %3431 = vmatpush1.bf16.msra.mxu0 0
    %3432 = vmatprep.subr.bf16.mxu0 0
    %3433 = vmatpush1.bf16.msra.mxu0 0
    %3434 = vmatprep.subr.bf16.mxu0 0
    %3435 = vmatpush1.bf16.msra.mxu0 0
    %3436 = vmatprep.subr.bf16.mxu0 0
    %3437 = vmatpush1.bf16.msra.mxu0 0
    %3438 = vmatprep.subr.bf16.mxu0 0
    %3439 = vmatpush1.bf16.msra.mxu0 0
    %3440 = vmatprep.subr.bf16.mxu0 0
    %3441 = vmatpush1.bf16.msra.mxu0 0
    %3442 = vmatprep.mubr.bf16.mxu0 0
    %3443 = vmatmul.mubr.bf16.gmra.mrb[0].mxu0 %v2018
    %v3444 = vpop.f32.mrb[0].mxu0
    %v3445 = vadd.f32 %v3323, %v3444
    %v3446 = vpop.f32.mrb[0].mxu0
    %v3447 = vadd.f32 %v3327, %v3446
    %v3448 = vpop.f32.mrb[0].mxu0
    %v3449 = vadd.f32 %v3323, %v3448
    %v3450 = vpop.f32.mrb[0].mxu0
    %v3451 = vadd.f32 %v3327, %v3450
    %3452 = vmatprep.mubr.bf16.mxu0 0
    %3453 = vmatmul.mubr.bf16.gmra.mrb[0].mxu0 %v2019
    %v3454 = vpop.f32.mrb[0].mxu0
    %v3455 = vadd.f32 %v3323, %v3454
    %v3456 = vpop.f32.mrb[0].mxu0
    %v3457 = vadd.f32 %v3327, %v3456
    %v3458 = vpop.f32.mrb[0].mxu0
    %v3459 = vadd.f32 %v3323, %v3458
    %v3460 = vpop.f32.mrb[0].mxu0
    %v3461 = vadd.f32 %v3327, %v3460
    %3462 = vmatprep.mubr.bf16.mxu0 0
    %3463 = vmatmul.mubr.bf16.gmra.mrb[0].mxu0 %v2020
    %v3464 = vpop.f32.mrb[0].mxu0
    %v3465 = vadd.f32 %v3323, %v3464
    %v3466 = vpop.f32.mrb[0].mxu0
    %v3467 = vadd.f32 %v3327, %v3466
    %v3468 = vpop.f32.mrb[0].mxu0
    %v3469 = vadd.f32 %v3323, %v3468
    %v3470 = vpop.f32.mrb[0].mxu0
    %v3471 = vadd.f32 %v3327, %v3470
    %3472 = vmatprep.mubr.bf16.mxu0 0
    %3473 = vmatmul.mubr.bf16.gmra.mrb[0].mxu0 %v2021
    %v3474 = vpop.f32.mrb[0].mxu0
    %v3475 = vadd.f32 %v3323, %v3474
    %v3476 = vpop.f32.mrb[0].mxu0
    %v3477 = vadd.f32 %v3327, %v3476
    %v3478 = vpop.f32.mrb[0].mxu0
    %v3479 = vadd.f32 %v3323, %v3478
    %v3480 = vpop.f32.mrb[0].mxu0
    %v3481 = vadd.f32 %v3327, %v3480
    %3482 = vmatprep.mubr.bf16.mxu0 0
    %3483 = vmatmul.mubr.bf16.gmra.mrb[0].mxu0 %v2022
    %v3484 = vpop.f32.mrb[0].mxu0
    %v3485 = vadd.f32 %v3323, %v3484
    %v3486 = vpop.f32.mrb[0].mxu0
    %v3487 = vadd.f32 %v3327, %v3486
    %v3488 = vpop.f32.mrb[0].mxu0
    %v3489 = vadd.f32 %v3323, %v3488
    %v3490 = vpop.f32.mrb[0].mxu0
    %v3491 = vadd.f32 %v3327, %v3490
    %3492 = vmatprep.mubr.bf16.mxu0 0
    %3493 = vmatmul.mubr.bf16.gmra.mrb[0].mxu0 %v2023
    %v3494 = vpop.f32.mrb[0].mxu0
    %v3495 = vadd.f32 %v3323, %v3494
    %v3496 = vpop.f32.mrb[0].mxu0
    %v3497 = vadd.f32 %v3327, %v3496
    %v3498 = vpop.f32.mrb[0].mxu0
    %v3499 = vadd.f32 %v3323, %v3498
    %v3500 = vpop.f32.mrb[0].mxu0
    %v3501 = vadd.f32 %v3327, %v3500
    %3502 = vmatprep.mubr.bf16.mxu0 0
    %3503 = vmatmul.mubr.bf16.gmra.mrb[0].mxu0 %v2024
    %v3504 = vpop.f32.mrb[0].mxu0
    %v3505 = vadd.f32 %v3323, %v3504
    %v3506 = vpop.f32.mrb[0].mxu0
    %v3507 = vadd.f32 %v3327, %v3506
    %v3508 = vpop.f32.mrb[0].mxu0
    %v3509 = vadd.f32 %v3323, %v3508
    %v3510 = vpop.f32.mrb[0].mxu0
    %v3511 = vadd.f32 %v3327, %v3510
    %3512 = vmatprep.mubr.bf16.mxu0 0
    %3513 = vmatmul.mubr.bf16.gmra.mrb[0].mxu0 %v2025
    %v3514 = vpop.f32.mrb[0].mxu0
    %v3515 = vadd.f32 %v3323, %v3514
    %v3516 = vpop.f32.mrb[0].mxu0
    %v3517 = vadd.f32 %v3327, %v3516
    %v3518 = vpop.f32.mrb[0].mxu0
    %v3519 = vadd.f32 %v3323, %v3518
    %v3520 = vpop.f32.mrb[0].mxu0
    %v3521 = vadd.f32 %v3327, %v3520
    %3522 = vmatprep.mubr.bf16.mxu0 0
    %3523 = vmatmul.mubr.bf16.gmra.mrb[0].mxu0 %v2026
    %v3524 = vpop.f32.mrb[0].mxu0
    %v3525 = vadd.f32 %v3323, %v3524
    %v3526 = vpop.f32.mrb[0].mxu0
    %v3527 = vadd.f32 %v3327, %v3526
    %v3528 = vpop.f32.mrb[0].mxu0
    %v3529 = vadd.f32 %v3323, %v3528
    %v3530 = vpop.f32.mrb[0].mxu0
    %v3531 = vadd.f32 %v3327, %v3530
    %3532 = vmatprep.mubr.bf16.mxu0 0
    %3533 = vmatmul.mubr.bf16.gmra.mrb[0].mxu0 %v2027
    %v3534 = vpop.f32.mrb[0].mxu0
    %v3535 = vadd.f32 %v3323, %v3534
    %v3536 = vpop.f32.mrb[0].mxu0
    %v3537 = vadd.f32 %v3327, %v3536
    %v3538 = vpop.f32.mrb[0].mxu0
    %v3539 = vadd.f32 %v3323, %v3538
    %v3540 = vpop.f32.mrb[0].mxu0
    %v3541 = vadd.f32 %v3327, %v3540
    %3542 = vmatprep.mubr.bf16.mxu0 0
    %3543 = vmatmul.mubr.bf16.gmra.mrb[0].mxu0 %v2028
    %v3544 = vpop.f32.mrb[0].mxu0
    %v3545 = vadd.f32 %v3323, %v3544
    %v3546 = vpop.f32.mrb[0].mxu0
    %v3547 = vadd.f32 %v3327, %v3546
    %v3548 = vpop.f32.mrb[0].mxu0
    %v3549 = vadd.f32 %v3323, %v3548
    %v3550 = vpop.f32.mrb[0].mxu0
    %v3551 = vadd.f32 %v3327, %v3550
    %3552 = vmatprep.mubr.bf16.mxu0 0
    %3553 = vmatmul.mubr.bf16.gmra.mrb[0].mxu0 %v2029
    %v3554 = vpop.f32.mrb[0].mxu0
    %v3555 = vadd.f32 %v3323, %v3554
    %v3556 = vpop.f32.mrb[0].mxu0
    %v3557 = vadd.f32 %v3327, %v3556
    %v3558 = vpop.f32.mrb[0].mxu0
    %v3559 = vadd.f32 %v3323, %v3558
    %v3560 = vpop.f32.mrb[0].mxu0
    %v3561 = vadd.f32 %v3327, %v3560
    %3562 = vmatprep.mubr.bf16.mxu0 0
    %3563 = vmatmul.mubr.bf16.gmra.mrb[0].mxu0 %v2030
    %v3564 = vpop.f32.mrb[0].mxu0
    %v3565 = vadd.f32 %v3323, %v3564
    %v3566 = vpop.f32.mrb[0].mxu0
    %v3567 = vadd.f32 %v3327, %v3566
    %v3568 = vpop.f32.mrb[0].mxu0
    %v3569 = vadd.f32 %v3323, %v3568
    %v3570 = vpop.f32.mrb[0].mxu0
    %v3571 = vadd.f32 %v3327, %v3570
    %3572 = vmatprep.mubr.bf16.mxu0 0
    %3573 = vmatmul.mubr.bf16.gmra.mrb[0].mxu0 %v2031
    %v3574 = vpop.f32.mrb[0].mxu0
    %v3575 = vadd.f32 %v3323, %v3574
    %v3576 = vpop.f32.mrb[0].mxu0
    %v3577 = vadd.f32 %v3327, %v3576
    %v3578 = vpop.f32.mrb[0].mxu0
    %v3579 = vadd.f32 %v3323, %v3578
    %v3580 = vpop.f32.mrb[0].mxu0
    %v3581 = vadd.f32 %v3327, %v3580
    %3582 = vmatprep.mubr.bf16.mxu0 0
    %3583 = vmatmul.mubr.bf16.gmra.mrb[0].mxu0 %v2032
    %v3584 = vpop.f32.mrb[0].mxu0
    %v3585 = vadd.f32 %v3323, %v3584
    %v3586 = vpop.f32.mrb[0].mxu0
    %v3587 = vadd.f32 %v3327, %v3586
    %v3588 = vpop.f32.mrb[0].mxu0
    %v3589 = vadd.f32 %v3323, %v3588
    %v3590 = vpop.f32.mrb[0].mxu0
    %v3591 = vadd.f32 %v3327, %v3590
    %3592 = vmatprep.mubr.bf16.mxu0 0
    %3593 = vmatmul.mubr.bf16.gmra.mrb[0].mxu0 %v2033
    %v3594 = vpop.f32.mrb[0].mxu0
    %v3595 = vadd.f32 %v3323, %v3594
    %v3596 = vpop.f32.mrb[0].mxu0
    %v3597 = vadd.f32 %v3327, %v3596
    %v3598 = vpop.f32.mrb[0].mxu0
    %v3599 = vadd.f32 %v3323, %v3598
    %v3600 = vpop.f32.mrb[0].mxu0
    %v3601 = vadd.f32 %v3327, %v3600
    %3602 = vdwg.mxu0
    %v3603 = vmul.f32 %v3445, 0.5
    %v3604 = vmul.f32 %v3447, 0.5
    %v3605 = vmul.f32 %v3449, 0.5
    %v3606 = vmul.f32 %v3451, 0.5
    %v3607 = vmul.f32 %v3455, 0.5
    %v3608 = vmul.f32 %v3457, 0.5
    %v3609 = vmul.f32 %v3459, 0.5
    %v3610 = vmul.f32 %v3461, 0.5
    %v3611 = vmul.f32 %v3465, 0.5
    %v3612 = vmul.f32 %v3467, 0.5
    %v3613 = vmul.f32 %v3469, 0.5
    %v3614 = vmul.f32 %v3471, 0.5
    %v3615 = vmul.f32 %v3475, 0.5
    %v3616 = vmul.f32 %v3477, 0.5
    %v3617 = vmul.f32 %v3479, 0.5
    %v3618 = vmul.f32 %v3481, 0.5
    %v3619 = vmul.f32 %v3485, 0.5
    %v3620 = vmul.f32 %v3487, 0.5
    %v3621 = vmul.f32 %v3489, 0.5
    %v3622 = vmul.f32 %v3491, 0.5
    %v3623 = vmul.f32 %v3495, 0.5
    %v3624 = vmul.f32 %v3497, 0.5
    %v3625 = vmul.f32 %v3499, 0.5
    %v3626 = vmul.f32 %v3501, 0.5
    %v3627 = vmul.f32 %v3505, 0.5
    %v3628 = vmul.f32 %v3507, 0.5
    %v3629 = vmul.f32 %v3509, 0.5
    %v3630 = vmul.f32 %v3511, 0.5
    %v3631 = vmul.f32 %v3515, 0.5
    %v3632 = vmul.f32 %v3517, 0.5
    %v3633 = vmul.f32 %v3519, 0.5
    %v3634 = vmul.f32 %v3521, 0.5
    %v3635 = vmul.f32 %v3525, 0.5
    %v3636 = vmul.f32 %v3527, 0.5
    %v3637 = vmul.f32 %v3529, 0.5
    %v3638 = vmul.f32 %v3531, 0.5
    %v3639 = vmul.f32 %v3535, 0.5
    %v3640 = vmul.f32 %v3537, 0.5
    %v3641 = vmul.f32 %v3539, 0.5
    %v3642 = vmul.f32 %v3541, 0.5
    %v3643 = vmul.f32 %v3545, 0.5
    %v3644 = vmul.f32 %v3547, 0.5
    %v3645 = vmul.f32 %v3549, 0.5
    %v3646 = vmul.f32 %v3551, 0.5
    %v3647 = vmul.f32 %v3555, 0.5
    %v3648 = vmul.f32 %v3557, 0.5
    %v3649 = vmul.f32 %v3559, 0.5
    %v3650 = vmul.f32 %v3561, 0.5
    %v3651 = vmul.f32 %v3565, 0.5
    %v3652 = vmul.f32 %v3567, 0.5
    %v3653 = vmul.f32 %v3569, 0.5
    %v3654 = vmul.f32 %v3571, 0.5
    %v3655 = vmul.f32 %v3575, 0.5
    %v3656 = vmul.f32 %v3577, 0.5
    %v3657 = vmul.f32 %v3579, 0.5
    %v3658 = vmul.f32 %v3581, 0.5
    %v3659 = vmul.f32 %v3585, 0.5
    %v3660 = vmul.f32 %v3587, 0.5
    %v3661 = vmul.f32 %v3589, 0.5
    %v3662 = vmul.f32 %v3591, 0.5
    %v3663 = vmul.f32 %v3595, 0.5
    %v3664 = vmul.f32 %v3597, 0.5
    %v3665 = vmul.f32 %v3599, 0.5
    %v3666 = vmul.f32 %v3601, 0.5
    %v3667 = vmul.f32 %v3445, 0.044715
    %v3668 = vmul.f32 %v3447, 0.044715
    %v3669 = vmul.f32 %v3449, 0.044715
    %v3670 = vmul.f32 %v3451, 0.044715
    %v3671 = vmul.f32 %v3455, 0.044715
    %v3672 = vmul.f32 %v3457, 0.044715
    %v3673 = vmul.f32 %v3459, 0.044715
    %v3674 = vmul.f32 %v3461, 0.044715
    %v3675 = vmul.f32 %v3465, 0.044715
    %v3676 = vmul.f32 %v3467, 0.044715
    %v3677 = vmul.f32 %v3469, 0.044715
    %v3678 = vmul.f32 %v3471, 0.044715
    %v3679 = vmul.f32 %v3475, 0.044715
    %v3680 = vmul.f32 %v3477, 0.044715
    %v3681 = vmul.f32 %v3479, 0.044715
    %v3682 = vmul.f32 %v3481, 0.044715
    %v3683 = vmul.f32 %v3485, 0.044715
    %v3684 = vmul.f32 %v3487, 0.044715
    %v3685 = vmul.f32 %v3489, 0.044715
    %v3686 = vmul.f32 %v3491, 0.044715
    %v3687 = vmul.f32 %v3495, 0.044715
    %v3688 = vmul.f32 %v3497, 0.044715
    %v3689 = vmul.f32 %v3499, 0.044715
    %v3690 = vmul.f32 %v3501, 0.044715
    %v3691 = vmul.f32 %v3505, 0.044715
    %v3692 = vmul.f32 %v3507, 0.044715
    %v3693 = vmul.f32 %v3509, 0.044715
    %v3694 = vmul.f32 %v3511, 0.044715
    %v3695 = vmul.f32 %v3515, 0.044715
    %v3696 = vmul.f32 %v3517, 0.044715
    %v3697 = vmul.f32 %v3519, 0.044715
    %v3698 = vmul.f32 %v3521, 0.044715
    %v3699 = vmul.f32 %v3525, 0.044715
    %v3700 = vmul.f32 %v3527, 0.044715
    %v3701 = vmul.f32 %v3529, 0.044715
    %v3702 = vmul.f32 %v3531, 0.044715
    %v3703 = vmul.f32 %v3535, 0.044715
    %v3704 = vmul.f32 %v3537, 0.044715
    %v3705 = vmul.f32 %v3539, 0.044715
    %v3706 = vmul.f32 %v3541, 0.044715
    %v3707 = vmul.f32 %v3545, 0.044715
    %v3708 = vmul.f32 %v3547, 0.044715
    %v3709 = vmul.f32 %v3549, 0.044715
    %v3710 = vmul.f32 %v3551, 0.044715
    %v3711 = vmul.f32 %v3555, 0.044715
    %v3712 = vmul.f32 %v3557, 0.044715
    %v3713 = vmul.f32 %v3559, 0.044715
    %v3714 = vmul.f32 %v3561, 0.044715
    %v3715 = vmul.f32 %v3565, 0.044715
    %v3716 = vmul.f32 %v3567, 0.044715
    %v3717 = vmul.f32 %v3569, 0.044715
    %v3718 = vmul.f32 %v3571, 0.044715
    %v3719 = vmul.f32 %v3575, 0.044715
    %v3720 = vmul.f32 %v3577, 0.044715
    %v3721 = vmul.f32 %v3579, 0.044715
    %v3722 = vmul.f32 %v3581, 0.044715
    %v3723 = vmul.f32 %v3585, 0.044715
    %v3724 = vmul.f32 %v3587, 0.044715
    %v3725 = vmul.f32 %v3589, 0.044715
    %v3726 = vmul.f32 %v3591, 0.044715
    %v3727 = vmul.f32 %v3595, 0.044715
    %v3728 = vmul.f32 %v3597, 0.044715
    %v3729 = vmul.f32 %v3599, 0.044715
    %v3730 = vmul.f32 %v3601, 0.044715
    %v3731 = vmul.f32 %v3667, %v3445
    %v3732 = vmul.f32 %v3668, %v3447
    %v3733 = vmul.f32 %v3669, %v3449
    %v3734 = vmul.f32 %v3670, %v3451
    %v3735 = vmul.f32 %v3671, %v3455
    %v3736 = vmul.f32 %v3672, %v3457
    %v3737 = vmul.f32 %v3673, %v3459
    %v3738 = vmul.f32 %v3674, %v3461
    %v3739 = vmul.f32 %v3675, %v3465
    %v3740 = vmul.f32 %v3676, %v3467
    %v3741 = vmul.f32 %v3677, %v3469
    %v3742 = vmul.f32 %v3678, %v3471
    %v3743 = vmul.f32 %v3679, %v3475
    %v3744 = vmul.f32 %v3680, %v3477
    %v3745 = vmul.f32 %v3681, %v3479
    %v3746 = vmul.f32 %v3682, %v3481
    %v3747 = vmul.f32 %v3683, %v3485
    %v3748 = vmul.f32 %v3684, %v3487
    %v3749 = vmul.f32 %v3685, %v3489
    %v3750 = vmul.f32 %v3686, %v3491
    %v3751 = vmul.f32 %v3687, %v3495
    %v3752 = vmul.f32 %v3688, %v3497
    %v3753 = vmul.f32 %v3689, %v3499
    %v3754 = vmul.f32 %v3690, %v3501
    %v3755 = vmul.f32 %v3691, %v3505
    %v3756 = vmul.f32 %v3692, %v3507
    %v3757 = vmul.f32 %v3693, %v3509
    %v3758 = vmul.f32 %v3694, %v3511
    %v3759 = vmul.f32 %v3695, %v3515
    %v3760 = vmul.f32 %v3696, %v3517
    %v3761 = vmul.f32 %v3697, %v3519
    %v3762 = vmul.f32 %v3698, %v3521
    %v3763 = vmul.f32 %v3699, %v3525
    %v3764 = vmul.f32 %v3700, %v3527
    %v3765 = vmul.f32 %v3701, %v3529
    %v3766 = vmul.f32 %v3702, %v3531
    %v3767 = vmul.f32 %v3703, %v3535
    %v3768 = vmul.f32 %v3704, %v3537
    %v3769 = vmul.f32 %v3705, %v3539
    %v3770 = vmul.f32 %v3706, %v3541
    %v3771 = vmul.f32 %v3707, %v3545
    %v3772 = vmul.f32 %v3708, %v3547
    %v3773 = vmul.f32 %v3709, %v3549
    %v3774 = vmul.f32 %v3710, %v3551
    %v3775 = vmul.f32 %v3711, %v3555
    %v3776 = vmul.f32 %v3712, %v3557
    %v3777 = vmul.f32 %v3713, %v3559
    %v3778 = vmul.f32 %v3714, %v3561
    %v3779 = vmul.f32 %v3715, %v3565
    %v3780 = vmul.f32 %v3716, %v3567
    %v3781 = vmul.f32 %v3717, %v3569
    %v3782 = vmul.f32 %v3718, %v3571
    %v3783 = vmul.f32 %v3719, %v3575
    %v3784 = vmul.f32 %v3720, %v3577
    %v3785 = vmul.f32 %v3721, %v3579
    %v3786 = vmul.f32 %v3722, %v3581
    %v3787 = vmul.f32 %v3723, %v3585
    %v3788 = vmul.f32 %v3724, %v3587
    %v3789 = vmul.f32 %v3725, %v3589
    %v3790 = vmul.f32 %v3726, %v3591
    %v3791 = vmul.f32 %v3727, %v3595
    %v3792 = vmul.f32 %v3728, %v3597
    %v3793 = vmul.f32 %v3729, %v3599
    %v3794 = vmul.f32 %v3730, %v3601
    %v3795 = vmul.f32 %v3731, %v3445
    %v3796 = vmul.f32 %v3732, %v3447
    %v3797 = vmul.f32 %v3733, %v3449
    %v3798 = vmul.f32 %v3734, %v3451
    %v3799 = vmul.f32 %v3735, %v3455
    %v3800 = vmul.f32 %v3736, %v3457
    %v3801 = vmul.f32 %v3737, %v3459
    %v3802 = vmul.f32 %v3738, %v3461
    %v3803 = vmul.f32 %v3739, %v3465
    %v3804 = vmul.f32 %v3740, %v3467
    %v3805 = vmul.f32 %v3741, %v3469
    %v3806 = vmul.f32 %v3742, %v3471
    %v3807 = vmul.f32 %v3743, %v3475
    %v3808 = vmul.f32 %v3744, %v3477
    %v3809 = vmul.f32 %v3745, %v3479
    %v3810 = vmul.f32 %v3746, %v3481
    %v3811 = vmul.f32 %v3747, %v3485
    %v3812 = vmul.f32 %v3748, %v3487
    %v3813 = vmul.f32 %v3749, %v3489
    %v3814 = vmul.f32 %v3750, %v3491
    %v3815 = vmul.f32 %v3751, %v3495
    %v3816 = vmul.f32 %v3752, %v3497
    %v3817 = vmul.f32 %v3753, %v3499
    %v3818 = vmul.f32 %v3754, %v3501
    %v3819 = vmul.f32 %v3755, %v3505
    %v3820 = vmul.f32 %v3756, %v3507
    %v3821 = vmul.f32 %v3757, %v3509
    %v3822 = vmul.f32 %v3758, %v3511
    %v3823 = vmul.f32 %v3759, %v3515
    %v3824 = vmul.f32 %v3760, %v3517
    %v3825 = vmul.f32 %v3761, %v3519
    %v3826 = vmul.f32 %v3762, %v3521
    %v3827 = vmul.f32 %v3763, %v3525
    %v3828 = vmul.f32 %v3764, %v3527
    %v3829 = vmul.f32 %v3765, %v3529
    %v3830 = vmul.f32 %v3766, %v3531
    %v3831 = vmul.f32 %v3767, %v3535
    %v3832 = vmul.f32 %v3768, %v3537
    %v3833 = vmul.f32 %v3769, %v3539
    %v3834 = vmul.f32 %v3770, %v3541
    %v3835 = vmul.f32 %v3771, %v3545
    %v3836 = vmul.f32 %v3772, %v3547
    %v3837 = vmul.f32 %v3773, %v3549
    %v3838 = vmul.f32 %v3774, %v3551
    %v3839 = vmul.f32 %v3775, %v3555
    %v3840 = vmul.f32 %v3776, %v3557
    %v3841 = vmul.f32 %v3777, %v3559
    %v3842 = vmul.f32 %v3778, %v3561
    %v3843 = vmul.f32 %v3779, %v3565
    %v3844 = vmul.f32 %v3780, %v3567
    %v3845 = vmul.f32 %v3781, %v3569
    %v3846 = vmul.f32 %v3782, %v3571
    %v3847 = vmul.f32 %v3783, %v3575
    %v3848 = vmul.f32 %v3784, %v3577
    %v3849 = vmul.f32 %v3785, %v3579
    %v3850 = vmul.f32 %v3786, %v3581
    %v3851 = vmul.f32 %v3787, %v3585
    %v3852 = vmul.f32 %v3788, %v3587
    %v3853 = vmul.f32 %v3789, %v3589
    %v3854 = vmul.f32 %v3790, %v3591
    %v3855 = vmul.f32 %v3791, %v3595
    %v3856 = vmul.f32 %v3792, %v3597
    %v3857 = vmul.f32 %v3793, %v3599
    %v3858 = vmul.f32 %v3794, %v3601
    %v3859 = vadd.f32 %v3445, %v3795
    %v3860 = vadd.f32 %v3447, %v3796
    %v3861 = vadd.f32 %v3449, %v3797
    %v3862 = vadd.f32 %v3451, %v3798
    %v3863 = vadd.f32 %v3455, %v3799
    %v3864 = vadd.f32 %v3457, %v3800
    %v3865 = vadd.f32 %v3459, %v3801
    %v3866 = vadd.f32 %v3461, %v3802
    %v3867 = vadd.f32 %v3465, %v3803
    %v3868 = vadd.f32 %v3467, %v3804
    %v3869 = vadd.f32 %v3469, %v3805
    %v3870 = vadd.f32 %v3471, %v3806
    %v3871 = vadd.f32 %v3475, %v3807
    %v3872 = vadd.f32 %v3477, %v3808
    %v3873 = vadd.f32 %v3479, %v3809
    %v3874 = vadd.f32 %v3481, %v3810
    %v3875 = vadd.f32 %v3485, %v3811
    %v3876 = vadd.f32 %v3487, %v3812
    %v3877 = vadd.f32 %v3489, %v3813
    %v3878 = vadd.f32 %v3491, %v3814
    %v3879 = vadd.f32 %v3495, %v3815
    %v3880 = vadd.f32 %v3497, %v3816
    %v3881 = vadd.f32 %v3499, %v3817
    %v3882 = vadd.f32 %v3501, %v3818
    %v3883 = vadd.f32 %v3505, %v3819
    %v3884 = vadd.f32 %v3507, %v3820
    %v3885 = vadd.f32 %v3509, %v3821
    %v3886 = vadd.f32 %v3511, %v3822
    %v3887 = vadd.f32 %v3515, %v3823
    %v3888 = vadd.f32 %v3517, %v3824
    %v3889 = vadd.f32 %v3519, %v3825
    %v3890 = vadd.f32 %v3521, %v3826
    %v3891 = vadd.f32 %v3525, %v3827
    %v3892 = vadd.f32 %v3527, %v3828
    %v3893 = vadd.f32 %v3529, %v3829
    %v3894 = vadd.f32 %v3531, %v3830
    %v3895 = vadd.f32 %v3535, %v3831
    %v3896 = vadd.f32 %v3537, %v3832
    %v3897 = vadd.f32 %v3539, %v3833
    %v3898 = vadd.f32 %v3541, %v3834
    %v3899 = vadd.f32 %v3545, %v3835
    %v3900 = vadd.f32 %v3547, %v3836
    %v3901 = vadd.f32 %v3549, %v3837
    %v3902 = vadd.f32 %v3551, %v3838
    %v3903 = vadd.f32 %v3555, %v3839
    %v3904 = vadd.f32 %v3557, %v3840
    %v3905 = vadd.f32 %v3559, %v3841
    %v3906 = vadd.f32 %v3561, %v3842
    %v3907 = vadd.f32 %v3565, %v3843
    %v3908 = vadd.f32 %v3567, %v3844
    %v3909 = vadd.f32 %v3569, %v3845
    %v3910 = vadd.f32 %v3571, %v3846
    %v3911 = vadd.f32 %v3575, %v3847
    %v3912 = vadd.f32 %v3577, %v3848
    %v3913 = vadd.f32 %v3579, %v3849
    %v3914 = vadd.f32 %v3581, %v3850
    %v3915 = vadd.f32 %v3585, %v3851
    %v3916 = vadd.f32 %v3587, %v3852
    %v3917 = vadd.f32 %v3589, %v3853
    %v3918 = vadd.f32 %v3591, %v3854
    %v3919 = vadd.f32 %v3595, %v3855
    %v3920 = vadd.f32 %v3597, %v3856
    %v3921 = vadd.f32 %v3599, %v3857
    %v3922 = vadd.f32 %v3601, %v3858
    %v3923 = vmul.f32 %v3859, 0.7978846
    %v3924 = vmul.f32 %v3860, 0.7978846
    %v3925 = vmul.f32 %v3861, 0.7978846
    %v3926 = vmul.f32 %v3862, 0.7978846
    %v3927 = vmul.f32 %v3863, 0.7978846
    %v3928 = vmul.f32 %v3864, 0.7978846
    %v3929 = vmul.f32 %v3865, 0.7978846
    %v3930 = vmul.f32 %v3866, 0.7978846
    %v3931 = vmul.f32 %v3867, 0.7978846
    %v3932 = vmul.f32 %v3868, 0.7978846
    %v3933 = vmul.f32 %v3869, 0.7978846
    %v3934 = vmul.f32 %v3870, 0.7978846
    %v3935 = vmul.f32 %v3871, 0.7978846
    %v3936 = vmul.f32 %v3872, 0.7978846
    %v3937 = vmul.f32 %v3873, 0.7978846
    %v3938 = vmul.f32 %v3874, 0.7978846
    %v3939 = vmul.f32 %v3875, 0.7978846
    %v3940 = vmul.f32 %v3876, 0.7978846
    %v3941 = vmul.f32 %v3877, 0.7978846
    %v3942 = vmul.f32 %v3878, 0.7978846
    %v3943 = vmul.f32 %v3879, 0.7978846
    %v3944 = vmul.f32 %v3880, 0.7978846
    %v3945 = vmul.f32 %v3881, 0.7978846
    %v3946 = vmul.f32 %v3882, 0.7978846
    %v3947 = vmul.f32 %v3883, 0.7978846
    %v3948 = vmul.f32 %v3884, 0.7978846
    %v3949 = vmul.f32 %v3885, 0.7978846
    %v3950 = vmul.f32 %v3886, 0.7978846
    %v3951 = vmul.f32 %v3887, 0.7978846
    %v3952 = vmul.f32 %v3888, 0.7978846
    %v3953 = vmul.f32 %v3889, 0.7978846
    %v3954 = vmul.f32 %v3890, 0.7978846
    %v3955 = vmul.f32 %v3891, 0.7978846
    %v3956 = vmul.f32 %v3892, 0.7978846
    %v3957 = vmul.f32 %v3893, 0.7978846
    %v3958 = vmul.f32 %v3894, 0.7978846
    %v3959 = vmul.f32 %v3895, 0.7978846
    %v3960 = vmul.f32 %v3896, 0.7978846
    %v3961 = vmul.f32 %v3897, 0.7978846
    %v3962 = vmul.f32 %v3898, 0.7978846
    %v3963 = vmul.f32 %v3899, 0.7978846
    %v3964 = vmul.f32 %v3900, 0.7978846
    %v3965 = vmul.f32 %v3901, 0.7978846
    %v3966 = vmul.f32 %v3902, 0.7978846
    %v3967 = vmul.f32 %v3903, 0.7978846
    %v3968 = vmul.f32 %v3904, 0.7978846
    %v3969 = vmul.f32 %v3905, 0.7978846
    %v3970 = vmul.f32 %v3906, 0.7978846
    %v3971 = vmul.f32 %v3907, 0.7978846
    %v3972 = vmul.f32 %v3908, 0.7978846
    %v3973 = vmul.f32 %v3909, 0.7978846
    %v3974 = vmul.f32 %v3910, 0.7978846
    %v3975 = vmul.f32 %v3911, 0.7978846
    %v3976 = vmul.f32 %v3912, 0.7978846
    %v3977 = vmul.f32 %v3913, 0.7978846
    %v3978 = vmul.f32 %v3914, 0.7978846
    %v3979 = vmul.f32 %v3915, 0.7978846
    %v3980 = vmul.f32 %v3916, 0.7978846
    %v3981 = vmul.f32 %v3917, 0.7978846
    %v3982 = vmul.f32 %v3918, 0.7978846
    %v3983 = vmul.f32 %v3919, 0.7978846
    %v3984 = vmul.f32 %v3920, 0.7978846
    %v3985 = vmul.f32 %v3921, 0.7978846
    %v3986 = vmul.f32 %v3922, 0.7978846
    %v3987 = vtanh.pop %v3923
    %v3988 = vtanh.pop %v3924
    %v3989 = vtanh.pop %v3925
    %v3990 = vtanh.pop %v3926
    %v3991 = vtanh.pop %v3927
    %v3992 = vtanh.pop %v3928
    %v3993 = vtanh.pop %v3929
    %v3994 = vtanh.pop %v3930
    %v3995 = vtanh.pop %v3931
    %v3996 = vtanh.pop %v3932
    %v3997 = vtanh.pop %v3933
    %v3998 = vtanh.pop %v3934
    %v3999 = vtanh.pop %v3935
    %v4000 = vtanh.pop %v3936
    %v4001 = vtanh.pop %v3937
    %v4002 = vtanh.pop %v3938
    %v4003 = vtanh.pop %v3939
    %v4004 = vtanh.pop %v3940
    %v4005 = vtanh.pop %v3941
    %v4006 = vtanh.pop %v3942
    %v4007 = vtanh.pop %v3943
    %v4008 = vtanh.pop %v3944
    %v4009 = vtanh.pop %v3945
    %v4010 = vtanh.pop %v3946
    %v4011 = vtanh.pop %v3947
    %v4012 = vtanh.pop %v3948
    %v4013 = vtanh.pop %v3949
    %v4014 = vtanh.pop %v3950
    %v4015 = vtanh.pop %v3951
    %v4016 = vtanh.pop %v3952
    %v4017 = vtanh.pop %v3953
    %v4018 = vtanh.pop %v3954
    %v4019 = vtanh.pop %v3955
    %v4020 = vtanh.pop %v3956
    %v4021 = vtanh.pop %v3957
    %v4022 = vtanh.pop %v3958
    %v4023 = vtanh.pop %v3959
    %v4024 = vtanh.pop %v3960
    %v4025 = vtanh.pop %v3961
    %v4026 = vtanh.pop %v3962
    %v4027 = vtanh.pop %v3963
    %v4028 = vtanh.pop %v3964
    %v4029 = vtanh.pop %v3965
    %v4030 = vtanh.pop %v3966
    %v4031 = vtanh.pop %v3967
    %v4032 = vtanh.pop %v3968
    %v4033 = vtanh.pop %v3969
    %v4034 = vtanh.pop %v3970
    %v4035 = vtanh.pop %v3971
    %v4036 = vtanh.pop %v3972
    %v4037 = vtanh.pop %v3973
    %v4038 = vtanh.pop %v3974
    %v4039 = vtanh.pop %v3975
    %v4040 = vtanh.pop %v3976
    %v4041 = vtanh.pop %v3977
    %v4042 = vtanh.pop %v3978
    %v4043 = vtanh.pop %v3979
    %v4044 = vtanh.pop %v3980
    %v4045 = vtanh.pop %v3981
    %v4046 = vtanh.pop %v3982
    %v4047 = vtanh.pop %v3983
    %v4048 = vtanh.pop %v3984
    %v4049 = vtanh.pop %v3985
    %v4050 = vtanh.pop %v3986
    %v4051 = vadd.f32 %v3987, 1.0
    %v4052 = vadd.f32 %v3988, 1.0
    %v4053 = vadd.f32 %v3989, 1.0
    %v4054 = vadd.f32 %v3990, 1.0
    %v4055 = vadd.f32 %v3991, 1.0
    %v4056 = vadd.f32 %v3992, 1.0
    %v4057 = vadd.f32 %v3993, 1.0
    %v4058 = vadd.f32 %v3994, 1.0
    %v4059 = vadd.f32 %v3995, 1.0
    %v4060 = vadd.f32 %v3996, 1.0
    %v4061 = vadd.f32 %v3997, 1.0
    %v4062 = vadd.f32 %v3998, 1.0
    %v4063 = vadd.f32 %v3999, 1.0
    %v4064 = vadd.f32 %v4000, 1.0
    %v4065 = vadd.f32 %v4001, 1.0
    %v4066 = vadd.f32 %v4002, 1.0
    %v4067 = vadd.f32 %v4003, 1.0
    %v4068 = vadd.f32 %v4004, 1.0
    %v4069 = vadd.f32 %v4005, 1.0
    %v4070 = vadd.f32 %v4006, 1.0
    %v4071 = vadd.f32 %v4007, 1.0
    %v4072 = vadd.f32 %v4008, 1.0
    %v4073 = vadd.f32 %v4009, 1.0
    %v4074 = vadd.f32 %v4010, 1.0
    %v4075 = vadd.f32 %v4011, 1.0
    %v4076 = vadd.f32 %v4012, 1.0
    %v4077 = vadd.f32 %v4013, 1.0
    %v4078 = vadd.f32 %v4014, 1.0
    %v4079 = vadd.f32 %v4015, 1.0
    %v4080 = vadd.f32 %v4016, 1.0
    %v4081 = vadd.f32 %v4017, 1.0
    %v4082 = vadd.f32 %v4018, 1.0
    %v4083 = vadd.f32 %v4019, 1.0
    %v4084 = vadd.f32 %v4020, 1.0
    %v4085 = vadd.f32 %v4021, 1.0
    %v4086 = vadd.f32 %v4022, 1.0
    %v4087 = vadd.f32 %v4023, 1.0
    %v4088 = vadd.f32 %v4024, 1.0
    %v4089 = vadd.f32 %v4025, 1.0
    %v4090 = vadd.f32 %v4026, 1.0
    %v4091 = vadd.f32 %v4027, 1.0
    %v4092 = vadd.f32 %v4028, 1.0
    %v4093 = vadd.f32 %v4029, 1.0
    %v4094 = vadd.f32 %v4030, 1.0
    %v4095 = vadd.f32 %v4031, 1.0
    %v4096 = vadd.f32 %v4032, 1.0
    %v4097 = vadd.f32 %v4033, 1.0
    %v4098 = vadd.f32 %v4034, 1.0
    %v4099 = vadd.f32 %v4035, 1.0
    %v4100 = vadd.f32 %v4036, 1.0
    %v4101 = vadd.f32 %v4037, 1.0
    %v4102 = vadd.f32 %v4038, 1.0
    %v4103 = vadd.f32 %v4039, 1.0
    %v4104 = vadd.f32 %v4040, 1.0
    %v4105 = vadd.f32 %v4041, 1.0
    %v4106 = vadd.f32 %v4042, 1.0
    %v4107 = vadd.f32 %v4043, 1.0
    %v4108 = vadd.f32 %v4044, 1.0
    %v4109 = vadd.f32 %v4045, 1.0
    %v4110 = vadd.f32 %v4046, 1.0
    %v4111 = vadd.f32 %v4047, 1.0
    %v4112 = vadd.f32 %v4048, 1.0
    %v4113 = vadd.f32 %v4049, 1.0
    %v4114 = vadd.f32 %v4050, 1.0
    %v4115 = vmul.f32 %v3603, %v4051
    %v4116 = vmul.f32 %v3604, %v4052
    %v4117 = vmul.f32 %v3605, %v4053
    %v4118 = vmul.f32 %v3606, %v4054
    %v4119 = vmul.f32 %v3607, %v4055
    %v4120 = vmul.f32 %v3608, %v4056
    %v4121 = vmul.f32 %v3609, %v4057
    %v4122 = vmul.f32 %v3610, %v4058
    %v4123 = vmul.f32 %v3611, %v4059
    %v4124 = vmul.f32 %v3612, %v4060
    %v4125 = vmul.f32 %v3613, %v4061
    %v4126 = vmul.f32 %v3614, %v4062
    %v4127 = vmul.f32 %v3615, %v4063
    %v4128 = vmul.f32 %v3616, %v4064
    %v4129 = vmul.f32 %v3617, %v4065
    %v4130 = vmul.f32 %v3618, %v4066
    %v4131 = vmul.f32 %v3619, %v4067
    %v4132 = vmul.f32 %v3620, %v4068
    %v4133 = vmul.f32 %v3621, %v4069
    %v4134 = vmul.f32 %v3622, %v4070
    %v4135 = vmul.f32 %v3623, %v4071
    %v4136 = vmul.f32 %v3624, %v4072
    %v4137 = vmul.f32 %v3625, %v4073
    %v4138 = vmul.f32 %v3626, %v4074
    %v4139 = vmul.f32 %v3627, %v4075
    %v4140 = vmul.f32 %v3628, %v4076
    %v4141 = vmul.f32 %v3629, %v4077
    %v4142 = vmul.f32 %v3630, %v4078
    %v4143 = vmul.f32 %v3631, %v4079
    %v4144 = vmul.f32 %v3632, %v4080
    %v4145 = vmul.f32 %v3633, %v4081
    %v4146 = vmul.f32 %v3634, %v4082
    %v4147 = vmul.f32 %v3635, %v4083
    %v4148 = vmul.f32 %v3636, %v4084
    %v4149 = vmul.f32 %v3637, %v4085
    %v4150 = vmul.f32 %v3638, %v4086
    %v4151 = vmul.f32 %v3639, %v4087
    %v4152 = vmul.f32 %v3640, %v4088
    %v4153 = vmul.f32 %v3641, %v4089
    %v4154 = vmul.f32 %v3642, %v4090
    %v4155 = vmul.f32 %v3643, %v4091
    %v4156 = vmul.f32 %v3644, %v4092
    %v4157 = vmul.f32 %v3645, %v4093
    %v4158 = vmul.f32 %v3646, %v4094
    %v4159 = vmul.f32 %v3647, %v4095
    %v4160 = vmul.f32 %v3648, %v4096
    %v4161 = vmul.f32 %v3649, %v4097
    %v4162 = vmul.f32 %v3650, %v4098
    %v4163 = vmul.f32 %v3651, %v4099
    %v4164 = vmul.f32 %v3652, %v4100
    %v4165 = vmul.f32 %v3653, %v4101
    %v4166 = vmul.f32 %v3654, %v4102
    %v4167 = vmul.f32 %v3655, %v4103
    %v4168 = vmul.f32 %v3656, %v4104
    %v4169 = vmul.f32 %v3657, %v4105
    %v4170 = vmul.f32 %v3658, %v4106
    %v4171 = vmul.f32 %v3659, %v4107
    %v4172 = vmul.f32 %v3660, %v4108
    %v4173 = vmul.f32 %v3661, %v4109
    %v4174 = vmul.f32 %v3662, %v4110
    %v4175 = vmul.f32 %v3663, %v4111
    %v4176 = vmul.f32 %v3664, %v4112
    %v4177 = vmul.f32 %v3665, %v4113
    %v4178 = vmul.f32 %v3666, %v4114
    %v4179 = vpack.c.bf16 %v4117, %v4115
    %v4180 = vpack.c.bf16 %v4118, %v4116
    %v4181 = vpack.c.bf16 %v4121, %v4119
    %v4182 = vpack.c.bf16 %v4122, %v4120
    %v4183 = vpack.c.bf16 %v4125, %v4123
    %v4184 = vpack.c.bf16 %v4126, %v4124
    %v4185 = vpack.c.bf16 %v4129, %v4127
    %v4186 = vpack.c.bf16 %v4130, %v4128
    %v4187 = vpack.c.bf16 %v4133, %v4131
    %v4188 = vpack.c.bf16 %v4134, %v4132
    %v4189 = vpack.c.bf16 %v4137, %v4135
    %v4190 = vpack.c.bf16 %v4138, %v4136
    %v4191 = vpack.c.bf16 %v4141, %v4139
    %v4192 = vpack.c.bf16 %v4142, %v4140
    %v4193 = vpack.c.bf16 %v4145, %v4143
    %v4194 = vpack.c.bf16 %v4146, %v4144
    %v4195 = vpack.c.bf16 %v4149, %v4147
    %v4196 = vpack.c.bf16 %v4150, %v4148
    %v4197 = vpack.c.bf16 %v4153, %v4151
    %v4198 = vpack.c.bf16 %v4154, %v4152
    %v4199 = vpack.c.bf16 %v4157, %v4155
    %v4200 = vpack.c.bf16 %v4158, %v4156
    %v4201 = vpack.c.bf16 %v4161, %v4159
    %v4202 = vpack.c.bf16 %v4162, %v4160
    %v4203 = vpack.c.bf16 %v4165, %v4163
    %v4204 = vpack.c.bf16 %v4166, %v4164
    %v4205 = vpack.c.bf16 %v4169, %v4167
    %v4206 = vpack.c.bf16 %v4170, %v4168
    %v4207 = vpack.c.bf16 %v4173, %v4171
    %v4208 = vpack.c.bf16 %v4174, %v4172
    %v4209 = vpack.c.bf16 %v4177, %v4175
    %v4210 = vpack.c.bf16 %v4178, %v4176
    %v4211 = vld [vmem:[%s3 + $0x80] sm:$0xf]
    %v4212 = vld [vmem:[%s3 + $0x84] sm:$0xf]
    %v4213 = vld [vmem:[%s3 + $0x88] sm:$0xf]
    %v4214 = vld [vmem:[%s3 + $0x8c] sm:$0xf]
    %v4215 = vld [vmem:[%s3 + $0x90] sm:$0xf]
    %v4216 = vld [vmem:[%s3 + $0x94] sm:$0xf]
    %v4217 = vld [vmem:[%s3 + $0x98] sm:$0xf]
    %v4218 = vld [vmem:[%s3 + $0x9c] sm:$0xf]
    %v4219 = vld [vmem:[%s3 + $0xa0] sm:$0xf]
    %v4220 = vld [vmem:[%s3 + $0xa4] sm:$0xf]
    %v4221 = vld [vmem:[%s3 + $0xa8] sm:$0xf]
    %v4222 = vld [vmem:[%s3 + $0xac] sm:$0xf]
    %v4223 = vld [vmem:[%s3 + $0xb0] sm:$0xf]
    %v4224 = vld [vmem:[%s3 + $0xb4] sm:$0xf]
    %v4225 = vld [vmem:[%s3 + $0xb8] sm:$0xf]
    %v4226 = vld [vmem:[%s3 + $0xbc] sm:$0xf]
    %v4227 = vld [vmem:[%s3 + $0xc0] sm:$0xf]
    %v4228 = vld [vmem:[%s3 + $0xc4] sm:$0xf]
    %v4229 = vld [vmem:[%s3 + $0xc8] sm:$0xf]
    %v4230 = vld [vmem:[%s3 + $0xcc] sm:$0xf]
    %v4231 = vld [vmem:[%s3 + $0xd0] sm:$0xf]
    %v4232 = vld [vmem:[%s3 + $0xd4] sm:$0xf]
    %v4233 = vld [vmem:[%s3 + $0xd8] sm:$0xf]
    %v4234 = vld [vmem:[%s3 + $0xdc] sm:$0xf]
    %v4235 = vld [vmem:[%s3 + $0xe0] sm:$0xf]
    %v4236 = vld [vmem:[%s3 + $0xe4] sm:$0xf]
    %v4237 = vld [vmem:[%s3 + $0xe8] sm:$0xf]
    %v4238 = vld [vmem:[%s3 + $0xec] sm:$0xf]
    %v4239 = vld [vmem:[%s3 + $0xf0] sm:$0xf]
    %v4240 = vld [vmem:[%s3 + $0xf4] sm:$0xf]
    %v4241 = vld [vmem:[%s3 + $0xf8] sm:$0xf]
    %v4242 = vld [vmem:[%s3 + $0xfc] sm:$0xf]
    %v4275 = vunpack.c.l.b16 %v4211
    %v4276 = vunpack.c.l.b16 %v4212
    %v4277 = vunpack.c.l.b16 %v4213
    %v4278 = vunpack.c.l.b16 %v4214
    %v4279 = vunpack.c.l.b16 %v4215
    %v4280 = vunpack.c.l.b16 %v4216
    %v4281 = vunpack.c.l.b16 %v4217
    %v4282 = vunpack.c.l.b16 %v4218
    %v4283 = vunpack.c.l.b16 %v4219
    %v4284 = vunpack.c.l.b16 %v4220
    %v4285 = vunpack.c.l.b16 %v4221
    %v4286 = vunpack.c.l.b16 %v4222
    %v4287 = vunpack.c.l.b16 %v4223
    %v4288 = vunpack.c.l.b16 %v4224
    %v4289 = vunpack.c.l.b16 %v4225
    %v4290 = vunpack.c.l.b16 %v4226
    %v4291 = vunpack.c.l.b16 %v4227
    %v4292 = vunpack.c.l.b16 %v4228
    %v4293 = vunpack.c.l.b16 %v4229
    %v4294 = vunpack.c.l.b16 %v4230
    %v4295 = vunpack.c.l.b16 %v4231
    %v4296 = vunpack.c.l.b16 %v4232
    %v4297 = vunpack.c.l.b16 %v4233
    %v4298 = vunpack.c.l.b16 %v4234
    %v4299 = vunpack.c.l.b16 %v4235
    %v4300 = vunpack.c.l.b16 %v4236
    %v4301 = vunpack.c.l.b16 %v4237
    %v4302 = vunpack.c.l.b16 %v4238
    %v4303 = vunpack.c.l.b16 %v4239
    %v4304 = vunpack.c.l.b16 %v4240
    %v4305 = vunpack.c.l.b16 %v4241
    %v4306 = vunpack.c.l.b16 %v4242
    %v4307 = vpack.c.b16 %v4276, %v4275
    %v4308 = vpack.c.b16 %v4278, %v4277
    %v4309 = vpack.c.b16 %v4280, %v4279
    %v4310 = vpack.c.b16 %v4282, %v4281
    %v4311 = vpack.c.b16 %v4284, %v4283
    %v4312 = vpack.c.b16 %v4286, %v4285
    %v4313 = vpack.c.b16 %v4288, %v4287
    %v4314 = vpack.c.b16 %v4290, %v4289
    %v4315 = vpack.c.b16 %v4292, %v4291
    %v4316 = vpack.c.b16 %v4294, %v4293
    %v4317 = vpack.c.b16 %v4296, %v4295
    %v4318 = vpack.c.b16 %v4298, %v4297
    %v4319 = vpack.c.b16 %v4300, %v4299
    %v4320 = vpack.c.b16 %v4302, %v4301
    %v4321 = vpack.c.b16 %v4304, %v4303
    %v4322 = vpack.c.b16 %v4306, %v4305
    %4339 = vmatprep.subr.bf16.mxu0 0
    %4340 = vmatpush1.bf16.msra.mxu0 %v4307
    %4341 = vmatprep.subr.bf16.mxu0 0
    %4342 = vmatpush1.bf16.msra.mxu0 %v4308
    %4343 = vmatprep.subr.bf16.mxu0 0
    %4344 = vmatpush1.bf16.msra.mxu0 %v4309
    %4345 = vmatprep.subr.bf16.mxu0 0
    %4346 = vmatpush1.bf16.msra.mxu0 %v4310
    %4347 = vmatprep.subr.bf16.mxu0 0
    %4348 = vmatpush1.bf16.msra.mxu0 %v4311
    %4349 = vmatprep.subr.bf16.mxu0 0
    %4350 = vmatpush1.bf16.msra.mxu0 %v4312
    %4351 = vmatprep.subr.bf16.mxu0 0
    %4352 = vmatpush1.bf16.msra.mxu0 %v4313
    %4353 = vmatprep.subr.bf16.mxu0 0
    %4354 = vmatpush1.bf16.msra.mxu0 %v4314
    %4355 = vmatprep.subr.bf16.mxu0 0
    %4356 = vmatpush1.bf16.msra.mxu0 %v4315
    %4357 = vmatprep.subr.bf16.mxu0 0
    %4358 = vmatpush1.bf16.msra.mxu0 %v4316
    %4359 = vmatprep.subr.bf16.mxu0 0
    %4360 = vmatpush1.bf16.msra.mxu0 %v4317
    %4361 = vmatprep.subr.bf16.mxu0 0
    %4362 = vmatpush1.bf16.msra.mxu0 %v4318
    %4363 = vmatprep.subr.bf16.mxu0 0
    %4364 = vmatpush1.bf16.msra.mxu0 %v4319
    %4365 = vmatprep.subr.bf16.mxu0 0
    %4366 = vmatpush1.bf16.msra.mxu0 %v4320
    %4367 = vmatprep.subr.bf16.mxu0 0
    %4368 = vmatpush1.bf16.msra.mxu0 %v4321
    %4369 = vmatprep.subr.bf16.mxu0 0
    %4370 = vmatpush1.bf16.msra.mxu0 %v4322
    %4371 = vmatprep.mubr.bf16.mxu0 %v4180
    %4372 = vmatmul.mubr.bf16.gmra.mrb[0].mxu0 %v4179
    %v4373 = vpop.f32.mrb[0].mxu0
    %v4374 = vadd.f32 0.0, %v4373
    %v4375 = vpop.f32.mrb[0].mxu0
    %v4376 = vpop.f32.mrb[0].mxu0
    %v4377 = vadd.f32 0.0, %v4376
    %v4378 = vpop.f32.mrb[0].mxu0
    %4379 = vmatprep.mubr.bf16.mxu0 %v4182
    %4380 = vmatmul.mubr.bf16.gmra.mrb[0].mxu0 %v4181
    %v4381 = vpop.f32.mrb[0].mxu0
    %v4382 = vadd.f32 0.0, %v4381
    %v4383 = vpop.f32.mrb[0].mxu0
    %v4384 = vpop.f32.mrb[0].mxu0
    %v4385 = vadd.f32 0.0, %v4384
    %v4386 = vpop.f32.mrb[0].mxu0
    %4387 = vmatprep.mubr.bf16.mxu0 %v4184
    %4388 = vmatmul.mubr.bf16.gmra.mrb[0].mxu0 %v4183
    %v4389 = vpop.f32.mrb[0].mxu0
    %v4390 = vadd.f32 0.0, %v4389
    %v4391 = vpop.f32.mrb[0].mxu0
    %v4392 = vpop.f32.mrb[0].mxu0
    %v4393 = vadd.f32 0.0, %v4392
    %v4394 = vpop.f32.mrb[0].mxu0
    %4395 = vmatprep.mubr.bf16.mxu0 %v4186
    %4396 = vmatmul.mubr.bf16.gmra.mrb[0].mxu0 %v4185
    %v4397 = vpop.f32.mrb[0].mxu0
    %v4398 = vadd.f32 0.0, %v4397
    %v4399 = vpop.f32.mrb[0].mxu0
    %v4400 = vpop.f32.mrb[0].mxu0
    %v4401 = vadd.f32 0.0, %v4400
    %v4402 = vpop.f32.mrb[0].mxu0
    %4403 = vmatprep.mubr.bf16.mxu0 %v4188
    %4404 = vmatmul.mubr.bf16.gmra.mrb[0].mxu0 %v4187
    %v4405 = vpop.f32.mrb[0].mxu0
    %v4406 = vadd.f32 0.0, %v4405
    %v4407 = vpop.f32.mrb[0].mxu0
    %v4408 = vpop.f32.mrb[0].mxu0
    %v4409 = vadd.f32 0.0, %v4408
    %v4410 = vpop.f32.mrb[0].mxu0
    %4411 = vmatprep.mubr.bf16.mxu0 %v4190
    %4412 = vmatmul.mubr.bf16.gmra.mrb[0].mxu0 %v4189
    %v4413 = vpop.f32.mrb[0].mxu0
    %v4414 = vadd.f32 0.0, %v4413
    %v4415 = vpop.f32.mrb[0].mxu0
    %v4416 = vpop.f32.mrb[0].mxu0
    %v4417 = vadd.f32 0.0, %v4416
    %v4418 = vpop.f32.mrb[0].mxu0
    %4419 = vmatprep.mubr.bf16.mxu0 %v4192
    %4420 = vmatmul.mubr.bf16.gmra.mrb[0].mxu0 %v4191
    %v4421 = vpop.f32.mrb[0].mxu0
    %v4422 = vadd.f32 0.0, %v4421
    %v4423 = vpop.f32.mrb[0].mxu0
    %v4424 = vpop.f32.mrb[0].mxu0
    %v4425 = vadd.f32 0.0, %v4424
    %v4426 = vpop.f32.mrb[0].mxu0
    %4427 = vmatprep.mubr.bf16.mxu0 %v4194
    %4428 = vmatmul.mubr.bf16.gmra.mrb[0].mxu0 %v4193
    %v4429 = vpop.f32.mrb[0].mxu0
    %v4430 = vadd.f32 0.0, %v4429
    %v4431 = vpop.f32.mrb[0].mxu0
    %v4432 = vpop.f32.mrb[0].mxu0
    %v4433 = vadd.f32 0.0, %v4432
    %v4434 = vpop.f32.mrb[0].mxu0
    %4435 = vmatprep.mubr.bf16.mxu0 %v4196
    %4436 = vmatmul.mubr.bf16.gmra.mrb[0].mxu0 %v4195
    %v4437 = vpop.f32.mrb[0].mxu0
    %v4438 = vadd.f32 0.0, %v4437
    %v4439 = vpop.f32.mrb[0].mxu0
    %v4440 = vpop.f32.mrb[0].mxu0
    %v4441 = vadd.f32 0.0, %v4440
    %v4442 = vpop.f32.mrb[0].mxu0
    %4443 = vmatprep.mubr.bf16.mxu0 %v4198
    %4444 = vmatmul.mubr.bf16.gmra.mrb[0].mxu0 %v4197
    %v4445 = vpop.f32.mrb[0].mxu0
    %v4446 = vadd.f32 0.0, %v4445
    %v4447 = vpop.f32.mrb[0].mxu0
    %v4448 = vpop.f32.mrb[0].mxu0
    %v4449 = vadd.f32 0.0, %v4448
    %v4450 = vpop.f32.mrb[0].mxu0
    %4451 = vmatprep.mubr.bf16.mxu0 %v4200
    %4452 = vmatmul.mubr.bf16.gmra.mrb[0].mxu0 %v4199
    %v4453 = vpop.f32.mrb[0].mxu0
    %v4454 = vadd.f32 0.0, %v4453
    %v4455 = vpop.f32.mrb[0].mxu0
    %v4456 = vpop.f32.mrb[0].mxu0
    %v4457 = vadd.f32 0.0, %v4456
    %v4458 = vpop.f32.mrb[0].mxu0
    %4459 = vmatprep.mubr.bf16.mxu0 %v4202
    %4460 = vmatmul.mubr.bf16.gmra.mrb[0].mxu0 %v4201
    %v4461 = vpop.f32.mrb[0].mxu0
    %v4462 = vadd.f32 0.0, %v4461
    %v4463 = vpop.f32.mrb[0].mxu0
    %v4464 = vpop.f32.mrb[0].mxu0
    %v4465 = vadd.f32 0.0, %v4464
    %v4466 = vpop.f32.mrb[0].mxu0
    %4467 = vmatprep.mubr.bf16.mxu0 %v4204
    %4468 = vmatmul.mubr.bf16.gmra.mrb[0].mxu0 %v4203
    %v4469 = vpop.f32.mrb[0].mxu0
    %v4470 = vadd.f32 0.0, %v4469
    %v4471 = vpop.f32.mrb[0].mxu0
    %v4472 = vpop.f32.mrb[0].mxu0
    %v4473 = vadd.f32 0.0, %v4472
    %v4474 = vpop.f32.mrb[0].mxu0
    %4475 = vmatprep.mubr.bf16.mxu0 %v4206
    %4476 = vmatmul.mubr.bf16.gmra.mrb[0].mxu0 %v4205
    %v4477 = vpop.f32.mrb[0].mxu0
    %v4478 = vadd.f32 0.0, %v4477
    %v4479 = vpop.f32.mrb[0].mxu0
    %v4480 = vpop.f32.mrb[0].mxu0
    %v4481 = vadd.f32 0.0, %v4480
    %v4482 = vpop.f32.mrb[0].mxu0
    %4483 = vmatprep.mubr.bf16.mxu0 %v4208
    %4484 = vmatmul.mubr.bf16.gmra.mrb[0].mxu0 %v4207
    %v4485 = vpop.f32.mrb[0].mxu0
    %v4486 = vadd.f32 0.0, %v4485
    %v4487 = vpop.f32.mrb[0].mxu0
    %v4488 = vpop.f32.mrb[0].mxu0
    %v4489 = vadd.f32 0.0, %v4488
    %v4490 = vpop.f32.mrb[0].mxu0
    %4491 = vmatprep.mubr.bf16.mxu0 %v4210
    %4492 = vmatmul.mubr.bf16.gmra.mrb[0].mxu0 %v4209
    %v4493 = vpop.f32.mrb[0].mxu0
    %v4494 = vadd.f32 0.0, %v4493
    %v4495 = vpop.f32.mrb[0].mxu0
    %v4496 = vpop.f32.mrb[0].mxu0
    %v4497 = vadd.f32 0.0, %v4496
    %v4498 = vpop.f32.mrb[0].mxu0
    %4499 = vdwg.mxu0
    %v4500 = vadd.f32 %v3269, %v4374
    %v4501 = vadd.f32 %v3270, %v4377
    %v4502 = vadd.f32 %v3271, %v4382
    %v4503 = vadd.f32 %v3272, %v4385
    %v4504 = vadd.f32 %v3273, %v4390
    %v4505 = vadd.f32 %v3274, %v4393
    %v4506 = vadd.f32 %v3275, %v4398
    %v4507 = vadd.f32 %v3276, %v4401
    %v4508 = vadd.f32 %v3277, %v4406
    %v4509 = vadd.f32 %v3278, %v4409
    %v4510 = vadd.f32 %v3279, %v4414
    %v4511 = vadd.f32 %v3280, %v4417
    %v4512 = vadd.f32 %v3281, %v4422
    %v4513 = vadd.f32 %v3282, %v4425
    %v4514 = vadd.f32 %v3283, %v4430
    %v4515 = vadd.f32 %v3284, %v4433
    %v4516 = vadd.f32 %v3285, %v4438
    %v4517 = vadd.f32 %v3286, %v4441
    %v4518 = vadd.f32 %v3287, %v4446
    %v4519 = vadd.f32 %v3288, %v4449
    %v4520 = vadd.f32 %v3289, %v4454
    %v4521 = vadd.f32 %v3290, %v4457
    %v4522 = vadd.f32 %v3291, %v4462
    %v4523 = vadd.f32 %v3292, %v4465
    %v4524 = vadd.f32 %v3293, %v4470
    %v4525 = vadd.f32 %v3294, %v4473
    %v4526 = vadd.f32 %v3295, %v4478
    %v4527 = vadd.f32 %v3296, %v4481
    %v4528 = vadd.f32 %v3297, %v4486
    %v4529 = vadd.f32 %v3298, %v4489
    %v4530 = vadd.f32 %v3299, %v4494
    %v4531 = vadd.f32 %v3300, %v4497
    %v4532 = vld [vmem:[%s5 + $0x8] sm:$0x1]
    %v4533 = vld [vmem:[%s5 + $0x9] sm:$0x1]
    %4534 = vadd.xlane.f32.xlu0 %v4500
    %v4535 = vpop.xlane.xlu0 %4534
    %4536 = vadd.xlane.f32.xlu0 %v4501
    %v4537 = vpop.xlane.xlu0 %4536
    %4538 = vadd.xlane.f32.xlu0 %v4502
    %v4539 = vpop.xlane.xlu0 %4538
    %4540 = vadd.xlane.f32.xlu0 %v4503
    %v4541 = vpop.xlane.xlu0 %4540
    %4542 = vadd.xlane.f32.xlu0 %v4504
    %v4543 = vpop.xlane.xlu0 %4542
    %4544 = vadd.xlane.f32.xlu0 %v4505
    %v4545 = vpop.xlane.xlu0 %4544
    %4546 = vadd.xlane.f32.xlu0 %v4506
    %v4547 = vpop.xlane.xlu0 %4546
    %4548 = vadd.xlane.f32.xlu0 %v4507
    %v4549 = vpop.xlane.xlu0 %4548
    %4550 = vadd.xlane.f32.xlu0 %v4508
    %v4551 = vpop.xlane.xlu0 %4550
    %4552 = vadd.xlane.f32.xlu0 %v4509
    %v4553 = vpop.xlane.xlu0 %4552
    %4554 = vadd.xlane.f32.xlu0 %v4510
    %v4555 = vpop.xlane.xlu0 %4554
    %4556 = vadd.xlane.f32.xlu0 %v4511
    %v4557 = vpop.xlane.xlu0 %4556
    %4558 = vadd.xlane.f32.xlu0 %v4512
    %v4559 = vpop.xlane.xlu0 %4558
    %4560 = vadd.xlane.f32.xlu0 %v4513
    %v4561 = vpop.xlane.xlu0 %4560
    %4562 = vadd.xlane.f32.xlu0 %v4514
    %v4563 = vpop.xlane.xlu0 %4562
    %4564 = vadd.xlane.f32.xlu0 %v4515
    %v4565 = vpop.xlane.xlu0 %4564
    %4566 = vadd.xlane.f32.xlu0 %v4516
    %v4567 = vpop.xlane.xlu0 %4566
    %4568 = vadd.xlane.f32.xlu0 %v4517
    %v4569 = vpop.xlane.xlu0 %4568
    %4570 = vadd.xlane.f32.xlu0 %v4518
    %v4571 = vpop.xlane.xlu0 %4570
    %4572 = vadd.xlane.f32.xlu0 %v4519
    %v4573 = vpop.xlane.xlu0 %4572
    %4574 = vadd.xlane.f32.xlu0 %v4520
    %v4575 = vpop.xlane.xlu0 %4574
    %4576 = vadd.xlane.f32.xlu0 %v4521
    %v4577 = vpop.xlane.xlu0 %4576
    %4578 = vadd.xlane.f32.xlu0 %v4522
    %v4579 = vpop.xlane.xlu0 %4578
    %4580 = vadd.xlane.f32.xlu0 %v4523
    %v4581 = vpop.xlane.xlu0 %4580
    %4582 = vadd.xlane.f32.xlu0 %v4524
    %v4583 = vpop.xlane.xlu0 %4582
    %4584 = vadd.xlane.f32.xlu0 %v4525
    %v4585 = vpop.xlane.xlu0 %4584
    %4586 = vadd.xlane.f32.xlu0 %v4526
    %v4587 = vpop.xlane.xlu0 %4586
    %4588 = vadd.xlane.f32.xlu0 %v4527
    %v4589 = vpop.xlane.xlu0 %4588
    %4590 = vadd.xlane.f32.xlu0 %v4528
    %v4591 = vpop.xlane.xlu0 %4590
    %4592 = vadd.xlane.f32.xlu0 %v4529
    %v4593 = vpop.xlane.xlu0 %4592
    %4594 = vadd.xlane.f32.xlu0 %v4530
    %v4595 = vpop.xlane.xlu0 %4594
    %4596 = vadd.xlane.f32.xlu0 %v4531
    %v4597 = vpop.xlane.xlu0 %4596
    %v4598 = vmul.f32 %v4535, %v449
    %v4599 = vmul.f32 %v4537, %v449
    %v4600 = vmul.f32 %v4539, %v449
    %v4601 = vmul.f32 %v4541, %v449
    %v4602 = vmul.f32 %v4543, %v449
    %v4603 = vmul.f32 %v4545, %v449
    %v4604 = vmul.f32 %v4547, %v449
    %v4605 = vmul.f32 %v4549, %v449
    %v4606 = vmul.f32 %v4551, %v449
    %v4607 = vmul.f32 %v4553, %v449
    %v4608 = vmul.f32 %v4555, %v449
    %v4609 = vmul.f32 %v4557, %v449
    %v4610 = vmul.f32 %v4559, %v449
    %v4611 = vmul.f32 %v4561, %v449
    %v4612 = vmul.f32 %v4563, %v449
    %v4613 = vmul.f32 %v4565, %v449
    %v4614 = vmul.f32 %v4567, %v449
    %v4615 = vmul.f32 %v4569, %v449
    %v4616 = vmul.f32 %v4571, %v449
    %v4617 = vmul.f32 %v4573, %v449
    %v4618 = vmul.f32 %v4575, %v449
    %v4619 = vmul.f32 %v4577, %v449
    %v4620 = vmul.f32 %v4579, %v449
    %v4621 = vmul.f32 %v4581, %v449
    %v4622 = vmul.f32 %v4583, %v449
    %v4623 = vmul.f32 %v4585, %v449
    %v4624 = vmul.f32 %v4587, %v449
    %v4625 = vmul.f32 %v4589, %v449
    %v4626 = vmul.f32 %v4591, %v449
    %v4627 = vmul.f32 %v4593, %v449
    %v4628 = vmul.f32 %v4595, %v449
    %v4629 = vmul.f32 %v4597, %v449
    %v4630 = vsub.f32 %v4500, %v4598
    %v4631 = vsub.f32 %v4501, %v4599
    %v4632 = vsub.f32 %v4502, %v4600
    %v4633 = vsub.f32 %v4503, %v4601
    %v4634 = vsub.f32 %v4504, %v4602
    %v4635 = vsub.f32 %v4505, %v4603
    %v4636 = vsub.f32 %v4506, %v4604
    %v4637 = vsub.f32 %v4507, %v4605
    %v4638 = vsub.f32 %v4508, %v4606
    %v4639 = vsub.f32 %v4509, %v4607
    %v4640 = vsub.f32 %v4510, %v4608
    %v4641 = vsub.f32 %v4511, %v4609
    %v4642 = vsub.f32 %v4512, %v4610
    %v4643 = vsub.f32 %v4513, %v4611
    %v4644 = vsub.f32 %v4514, %v4612
    %v4645 = vsub.f32 %v4515, %v4613
    %v4646 = vsub.f32 %v4516, %v4614
    %v4647 = vsub.f32 %v4517, %v4615
    %v4648 = vsub.f32 %v4518, %v4616
    %v4649 = vsub.f32 %v4519, %v4617
    %v4650 = vsub.f32 %v4520, %v4618
    %v4651 = vsub.f32 %v4521, %v4619
    %v4652 = vsub.f32 %v4522, %v4620
    %v4653 = vsub.f32 %v4523, %v4621
    %v4654 = vsub.f32 %v4524, %v4622
    %v4655 = vsub.f32 %v4525, %v4623
    %v4656 = vsub.f32 %v4526, %v4624
    %v4657 = vsub.f32 %v4527, %v4625
    %v4658 = vsub.f32 %v4528, %v4626
    %v4659 = vsub.f32 %v4529, %v4627
    %v4660 = vsub.f32 %v4530, %v4628
    %v4661 = vsub.f32 %v4531, %v4629
    %v4662 = vmul.f32 %v4630, %v4630
    %v4663 = vmul.f32 %v4631, %v4631
    %v4664 = vmul.f32 %v4632, %v4632
    %v4665 = vmul.f32 %v4633, %v4633
    %v4666 = vmul.f32 %v4634, %v4634
    %v4667 = vmul.f32 %v4635, %v4635
    %v4668 = vmul.f32 %v4636, %v4636
    %v4669 = vmul.f32 %v4637, %v4637
    %v4670 = vmul.f32 %v4638, %v4638
    %v4671 = vmul.f32 %v4639, %v4639
    %v4672 = vmul.f32 %v4640, %v4640
    %v4673 = vmul.f32 %v4641, %v4641
    %v4674 = vmul.f32 %v4642, %v4642
    %v4675 = vmul.f32 %v4643, %v4643
    %v4676 = vmul.f32 %v4644, %v4644
    %v4677 = vmul.f32 %v4645, %v4645
    %v4678 = vmul.f32 %v4646, %v4646
    %v4679 = vmul.f32 %v4647, %v4647
    %v4680 = vmul.f32 %v4648, %v4648
    %v4681 = vmul.f32 %v4649, %v4649
    %v4682 = vmul.f32 %v4650, %v4650
    %v4683 = vmul.f32 %v4651, %v4651
    %v4684 = vmul.f32 %v4652, %v4652
    %v4685 = vmul.f32 %v4653, %v4653
    %v4686 = vmul.f32 %v4654, %v4654
    %v4687 = vmul.f32 %v4655, %v4655
    %v4688 = vmul.f32 %v4656, %v4656
    %v4689 = vmul.f32 %v4657, %v4657
    %v4690 = vmul.f32 %v4658, %v4658
    %v4691 = vmul.f32 %v4659, %v4659
    %v4692 = vmul.f32 %v4660, %v4660
    %v4693 = vmul.f32 %v4661, %v4661
    %4694 = vadd.xlane.f32.xlu0 %v4662
    %v4695 = vpop.xlane.xlu0 %4694
    %4696 = vadd.xlane.f32.xlu0 %v4663
    %v4697 = vpop.xlane.xlu0 %4696
    %4698 = vadd.xlane.f32.xlu0 %v4664
    %v4699 = vpop.xlane.xlu0 %4698
    %4700 = vadd.xlane.f32.xlu0 %v4665
    %v4701 = vpop.xlane.xlu0 %4700
    %4702 = vadd.xlane.f32.xlu0 %v4666
    %v4703 = vpop.xlane.xlu0 %4702
    %4704 = vadd.xlane.f32.xlu0 %v4667
    %v4705 = vpop.xlane.xlu0 %4704
    %4706 = vadd.xlane.f32.xlu0 %v4668
    %v4707 = vpop.xlane.xlu0 %4706
    %4708 = vadd.xlane.f32.xlu0 %v4669
    %v4709 = vpop.xlane.xlu0 %4708
    %4710 = vadd.xlane.f32.xlu0 %v4670
    %v4711 = vpop.xlane.xlu0 %4710
    %4712 = vadd.xlane.f32.xlu0 %v4671
    %v4713 = vpop.xlane.xlu0 %4712
    %4714 = vadd.xlane.f32.xlu0 %v4672
    %v4715 = vpop.xlane.xlu0 %4714
    %4716 = vadd.xlane.f32.xlu0 %v4673
    %v4717 = vpop.xlane.xlu0 %4716
    %4718 = vadd.xlane.f32.xlu0 %v4674
    %v4719 = vpop.xlane.xlu0 %4718
    %4720 = vadd.xlane.f32.xlu0 %v4675
    %v4721 = vpop.xlane.xlu0 %4720
    %4722 = vadd.xlane.f32.xlu0 %v4676
    %v4723 = vpop.xlane.xlu0 %4722
    %4724 = vadd.xlane.f32.xlu0 %v4677
    %v4725 = vpop.xlane.xlu0 %4724
    %4726 = vadd.xlane.f32.xlu0 %v4678
    %v4727 = vpop.xlane.xlu0 %4726
    %4728 = vadd.xlane.f32.xlu0 %v4679
    %v4729 = vpop.xlane.xlu0 %4728
    %4730 = vadd.xlane.f32.xlu0 %v4680
    %v4731 = vpop.xlane.xlu0 %4730
    %4732 = vadd.xlane.f32.xlu0 %v4681
    %v4733 = vpop.xlane.xlu0 %4732
    %4734 = vadd.xlane.f32.xlu0 %v4682
    %v4735 = vpop.xlane.xlu0 %4734
    %4736 = vadd.xlane.f32.xlu0 %v4683
    %v4737 = vpop.xlane.xlu0 %4736
    %4738 = vadd.xlane.f32.xlu0 %v4684
    %v4739 = vpop.xlane.xlu0 %4738
    %4740 = vadd.xlane.f32.xlu0 %v4685
    %v4741 = vpop.xlane.xlu0 %4740
    %4742 = vadd.xlane.f32.xlu0 %v4686
    %v4743 = vpop.xlane.xlu0 %4742
    %4744 = vadd.xlane.f32.xlu0 %v4687
    %v4745 = vpop.xlane.xlu0 %4744
    %4746 = vadd.xlane.f32.xlu0 %v4688
    %v4747 = vpop.xlane.xlu0 %4746
    %4748 = vadd.xlane.f32.xlu0 %v4689
    %v4749 = vpop.xlane.xlu0 %4748
    %4750 = vadd.xlane.f32.xlu0 %v4690
    %v4751 = vpop.xlane.xlu0 %4750
    %4752 = vadd.xlane.f32.xlu0 %v4691
    %v4753 = vpop.xlane.xlu0 %4752
    %4754 = vadd.xlane.f32.xlu0 %v4692
    %v4755 = vpop.xlane.xlu0 %4754
    %4756 = vadd.xlane.f32.xlu0 %v4693
    %v4757 = vpop.xlane.xlu0 %4756
    %v4758 = vmul.f32 %v4695, %v449
    %v4759 = vmul.f32 %v4697, %v449
    %v4760 = vmul.f32 %v4699, %v449
    %v4761 = vmul.f32 %v4701, %v449
    %v4762 = vmul.f32 %v4703, %v449
    %v4763 = vmul.f32 %v4705, %v449
    %v4764 = vmul.f32 %v4707, %v449
    %v4765 = vmul.f32 %v4709, %v449
    %v4766 = vmul.f32 %v4711, %v449
    %v4767 = vmul.f32 %v4713, %v449
    %v4768 = vmul.f32 %v4715, %v449
    %v4769 = vmul.f32 %v4717, %v449
    %v4770 = vmul.f32 %v4719, %v449
    %v4771 = vmul.f32 %v4721, %v449
    %v4772 = vmul.f32 %v4723, %v449
    %v4773 = vmul.f32 %v4725, %v449
    %v4774 = vmul.f32 %v4727, %v449
    %v4775 = vmul.f32 %v4729, %v449
    %v4776 = vmul.f32 %v4731, %v449
    %v4777 = vmul.f32 %v4733, %v449
    %v4778 = vmul.f32 %v4735, %v449
    %v4779 = vmul.f32 %v4737, %v449
    %v4780 = vmul.f32 %v4739, %v449
    %v4781 = vmul.f32 %v4741, %v449
    %v4782 = vmul.f32 %v4743, %v449
    %v4783 = vmul.f32 %v4745, %v449
    %v4784 = vmul.f32 %v4747, %v449
    %v4785 = vmul.f32 %v4749, %v449
    %v4786 = vmul.f32 %v4751, %v449
    %v4787 = vmul.f32 %v4753, %v449
    %v4788 = vmul.f32 %v4755, %v449
    %v4789 = vmul.f32 %v4757, %v449
    %v4790 = vadd.f32 %v4758, 1e-05
    %v4791 = vadd.f32 %v4759, 1e-05
    %v4792 = vadd.f32 %v4760, 1e-05
    %v4793 = vadd.f32 %v4761, 1e-05
    %v4794 = vadd.f32 %v4762, 1e-05
    %v4795 = vadd.f32 %v4763, 1e-05
    %v4796 = vadd.f32 %v4764, 1e-05
    %v4797 = vadd.f32 %v4765, 1e-05
    %v4798 = vadd.f32 %v4766, 1e-05
    %v4799 = vadd.f32 %v4767, 1e-05
    %v4800 = vadd.f32 %v4768, 1e-05
    %v4801 = vadd.f32 %v4769, 1e-05
    %v4802 = vadd.f32 %v4770, 1e-05
    %v4803 = vadd.f32 %v4771, 1e-05
    %v4804 = vadd.f32 %v4772, 1e-05
    %v4805 = vadd.f32 %v4773, 1e-05
    %v4806 = vadd.f32 %v4774, 1e-05
    %v4807 = vadd.f32 %v4775, 1e-05
    %v4808 = vadd.f32 %v4776, 1e-05
    %v4809 = vadd.f32 %v4777, 1e-05
    %v4810 = vadd.f32 %v4778, 1e-05
    %v4811 = vadd.f32 %v4779, 1e-05
    %v4812 = vadd.f32 %v4780, 1e-05
    %v4813 = vadd.f32 %v4781, 1e-05
    %v4814 = vadd.f32 %v4782, 1e-05
    %v4815 = vadd.f32 %v4783, 1e-05
    %v4816 = vadd.f32 %v4784, 1e-05
    %v4817 = vadd.f32 %v4785, 1e-05
    %v4818 = vadd.f32 %v4786, 1e-05
    %v4819 = vadd.f32 %v4787, 1e-05
    %v4820 = vadd.f32 %v4788, 1e-05
    %v4821 = vadd.f32 %v4789, 1e-05
    %v4822 = vrsqrt.pop %v4790
    %v4823 = vrsqrt.pop %v4791
    %v4824 = vrsqrt.pop %v4792
    %v4825 = vrsqrt.pop %v4793
    %v4826 = vrsqrt.pop %v4794
    %v4827 = vrsqrt.pop %v4795
    %v4828 = vrsqrt.pop %v4796
    %v4829 = vrsqrt.pop %v4797
    %v4830 = vrsqrt.pop %v4798
    %v4831 = vrsqrt.pop %v4799
    %v4832 = vrsqrt.pop %v4800
    %v4833 = vrsqrt.pop %v4801
    %v4834 = vrsqrt.pop %v4802
    %v4835 = vrsqrt.pop %v4803
    %v4836 = vrsqrt.pop %v4804
    %v4837 = vrsqrt.pop %v4805
    %v4838 = vrsqrt.pop %v4806
    %v4839 = vrsqrt.pop %v4807
    %v4840 = vrsqrt.pop %v4808
    %v4841 = vrsqrt.pop %v4809
    %v4842 = vrsqrt.pop %v4810
    %v4843 = vrsqrt.pop %v4811
    %v4844 = vrsqrt.pop %v4812
    %v4845 = vrsqrt.pop %v4813
    %v4846 = vrsqrt.pop %v4814
    %v4847 = vrsqrt.pop %v4815
    %v4848 = vrsqrt.pop %v4816
    %v4849 = vrsqrt.pop %v4817
    %v4850 = vrsqrt.pop %v4818
    %v4851 = vrsqrt.pop %v4819
    %v4852 = vrsqrt.pop %v4820
    %v4853 = vrsqrt.pop %v4821
    %v4854 = vmul.f32 %v4630, %v4822
    %v4855 = vmul.f32 %v4631, %v4823
    %v4856 = vmul.f32 %v4632, %v4824
    %v4857 = vmul.f32 %v4633, %v4825
    %v4858 = vmul.f32 %v4634, %v4826
    %v4859 = vmul.f32 %v4635, %v4827
    %v4860 = vmul.f32 %v4636, %v4828
    %v4861 = vmul.f32 %v4637, %v4829
    %v4862 = vmul.f32 %v4638, %v4830
    %v4863 = vmul.f32 %v4639, %v4831
    %v4864 = vmul.f32 %v4640, %v4832
    %v4865 = vmul.f32 %v4641, %v4833
    %v4866 = vmul.f32 %v4642, %v4834
    %v4867 = vmul.f32 %v4643, %v4835
    %v4868 = vmul.f32 %v4644, %v4836
    %v4869 = vmul.f32 %v4645, %v4837
    %v4870 = vmul.f32 %v4646, %v4838
    %v4871 = vmul.f32 %v4647, %v4839
    %v4872 = vmul.f32 %v4648, %v4840
    %v4873 = vmul.f32 %v4649, %v4841
    %v4874 = vmul.f32 %v4650, %v4842
    %v4875 = vmul.f32 %v4651, %v4843
    %v4876 = vmul.f32 %v4652, %v4844
    %v4877 = vmul.f32 %v4653, %v4845
    %v4878 = vmul.f32 %v4654, %v4846
    %v4879 = vmul.f32 %v4655, %v4847
    %v4880 = vmul.f32 %v4656, %v4848
    %v4881 = vmul.f32 %v4657, %v4849
    %v4882 = vmul.f32 %v4658, %v4850
    %v4883 = vmul.f32 %v4659, %v4851
    %v4884 = vmul.f32 %v4660, %v4852
    %v4885 = vmul.f32 %v4661, %v4853
    %v4886 = vlaneseq
    %v4887 = vshrl.u32 %v4886, 7
    %v4888 = vsub.s32 0, %v4887
    %v4889 = vrot.slane %v4532, %v4888
    %v4890 = vmul.f32 %v4854, %v4889
    %v4891 = vmul.f32 %v4855, %v4889
    %v4892 = vmul.f32 %v4856, %v4889
    %v4893 = vmul.f32 %v4857, %v4889
    %v4894 = vmul.f32 %v4858, %v4889
    %v4895 = vmul.f32 %v4859, %v4889
    %v4896 = vmul.f32 %v4860, %v4889
    %v4897 = vmul.f32 %v4861, %v4889
    %v4898 = vmul.f32 %v4862, %v4889
    %v4899 = vmul.f32 %v4863, %v4889
    %v4900 = vmul.f32 %v4864, %v4889
    %v4901 = vmul.f32 %v4865, %v4889
    %v4902 = vmul.f32 %v4866, %v4889
    %v4903 = vmul.f32 %v4867, %v4889
    %v4904 = vmul.f32 %v4868, %v4889
    %v4905 = vmul.f32 %v4869, %v4889
    %v4906 = vmul.f32 %v4870, %v4889
    %v4907 = vmul.f32 %v4871, %v4889
    %v4908 = vmul.f32 %v4872, %v4889
    %v4909 = vmul.f32 %v4873, %v4889
    %v4910 = vmul.f32 %v4874, %v4889
    %v4911 = vmul.f32 %v4875, %v4889
    %v4912 = vmul.f32 %v4876, %v4889
    %v4913 = vmul.f32 %v4877, %v4889
    %v4914 = vmul.f32 %v4878, %v4889
    %v4915 = vmul.f32 %v4879, %v4889
    %v4916 = vmul.f32 %v4880, %v4889
    %v4917 = vmul.f32 %v4881, %v4889
    %v4918 = vmul.f32 %v4882, %v4889
    %v4919 = vmul.f32 %v4883, %v4889
    %v4920 = vmul.f32 %v4884, %v4889
    %v4921 = vmul.f32 %v4885, %v4889
    %v4922 = vlaneseq
    %v4923 = vshrl.u32 %v4922, 7
    %v4924 = vsub.s32 0, %v4923
    %v4925 = vrot.slane %v4533, %v4924
    %v4926 = vadd.f32 %v4890, %v4925
    %v4927 = vadd.f32 %v4891, %v4925
    %v4928 = vadd.f32 %v4892, %v4925
    %v4929 = vadd.f32 %v4893, %v4925
    %v4930 = vadd.f32 %v4894, %v4925
    %v4931 = vadd.f32 %v4895, %v4925
    %v4932 = vadd.f32 %v4896, %v4925
    %v4933 = vadd.f32 %v4897, %v4925
    %v4934 = vadd.f32 %v4898, %v4925
    %v4935 = vadd.f32 %v4899, %v4925
    %v4936 = vadd.f32 %v4900, %v4925
    %v4937 = vadd.f32 %v4901, %v4925
    %v4938 = vadd.f32 %v4902, %v4925
    %v4939 = vadd.f32 %v4903, %v4925
    %v4940 = vadd.f32 %v4904, %v4925
    %v4941 = vadd.f32 %v4905, %v4925
    %v4942 = vadd.f32 %v4906, %v4925
    %v4943 = vadd.f32 %v4907, %v4925
    %v4944 = vadd.f32 %v4908, %v4925
    %v4945 = vadd.f32 %v4909, %v4925
    %v4946 = vadd.f32 %v4910, %v4925
    %v4947 = vadd.f32 %v4911, %v4925
    %v4948 = vadd.f32 %v4912, %v4925
    %v4949 = vadd.f32 %v4913, %v4925
    %v4950 = vadd.f32 %v4914, %v4925
    %v4951 = vadd.f32 %v4915, %v4925
    %v4952 = vadd.f32 %v4916, %v4925
    %v4953 = vadd.f32 %v4917, %v4925
    %v4954 = vadd.f32 %v4918, %v4925
    %v4955 = vadd.f32 %v4919, %v4925
    %v4956 = vadd.f32 %v4920, %v4925
    %v4957 = vadd.f32 %v4921, %v4925
    %v4958 = vpack.c.bf16 %v4927, %v4926
    %v4959 = vpack.c.bf16 %v4929, %v4928
    %v4960 = vpack.c.bf16 %v4931, %v4930
    %v4961 = vpack.c.bf16 %v4933, %v4932
    %v4962 = vpack.c.bf16 %v4935, %v4934
    %v4963 = vpack.c.bf16 %v4937, %v4936
    %v4964 = vpack.c.bf16 %v4939, %v4938
    %v4965 = vpack.c.bf16 %v4941, %v4940
    %v4966 = vpack.c.bf16 %v4943, %v4942
    %v4967 = vpack.c.bf16 %v4945, %v4944
    %v4968 = vpack.c.bf16 %v4947, %v4946
    %v4969 = vpack.c.bf16 %v4949, %v4948
    %v4970 = vpack.c.bf16 %v4951, %v4950
    %v4971 = vpack.c.bf16 %v4953, %v4952
    %v4972 = vpack.c.bf16 %v4955, %v4954
    %v4973 = vpack.c.bf16 %v4957, %v4956
    %s4974 = scalar_lea.vmem %s1, 192
    %v4975 = vld [vmem:[%s4974] sm:$0xf]
    %v4976 = vld [vmem:[%s4974 + $0x4] sm:$0xf]
    %v4977 = vld [vmem:[%s4974 + $0x8] sm:$0xf]
    %v4978 = vld [vmem:[%s4974 + $0xc] sm:$0xf]
    %v4979 = vld [vmem:[%s4974 + $0x10] sm:$0xf]
    %v4980 = vld [vmem:[%s4974 + $0x14] sm:$0xf]
    %v4981 = vld [vmem:[%s4974 + $0x18] sm:$0xf]
    %v4982 = vld [vmem:[%s4974 + $0x1c] sm:$0xf]
    %v4983 = vld [vmem:[%s4974 + $0x20] sm:$0xf]
    %v4984 = vld [vmem:[%s4974 + $0x24] sm:$0xf]
    %v4985 = vld [vmem:[%s4974 + $0x28] sm:$0xf]
    %v4986 = vld [vmem:[%s4974 + $0x2c] sm:$0xf]
    %v4987 = vld [vmem:[%s4974 + $0x30] sm:$0xf]
    %v4988 = vld [vmem:[%s4974 + $0x34] sm:$0xf]
    %v4989 = vld [vmem:[%s4974 + $0x38] sm:$0xf]
    %v4990 = vld [vmem:[%s4974 + $0x3c] sm:$0xf]
    %v4991 = vld [vmem:[%s5 + $0xa] sm:$0x1]
    %v4992 = vlaneseq
    %v4993 = vshrl.u32 %v4992, 7
    %v4994 = vsub.s32 0, %v4993
    %v4995 = vrot.slane %v4991, %v4994
    %v5012 = vunpack.c.l.b16 %v4975
    %v5013 = vunpack.c.l.b16 %v4976
    %v5014 = vunpack.c.l.b16 %v4977
    %v5015 = vunpack.c.l.b16 %v4978
    %v5016 = vunpack.c.l.b16 %v4979
    %v5017 = vunpack.c.l.b16 %v4980
    %v5018 = vunpack.c.l.b16 %v4981
    %v5019 = vunpack.c.l.b16 %v4982
    %v5020 = vunpack.c.l.b16 %v4983
    %v5021 = vunpack.c.l.b16 %v4984
    %v5022 = vunpack.c.l.b16 %v4985
    %v5023 = vunpack.c.l.b16 %v4986
    %v5024 = vunpack.c.l.b16 %v4987
    %v5025 = vunpack.c.l.b16 %v4988
    %v5026 = vunpack.c.l.b16 %v4989
    %v5027 = vunpack.c.l.b16 %v4990
    %v5028 = vpack.c.b16 %v5013, %v5012
    %v5029 = vpack.c.b16 %v5015, %v5014
    %v5030 = vpack.c.b16 %v5017, %v5016
    %v5031 = vpack.c.b16 %v5019, %v5018
    %v5032 = vpack.c.b16 %v5021, %v5020
    %v5033 = vpack.c.b16 %v5023, %v5022
    %v5034 = vpack.c.b16 %v5025, %v5024
    %v5035 = vpack.c.b16 %v5027, %v5026
    %5044 = vmatprep.subr.bf16.mxu0 0
    %5045 = vmatpush1.bf16.msra.mxu0 %v5028
    %5046 = vmatprep.subr.bf16.mxu0 0
    %5047 = vmatpush1.bf16.msra.mxu0 %v5029
    %5048 = vmatprep.subr.bf16.mxu0 0
    %5049 = vmatpush1.bf16.msra.mxu0 %v5030
    %5050 = vmatprep.subr.bf16.mxu0 0
    %5051 = vmatpush1.bf16.msra.mxu0 %v5031
    %5052 = vmatprep.subr.bf16.mxu0 0
    %5053 = vmatpush1.bf16.msra.mxu0 %v5032
    %5054 = vmatprep.subr.bf16.mxu0 0
    %5055 = vmatpush1.bf16.msra.mxu0 %v5033
    %5056 = vmatprep.subr.bf16.mxu0 0
    %5057 = vmatpush1.bf16.msra.mxu0 %v5034
    %5058 = vmatprep.subr.bf16.mxu0 0
    %5059 = vmatpush1.bf16.msra.mxu0 %v5035
    %5060 = vmatprep.subr.bf16.mxu0 0
    %5061 = vmatpush1.bf16.msra.mxu0 0
    %5062 = vmatprep.subr.bf16.mxu0 0
    %5063 = vmatpush1.bf16.msra.mxu0 0
    %5064 = vmatprep.subr.bf16.mxu0 0
    %5065 = vmatpush1.bf16.msra.mxu0 0
    %5066 = vmatprep.subr.bf16.mxu0 0
    %5067 = vmatpush1.bf16.msra.mxu0 0
    %5068 = vmatprep.subr.bf16.mxu0 0
    %5069 = vmatpush1.bf16.msra.mxu0 0
    %5070 = vmatprep.subr.bf16.mxu0 0
    %5071 = vmatpush1.bf16.msra.mxu0 0
    %5072 = vmatprep.subr.bf16.mxu0 0
    %5073 = vmatpush1.bf16.msra.mxu0 0
    %5074 = vmatprep.subr.bf16.mxu0 0
    %5075 = vmatpush1.bf16.msra.mxu0 0
    %5076 = vmatprep.mubr.bf16.mxu0 0
    %5077 = vmatmul.mubr.bf16.gmra.mrb[0].mxu0 %v4958
    %v5078 = vpop.f32.mrb[0].mxu0
    %v5079 = vadd.f32 %v4995, %v5078
    %v5080 = vpop.f32.mrb[0].mxu0
    %v5081 = vpop.f32.mrb[0].mxu0
    %v5082 = vadd.f32 %v4995, %v5081
    %v5083 = vpop.f32.mrb[0].mxu0
    %5084 = vmatprep.mubr.bf16.mxu0 0
    %5085 = vmatmul.mubr.bf16.gmra.mrb[0].mxu0 %v4959
    %v5086 = vpop.f32.mrb[0].mxu0
    %v5087 = vadd.f32 %v4995, %v5086
    %v5088 = vpop.f32.mrb[0].mxu0
    %v5089 = vpop.f32.mrb[0].mxu0
    %v5090 = vadd.f32 %v4995, %v5089
    %v5091 = vpop.f32.mrb[0].mxu0
    %5092 = vmatprep.mubr.bf16.mxu0 0
    %5093 = vmatmul.mubr.bf16.gmra.mrb[0].mxu0 %v4960
    %v5094 = vpop.f32.mrb[0].mxu0
    %v5095 = vadd.f32 %v4995, %v5094
    %v5096 = vpop.f32.mrb[0].mxu0
    %v5097 = vpop.f32.mrb[0].mxu0
    %v5098 = vadd.f32 %v4995, %v5097
    %v5099 = vpop.f32.mrb[0].mxu0
    %5100 = vmatprep.mubr.bf16.mxu0 0
    %5101 = vmatmul.mubr.bf16.gmra.mrb[0].mxu0 %v4961
    %v5102 = vpop.f32.mrb[0].mxu0
    %v5103 = vadd.f32 %v4995, %v5102
    %v5104 = vpop.f32.mrb[0].mxu0
    %v5105 = vpop.f32.mrb[0].mxu0
    %v5106 = vadd.f32 %v4995, %v5105
    %v5107 = vpop.f32.mrb[0].mxu0
    %5108 = vmatprep.mubr.bf16.mxu0 0
    %5109 = vmatmul.mubr.bf16.gmra.mrb[0].mxu0 %v4962
    %v5110 = vpop.f32.mrb[0].mxu0
    %v5111 = vadd.f32 %v4995, %v5110
    %v5112 = vpop.f32.mrb[0].mxu0
    %v5113 = vpop.f32.mrb[0].mxu0
    %v5114 = vadd.f32 %v4995, %v5113
    %v5115 = vpop.f32.mrb[0].mxu0
    %5116 = vmatprep.mubr.bf16.mxu0 0
    %5117 = vmatmul.mubr.bf16.gmra.mrb[0].mxu0 %v4963
    %v5118 = vpop.f32.mrb[0].mxu0
    %v5119 = vadd.f32 %v4995, %v5118
    %v5120 = vpop.f32.mrb[0].mxu0
    %v5121 = vpop.f32.mrb[0].mxu0
    %v5122 = vadd.f32 %v4995, %v5121
    %v5123 = vpop.f32.mrb[0].mxu0
    %5124 = vmatprep.mubr.bf16.mxu0 0
    %5125 = vmatmul.mubr.bf16.gmra.mrb[0].mxu0 %v4964
    %v5126 = vpop.f32.mrb[0].mxu0
    %v5127 = vadd.f32 %v4995, %v5126
    %v5128 = vpop.f32.mrb[0].mxu0
    %v5129 = vpop.f32.mrb[0].mxu0
    %v5130 = vadd.f32 %v4995, %v5129
    %v5131 = vpop.f32.mrb[0].mxu0
    %5132 = vmatprep.mubr.bf16.mxu0 0
    %5133 = vmatmul.mubr.bf16.gmra.mrb[0].mxu0 %v4965
    %v5134 = vpop.f32.mrb[0].mxu0
    %v5135 = vadd.f32 %v4995, %v5134
    %v5136 = vpop.f32.mrb[0].mxu0
    %v5137 = vpop.f32.mrb[0].mxu0
    %v5138 = vadd.f32 %v4995, %v5137
    %v5139 = vpop.f32.mrb[0].mxu0
    %5140 = vmatprep.mubr.bf16.mxu0 0
    %5141 = vmatmul.mubr.bf16.gmra.mrb[0].mxu0 %v4966
    %v5142 = vpop.f32.mrb[0].mxu0
    %v5143 = vadd.f32 %v4995, %v5142
    %v5144 = vpop.f32.mrb[0].mxu0
    %v5145 = vpop.f32.mrb[0].mxu0
    %v5146 = vadd.f32 %v4995, %v5145
    %v5147 = vpop.f32.mrb[0].mxu0
    %5148 = vmatprep.mubr.bf16.mxu0 0
    %5149 = vmatmul.mubr.bf16.gmra.mrb[0].mxu0 %v4967
    %v5150 = vpop.f32.mrb[0].mxu0
    %v5151 = vadd.f32 %v4995, %v5150
    %v5152 = vpop.f32.mrb[0].mxu0
    %v5153 = vpop.f32.mrb[0].mxu0
    %v5154 = vadd.f32 %v4995, %v5153
    %v5155 = vpop.f32.mrb[0].mxu0
    %5156 = vmatprep.mubr.bf16.mxu0 0
    %5157 = vmatmul.mubr.bf16.gmra.mrb[0].mxu0 %v4968
    %v5158 = vpop.f32.mrb[0].mxu0
    %v5159 = vadd.f32 %v4995, %v5158
    %v5160 = vpop.f32.mrb[0].mxu0
    %v5161 = vpop.f32.mrb[0].mxu0
    %v5162 = vadd.f32 %v4995, %v5161
    %v5163 = vpop.f32.mrb[0].mxu0
    %5164 = vmatprep.mubr.bf16.mxu0 0
    %5165 = vmatmul.mubr.bf16.gmra.mrb[0].mxu0 %v4969
    %v5166 = vpop.f32.mrb[0].mxu0
    %v5167 = vadd.f32 %v4995, %v5166
    %v5168 = vpop.f32.mrb[0].mxu0
    %v5169 = vpop.f32.mrb[0].mxu0
    %v5170 = vadd.f32 %v4995, %v5169
    %v5171 = vpop.f32.mrb[0].mxu0
    %5172 = vmatprep.mubr.bf16.mxu0 0
    %5173 = vmatmul.mubr.bf16.gmra.mrb[0].mxu0 %v4970
    %v5174 = vpop.f32.mrb[0].mxu0
    %v5175 = vadd.f32 %v4995, %v5174
    %v5176 = vpop.f32.mrb[0].mxu0
    %v5177 = vpop.f32.mrb[0].mxu0
    %v5178 = vadd.f32 %v4995, %v5177
    %v5179 = vpop.f32.mrb[0].mxu0
    %5180 = vmatprep.mubr.bf16.mxu0 0
    %5181 = vmatmul.mubr.bf16.gmra.mrb[0].mxu0 %v4971
    %v5182 = vpop.f32.mrb[0].mxu0
    %v5183 = vadd.f32 %v4995, %v5182
    %v5184 = vpop.f32.mrb[0].mxu0
    %v5185 = vpop.f32.mrb[0].mxu0
    %v5186 = vadd.f32 %v4995, %v5185
    %v5187 = vpop.f32.mrb[0].mxu0
    %5188 = vmatprep.mubr.bf16.mxu0 0
    %5189 = vmatmul.mubr.bf16.gmra.mrb[0].mxu0 %v4972
    %v5190 = vpop.f32.mrb[0].mxu0
    %v5191 = vadd.f32 %v4995, %v5190
    %v5192 = vpop.f32.mrb[0].mxu0
    %v5193 = vpop.f32.mrb[0].mxu0
    %v5194 = vadd.f32 %v4995, %v5193
    %v5195 = vpop.f32.mrb[0].mxu0
    %5196 = vmatprep.mubr.bf16.mxu0 0
    %5197 = vmatmul.mubr.bf16.gmra.mrb[0].mxu0 %v4973
    %v5198 = vpop.f32.mrb[0].mxu0
    %v5199 = vadd.f32 %v4995, %v5198
    %v5200 = vpop.f32.mrb[0].mxu0
    %v5201 = vpop.f32.mrb[0].mxu0
    %v5202 = vadd.f32 %v4995, %v5201
    %v5203 = vpop.f32.mrb[0].mxu0
    %5204 = vdwg.mxu0
    %v5205 = vmul.f32 %v5079, 0.5
    %v5206 = vmul.f32 %v5082, 0.5
    %v5207 = vmul.f32 %v5087, 0.5
    %v5208 = vmul.f32 %v5090, 0.5
    %v5209 = vmul.f32 %v5095, 0.5
    %v5210 = vmul.f32 %v5098, 0.5
    %v5211 = vmul.f32 %v5103, 0.5
    %v5212 = vmul.f32 %v5106, 0.5
    %v5213 = vmul.f32 %v5111, 0.5
    %v5214 = vmul.f32 %v5114, 0.5
    %v5215 = vmul.f32 %v5119, 0.5
    %v5216 = vmul.f32 %v5122, 0.5
    %v5217 = vmul.f32 %v5127, 0.5
    %v5218 = vmul.f32 %v5130, 0.5
    %v5219 = vmul.f32 %v5135, 0.5
    %v5220 = vmul.f32 %v5138, 0.5
    %v5221 = vmul.f32 %v5143, 0.5
    %v5222 = vmul.f32 %v5146, 0.5
    %v5223 = vmul.f32 %v5151, 0.5
    %v5224 = vmul.f32 %v5154, 0.5
    %v5225 = vmul.f32 %v5159, 0.5
    %v5226 = vmul.f32 %v5162, 0.5
    %v5227 = vmul.f32 %v5167, 0.5
    %v5228 = vmul.f32 %v5170, 0.5
    %v5229 = vmul.f32 %v5175, 0.5
    %v5230 = vmul.f32 %v5178, 0.5
    %v5231 = vmul.f32 %v5183, 0.5
    %v5232 = vmul.f32 %v5186, 0.5
    %v5233 = vmul.f32 %v5191, 0.5
    %v5234 = vmul.f32 %v5194, 0.5
    %v5235 = vmul.f32 %v5199, 0.5
    %v5236 = vmul.f32 %v5202, 0.5
    %v5237 = vmul.f32 %v5079, 0.044715
    %v5238 = vmul.f32 %v5082, 0.044715
    %v5239 = vmul.f32 %v5087, 0.044715
    %v5240 = vmul.f32 %v5090, 0.044715
    %v5241 = vmul.f32 %v5095, 0.044715
    %v5242 = vmul.f32 %v5098, 0.044715
    %v5243 = vmul.f32 %v5103, 0.044715
    %v5244 = vmul.f32 %v5106, 0.044715
    %v5245 = vmul.f32 %v5111, 0.044715
    %v5246 = vmul.f32 %v5114, 0.044715
    %v5247 = vmul.f32 %v5119, 0.044715
    %v5248 = vmul.f32 %v5122, 0.044715
    %v5249 = vmul.f32 %v5127, 0.044715
    %v5250 = vmul.f32 %v5130, 0.044715
    %v5251 = vmul.f32 %v5135, 0.044715
    %v5252 = vmul.f32 %v5138, 0.044715
    %v5253 = vmul.f32 %v5143, 0.044715
    %v5254 = vmul.f32 %v5146, 0.044715
    %v5255 = vmul.f32 %v5151, 0.044715
    %v5256 = vmul.f32 %v5154, 0.044715
    %v5257 = vmul.f32 %v5159, 0.044715
    %v5258 = vmul.f32 %v5162, 0.044715
    %v5259 = vmul.f32 %v5167, 0.044715
    %v5260 = vmul.f32 %v5170, 0.044715
    %v5261 = vmul.f32 %v5175, 0.044715
    %v5262 = vmul.f32 %v5178, 0.044715
    %v5263 = vmul.f32 %v5183, 0.044715
    %v5264 = vmul.f32 %v5186, 0.044715
    %v5265 = vmul.f32 %v5191, 0.044715
    %v5266 = vmul.f32 %v5194, 0.044715
    %v5267 = vmul.f32 %v5199, 0.044715
    %v5268 = vmul.f32 %v5202, 0.044715
    %v5269 = vmul.f32 %v5237, %v5079
    %v5270 = vmul.f32 %v5238, %v5082
    %v5271 = vmul.f32 %v5239, %v5087
    %v5272 = vmul.f32 %v5240, %v5090
    %v5273 = vmul.f32 %v5241, %v5095
    %v5274 = vmul.f32 %v5242, %v5098
    %v5275 = vmul.f32 %v5243, %v5103
    %v5276 = vmul.f32 %v5244, %v5106
    %v5277 = vmul.f32 %v5245, %v5111
    %v5278 = vmul.f32 %v5246, %v5114
    %v5279 = vmul.f32 %v5247, %v5119
    %v5280 = vmul.f32 %v5248, %v5122
    %v5281 = vmul.f32 %v5249, %v5127
    %v5282 = vmul.f32 %v5250, %v5130
    %v5283 = vmul.f32 %v5251, %v5135
    %v5284 = vmul.f32 %v5252, %v5138
    %v5285 = vmul.f32 %v5253, %v5143
    %v5286 = vmul.f32 %v5254, %v5146
    %v5287 = vmul.f32 %v5255, %v5151
    %v5288 = vmul.f32 %v5256, %v5154
    %v5289 = vmul.f32 %v5257, %v5159
    %v5290 = vmul.f32 %v5258, %v5162
    %v5291 = vmul.f32 %v5259, %v5167
    %v5292 = vmul.f32 %v5260, %v5170
    %v5293 = vmul.f32 %v5261, %v5175
    %v5294 = vmul.f32 %v5262, %v5178
    %v5295 = vmul.f32 %v5263, %v5183
    %v5296 = vmul.f32 %v5264, %v5186
    %v5297 = vmul.f32 %v5265, %v5191
    %v5298 = vmul.f32 %v5266, %v5194
    %v5299 = vmul.f32 %v5267, %v5199
    %v5300 = vmul.f32 %v5268, %v5202
    %v5301 = vmul.f32 %v5269, %v5079
    %v5302 = vmul.f32 %v5270, %v5082
    %v5303 = vmul.f32 %v5271, %v5087
    %v5304 = vmul.f32 %v5272, %v5090
    %v5305 = vmul.f32 %v5273, %v5095
    %v5306 = vmul.f32 %v5274, %v5098
    %v5307 = vmul.f32 %v5275, %v5103
    %v5308 = vmul.f32 %v5276, %v5106
    %v5309 = vmul.f32 %v5277, %v5111
    %v5310 = vmul.f32 %v5278, %v5114
    %v5311 = vmul.f32 %v5279, %v5119
    %v5312 = vmul.f32 %v5280, %v5122
    %v5313 = vmul.f32 %v5281, %v5127
    %v5314 = vmul.f32 %v5282, %v5130
    %v5315 = vmul.f32 %v5283, %v5135
    %v5316 = vmul.f32 %v5284, %v5138
    %v5317 = vmul.f32 %v5285, %v5143
    %v5318 = vmul.f32 %v5286, %v5146
    %v5319 = vmul.f32 %v5287, %v5151
    %v5320 = vmul.f32 %v5288, %v5154
    %v5321 = vmul.f32 %v5289, %v5159
    %v5322 = vmul.f32 %v5290, %v5162
    %v5323 = vmul.f32 %v5291, %v5167
    %v5324 = vmul.f32 %v5292, %v5170
    %v5325 = vmul.f32 %v5293, %v5175
    %v5326 = vmul.f32 %v5294, %v5178
    %v5327 = vmul.f32 %v5295, %v5183
    %v5328 = vmul.f32 %v5296, %v5186
    %v5329 = vmul.f32 %v5297, %v5191
    %v5330 = vmul.f32 %v5298, %v5194
    %v5331 = vmul.f32 %v5299, %v5199
    %v5332 = vmul.f32 %v5300, %v5202
    %v5333 = vadd.f32 %v5079, %v5301
    %v5334 = vadd.f32 %v5082, %v5302
    %v5335 = vadd.f32 %v5087, %v5303
    %v5336 = vadd.f32 %v5090, %v5304
    %v5337 = vadd.f32 %v5095, %v5305
    %v5338 = vadd.f32 %v5098, %v5306
    %v5339 = vadd.f32 %v5103, %v5307
    %v5340 = vadd.f32 %v5106, %v5308
    %v5341 = vadd.f32 %v5111, %v5309
    %v5342 = vadd.f32 %v5114, %v5310
    %v5343 = vadd.f32 %v5119, %v5311
    %v5344 = vadd.f32 %v5122, %v5312
    %v5345 = vadd.f32 %v5127, %v5313
    %v5346 = vadd.f32 %v5130, %v5314
    %v5347 = vadd.f32 %v5135, %v5315
    %v5348 = vadd.f32 %v5138, %v5316
    %v5349 = vadd.f32 %v5143, %v5317
    %v5350 = vadd.f32 %v5146, %v5318
    %v5351 = vadd.f32 %v5151, %v5319
    %v5352 = vadd.f32 %v5154, %v5320
    %v5353 = vadd.f32 %v5159, %v5321
    %v5354 = vadd.f32 %v5162, %v5322
    %v5355 = vadd.f32 %v5167, %v5323
    %v5356 = vadd.f32 %v5170, %v5324
    %v5357 = vadd.f32 %v5175, %v5325
    %v5358 = vadd.f32 %v5178, %v5326
    %v5359 = vadd.f32 %v5183, %v5327
    %v5360 = vadd.f32 %v5186, %v5328
    %v5361 = vadd.f32 %v5191, %v5329
    %v5362 = vadd.f32 %v5194, %v5330
    %v5363 = vadd.f32 %v5199, %v5331
    %v5364 = vadd.f32 %v5202, %v5332
    %v5365 = vmul.f32 %v5333, 0.7978846
    %v5366 = vmul.f32 %v5334, 0.7978846
    %v5367 = vmul.f32 %v5335, 0.7978846
    %v5368 = vmul.f32 %v5336, 0.7978846
    %v5369 = vmul.f32 %v5337, 0.7978846
    %v5370 = vmul.f32 %v5338, 0.7978846
    %v5371 = vmul.f32 %v5339, 0.7978846
    %v5372 = vmul.f32 %v5340, 0.7978846
    %v5373 = vmul.f32 %v5341, 0.7978846
    %v5374 = vmul.f32 %v5342, 0.7978846
    %v5375 = vmul.f32 %v5343, 0.7978846
    %v5376 = vmul.f32 %v5344, 0.7978846
    %v5377 = vmul.f32 %v5345, 0.7978846
    %v5378 = vmul.f32 %v5346, 0.7978846
    %v5379 = vmul.f32 %v5347, 0.7978846
    %v5380 = vmul.f32 %v5348, 0.7978846
    %v5381 = vmul.f32 %v5349, 0.7978846
    %v5382 = vmul.f32 %v5350, 0.7978846
    %v5383 = vmul.f32 %v5351, 0.7978846
    %v5384 = vmul.f32 %v5352, 0.7978846
    %v5385 = vmul.f32 %v5353, 0.7978846
    %v5386 = vmul.f32 %v5354, 0.7978846
    %v5387 = vmul.f32 %v5355, 0.7978846
    %v5388 = vmul.f32 %v5356, 0.7978846
    %v5389 = vmul.f32 %v5357, 0.7978846
    %v5390 = vmul.f32 %v5358, 0.7978846
    %v5391 = vmul.f32 %v5359, 0.7978846
    %v5392 = vmul.f32 %v5360, 0.7978846
    %v5393 = vmul.f32 %v5361, 0.7978846
    %v5394 = vmul.f32 %v5362, 0.7978846
    %v5395 = vmul.f32 %v5363, 0.7978846
    %v5396 = vmul.f32 %v5364, 0.7978846
    %v5397 = vtanh.pop %v5365
    %v5398 = vtanh.pop %v5366
    %v5399 = vtanh.pop %v5367
    %v5400 = vtanh.pop %v5368
    %v5401 = vtanh.pop %v5369
    %v5402 = vtanh.pop %v5370
    %v5403 = vtanh.pop %v5371
    %v5404 = vtanh.pop %v5372
    %v5405 = vtanh.pop %v5373
    %v5406 = vtanh.pop %v5374
    %v5407 = vtanh.pop %v5375
    %v5408 = vtanh.pop %v5376
    %v5409 = vtanh.pop %v5377
    %v5410 = vtanh.pop %v5378
    %v5411 = vtanh.pop %v5379
    %v5412 = vtanh.pop %v5380
    %v5413 = vtanh.pop %v5381
    %v5414 = vtanh.pop %v5382
    %v5415 = vtanh.pop %v5383
    %v5416 = vtanh.pop %v5384
    %v5417 = vtanh.pop %v5385
    %v5418 = vtanh.pop %v5386
    %v5419 = vtanh.pop %v5387
    %v5420 = vtanh.pop %v5388
    %v5421 = vtanh.pop %v5389
    %v5422 = vtanh.pop %v5390
    %v5423 = vtanh.pop %v5391
    %v5424 = vtanh.pop %v5392
    %v5425 = vtanh.pop %v5393
    %v5426 = vtanh.pop %v5394
    %v5427 = vtanh.pop %v5395
    %v5428 = vtanh.pop %v5396
    %v5429 = vadd.f32 %v5397, 1.0
    %v5430 = vadd.f32 %v5398, 1.0
    %v5431 = vadd.f32 %v5399, 1.0
    %v5432 = vadd.f32 %v5400, 1.0
    %v5433 = vadd.f32 %v5401, 1.0
    %v5434 = vadd.f32 %v5402, 1.0
    %v5435 = vadd.f32 %v5403, 1.0
    %v5436 = vadd.f32 %v5404, 1.0
    %v5437 = vadd.f32 %v5405, 1.0
    %v5438 = vadd.f32 %v5406, 1.0
    %v5439 = vadd.f32 %v5407, 1.0
    %v5440 = vadd.f32 %v5408, 1.0
    %v5441 = vadd.f32 %v5409, 1.0
    %v5442 = vadd.f32 %v5410, 1.0
    %v5443 = vadd.f32 %v5411, 1.0
    %v5444 = vadd.f32 %v5412, 1.0
    %v5445 = vadd.f32 %v5413, 1.0
    %v5446 = vadd.f32 %v5414, 1.0
    %v5447 = vadd.f32 %v5415, 1.0
    %v5448 = vadd.f32 %v5416, 1.0
    %v5449 = vadd.f32 %v5417, 1.0
    %v5450 = vadd.f32 %v5418, 1.0
    %v5451 = vadd.f32 %v5419, 1.0
    %v5452 = vadd.f32 %v5420, 1.0
    %v5453 = vadd.f32 %v5421, 1.0
    %v5454 = vadd.f32 %v5422, 1.0
    %v5455 = vadd.f32 %v5423, 1.0
    %v5456 = vadd.f32 %v5424, 1.0
    %v5457 = vadd.f32 %v5425, 1.0
    %v5458 = vadd.f32 %v5426, 1.0
    %v5459 = vadd.f32 %v5427, 1.0
    %v5460 = vadd.f32 %v5428, 1.0
    %v5461 = vmul.f32 %v5205, %v5429
    %v5462 = vmul.f32 %v5206, %v5430
    %v5463 = vmul.f32 %v5207, %v5431
    %v5464 = vmul.f32 %v5208, %v5432
    %v5465 = vmul.f32 %v5209, %v5433
    %v5466 = vmul.f32 %v5210, %v5434
    %v5467 = vmul.f32 %v5211, %v5435
    %v5468 = vmul.f32 %v5212, %v5436
    %v5469 = vmul.f32 %v5213, %v5437
    %v5470 = vmul.f32 %v5214, %v5438
    %v5471 = vmul.f32 %v5215, %v5439
    %v5472 = vmul.f32 %v5216, %v5440
    %v5473 = vmul.f32 %v5217, %v5441
    %v5474 = vmul.f32 %v5218, %v5442
    %v5475 = vmul.f32 %v5219, %v5443
    %v5476 = vmul.f32 %v5220, %v5444
    %v5477 = vmul.f32 %v5221, %v5445
    %v5478 = vmul.f32 %v5222, %v5446
    %v5479 = vmul.f32 %v5223, %v5447
    %v5480 = vmul.f32 %v5224, %v5448
    %v5481 = vmul.f32 %v5225, %v5449
    %v5482 = vmul.f32 %v5226, %v5450
    %v5483 = vmul.f32 %v5227, %v5451
    %v5484 = vmul.f32 %v5228, %v5452
    %v5485 = vmul.f32 %v5229, %v5453
    %v5486 = vmul.f32 %v5230, %v5454
    %v5487 = vmul.f32 %v5231, %v5455
    %v5488 = vmul.f32 %v5232, %v5456
    %v5489 = vmul.f32 %v5233, %v5457
    %v5490 = vmul.f32 %v5234, %v5458
    %v5491 = vmul.f32 %v5235, %v5459
    %v5492 = vmul.f32 %v5236, %v5460
    %v5493 = vpack.c.bf16 %v5462, %v5461
    %v5494 = vpack.c.bf16 %v5464, %v5463
    %v5495 = vpack.c.bf16 %v5466, %v5465
    %v5496 = vpack.c.bf16 %v5468, %v5467
    %v5497 = vpack.c.bf16 %v5470, %v5469
    %v5498 = vpack.c.bf16 %v5472, %v5471
    %v5499 = vpack.c.bf16 %v5474, %v5473
    %v5500 = vpack.c.bf16 %v5476, %v5475
    %v5501 = vpack.c.bf16 %v5478, %v5477
    %v5502 = vpack.c.bf16 %v5480, %v5479
    %v5503 = vpack.c.bf16 %v5482, %v5481
    %v5504 = vpack.c.bf16 %v5484, %v5483
    %v5505 = vpack.c.bf16 %v5486, %v5485
    %v5506 = vpack.c.bf16 %v5488, %v5487
    %v5507 = vpack.c.bf16 %v5490, %v5489
    %v5508 = vpack.c.bf16 %v5492, %v5491
    %s5509 = scalar_lea.vmem %s1, 256
    %v5510 = vld [vmem:[%s5509] sm:$0xf]
    %v5511 = vld [vmem:[%s5509 + $0x4] sm:$0xf]
    %v5512 = vld [vmem:[%s5509 + $0x8] sm:$0xf]
    %v5513 = vld [vmem:[%s5509 + $0xc] sm:$0xf]
    %v5514 = vld [vmem:[%s5509 + $0x10] sm:$0xf]
    %v5515 = vld [vmem:[%s5509 + $0x14] sm:$0xf]
    %v5516 = vld [vmem:[%s5509 + $0x18] sm:$0xf]
    %v5517 = vld [vmem:[%s5509 + $0x1c] sm:$0xf]
    %v5518 = vld [vmem:[%s5509 + $0x20] sm:$0xf]
    %v5519 = vld [vmem:[%s5509 + $0x24] sm:$0xf]
    %v5520 = vld [vmem:[%s5509 + $0x28] sm:$0xf]
    %v5521 = vld [vmem:[%s5509 + $0x2c] sm:$0xf]
    %v5522 = vld [vmem:[%s5509 + $0x30] sm:$0xf]
    %v5523 = vld [vmem:[%s5509 + $0x34] sm:$0xf]
    %v5524 = vld [vmem:[%s5509 + $0x38] sm:$0xf]
    %v5525 = vld [vmem:[%s5509 + $0x3c] sm:$0xf]
    %v5526 = vld [vmem:[%s5 + $0xb] sm:$0x1]
    %v5527 = vlaneseq
    %v5528 = vshrl.u32 %v5527, 7
    %v5529 = vsub.s32 0, %v5528
    %v5530 = vrot.slane %v5526, %v5529
    %v5547 = vunpack.c.l.b16 %v5510
    %v5548 = vunpack.c.l.b16 %v5511
    %v5549 = vunpack.c.l.b16 %v5512
    %v5550 = vunpack.c.l.b16 %v5513
    %v5551 = vunpack.c.l.b16 %v5514
    %v5552 = vunpack.c.l.b16 %v5515
    %v5553 = vunpack.c.l.b16 %v5516
    %v5554 = vunpack.c.l.b16 %v5517
    %v5555 = vunpack.c.l.b16 %v5518
    %v5556 = vunpack.c.l.b16 %v5519
    %v5557 = vunpack.c.l.b16 %v5520
    %v5558 = vunpack.c.l.b16 %v5521
    %v5559 = vunpack.c.l.b16 %v5522
    %v5560 = vunpack.c.l.b16 %v5523
    %v5561 = vunpack.c.l.b16 %v5524
    %v5562 = vunpack.c.l.b16 %v5525
    %v5563 = vpack.c.b16 %v5548, %v5547
    %v5564 = vpack.c.b16 %v5550, %v5549
    %v5565 = vpack.c.b16 %v5552, %v5551
    %v5566 = vpack.c.b16 %v5554, %v5553
    %v5567 = vpack.c.b16 %v5556, %v5555
    %v5568 = vpack.c.b16 %v5558, %v5557
    %v5569 = vpack.c.b16 %v5560, %v5559
    %v5570 = vpack.c.b16 %v5562, %v5561
    %5579 = vmatprep.subr.bf16.mxu0 0
    %5580 = vmatpush1.bf16.msra.mxu0 %v5563
    %5581 = vmatprep.subr.bf16.mxu0 0
    %5582 = vmatpush1.bf16.msra.mxu0 %v5564
    %5583 = vmatprep.subr.bf16.mxu0 0
    %5584 = vmatpush1.bf16.msra.mxu0 %v5565
    %5585 = vmatprep.subr.bf16.mxu0 0
    %5586 = vmatpush1.bf16.msra.mxu0 %v5566
    %5587 = vmatprep.subr.bf16.mxu0 0
    %5588 = vmatpush1.bf16.msra.mxu0 %v5567
    %5589 = vmatprep.subr.bf16.mxu0 0
    %5590 = vmatpush1.bf16.msra.mxu0 %v5568
    %5591 = vmatprep.subr.bf16.mxu0 0
    %5592 = vmatpush1.bf16.msra.mxu0 %v5569
    %5593 = vmatprep.subr.bf16.mxu0 0
    %5594 = vmatpush1.bf16.msra.mxu0 %v5570
    %5595 = vmatprep.subr.bf16.mxu0 0
    %5596 = vmatpush1.bf16.msra.mxu0 0
    %5597 = vmatprep.subr.bf16.mxu0 0
    %5598 = vmatpush1.bf16.msra.mxu0 0
    %5599 = vmatprep.subr.bf16.mxu0 0
    %5600 = vmatpush1.bf16.msra.mxu0 0
    %5601 = vmatprep.subr.bf16.mxu0 0
    %5602 = vmatpush1.bf16.msra.mxu0 0
    %5603 = vmatprep.subr.bf16.mxu0 0
    %5604 = vmatpush1.bf16.msra.mxu0 0
    %5605 = vmatprep.subr.bf16.mxu0 0
    %5606 = vmatpush1.bf16.msra.mxu0 0
    %5607 = vmatprep.subr.bf16.mxu0 0
    %5608 = vmatpush1.bf16.msra.mxu0 0
    %5609 = vmatprep.subr.bf16.mxu0 0
    %5610 = vmatpush1.bf16.msra.mxu0 0
    %5611 = vmatprep.mubr.bf16.mxu0 0
    %5612 = vmatmul.mubr.bf16.gmra.mrb[0].mxu0 %v5493
    %v5613 = vpop.f32.mrb[0].mxu0
    %v5614 = vadd.f32 %v5530, %v5613
    %v5615 = vpop.f32.mrb[0].mxu0
    %v5616 = vpop.f32.mrb[0].mxu0
    %v5617 = vadd.f32 %v5530, %v5616
    %v5618 = vpop.f32.mrb[0].mxu0
    %5619 = vmatprep.mubr.bf16.mxu0 0
    %5620 = vmatmul.mubr.bf16.gmra.mrb[0].mxu0 %v5494
    %v5621 = vpop.f32.mrb[0].mxu0
    %v5622 = vadd.f32 %v5530, %v5621
    %v5623 = vpop.f32.mrb[0].mxu0
    %v5624 = vpop.f32.mrb[0].mxu0
    %v5625 = vadd.f32 %v5530, %v5624
    %v5626 = vpop.f32.mrb[0].mxu0
    %5627 = vmatprep.mubr.bf16.mxu0 0
    %5628 = vmatmul.mubr.bf16.gmra.mrb[0].mxu0 %v5495
    %v5629 = vpop.f32.mrb[0].mxu0
    %v5630 = vadd.f32 %v5530, %v5629
    %v5631 = vpop.f32.mrb[0].mxu0
    %v5632 = vpop.f32.mrb[0].mxu0
    %v5633 = vadd.f32 %v5530, %v5632
    %v5634 = vpop.f32.mrb[0].mxu0
    %5635 = vmatprep.mubr.bf16.mxu0 0
    %5636 = vmatmul.mubr.bf16.gmra.mrb[0].mxu0 %v5496
    %v5637 = vpop.f32.mrb[0].mxu0
    %v5638 = vadd.f32 %v5530, %v5637
    %v5639 = vpop.f32.mrb[0].mxu0
    %v5640 = vpop.f32.mrb[0].mxu0
    %v5641 = vadd.f32 %v5530, %v5640
    %v5642 = vpop.f32.mrb[0].mxu0
    %5643 = vmatprep.mubr.bf16.mxu0 0
    %5644 = vmatmul.mubr.bf16.gmra.mrb[0].mxu0 %v5497
    %v5645 = vpop.f32.mrb[0].mxu0
    %v5646 = vadd.f32 %v5530, %v5645
    %v5647 = vpop.f32.mrb[0].mxu0
    %v5648 = vpop.f32.mrb[0].mxu0
    %v5649 = vadd.f32 %v5530, %v5648
    %v5650 = vpop.f32.mrb[0].mxu0
    %5651 = vmatprep.mubr.bf16.mxu0 0
    %5652 = vmatmul.mubr.bf16.gmra.mrb[0].mxu0 %v5498
    %v5653 = vpop.f32.mrb[0].mxu0
    %v5654 = vadd.f32 %v5530, %v5653
    %v5655 = vpop.f32.mrb[0].mxu0
    %v5656 = vpop.f32.mrb[0].mxu0
    %v5657 = vadd.f32 %v5530, %v5656
    %v5658 = vpop.f32.mrb[0].mxu0
    %5659 = vmatprep.mubr.bf16.mxu0 0
    %5660 = vmatmul.mubr.bf16.gmra.mrb[0].mxu0 %v5499
    %v5661 = vpop.f32.mrb[0].mxu0
    %v5662 = vadd.f32 %v5530, %v5661
    %v5663 = vpop.f32.mrb[0].mxu0
    %v5664 = vpop.f32.mrb[0].mxu0
    %v5665 = vadd.f32 %v5530, %v5664
    %v5666 = vpop.f32.mrb[0].mxu0
    %5667 = vmatprep.mubr.bf16.mxu0 0
    %5668 = vmatmul.mubr.bf16.gmra.mrb[0].mxu0 %v5500
    %v5669 = vpop.f32.mrb[0].mxu0
    %v5670 = vadd.f32 %v5530, %v5669
    %v5671 = vpop.f32.mrb[0].mxu0
    %v5672 = vpop.f32.mrb[0].mxu0
    %v5673 = vadd.f32 %v5530, %v5672
    %v5674 = vpop.f32.mrb[0].mxu0
    %5675 = vmatprep.mubr.bf16.mxu0 0
    %5676 = vmatmul.mubr.bf16.gmra.mrb[0].mxu0 %v5501
    %v5677 = vpop.f32.mrb[0].mxu0
    %v5678 = vadd.f32 %v5530, %v5677
    %v5679 = vpop.f32.mrb[0].mxu0
    %v5680 = vpop.f32.mrb[0].mxu0
    %v5681 = vadd.f32 %v5530, %v5680
    %v5682 = vpop.f32.mrb[0].mxu0
    %5683 = vmatprep.mubr.bf16.mxu0 0
    %5684 = vmatmul.mubr.bf16.gmra.mrb[0].mxu0 %v5502
    %v5685 = vpop.f32.mrb[0].mxu0
    %v5686 = vadd.f32 %v5530, %v5685
    %v5687 = vpop.f32.mrb[0].mxu0
    %v5688 = vpop.f32.mrb[0].mxu0
    %v5689 = vadd.f32 %v5530, %v5688
    %v5690 = vpop.f32.mrb[0].mxu0
    %5691 = vmatprep.mubr.bf16.mxu0 0
    %5692 = vmatmul.mubr.bf16.gmra.mrb[0].mxu0 %v5503
    %v5693 = vpop.f32.mrb[0].mxu0
    %v5694 = vadd.f32 %v5530, %v5693
    %v5695 = vpop.f32.mrb[0].mxu0
    %v5696 = vpop.f32.mrb[0].mxu0
    %v5697 = vadd.f32 %v5530, %v5696
    %v5698 = vpop.f32.mrb[0].mxu0
    %5699 = vmatprep.mubr.bf16.mxu0 0
    %5700 = vmatmul.mubr.bf16.gmra.mrb[0].mxu0 %v5504
    %v5701 = vpop.f32.mrb[0].mxu0
    %v5702 = vadd.f32 %v5530, %v5701
    %v5703 = vpop.f32.mrb[0].mxu0
    %v5704 = vpop.f32.mrb[0].mxu0
    %v5705 = vadd.f32 %v5530, %v5704
    %v5706 = vpop.f32.mrb[0].mxu0
    %5707 = vmatprep.mubr.bf16.mxu0 0
    %5708 = vmatmul.mubr.bf16.gmra.mrb[0].mxu0 %v5505
    %v5709 = vpop.f32.mrb[0].mxu0
    %v5710 = vadd.f32 %v5530, %v5709
    %v5711 = vpop.f32.mrb[0].mxu0
    %v5712 = vpop.f32.mrb[0].mxu0
    %v5713 = vadd.f32 %v5530, %v5712
    %v5714 = vpop.f32.mrb[0].mxu0
    %5715 = vmatprep.mubr.bf16.mxu0 0
    %5716 = vmatmul.mubr.bf16.gmra.mrb[0].mxu0 %v5506
    %v5717 = vpop.f32.mrb[0].mxu0
    %v5718 = vadd.f32 %v5530, %v5717
    %v5719 = vpop.f32.mrb[0].mxu0
    %v5720 = vpop.f32.mrb[0].mxu0
    %v5721 = vadd.f32 %v5530, %v5720
    %v5722 = vpop.f32.mrb[0].mxu0
    %5723 = vmatprep.mubr.bf16.mxu0 0
    %5724 = vmatmul.mubr.bf16.gmra.mrb[0].mxu0 %v5507
    %v5725 = vpop.f32.mrb[0].mxu0
    %v5726 = vadd.f32 %v5530, %v5725
    %v5727 = vpop.f32.mrb[0].mxu0
    %v5728 = vpop.f32.mrb[0].mxu0
    %v5729 = vadd.f32 %v5530, %v5728
    %v5730 = vpop.f32.mrb[0].mxu0
    %5731 = vmatprep.mubr.bf16.mxu0 0
    %5732 = vmatmul.mubr.bf16.gmra.mrb[0].mxu0 %v5508
    %v5733 = vpop.f32.mrb[0].mxu0
    %v5734 = vadd.f32 %v5530, %v5733
    %v5735 = vpop.f32.mrb[0].mxu0
    %v5736 = vpop.f32.mrb[0].mxu0
    %v5737 = vadd.f32 %v5530, %v5736
    %v5738 = vpop.f32.mrb[0].mxu0
    %5739 = vdwg.mxu0
    %v5740 = vld [vmem:[%s5 + $0xc] sm:$0x1]
    %v5741 = vld [vmem:[%s5 + $0xd] sm:$0x1]
    %5742 = vadd.xlane.f32.xlu0 %v5614
    %v5743 = vpop.xlane.xlu0 %5742
    %5744 = vadd.xlane.f32.xlu0 %v5617
    %v5745 = vpop.xlane.xlu0 %5744
    %5746 = vadd.xlane.f32.xlu0 %v5622
    %v5747 = vpop.xlane.xlu0 %5746
    %5748 = vadd.xlane.f32.xlu0 %v5625
    %v5749 = vpop.xlane.xlu0 %5748
    %5750 = vadd.xlane.f32.xlu0 %v5630
    %v5751 = vpop.xlane.xlu0 %5750
    %5752 = vadd.xlane.f32.xlu0 %v5633
    %v5753 = vpop.xlane.xlu0 %5752
    %5754 = vadd.xlane.f32.xlu0 %v5638
    %v5755 = vpop.xlane.xlu0 %5754
    %5756 = vadd.xlane.f32.xlu0 %v5641
    %v5757 = vpop.xlane.xlu0 %5756
    %5758 = vadd.xlane.f32.xlu0 %v5646
    %v5759 = vpop.xlane.xlu0 %5758
    %5760 = vadd.xlane.f32.xlu0 %v5649
    %v5761 = vpop.xlane.xlu0 %5760
    %5762 = vadd.xlane.f32.xlu0 %v5654
    %v5763 = vpop.xlane.xlu0 %5762
    %5764 = vadd.xlane.f32.xlu0 %v5657
    %v5765 = vpop.xlane.xlu0 %5764
    %5766 = vadd.xlane.f32.xlu0 %v5662
    %v5767 = vpop.xlane.xlu0 %5766
    %5768 = vadd.xlane.f32.xlu0 %v5665
    %v5769 = vpop.xlane.xlu0 %5768
    %5770 = vadd.xlane.f32.xlu0 %v5670
    %v5771 = vpop.xlane.xlu0 %5770
    %5772 = vadd.xlane.f32.xlu0 %v5673
    %v5773 = vpop.xlane.xlu0 %5772
    %5774 = vadd.xlane.f32.xlu0 %v5678
    %v5775 = vpop.xlane.xlu0 %5774
    %5776 = vadd.xlane.f32.xlu0 %v5681
    %v5777 = vpop.xlane.xlu0 %5776
    %5778 = vadd.xlane.f32.xlu0 %v5686
    %v5779 = vpop.xlane.xlu0 %5778
    %5780 = vadd.xlane.f32.xlu0 %v5689
    %v5781 = vpop.xlane.xlu0 %5780
    %5782 = vadd.xlane.f32.xlu0 %v5694
    %v5783 = vpop.xlane.xlu0 %5782
    %5784 = vadd.xlane.f32.xlu0 %v5697
    %v5785 = vpop.xlane.xlu0 %5784
    %5786 = vadd.xlane.f32.xlu0 %v5702
    %v5787 = vpop.xlane.xlu0 %5786
    %5788 = vadd.xlane.f32.xlu0 %v5705
    %v5789 = vpop.xlane.xlu0 %5788
    %5790 = vadd.xlane.f32.xlu0 %v5710
    %v5791 = vpop.xlane.xlu0 %5790
    %5792 = vadd.xlane.f32.xlu0 %v5713
    %v5793 = vpop.xlane.xlu0 %5792
    %5794 = vadd.xlane.f32.xlu0 %v5718
    %v5795 = vpop.xlane.xlu0 %5794
    %5796 = vadd.xlane.f32.xlu0 %v5721
    %v5797 = vpop.xlane.xlu0 %5796
    %5798 = vadd.xlane.f32.xlu0 %v5726
    %v5799 = vpop.xlane.xlu0 %5798
    %5800 = vadd.xlane.f32.xlu0 %v5729
    %v5801 = vpop.xlane.xlu0 %5800
    %5802 = vadd.xlane.f32.xlu0 %v5734
    %v5803 = vpop.xlane.xlu0 %5802
    %5804 = vadd.xlane.f32.xlu0 %v5737
    %v5805 = vpop.xlane.xlu0 %5804
    %v5806 = vmul.f32 %v5743, %v449
    %v5807 = vmul.f32 %v5745, %v449
    %v5808 = vmul.f32 %v5747, %v449
    %v5809 = vmul.f32 %v5749, %v449
    %v5810 = vmul.f32 %v5751, %v449
    %v5811 = vmul.f32 %v5753, %v449
    %v5812 = vmul.f32 %v5755, %v449
    %v5813 = vmul.f32 %v5757, %v449
    %v5814 = vmul.f32 %v5759, %v449
    %v5815 = vmul.f32 %v5761, %v449
    %v5816 = vmul.f32 %v5763, %v449
    %v5817 = vmul.f32 %v5765, %v449
    %v5818 = vmul.f32 %v5767, %v449
    %v5819 = vmul.f32 %v5769, %v449
    %v5820 = vmul.f32 %v5771, %v449
    %v5821 = vmul.f32 %v5773, %v449
    %v5822 = vmul.f32 %v5775, %v449
    %v5823 = vmul.f32 %v5777, %v449
    %v5824 = vmul.f32 %v5779, %v449
    %v5825 = vmul.f32 %v5781, %v449
    %v5826 = vmul.f32 %v5783, %v449
    %v5827 = vmul.f32 %v5785, %v449
    %v5828 = vmul.f32 %v5787, %v449
    %v5829 = vmul.f32 %v5789, %v449
    %v5830 = vmul.f32 %v5791, %v449
    %v5831 = vmul.f32 %v5793, %v449
    %v5832 = vmul.f32 %v5795, %v449
    %v5833 = vmul.f32 %v5797, %v449
    %v5834 = vmul.f32 %v5799, %v449
    %v5835 = vmul.f32 %v5801, %v449
    %v5836 = vmul.f32 %v5803, %v449
    %v5837 = vmul.f32 %v5805, %v449
    %v5838 = vsub.f32 %v5614, %v5806
    %v5839 = vsub.f32 %v5617, %v5807
    %v5840 = vsub.f32 %v5622, %v5808
    %v5841 = vsub.f32 %v5625, %v5809
    %v5842 = vsub.f32 %v5630, %v5810
    %v5843 = vsub.f32 %v5633, %v5811
    %v5844 = vsub.f32 %v5638, %v5812
    %v5845 = vsub.f32 %v5641, %v5813
    %v5846 = vsub.f32 %v5646, %v5814
    %v5847 = vsub.f32 %v5649, %v5815
    %v5848 = vsub.f32 %v5654, %v5816
    %v5849 = vsub.f32 %v5657, %v5817
    %v5850 = vsub.f32 %v5662, %v5818
    %v5851 = vsub.f32 %v5665, %v5819
    %v5852 = vsub.f32 %v5670, %v5820
    %v5853 = vsub.f32 %v5673, %v5821
    %v5854 = vsub.f32 %v5678, %v5822
    %v5855 = vsub.f32 %v5681, %v5823
    %v5856 = vsub.f32 %v5686, %v5824
    %v5857 = vsub.f32 %v5689, %v5825
    %v5858 = vsub.f32 %v5694, %v5826
    %v5859 = vsub.f32 %v5697, %v5827
    %v5860 = vsub.f32 %v5702, %v5828
    %v5861 = vsub.f32 %v5705, %v5829
    %v5862 = vsub.f32 %v5710, %v5830
    %v5863 = vsub.f32 %v5713, %v5831
    %v5864 = vsub.f32 %v5718, %v5832
    %v5865 = vsub.f32 %v5721, %v5833
    %v5866 = vsub.f32 %v5726, %v5834
    %v5867 = vsub.f32 %v5729, %v5835
    %v5868 = vsub.f32 %v5734, %v5836
    %v5869 = vsub.f32 %v5737, %v5837
    %v5870 = vmul.f32 %v5838, %v5838
    %v5871 = vmul.f32 %v5839, %v5839
    %v5872 = vmul.f32 %v5840, %v5840
    %v5873 = vmul.f32 %v5841, %v5841
    %v5874 = vmul.f32 %v5842, %v5842
    %v5875 = vmul.f32 %v5843, %v5843
    %v5876 = vmul.f32 %v5844, %v5844
    %v5877 = vmul.f32 %v5845, %v5845
    %v5878 = vmul.f32 %v5846, %v5846
    %v5879 = vmul.f32 %v5847, %v5847
    %v5880 = vmul.f32 %v5848, %v5848
    %v5881 = vmul.f32 %v5849, %v5849
    %v5882 = vmul.f32 %v5850, %v5850
    %v5883 = vmul.f32 %v5851, %v5851
    %v5884 = vmul.f32 %v5852, %v5852
    %v5885 = vmul.f32 %v5853, %v5853
    %v5886 = vmul.f32 %v5854, %v5854
    %v5887 = vmul.f32 %v5855, %v5855
    %v5888 = vmul.f32 %v5856, %v5856
    %v5889 = vmul.f32 %v5857, %v5857
    %v5890 = vmul.f32 %v5858, %v5858
    %v5891 = vmul.f32 %v5859, %v5859
    %v5892 = vmul.f32 %v5860, %v5860
    %v5893 = vmul.f32 %v5861, %v5861
    %v5894 = vmul.f32 %v5862, %v5862
    %v5895 = vmul.f32 %v5863, %v5863
    %v5896 = vmul.f32 %v5864, %v5864
    %v5897 = vmul.f32 %v5865, %v5865
    %v5898 = vmul.f32 %v5866, %v5866
    %v5899 = vmul.f32 %v5867, %v5867
    %v5900 = vmul.f32 %v5868, %v5868
    %v5901 = vmul.f32 %v5869, %v5869
    %5902 = vadd.xlane.f32.xlu0 %v5870
    %v5903 = vpop.xlane.xlu0 %5902
    %5904 = vadd.xlane.f32.xlu0 %v5871
    %v5905 = vpop.xlane.xlu0 %5904
    %5906 = vadd.xlane.f32.xlu0 %v5872
    %v5907 = vpop.xlane.xlu0 %5906
    %5908 = vadd.xlane.f32.xlu0 %v5873
    %v5909 = vpop.xlane.xlu0 %5908
    %5910 = vadd.xlane.f32.xlu0 %v5874
    %v5911 = vpop.xlane.xlu0 %5910
    %5912 = vadd.xlane.f32.xlu0 %v5875
    %v5913 = vpop.xlane.xlu0 %5912
    %5914 = vadd.xlane.f32.xlu0 %v5876
    %v5915 = vpop.xlane.xlu0 %5914
    %5916 = vadd.xlane.f32.xlu0 %v5877
    %v5917 = vpop.xlane.xlu0 %5916
    %5918 = vadd.xlane.f32.xlu0 %v5878
    %v5919 = vpop.xlane.xlu0 %5918
    %5920 = vadd.xlane.f32.xlu0 %v5879
    %v5921 = vpop.xlane.xlu0 %5920
    %5922 = vadd.xlane.f32.xlu0 %v5880
    %v5923 = vpop.xlane.xlu0 %5922
    %5924 = vadd.xlane.f32.xlu0 %v5881
    %v5925 = vpop.xlane.xlu0 %5924
    %5926 = vadd.xlane.f32.xlu0 %v5882
    %v5927 = vpop.xlane.xlu0 %5926
    %5928 = vadd.xlane.f32.xlu0 %v5883
    %v5929 = vpop.xlane.xlu0 %5928
    %5930 = vadd.xlane.f32.xlu0 %v5884
    %v5931 = vpop.xlane.xlu0 %5930
    %5932 = vadd.xlane.f32.xlu0 %v5885
    %v5933 = vpop.xlane.xlu0 %5932
    %5934 = vadd.xlane.f32.xlu0 %v5886
    %v5935 = vpop.xlane.xlu0 %5934
    %5936 = vadd.xlane.f32.xlu0 %v5887
    %v5937 = vpop.xlane.xlu0 %5936
    %5938 = vadd.xlane.f32.xlu0 %v5888
    %v5939 = vpop.xlane.xlu0 %5938
    %5940 = vadd.xlane.f32.xlu0 %v5889
    %v5941 = vpop.xlane.xlu0 %5940
    %5942 = vadd.xlane.f32.xlu0 %v5890
    %v5943 = vpop.xlane.xlu0 %5942
    %5944 = vadd.xlane.f32.xlu0 %v5891
    %v5945 = vpop.xlane.xlu0 %5944
    %5946 = vadd.xlane.f32.xlu0 %v5892
    %v5947 = vpop.xlane.xlu0 %5946
    %5948 = vadd.xlane.f32.xlu0 %v5893
    %v5949 = vpop.xlane.xlu0 %5948
    %5950 = vadd.xlane.f32.xlu0 %v5894
    %v5951 = vpop.xlane.xlu0 %5950
    %5952 = vadd.xlane.f32.xlu0 %v5895
    %v5953 = vpop.xlane.xlu0 %5952
    %5954 = vadd.xlane.f32.xlu0 %v5896
    %v5955 = vpop.xlane.xlu0 %5954
    %5956 = vadd.xlane.f32.xlu0 %v5897
    %v5957 = vpop.xlane.xlu0 %5956
    %5958 = vadd.xlane.f32.xlu0 %v5898
    %v5959 = vpop.xlane.xlu0 %5958
    %5960 = vadd.xlane.f32.xlu0 %v5899
    %v5961 = vpop.xlane.xlu0 %5960
    %5962 = vadd.xlane.f32.xlu0 %v5900
    %v5963 = vpop.xlane.xlu0 %5962
    %5964 = vadd.xlane.f32.xlu0 %v5901
    %v5965 = vpop.xlane.xlu0 %5964
    %v5966 = vmul.f32 %v5903, %v449
    %v5967 = vmul.f32 %v5905, %v449
    %v5968 = vmul.f32 %v5907, %v449
    %v5969 = vmul.f32 %v5909, %v449
    %v5970 = vmul.f32 %v5911, %v449
    %v5971 = vmul.f32 %v5913, %v449
    %v5972 = vmul.f32 %v5915, %v449
    %v5973 = vmul.f32 %v5917, %v449
    %v5974 = vmul.f32 %v5919, %v449
    %v5975 = vmul.f32 %v5921, %v449
    %v5976 = vmul.f32 %v5923, %v449
    %v5977 = vmul.f32 %v5925, %v449
    %v5978 = vmul.f32 %v5927, %v449
    %v5979 = vmul.f32 %v5929, %v449
    %v5980 = vmul.f32 %v5931, %v449
    %v5981 = vmul.f32 %v5933, %v449
    %v5982 = vmul.f32 %v5935, %v449
    %v5983 = vmul.f32 %v5937, %v449
    %v5984 = vmul.f32 %v5939, %v449
    %v5985 = vmul.f32 %v5941, %v449
    %v5986 = vmul.f32 %v5943, %v449
    %v5987 = vmul.f32 %v5945, %v449
    %v5988 = vmul.f32 %v5947, %v449
    %v5989 = vmul.f32 %v5949, %v449
    %v5990 = vmul.f32 %v5951, %v449
    %v5991 = vmul.f32 %v5953, %v449
    %v5992 = vmul.f32 %v5955, %v449
    %v5993 = vmul.f32 %v5957, %v449
    %v5994 = vmul.f32 %v5959, %v449
    %v5995 = vmul.f32 %v5961, %v449
    %v5996 = vmul.f32 %v5963, %v449
    %v5997 = vmul.f32 %v5965, %v449
    %v5998 = vadd.f32 %v5966, 1e-05
    %v5999 = vadd.f32 %v5967, 1e-05
    %v6000 = vadd.f32 %v5968, 1e-05
    %v6001 = vadd.f32 %v5969, 1e-05
    %v6002 = vadd.f32 %v5970, 1e-05
    %v6003 = vadd.f32 %v5971, 1e-05
    %v6004 = vadd.f32 %v5972, 1e-05
    %v6005 = vadd.f32 %v5973, 1e-05
    %v6006 = vadd.f32 %v5974, 1e-05
    %v6007 = vadd.f32 %v5975, 1e-05
    %v6008 = vadd.f32 %v5976, 1e-05
    %v6009 = vadd.f32 %v5977, 1e-05
    %v6010 = vadd.f32 %v5978, 1e-05
    %v6011 = vadd.f32 %v5979, 1e-05
    %v6012 = vadd.f32 %v5980, 1e-05
    %v6013 = vadd.f32 %v5981, 1e-05
    %v6014 = vadd.f32 %v5982, 1e-05
    %v6015 = vadd.f32 %v5983, 1e-05
    %v6016 = vadd.f32 %v5984, 1e-05
    %v6017 = vadd.f32 %v5985, 1e-05
    %v6018 = vadd.f32 %v5986, 1e-05
    %v6019 = vadd.f32 %v5987, 1e-05
    %v6020 = vadd.f32 %v5988, 1e-05
    %v6021 = vadd.f32 %v5989, 1e-05
    %v6022 = vadd.f32 %v5990, 1e-05
    %v6023 = vadd.f32 %v5991, 1e-05
    %v6024 = vadd.f32 %v5992, 1e-05
    %v6025 = vadd.f32 %v5993, 1e-05
    %v6026 = vadd.f32 %v5994, 1e-05
    %v6027 = vadd.f32 %v5995, 1e-05
    %v6028 = vadd.f32 %v5996, 1e-05
    %v6029 = vadd.f32 %v5997, 1e-05
    %v6030 = vrsqrt.pop %v5998
    %v6031 = vrsqrt.pop %v5999
    %v6032 = vrsqrt.pop %v6000
    %v6033 = vrsqrt.pop %v6001
    %v6034 = vrsqrt.pop %v6002
    %v6035 = vrsqrt.pop %v6003
    %v6036 = vrsqrt.pop %v6004
    %v6037 = vrsqrt.pop %v6005
    %v6038 = vrsqrt.pop %v6006
    %v6039 = vrsqrt.pop %v6007
    %v6040 = vrsqrt.pop %v6008
    %v6041 = vrsqrt.pop %v6009
    %v6042 = vrsqrt.pop %v6010
    %v6043 = vrsqrt.pop %v6011
    %v6044 = vrsqrt.pop %v6012
    %v6045 = vrsqrt.pop %v6013
    %v6046 = vrsqrt.pop %v6014
    %v6047 = vrsqrt.pop %v6015
    %v6048 = vrsqrt.pop %v6016
    %v6049 = vrsqrt.pop %v6017
    %v6050 = vrsqrt.pop %v6018
    %v6051 = vrsqrt.pop %v6019
    %v6052 = vrsqrt.pop %v6020
    %v6053 = vrsqrt.pop %v6021
    %v6054 = vrsqrt.pop %v6022
    %v6055 = vrsqrt.pop %v6023
    %v6056 = vrsqrt.pop %v6024
    %v6057 = vrsqrt.pop %v6025
    %v6058 = vrsqrt.pop %v6026
    %v6059 = vrsqrt.pop %v6027
    %v6060 = vrsqrt.pop %v6028
    %v6061 = vrsqrt.pop %v6029
    %v6062 = vmul.f32 %v5838, %v6030
    %v6063 = vmul.f32 %v5839, %v6031
    %v6064 = vmul.f32 %v5840, %v6032
    %v6065 = vmul.f32 %v5841, %v6033
    %v6066 = vmul.f32 %v5842, %v6034
    %v6067 = vmul.f32 %v5843, %v6035
    %v6068 = vmul.f32 %v5844, %v6036
    %v6069 = vmul.f32 %v5845, %v6037
    %v6070 = vmul.f32 %v5846, %v6038
    %v6071 = vmul.f32 %v5847, %v6039
    %v6072 = vmul.f32 %v5848, %v6040
    %v6073 = vmul.f32 %v5849, %v6041
    %v6074 = vmul.f32 %v5850, %v6042
    %v6075 = vmul.f32 %v5851, %v6043
    %v6076 = vmul.f32 %v5852, %v6044
    %v6077 = vmul.f32 %v5853, %v6045
    %v6078 = vmul.f32 %v5854, %v6046
    %v6079 = vmul.f32 %v5855, %v6047
    %v6080 = vmul.f32 %v5856, %v6048
    %v6081 = vmul.f32 %v5857, %v6049
    %v6082 = vmul.f32 %v5858, %v6050
    %v6083 = vmul.f32 %v5859, %v6051
    %v6084 = vmul.f32 %v5860, %v6052
    %v6085 = vmul.f32 %v5861, %v6053
    %v6086 = vmul.f32 %v5862, %v6054
    %v6087 = vmul.f32 %v5863, %v6055
    %v6088 = vmul.f32 %v5864, %v6056
    %v6089 = vmul.f32 %v5865, %v6057
    %v6090 = vmul.f32 %v5866, %v6058
    %v6091 = vmul.f32 %v5867, %v6059
    %v6092 = vmul.f32 %v5868, %v6060
    %v6093 = vmul.f32 %v5869, %v6061
    %v6094 = vlaneseq
    %v6095 = vshrl.u32 %v6094, 7
    %v6096 = vsub.s32 0, %v6095
    %v6097 = vrot.slane %v5740, %v6096
    %v6098 = vmul.f32 %v6062, %v6097
    %v6099 = vmul.f32 %v6063, %v6097
    %v6100 = vmul.f32 %v6064, %v6097
    %v6101 = vmul.f32 %v6065, %v6097
    %v6102 = vmul.f32 %v6066, %v6097
    %v6103 = vmul.f32 %v6067, %v6097
    %v6104 = vmul.f32 %v6068, %v6097
    %v6105 = vmul.f32 %v6069, %v6097
    %v6106 = vmul.f32 %v6070, %v6097
    %v6107 = vmul.f32 %v6071, %v6097
    %v6108 = vmul.f32 %v6072, %v6097
    %v6109 = vmul.f32 %v6073, %v6097
    %v6110 = vmul.f32 %v6074, %v6097
    %v6111 = vmul.f32 %v6075, %v6097
    %v6112 = vmul.f32 %v6076, %v6097
    %v6113 = vmul.f32 %v6077, %v6097
    %v6114 = vmul.f32 %v6078, %v6097
    %v6115 = vmul.f32 %v6079, %v6097
    %v6116 = vmul.f32 %v6080, %v6097
    %v6117 = vmul.f32 %v6081, %v6097
    %v6118 = vmul.f32 %v6082, %v6097
    %v6119 = vmul.f32 %v6083, %v6097
    %v6120 = vmul.f32 %v6084, %v6097
    %v6121 = vmul.f32 %v6085, %v6097
    %v6122 = vmul.f32 %v6086, %v6097
    %v6123 = vmul.f32 %v6087, %v6097
    %v6124 = vmul.f32 %v6088, %v6097
    %v6125 = vmul.f32 %v6089, %v6097
    %v6126 = vmul.f32 %v6090, %v6097
    %v6127 = vmul.f32 %v6091, %v6097
    %v6128 = vmul.f32 %v6092, %v6097
    %v6129 = vmul.f32 %v6093, %v6097
    %v6130 = vlaneseq
    %v6131 = vshrl.u32 %v6130, 7
    %v6132 = vsub.s32 0, %v6131
    %v6133 = vrot.slane %v5741, %v6132
    %v6134 = vadd.f32 %v6098, %v6133
    %v6135 = vadd.f32 %v6099, %v6133
    %v6136 = vadd.f32 %v6100, %v6133
    %v6137 = vadd.f32 %v6101, %v6133
    %v6138 = vadd.f32 %v6102, %v6133
    %v6139 = vadd.f32 %v6103, %v6133
    %v6140 = vadd.f32 %v6104, %v6133
    %v6141 = vadd.f32 %v6105, %v6133
    %v6142 = vadd.f32 %v6106, %v6133
    %v6143 = vadd.f32 %v6107, %v6133
    %v6144 = vadd.f32 %v6108, %v6133
    %v6145 = vadd.f32 %v6109, %v6133
    %v6146 = vadd.f32 %v6110, %v6133
    %v6147 = vadd.f32 %v6111, %v6133
    %v6148 = vadd.f32 %v6112, %v6133
    %v6149 = vadd.f32 %v6113, %v6133
    %v6150 = vadd.f32 %v6114, %v6133
    %v6151 = vadd.f32 %v6115, %v6133
    %v6152 = vadd.f32 %v6116, %v6133
    %v6153 = vadd.f32 %v6117, %v6133
    %v6154 = vadd.f32 %v6118, %v6133
    %v6155 = vadd.f32 %v6119, %v6133
    %v6156 = vadd.f32 %v6120, %v6133
    %v6157 = vadd.f32 %v6121, %v6133
    %v6158 = vadd.f32 %v6122, %v6133
    %v6159 = vadd.f32 %v6123, %v6133
    %v6160 = vadd.f32 %v6124, %v6133
    %v6161 = vadd.f32 %v6125, %v6133
    %v6162 = vadd.f32 %v6126, %v6133
    %v6163 = vadd.f32 %v6127, %v6133
    %v6164 = vadd.f32 %v6128, %v6133
    %v6165 = vadd.f32 %v6129, %v6133
    %v6166 = vpack.c.bf16 %v6135, %v6134
    %v6167 = vpack.c.bf16 %v6137, %v6136
    %v6168 = vpack.c.bf16 %v6139, %v6138
    %v6169 = vpack.c.bf16 %v6141, %v6140
    %v6170 = vpack.c.bf16 %v6143, %v6142
    %v6171 = vpack.c.bf16 %v6145, %v6144
    %v6172 = vpack.c.bf16 %v6147, %v6146
    %v6173 = vpack.c.bf16 %v6149, %v6148
    %v6174 = vpack.c.bf16 %v6151, %v6150
    %v6175 = vpack.c.bf16 %v6153, %v6152
    %v6176 = vpack.c.bf16 %v6155, %v6154
    %v6177 = vpack.c.bf16 %v6157, %v6156
    %v6178 = vpack.c.bf16 %v6159, %v6158
    %v6179 = vpack.c.bf16 %v6161, %v6160
    %v6180 = vpack.c.bf16 %v6163, %v6162
    %v6181 = vpack.c.bf16 %v6165, %v6164
    %v6182 = vld [vmem:[%s5 + $0xe] sm:$0x1]
    %v6183 = vlaneseq
    %v6184 = vshrl.u32 %v6183, 7
    %v6185 = vsub.s32 0, %v6184
    %v6186 = vrot.slane %v6182, %v6185
    %v6187 = vadd.f32 %v4500, %v6186
    %v6188 = vadd.f32 %v4501, %v6186
    %v6189 = vadd.f32 %v4502, %v6186
    %v6190 = vadd.f32 %v4503, %v6186
    %v6191 = vadd.f32 %v4504, %v6186
    %v6192 = vadd.f32 %v4505, %v6186
    %v6193 = vadd.f32 %v4506, %v6186
    %v6194 = vadd.f32 %v4507, %v6186
    %v6195 = vadd.f32 %v4508, %v6186
    %v6196 = vadd.f32 %v4509, %v6186
    %v6197 = vadd.f32 %v4510, %v6186
    %v6198 = vadd.f32 %v4511, %v6186
    %v6199 = vadd.f32 %v4512, %v6186
    %v6200 = vadd.f32 %v4513, %v6186
    %v6201 = vadd.f32 %v4514, %v6186
    %v6202 = vadd.f32 %v4515, %v6186
    %v6203 = vadd.f32 %v4516, %v6186
    %v6204 = vadd.f32 %v4517, %v6186
    %v6205 = vadd.f32 %v4518, %v6186
    %v6206 = vadd.f32 %v4519, %v6186
    %v6207 = vadd.f32 %v4520, %v6186
    %v6208 = vadd.f32 %v4521, %v6186
    %v6209 = vadd.f32 %v4522, %v6186
    %v6210 = vadd.f32 %v4523, %v6186
    %v6211 = vadd.f32 %v4524, %v6186
    %v6212 = vadd.f32 %v4525, %v6186
    %v6213 = vadd.f32 %v4526, %v6186
    %v6214 = vadd.f32 %v4527, %v6186
    %v6215 = vadd.f32 %v4528, %v6186
    %v6216 = vadd.f32 %v4529, %v6186
    %v6217 = vadd.f32 %v4530, %v6186
    %v6218 = vadd.f32 %v4531, %v6186
    %s6219 = scalar_lea.vmem %s2, 256
    %v6220 = vld [vmem:[%s6219] sm:$0xff]
    %v6221 = vld [vmem:[%s6219 + $0x10] sm:$0xff]
    %v6222 = vld [vmem:[%s6219 + $0x20] sm:$0xff]
    %v6223 = vld [vmem:[%s6219 + $0x30] sm:$0xff]
    %v6224 = vld [vmem:[%s6219 + $0x40] sm:$0xff]
    %v6225 = vld [vmem:[%s6219 + $0x50] sm:$0xff]
    %v6226 = vld [vmem:[%s6219 + $0x60] sm:$0xff]
    %v6227 = vld [vmem:[%s6219 + $0x70] sm:$0xff]
    %v6228 = vld [vmem:[%s6219 + $0x80] sm:$0xff]
    %v6229 = vld [vmem:[%s6219 + $0x90] sm:$0xff]
    %v6230 = vld [vmem:[%s6219 + $0xa0] sm:$0xff]
    %v6231 = vld [vmem:[%s6219 + $0xb0] sm:$0xff]
    %v6232 = vld [vmem:[%s6219 + $0xc0] sm:$0xff]
    %v6233 = vld [vmem:[%s6219 + $0xd0] sm:$0xff]
    %v6234 = vld [vmem:[%s6219 + $0xe0] sm:$0xff]
    %v6235 = vld [vmem:[%s6219 + $0xf0] sm:$0xff]
    %s6236 = scalar_lea.vmem %s4, 1
    %v6237 = vld [vmem:[%s6236] ss:$2 sm:$0x3]
    %v6239 = vlaneseq
    %v6240 = vshrl.u32 %v6239, 7
    %v6241 = vsub.s32 0, %v6240
    %v6242 = vrot.slane %v6237, %v6241
    %v6243 = vlaneseq
    %v6244 = vshrl.u32 %v6243, 7
    %v6245 = vsub.s32 1, %v6244
    %v6246 = vrot.slane %v6237, %v6245
    %v6265 = vunpack.c.l.b16 %v6220
    %v6266 = vunpack.c.h.b16 %v6220
    %v6267 = vunpack.c.l.b16 %v6221
    %v6268 = vunpack.c.h.b16 %v6221
    %v6269 = vunpack.c.l.b16 %v6222
    %v6270 = vunpack.c.h.b16 %v6222
    %v6271 = vunpack.c.l.b16 %v6223
    %v6272 = vunpack.c.h.b16 %v6223
    %v6273 = vunpack.c.l.b16 %v6224
    %v6274 = vunpack.c.h.b16 %v6224
    %v6275 = vunpack.c.l.b16 %v6225
    %v6276 = vunpack.c.h.b16 %v6225
    %v6277 = vunpack.c.l.b16 %v6226
    %v6278 = vunpack.c.h.b16 %v6226
    %v6279 = vunpack.c.l.b16 %v6227
    %v6280 = vunpack.c.h.b16 %v6227
    %v6281 = vunpack.c.l.b16 %v6228
    %v6282 = vunpack.c.h.b16 %v6228
    %v6283 = vunpack.c.l.b16 %v6229
    %v6284 = vunpack.c.h.b16 %v6229
    %v6285 = vunpack.c.l.b16 %v6230
    %v6286 = vunpack.c.h.b16 %v6230
    %v6287 = vunpack.c.l.b16 %v6231
    %v6288 = vunpack.c.h.b16 %v6231
    %v6289 = vunpack.c.l.b16 %v6232
    %v6290 = vunpack.c.h.b16 %v6232
    %v6291 = vunpack.c.l.b16 %v6233
    %v6292 = vunpack.c.h.b16 %v6233
    %v6293 = vunpack.c.l.b16 %v6234
    %v6294 = vunpack.c.h.b16 %v6234
    %v6295 = vunpack.c.l.b16 %v6235
    %v6296 = vunpack.c.h.b16 %v6235
    %v6297 = vpack.c.b16 %v6267, %v6265
    %v6298 = vpack.c.b16 %v6268, %v6266
    %v6299 = vpack.c.b16 %v6271, %v6269
    %v6300 = vpack.c.b16 %v6272, %v6270
    %v6301 = vpack.c.b16 %v6275, %v6273
    %v6302 = vpack.c.b16 %v6276, %v6274
    %v6303 = vpack.c.b16 %v6279, %v6277
    %v6304 = vpack.c.b16 %v6280, %v6278
    %v6305 = vpack.c.b16 %v6283, %v6281
    %v6306 = vpack.c.b16 %v6284, %v6282
    %v6307 = vpack.c.b16 %v6287, %v6285
    %v6308 = vpack.c.b16 %v6288, %v6286
    %v6309 = vpack.c.b16 %v6291, %v6289
    %v6310 = vpack.c.b16 %v6292, %v6290
    %v6311 = vpack.c.b16 %v6295, %v6293
    %v6312 = vpack.c.b16 %v6296, %v6294
    %6329 = vmatprep.subr.bf16.mxu0 %v6298
    %6330 = vmatpush1.bf16.msra.mxu0 %v6297
    %6331 = vmatprep.subr.bf16.mxu0 %v6300
    %6332 = vmatpush1.bf16.msra.mxu0 %v6299
    %6333 = vmatprep.subr.bf16.mxu0 %v6302
    %6334 = vmatpush1.bf16.msra.mxu0 %v6301
    %6335 = vmatprep.subr.bf16.mxu0 %v6304
    %6336 = vmatpush1.bf16.msra.mxu0 %v6303
    %6337 = vmatprep.subr.bf16.mxu0 %v6306
    %6338 = vmatpush1.bf16.msra.mxu0 %v6305
    %6339 = vmatprep.subr.bf16.mxu0 %v6308
    %6340 = vmatpush1.bf16.msra.mxu0 %v6307
    %6341 = vmatprep.subr.bf16.mxu0 %v6310
    %6342 = vmatpush1.bf16.msra.mxu0 %v6309
    %6343 = vmatprep.subr.bf16.mxu0 %v6312
    %6344 = vmatpush1.bf16.msra.mxu0 %v6311
    %6345 = vmatprep.subr.bf16.mxu0 0
    %6346 = vmatpush1.bf16.msra.mxu0 0
    %6347 = vmatprep.subr.bf16.mxu0 0
    %6348 = vmatpush1.bf16.msra.mxu0 0
    %6349 = vmatprep.subr.bf16.mxu0 0
    %6350 = vmatpush1.bf16.msra.mxu0 0
    %6351 = vmatprep.subr.bf16.mxu0 0
    %6352 = vmatpush1.bf16.msra.mxu0 0
    %6353 = vmatprep.subr.bf16.mxu0 0
    %6354 = vmatpush1.bf16.msra.mxu0 0
    %6355 = vmatprep.subr.bf16.mxu0 0
    %6356 = vmatpush1.bf16.msra.mxu0 0
    %6357 = vmatprep.subr.bf16.mxu0 0
    %6358 = vmatpush1.bf16.msra.mxu0 0
    %6359 = vmatprep.subr.bf16.mxu0 0
    %6360 = vmatpush1.bf16.msra.mxu0 0
    %6361 = vmatprep.mubr.bf16.mxu0 0
    %6362 = vmatmul.mubr.bf16.gmra.mrb[0].mxu0 %v6166
    %v6363 = vpop.f32.mrb[0].mxu0
    %v6364 = vadd.f32 %v6242, %v6363
    %v6365 = vpop.f32.mrb[0].mxu0
    %v6366 = vadd.f32 %v6246, %v6365
    %v6367 = vpop.f32.mrb[0].mxu0
    %v6368 = vadd.f32 %v6242, %v6367
    %v6369 = vpop.f32.mrb[0].mxu0
    %v6370 = vadd.f32 %v6246, %v6369
    %6371 = vmatprep.mubr.bf16.mxu0 0
    %6372 = vmatmul.mubr.bf16.gmra.mrb[0].mxu0 %v6167
    %v6373 = vpop.f32.mrb[0].mxu0
    %v6374 = vadd.f32 %v6242, %v6373
    %v6375 = vpop.f32.mrb[0].mxu0
    %v6376 = vadd.f32 %v6246, %v6375
    %v6377 = vpop.f32.mrb[0].mxu0
    %v6378 = vadd.f32 %v6242, %v6377
    %v6379 = vpop.f32.mrb[0].mxu0
    %v6380 = vadd.f32 %v6246, %v6379
    %6381 = vmatprep.mubr.bf16.mxu0 0
    %6382 = vmatmul.mubr.bf16.gmra.mrb[0].mxu0 %v6168
    %v6383 = vpop.f32.mrb[0].mxu0
    %v6384 = vadd.f32 %v6242, %v6383
    %v6385 = vpop.f32.mrb[0].mxu0
    %v6386 = vadd.f32 %v6246, %v6385
    %v6387 = vpop.f32.mrb[0].mxu0
    %v6388 = vadd.f32 %v6242, %v6387
    %v6389 = vpop.f32.mrb[0].mxu0
    %v6390 = vadd.f32 %v6246, %v6389
    %6391 = vmatprep.mubr.bf16.mxu0 0
    %6392 = vmatmul.mubr.bf16.gmra.mrb[0].mxu0 %v6169
    %v6393 = vpop.f32.mrb[0].mxu0
    %v6394 = vadd.f32 %v6242, %v6393
    %v6395 = vpop.f32.mrb[0].mxu0
    %v6396 = vadd.f32 %v6246, %v6395
    %v6397 = vpop.f32.mrb[0].mxu0
    %v6398 = vadd.f32 %v6242, %v6397
    %v6399 = vpop.f32.mrb[0].mxu0
    %v6400 = vadd.f32 %v6246, %v6399
    %6401 = vmatprep.mubr.bf16.mxu0 0
    %6402 = vmatmul.mubr.bf16.gmra.mrb[0].mxu0 %v6170
    %v6403 = vpop.f32.mrb[0].mxu0
    %v6404 = vadd.f32 %v6242, %v6403
    %v6405 = vpop.f32.mrb[0].mxu0
    %v6406 = vadd.f32 %v6246, %v6405
    %v6407 = vpop.f32.mrb[0].mxu0
    %v6408 = vadd.f32 %v6242, %v6407
    %v6409 = vpop.f32.mrb[0].mxu0
    %v6410 = vadd.f32 %v6246, %v6409
    %6411 = vmatprep.mubr.bf16.mxu0 0
    %6412 = vmatmul.mubr.bf16.gmra.mrb[0].mxu0 %v6171
    %v6413 = vpop.f32.mrb[0].mxu0
    %v6414 = vadd.f32 %v6242, %v6413
    %v6415 = vpop.f32.mrb[0].mxu0
    %v6416 = vadd.f32 %v6246, %v6415
    %v6417 = vpop.f32.mrb[0].mxu0
    %v6418 = vadd.f32 %v6242, %v6417
    %v6419 = vpop.f32.mrb[0].mxu0
    %v6420 = vadd.f32 %v6246, %v6419
    %6421 = vmatprep.mubr.bf16.mxu0 0
    %6422 = vmatmul.mubr.bf16.gmra.mrb[0].mxu0 %v6172
    %v6423 = vpop.f32.mrb[0].mxu0
    %v6424 = vadd.f32 %v6242, %v6423
    %v6425 = vpop.f32.mrb[0].mxu0
    %v6426 = vadd.f32 %v6246, %v6425
    %v6427 = vpop.f32.mrb[0].mxu0
    %v6428 = vadd.f32 %v6242, %v6427
    %v6429 = vpop.f32.mrb[0].mxu0
    %v6430 = vadd.f32 %v6246, %v6429
    %6431 = vmatprep.mubr.bf16.mxu0 0
    %6432 = vmatmul.mubr.bf16.gmra.mrb[0].mxu0 %v6173
    %v6433 = vpop.f32.mrb[0].mxu0
    %v6434 = vadd.f32 %v6242, %v6433
    %v6435 = vpop.f32.mrb[0].mxu0
    %v6436 = vadd.f32 %v6246, %v6435
    %v6437 = vpop.f32.mrb[0].mxu0
    %v6438 = vadd.f32 %v6242, %v6437
    %v6439 = vpop.f32.mrb[0].mxu0
    %v6440 = vadd.f32 %v6246, %v6439
    %6441 = vmatprep.mubr.bf16.mxu0 0
    %6442 = vmatmul.mubr.bf16.gmra.mrb[0].mxu0 %v6174
    %v6443 = vpop.f32.mrb[0].mxu0
    %v6444 = vadd.f32 %v6242, %v6443
    %v6445 = vpop.f32.mrb[0].mxu0
    %v6446 = vadd.f32 %v6246, %v6445
    %v6447 = vpop.f32.mrb[0].mxu0
    %v6448 = vadd.f32 %v6242, %v6447
    %v6449 = vpop.f32.mrb[0].mxu0
    %v6450 = vadd.f32 %v6246, %v6449
    %6451 = vmatprep.mubr.bf16.mxu0 0
    %6452 = vmatmul.mubr.bf16.gmra.mrb[0].mxu0 %v6175
    %v6453 = vpop.f32.mrb[0].mxu0
    %v6454 = vadd.f32 %v6242, %v6453
    %v6455 = vpop.f32.mrb[0].mxu0
    %v6456 = vadd.f32 %v6246, %v6455
    %v6457 = vpop.f32.mrb[0].mxu0
    %v6458 = vadd.f32 %v6242, %v6457
    %v6459 = vpop.f32.mrb[0].mxu0
    %v6460 = vadd.f32 %v6246, %v6459
    %6461 = vmatprep.mubr.bf16.mxu0 0
    %6462 = vmatmul.mubr.bf16.gmra.mrb[0].mxu0 %v6176
    %v6463 = vpop.f32.mrb[0].mxu0
    %v6464 = vadd.f32 %v6242, %v6463
    %v6465 = vpop.f32.mrb[0].mxu0
    %v6466 = vadd.f32 %v6246, %v6465
    %v6467 = vpop.f32.mrb[0].mxu0
    %v6468 = vadd.f32 %v6242, %v6467
    %v6469 = vpop.f32.mrb[0].mxu0
    %v6470 = vadd.f32 %v6246, %v6469
    %6471 = vmatprep.mubr.bf16.mxu0 0
    %6472 = vmatmul.mubr.bf16.gmra.mrb[0].mxu0 %v6177
    %v6473 = vpop.f32.mrb[0].mxu0
    %v6474 = vadd.f32 %v6242, %v6473
    %v6475 = vpop.f32.mrb[0].mxu0
    %v6476 = vadd.f32 %v6246, %v6475
    %v6477 = vpop.f32.mrb[0].mxu0
    %v6478 = vadd.f32 %v6242, %v6477
    %v6479 = vpop.f32.mrb[0].mxu0
    %v6480 = vadd.f32 %v6246, %v6479
    %6481 = vmatprep.mubr.bf16.mxu0 0
    %6482 = vmatmul.mubr.bf16.gmra.mrb[0].mxu0 %v6178
    %v6483 = vpop.f32.mrb[0].mxu0
    %v6484 = vadd.f32 %v6242, %v6483
    %v6485 = vpop.f32.mrb[0].mxu0
    %v6486 = vadd.f32 %v6246, %v6485
    %v6487 = vpop.f32.mrb[0].mxu0
    %v6488 = vadd.f32 %v6242, %v6487
    %v6489 = vpop.f32.mrb[0].mxu0
    %v6490 = vadd.f32 %v6246, %v6489
    %6491 = vmatprep.mubr.bf16.mxu0 0
    %6492 = vmatmul.mubr.bf16.gmra.mrb[0].mxu0 %v6179
    %v6493 = vpop.f32.mrb[0].mxu0
    %v6494 = vadd.f32 %v6242, %v6493
    %v6495 = vpop.f32.mrb[0].mxu0
    %v6496 = vadd.f32 %v6246, %v6495
    %v6497 = vpop.f32.mrb[0].mxu0
    %v6498 = vadd.f32 %v6242, %v6497
    %v6499 = vpop.f32.mrb[0].mxu0
    %v6500 = vadd.f32 %v6246, %v6499
    %6501 = vmatprep.mubr.bf16.mxu0 0
    %6502 = vmatmul.mubr.bf16.gmra.mrb[0].mxu0 %v6180
    %v6503 = vpop.f32.mrb[0].mxu0
    %v6504 = vadd.f32 %v6242, %v6503
    %v6505 = vpop.f32.mrb[0].mxu0
    %v6506 = vadd.f32 %v6246, %v6505
    %v6507 = vpop.f32.mrb[0].mxu0
    %v6508 = vadd.f32 %v6242, %v6507
    %v6509 = vpop.f32.mrb[0].mxu0
    %v6510 = vadd.f32 %v6246, %v6509
    %6511 = vmatprep.mubr.bf16.mxu0 0
    %6512 = vmatmul.mubr.bf16.gmra.mrb[0].mxu0 %v6181
    %v6513 = vpop.f32.mrb[0].mxu0
    %v6514 = vadd.f32 %v6242, %v6513
    %v6515 = vpop.f32.mrb[0].mxu0
    %v6516 = vadd.f32 %v6246, %v6515
    %v6517 = vpop.f32.mrb[0].mxu0
    %v6518 = vadd.f32 %v6242, %v6517
    %v6519 = vpop.f32.mrb[0].mxu0
    %v6520 = vadd.f32 %v6246, %v6519
    %6521 = vdwg.mxu0
    %v6522 = vmul.f32 %v6364, 0.5
    %v6523 = vmul.f32 %v6366, 0.5
    %v6524 = vmul.f32 %v6368, 0.5
    %v6525 = vmul.f32 %v6370, 0.5
    %v6526 = vmul.f32 %v6374, 0.5
    %v6527 = vmul.f32 %v6376, 0.5
    %v6528 = vmul.f32 %v6378, 0.5
    %v6529 = vmul.f32 %v6380, 0.5
    %v6530 = vmul.f32 %v6384, 0.5
    %v6531 = vmul.f32 %v6386, 0.5
    %v6532 = vmul.f32 %v6388, 0.5
    %v6533 = vmul.f32 %v6390, 0.5
    %v6534 = vmul.f32 %v6394, 0.5
    %v6535 = vmul.f32 %v6396, 0.5
    %v6536 = vmul.f32 %v6398, 0.5
    %v6537 = vmul.f32 %v6400, 0.5
    %v6538 = vmul.f32 %v6404, 0.5
    %v6539 = vmul.f32 %v6406, 0.5
    %v6540 = vmul.f32 %v6408, 0.5
    %v6541 = vmul.f32 %v6410, 0.5
    %v6542 = vmul.f32 %v6414, 0.5
    %v6543 = vmul.f32 %v6416, 0.5
    %v6544 = vmul.f32 %v6418, 0.5
    %v6545 = vmul.f32 %v6420, 0.5
    %v6546 = vmul.f32 %v6424, 0.5
    %v6547 = vmul.f32 %v6426, 0.5
    %v6548 = vmul.f32 %v6428, 0.5
    %v6549 = vmul.f32 %v6430, 0.5
    %v6550 = vmul.f32 %v6434, 0.5
    %v6551 = vmul.f32 %v6436, 0.5
    %v6552 = vmul.f32 %v6438, 0.5
    %v6553 = vmul.f32 %v6440, 0.5
    %v6554 = vmul.f32 %v6444, 0.5
    %v6555 = vmul.f32 %v6446, 0.5
    %v6556 = vmul.f32 %v6448, 0.5
    %v6557 = vmul.f32 %v6450, 0.5
    %v6558 = vmul.f32 %v6454, 0.5
    %v6559 = vmul.f32 %v6456, 0.5
    %v6560 = vmul.f32 %v6458, 0.5
    %v6561 = vmul.f32 %v6460, 0.5
    %v6562 = vmul.f32 %v6464, 0.5
    %v6563 = vmul.f32 %v6466, 0.5
    %v6564 = vmul.f32 %v6468, 0.5
    %v6565 = vmul.f32 %v6470, 0.5
    %v6566 = vmul.f32 %v6474, 0.5
    %v6567 = vmul.f32 %v6476, 0.5
    %v6568 = vmul.f32 %v6478, 0.5
    %v6569 = vmul.f32 %v6480, 0.5
    %v6570 = vmul.f32 %v6484, 0.5
    %v6571 = vmul.f32 %v6486, 0.5
    %v6572 = vmul.f32 %v6488, 0.5
    %v6573 = vmul.f32 %v6490, 0.5
    %v6574 = vmul.f32 %v6494, 0.5
    %v6575 = vmul.f32 %v6496, 0.5
    %v6576 = vmul.f32 %v6498, 0.5
    %v6577 = vmul.f32 %v6500, 0.5
    %v6578 = vmul.f32 %v6504, 0.5
    %v6579 = vmul.f32 %v6506, 0.5
    %v6580 = vmul.f32 %v6508, 0.5
    %v6581 = vmul.f32 %v6510, 0.5
    %v6582 = vmul.f32 %v6514, 0.5
    %v6583 = vmul.f32 %v6516, 0.5
    %v6584 = vmul.f32 %v6518, 0.5
    %v6585 = vmul.f32 %v6520, 0.5
    %v6586 = vmul.f32 %v6364, 0.044715
    %v6587 = vmul.f32 %v6366, 0.044715
    %v6588 = vmul.f32 %v6368, 0.044715
    %v6589 = vmul.f32 %v6370, 0.044715
    %v6590 = vmul.f32 %v6374, 0.044715
    %v6591 = vmul.f32 %v6376, 0.044715
    %v6592 = vmul.f32 %v6378, 0.044715
    %v6593 = vmul.f32 %v6380, 0.044715
    %v6594 = vmul.f32 %v6384, 0.044715
    %v6595 = vmul.f32 %v6386, 0.044715
    %v6596 = vmul.f32 %v6388, 0.044715
    %v6597 = vmul.f32 %v6390, 0.044715
    %v6598 = vmul.f32 %v6394, 0.044715
    %v6599 = vmul.f32 %v6396, 0.044715
    %v6600 = vmul.f32 %v6398, 0.044715
    %v6601 = vmul.f32 %v6400, 0.044715
    %v6602 = vmul.f32 %v6404, 0.044715
    %v6603 = vmul.f32 %v6406, 0.044715
    %v6604 = vmul.f32 %v6408, 0.044715
    %v6605 = vmul.f32 %v6410, 0.044715
    %v6606 = vmul.f32 %v6414, 0.044715
    %v6607 = vmul.f32 %v6416, 0.044715
    %v6608 = vmul.f32 %v6418, 0.044715
    %v6609 = vmul.f32 %v6420, 0.044715
    %v6610 = vmul.f32 %v6424, 0.044715
    %v6611 = vmul.f32 %v6426, 0.044715
    %v6612 = vmul.f32 %v6428, 0.044715
    %v6613 = vmul.f32 %v6430, 0.044715
    %v6614 = vmul.f32 %v6434, 0.044715
    %v6615 = vmul.f32 %v6436, 0.044715
    %v6616 = vmul.f32 %v6438, 0.044715
    %v6617 = vmul.f32 %v6440, 0.044715
    %v6618 = vmul.f32 %v6444, 0.044715
    %v6619 = vmul.f32 %v6446, 0.044715
    %v6620 = vmul.f32 %v6448, 0.044715
    %v6621 = vmul.f32 %v6450, 0.044715
    %v6622 = vmul.f32 %v6454, 0.044715
    %v6623 = vmul.f32 %v6456, 0.044715
    %v6624 = vmul.f32 %v6458, 0.044715
    %v6625 = vmul.f32 %v6460, 0.044715
    %v6626 = vmul.f32 %v6464, 0.044715
    %v6627 = vmul.f32 %v6466, 0.044715
    %v6628 = vmul.f32 %v6468, 0.044715
    %v6629 = vmul.f32 %v6470, 0.044715
    %v6630 = vmul.f32 %v6474, 0.044715
    %v6631 = vmul.f32 %v6476, 0.044715
    %v6632 = vmul.f32 %v6478, 0.044715
    %v6633 = vmul.f32 %v6480, 0.044715
    %v6634 = vmul.f32 %v6484, 0.044715
    %v6635 = vmul.f32 %v6486, 0.044715
    %v6636 = vmul.f32 %v6488, 0.044715
    %v6637 = vmul.f32 %v6490, 0.044715
    %v6638 = vmul.f32 %v6494, 0.044715
    %v6639 = vmul.f32 %v6496, 0.044715
    %v6640 = vmul.f32 %v6498, 0.044715
    %v6641 = vmul.f32 %v6500, 0.044715
    %v6642 = vmul.f32 %v6504, 0.044715
    %v6643 = vmul.f32 %v6506, 0.044715
    %v6644 = vmul.f32 %v6508, 0.044715
    %v6645 = vmul.f32 %v6510, 0.044715
    %v6646 = vmul.f32 %v6514, 0.044715
    %v6647 = vmul.f32 %v6516, 0.044715
    %v6648 = vmul.f32 %v6518, 0.044715
    %v6649 = vmul.f32 %v6520, 0.044715
    %v6650 = vmul.f32 %v6586, %v6364
    %v6651 = vmul.f32 %v6587, %v6366
    %v6652 = vmul.f32 %v6588, %v6368
    %v6653 = vmul.f32 %v6589, %v6370
    %v6654 = vmul.f32 %v6590, %v6374
    %v6655 = vmul.f32 %v6591, %v6376
    %v6656 = vmul.f32 %v6592, %v6378
    %v6657 = vmul.f32 %v6593, %v6380
    %v6658 = vmul.f32 %v6594, %v6384
    %v6659 = vmul.f32 %v6595, %v6386
    %v6660 = vmul.f32 %v6596, %v6388
    %v6661 = vmul.f32 %v6597, %v6390
    %v6662 = vmul.f32 %v6598, %v6394
    %v6663 = vmul.f32 %v6599, %v6396
    %v6664 = vmul.f32 %v6600, %v6398
    %v6665 = vmul.f32 %v6601, %v6400
    %v6666 = vmul.f32 %v6602, %v6404
    %v6667 = vmul.f32 %v6603, %v6406
    %v6668 = vmul.f32 %v6604, %v6408
    %v6669 = vmul.f32 %v6605, %v6410
    %v6670 = vmul.f32 %v6606, %v6414
    %v6671 = vmul.f32 %v6607, %v6416
    %v6672 = vmul.f32 %v6608, %v6418
    %v6673 = vmul.f32 %v6609, %v6420
    %v6674 = vmul.f32 %v6610, %v6424
    %v6675 = vmul.f32 %v6611, %v6426
    %v6676 = vmul.f32 %v6612, %v6428
    %v6677 = vmul.f32 %v6613, %v6430
    %v6678 = vmul.f32 %v6614, %v6434
    %v6679 = vmul.f32 %v6615, %v6436
    %v6680 = vmul.f32 %v6616, %v6438
    %v6681 = vmul.f32 %v6617, %v6440
    %v6682 = vmul.f32 %v6618, %v6444
    %v6683 = vmul.f32 %v6619, %v6446
    %v6684 = vmul.f32 %v6620, %v6448
    %v6685 = vmul.f32 %v6621, %v6450
    %v6686 = vmul.f32 %v6622, %v6454
    %v6687 = vmul.f32 %v6623, %v6456
    %v6688 = vmul.f32 %v6624, %v6458
    %v6689 = vmul.f32 %v6625, %v6460
    %v6690 = vmul.f32 %v6626, %v6464
    %v6691 = vmul.f32 %v6627, %v6466
    %v6692 = vmul.f32 %v6628, %v6468
    %v6693 = vmul.f32 %v6629, %v6470
    %v6694 = vmul.f32 %v6630, %v6474
    %v6695 = vmul.f32 %v6631, %v6476
    %v6696 = vmul.f32 %v6632, %v6478
    %v6697 = vmul.f32 %v6633, %v6480
    %v6698 = vmul.f32 %v6634, %v6484
    %v6699 = vmul.f32 %v6635, %v6486
    %v6700 = vmul.f32 %v6636, %v6488
    %v6701 = vmul.f32 %v6637, %v6490
    %v6702 = vmul.f32 %v6638, %v6494
    %v6703 = vmul.f32 %v6639, %v6496
    %v6704 = vmul.f32 %v6640, %v6498
    %v6705 = vmul.f32 %v6641, %v6500
    %v6706 = vmul.f32 %v6642, %v6504
    %v6707 = vmul.f32 %v6643, %v6506
    %v6708 = vmul.f32 %v6644, %v6508
    %v6709 = vmul.f32 %v6645, %v6510
    %v6710 = vmul.f32 %v6646, %v6514
    %v6711 = vmul.f32 %v6647, %v6516
    %v6712 = vmul.f32 %v6648, %v6518
    %v6713 = vmul.f32 %v6649, %v6520
    %v6714 = vmul.f32 %v6650, %v6364
    %v6715 = vmul.f32 %v6651, %v6366
    %v6716 = vmul.f32 %v6652, %v6368
    %v6717 = vmul.f32 %v6653, %v6370
    %v6718 = vmul.f32 %v6654, %v6374
    %v6719 = vmul.f32 %v6655, %v6376
    %v6720 = vmul.f32 %v6656, %v6378
    %v6721 = vmul.f32 %v6657, %v6380
    %v6722 = vmul.f32 %v6658, %v6384
    %v6723 = vmul.f32 %v6659, %v6386
    %v6724 = vmul.f32 %v6660, %v6388
    %v6725 = vmul.f32 %v6661, %v6390
    %v6726 = vmul.f32 %v6662, %v6394
    %v6727 = vmul.f32 %v6663, %v6396
    %v6728 = vmul.f32 %v6664, %v6398
    %v6729 = vmul.f32 %v6665, %v6400
    %v6730 = vmul.f32 %v6666, %v6404
    %v6731 = vmul.f32 %v6667, %v6406
    %v6732 = vmul.f32 %v6668, %v6408
    %v6733 = vmul.f32 %v6669, %v6410
    %v6734 = vmul.f32 %v6670, %v6414
    %v6735 = vmul.f32 %v6671, %v6416
    %v6736 = vmul.f32 %v6672, %v6418
    %v6737 = vmul.f32 %v6673, %v6420
    %v6738 = vmul.f32 %v6674, %v6424
    %v6739 = vmul.f32 %v6675, %v6426
    %v6740 = vmul.f32 %v6676, %v6428
    %v6741 = vmul.f32 %v6677, %v6430
    %v6742 = vmul.f32 %v6678, %v6434
    %v6743 = vmul.f32 %v6679, %v6436
    %v6744 = vmul.f32 %v6680, %v6438
    %v6745 = vmul.f32 %v6681, %v6440
    %v6746 = vmul.f32 %v6682, %v6444
    %v6747 = vmul.f32 %v6683, %v6446
    %v6748 = vmul.f32 %v6684, %v6448
    %v6749 = vmul.f32 %v6685, %v6450
    %v6750 = vmul.f32 %v6686, %v6454
    %v6751 = vmul.f32 %v6687, %v6456
    %v6752 = vmul.f32 %v6688, %v6458
    %v6753 = vmul.f32 %v6689, %v6460
    %v6754 = vmul.f32 %v6690, %v6464
    %v6755 = vmul.f32 %v6691, %v6466
    %v6756 = vmul.f32 %v6692, %v6468
    %v6757 = vmul.f32 %v6693, %v6470
    %v6758 = vmul.f32 %v6694, %v6474
    %v6759 = vmul.f32 %v6695, %v6476
    %v6760 = vmul.f32 %v6696, %v6478
    %v6761 = vmul.f32 %v6697, %v6480
    %v6762 = vmul.f32 %v6698, %v6484
    %v6763 = vmul.f32 %v6699, %v6486
    %v6764 = vmul.f32 %v6700, %v6488
    %v6765 = vmul.f32 %v6701, %v6490
    %v6766 = vmul.f32 %v6702, %v6494
    %v6767 = vmul.f32 %v6703, %v6496
    %v6768 = vmul.f32 %v6704, %v6498
    %v6769 = vmul.f32 %v6705, %v6500
    %v6770 = vmul.f32 %v6706, %v6504
    %v6771 = vmul.f32 %v6707, %v6506
    %v6772 = vmul.f32 %v6708, %v6508
    %v6773 = vmul.f32 %v6709, %v6510
    %v6774 = vmul.f32 %v6710, %v6514
    %v6775 = vmul.f32 %v6711, %v6516
    %v6776 = vmul.f32 %v6712, %v6518
    %v6777 = vmul.f32 %v6713, %v6520
    %v6778 = vadd.f32 %v6364, %v6714
    %v6779 = vadd.f32 %v6366, %v6715
    %v6780 = vadd.f32 %v6368, %v6716
    %v6781 = vadd.f32 %v6370, %v6717
    %v6782 = vadd.f32 %v6374, %v6718
    %v6783 = vadd.f32 %v6376, %v6719
    %v6784 = vadd.f32 %v6378, %v6720
    %v6785 = vadd.f32 %v6380, %v6721
    %v6786 = vadd.f32 %v6384, %v6722
    %v6787 = vadd.f32 %v6386, %v6723
    %v6788 = vadd.f32 %v6388, %v6724
    %v6789 = vadd.f32 %v6390, %v6725
    %v6790 = vadd.f32 %v6394, %v6726
    %v6791 = vadd.f32 %v6396, %v6727
    %v6792 = vadd.f32 %v6398, %v6728
    %v6793 = vadd.f32 %v6400, %v6729
    %v6794 = vadd.f32 %v6404, %v6730
    %v6795 = vadd.f32 %v6406, %v6731
    %v6796 = vadd.f32 %v6408, %v6732
    %v6797 = vadd.f32 %v6410, %v6733
    %v6798 = vadd.f32 %v6414, %v6734
    %v6799 = vadd.f32 %v6416, %v6735
    %v6800 = vadd.f32 %v6418, %v6736
    %v6801 = vadd.f32 %v6420, %v6737
    %v6802 = vadd.f32 %v6424, %v6738
    %v6803 = vadd.f32 %v6426, %v6739
    %v6804 = vadd.f32 %v6428, %v6740
    %v6805 = vadd.f32 %v6430, %v6741
    %v6806 = vadd.f32 %v6434, %v6742
    %v6807 = vadd.f32 %v6436, %v6743
    %v6808 = vadd.f32 %v6438, %v6744
    %v6809 = vadd.f32 %v6440, %v6745
    %v6810 = vadd.f32 %v6444, %v6746
    %v6811 = vadd.f32 %v6446, %v6747
    %v6812 = vadd.f32 %v6448, %v6748
    %v6813 = vadd.f32 %v6450, %v6749
    %v6814 = vadd.f32 %v6454, %v6750
    %v6815 = vadd.f32 %v6456, %v6751
    %v6816 = vadd.f32 %v6458, %v6752
    %v6817 = vadd.f32 %v6460, %v6753
    %v6818 = vadd.f32 %v6464, %v6754
    %v6819 = vadd.f32 %v6466, %v6755
    %v6820 = vadd.f32 %v6468, %v6756
    %v6821 = vadd.f32 %v6470, %v6757
    %v6822 = vadd.f32 %v6474, %v6758
    %v6823 = vadd.f32 %v6476, %v6759
    %v6824 = vadd.f32 %v6478, %v6760
    %v6825 = vadd.f32 %v6480, %v6761
    %v6826 = vadd.f32 %v6484, %v6762
    %v6827 = vadd.f32 %v6486, %v6763
    %v6828 = vadd.f32 %v6488, %v6764
    %v6829 = vadd.f32 %v6490, %v6765
    %v6830 = vadd.f32 %v6494, %v6766
    %v6831 = vadd.f32 %v6496, %v6767
    %v6832 = vadd.f32 %v6498, %v6768
    %v6833 = vadd.f32 %v6500, %v6769
    %v6834 = vadd.f32 %v6504, %v6770
    %v6835 = vadd.f32 %v6506, %v6771
    %v6836 = vadd.f32 %v6508, %v6772
    %v6837 = vadd.f32 %v6510, %v6773
    %v6838 = vadd.f32 %v6514, %v6774
    %v6839 = vadd.f32 %v6516, %v6775
    %v6840 = vadd.f32 %v6518, %v6776
    %v6841 = vadd.f32 %v6520, %v6777
    %v6842 = vmul.f32 %v6778, 0.7978846
    %v6843 = vmul.f32 %v6779, 0.7978846
    %v6844 = vmul.f32 %v6780, 0.7978846
    %v6845 = vmul.f32 %v6781, 0.7978846
    %v6846 = vmul.f32 %v6782, 0.7978846
    %v6847 = vmul.f32 %v6783, 0.7978846
    %v6848 = vmul.f32 %v6784, 0.7978846
    %v6849 = vmul.f32 %v6785, 0.7978846
    %v6850 = vmul.f32 %v6786, 0.7978846
    %v6851 = vmul.f32 %v6787, 0.7978846
    %v6852 = vmul.f32 %v6788, 0.7978846
    %v6853 = vmul.f32 %v6789, 0.7978846
    %v6854 = vmul.f32 %v6790, 0.7978846
    %v6855 = vmul.f32 %v6791, 0.7978846
    %v6856 = vmul.f32 %v6792, 0.7978846
    %v6857 = vmul.f32 %v6793, 0.7978846
    %v6858 = vmul.f32 %v6794, 0.7978846
    %v6859 = vmul.f32 %v6795, 0.7978846
    %v6860 = vmul.f32 %v6796, 0.7978846
    %v6861 = vmul.f32 %v6797, 0.7978846
    %v6862 = vmul.f32 %v6798, 0.7978846
    %v6863 = vmul.f32 %v6799, 0.7978846
    %v6864 = vmul.f32 %v6800, 0.7978846
    %v6865 = vmul.f32 %v6801, 0.7978846
    %v6866 = vmul.f32 %v6802, 0.7978846
    %v6867 = vmul.f32 %v6803, 0.7978846
    %v6868 = vmul.f32 %v6804, 0.7978846
    %v6869 = vmul.f32 %v6805, 0.7978846
    %v6870 = vmul.f32 %v6806, 0.7978846
    %v6871 = vmul.f32 %v6807, 0.7978846
    %v6872 = vmul.f32 %v6808, 0.7978846
    %v6873 = vmul.f32 %v6809, 0.7978846
    %v6874 = vmul.f32 %v6810, 0.7978846
    %v6875 = vmul.f32 %v6811, 0.7978846
    %v6876 = vmul.f32 %v6812, 0.7978846
    %v6877 = vmul.f32 %v6813, 0.7978846
    %v6878 = vmul.f32 %v6814, 0.7978846
    %v6879 = vmul.f32 %v6815, 0.7978846
    %v6880 = vmul.f32 %v6816, 0.7978846
    %v6881 = vmul.f32 %v6817, 0.7978846
    %v6882 = vmul.f32 %v6818, 0.7978846
    %v6883 = vmul.f32 %v6819, 0.7978846
    %v6884 = vmul.f32 %v6820, 0.7978846
    %v6885 = vmul.f32 %v6821, 0.7978846
    %v6886 = vmul.f32 %v6822, 0.7978846
    %v6887 = vmul.f32 %v6823, 0.7978846
    %v6888 = vmul.f32 %v6824, 0.7978846
    %v6889 = vmul.f32 %v6825, 0.7978846
    %v6890 = vmul.f32 %v6826, 0.7978846
    %v6891 = vmul.f32 %v6827, 0.7978846
    %v6892 = vmul.f32 %v6828, 0.7978846
    %v6893 = vmul.f32 %v6829, 0.7978846
    %v6894 = vmul.f32 %v6830, 0.7978846
    %v6895 = vmul.f32 %v6831, 0.7978846
    %v6896 = vmul.f32 %v6832, 0.7978846
    %v6897 = vmul.f32 %v6833, 0.7978846
    %v6898 = vmul.f32 %v6834, 0.7978846
    %v6899 = vmul.f32 %v6835, 0.7978846
    %v6900 = vmul.f32 %v6836, 0.7978846
    %v6901 = vmul.f32 %v6837, 0.7978846
    %v6902 = vmul.f32 %v6838, 0.7978846
    %v6903 = vmul.f32 %v6839, 0.7978846
    %v6904 = vmul.f32 %v6840, 0.7978846
    %v6905 = vmul.f32 %v6841, 0.7978846
    %v6906 = vtanh.pop %v6842
    %v6907 = vtanh.pop %v6843
    %v6908 = vtanh.pop %v6844
    %v6909 = vtanh.pop %v6845
    %v6910 = vtanh.pop %v6846
    %v6911 = vtanh.pop %v6847
    %v6912 = vtanh.pop %v6848
    %v6913 = vtanh.pop %v6849
    %v6914 = vtanh.pop %v6850
    %v6915 = vtanh.pop %v6851
    %v6916 = vtanh.pop %v6852
    %v6917 = vtanh.pop %v6853
    %v6918 = vtanh.pop %v6854
    %v6919 = vtanh.pop %v6855
    %v6920 = vtanh.pop %v6856
    %v6921 = vtanh.pop %v6857
    %v6922 = vtanh.pop %v6858
    %v6923 = vtanh.pop %v6859
    %v6924 = vtanh.pop %v6860
    %v6925 = vtanh.pop %v6861
    %v6926 = vtanh.pop %v6862
    %v6927 = vtanh.pop %v6863
    %v6928 = vtanh.pop %v6864
    %v6929 = vtanh.pop %v6865
    %v6930 = vtanh.pop %v6866
    %v6931 = vtanh.pop %v6867
    %v6932 = vtanh.pop %v6868
    %v6933 = vtanh.pop %v6869
    %v6934 = vtanh.pop %v6870
    %v6935 = vtanh.pop %v6871
    %v6936 = vtanh.pop %v6872
    %v6937 = vtanh.pop %v6873
    %v6938 = vtanh.pop %v6874
    %v6939 = vtanh.pop %v6875
    %v6940 = vtanh.pop %v6876
    %v6941 = vtanh.pop %v6877
    %v6942 = vtanh.pop %v6878
    %v6943 = vtanh.pop %v6879
    %v6944 = vtanh.pop %v6880
    %v6945 = vtanh.pop %v6881
    %v6946 = vtanh.pop %v6882
    %v6947 = vtanh.pop %v6883
    %v6948 = vtanh.pop %v6884
    %v6949 = vtanh.pop %v6885
    %v6950 = vtanh.pop %v6886
    %v6951 = vtanh.pop %v6887
    %v6952 = vtanh.pop %v6888
    %v6953 = vtanh.pop %v6889
    %v6954 = vtanh.pop %v6890
    %v6955 = vtanh.pop %v6891
    %v6956 = vtanh.pop %v6892
    %v6957 = vtanh.pop %v6893
    %v6958 = vtanh.pop %v6894
    %v6959 = vtanh.pop %v6895
    %v6960 = vtanh.pop %v6896
    %v6961 = vtanh.pop %v6897
    %v6962 = vtanh.pop %v6898
    %v6963 = vtanh.pop %v6899
    %v6964 = vtanh.pop %v6900
    %v6965 = vtanh.pop %v6901
    %v6966 = vtanh.pop %v6902
    %v6967 = vtanh.pop %v6903
    %v6968 = vtanh.pop %v6904
    %v6969 = vtanh.pop %v6905
    %v6970 = vadd.f32 %v6906, 1.0
    %v6971 = vadd.f32 %v6907, 1.0
    %v6972 = vadd.f32 %v6908, 1.0
    %v6973 = vadd.f32 %v6909, 1.0
    %v6974 = vadd.f32 %v6910, 1.0
    %v6975 = vadd.f32 %v6911, 1.0
    %v6976 = vadd.f32 %v6912, 1.0
    %v6977 = vadd.f32 %v6913, 1.0
    %v6978 = vadd.f32 %v6914, 1.0
    %v6979 = vadd.f32 %v6915, 1.0
    %v6980 = vadd.f32 %v6916, 1.0
    %v6981 = vadd.f32 %v6917, 1.0
    %v6982 = vadd.f32 %v6918, 1.0
    %v6983 = vadd.f32 %v6919, 1.0
    %v6984 = vadd.f32 %v6920, 1.0
    %v6985 = vadd.f32 %v6921, 1.0
    %v6986 = vadd.f32 %v6922, 1.0
    %v6987 = vadd.f32 %v6923, 1.0
    %v6988 = vadd.f32 %v6924, 1.0
    %v6989 = vadd.f32 %v6925, 1.0
    %v6990 = vadd.f32 %v6926, 1.0
    %v6991 = vadd.f32 %v6927, 1.0
    %v6992 = vadd.f32 %v6928, 1.0
    %v6993 = vadd.f32 %v6929, 1.0
    %v6994 = vadd.f32 %v6930, 1.0
    %v6995 = vadd.f32 %v6931, 1.0
    %v6996 = vadd.f32 %v6932, 1.0
    %v6997 = vadd.f32 %v6933, 1.0
    %v6998 = vadd.f32 %v6934, 1.0
    %v6999 = vadd.f32 %v6935, 1.0
    %v7000 = vadd.f32 %v6936, 1.0
    %v7001 = vadd.f32 %v6937, 1.0
    %v7002 = vadd.f32 %v6938, 1.0
    %v7003 = vadd.f32 %v6939, 1.0
    %v7004 = vadd.f32 %v6940, 1.0
    %v7005 = vadd.f32 %v6941, 1.0
    %v7006 = vadd.f32 %v6942, 1.0
    %v7007 = vadd.f32 %v6943, 1.0
    %v7008 = vadd.f32 %v6944, 1.0
    %v7009 = vadd.f32 %v6945, 1.0
    %v7010 = vadd.f32 %v6946, 1.0
    %v7011 = vadd.f32 %v6947, 1.0
    %v7012 = vadd.f32 %v6948, 1.0
    %v7013 = vadd.f32 %v6949, 1.0
    %v7014 = vadd.f32 %v6950, 1.0
    %v7015 = vadd.f32 %v6951, 1.0
    %v7016 = vadd.f32 %v6952, 1.0
    %v7017 = vadd.f32 %v6953, 1.0
    %v7018 = vadd.f32 %v6954, 1.0
    %v7019 = vadd.f32 %v6955, 1.0
    %v7020 = vadd.f32 %v6956, 1.0
    %v7021 = vadd.f32 %v6957, 1.0
    %v7022 = vadd.f32 %v6958, 1.0
    %v7023 = vadd.f32 %v6959, 1.0
    %v7024 = vadd.f32 %v6960, 1.0
    %v7025 = vadd.f32 %v6961, 1.0
    %v7026 = vadd.f32 %v6962, 1.0
    %v7027 = vadd.f32 %v6963, 1.0
    %v7028 = vadd.f32 %v6964, 1.0
    %v7029 = vadd.f32 %v6965, 1.0
    %v7030 = vadd.f32 %v6966, 1.0
    %v7031 = vadd.f32 %v6967, 1.0
    %v7032 = vadd.f32 %v6968, 1.0
    %v7033 = vadd.f32 %v6969, 1.0
    %v7034 = vmul.f32 %v6522, %v6970
    %v7035 = vmul.f32 %v6523, %v6971
    %v7036 = vmul.f32 %v6524, %v6972
    %v7037 = vmul.f32 %v6525, %v6973
    %v7038 = vmul.f32 %v6526, %v6974
    %v7039 = vmul.f32 %v6527, %v6975
    %v7040 = vmul.f32 %v6528, %v6976
    %v7041 = vmul.f32 %v6529, %v6977
    %v7042 = vmul.f32 %v6530, %v6978
    %v7043 = vmul.f32 %v6531, %v6979
    %v7044 = vmul.f32 %v6532, %v6980
    %v7045 = vmul.f32 %v6533, %v6981
    %v7046 = vmul.f32 %v6534, %v6982
    %v7047 = vmul.f32 %v6535, %v6983
    %v7048 = vmul.f32 %v6536, %v6984
    %v7049 = vmul.f32 %v6537, %v6985
    %v7050 = vmul.f32 %v6538, %v6986
    %v7051 = vmul.f32 %v6539, %v6987
    %v7052 = vmul.f32 %v6540, %v6988
    %v7053 = vmul.f32 %v6541, %v6989
    %v7054 = vmul.f32 %v6542, %v6990
    %v7055 = vmul.f32 %v6543, %v6991
    %v7056 = vmul.f32 %v6544, %v6992
    %v7057 = vmul.f32 %v6545, %v6993
    %v7058 = vmul.f32 %v6546, %v6994
    %v7059 = vmul.f32 %v6547, %v6995
    %v7060 = vmul.f32 %v6548, %v6996
    %v7061 = vmul.f32 %v6549, %v6997
    %v7062 = vmul.f32 %v6550, %v6998
    %v7063 = vmul.f32 %v6551, %v6999
    %v7064 = vmul.f32 %v6552, %v7000
    %v7065 = vmul.f32 %v6553, %v7001
    %v7066 = vmul.f32 %v6554, %v7002
    %v7067 = vmul.f32 %v6555, %v7003
    %v7068 = vmul.f32 %v6556, %v7004
    %v7069 = vmul.f32 %v6557, %v7005
    %v7070 = vmul.f32 %v6558, %v7006
    %v7071 = vmul.f32 %v6559, %v7007
    %v7072 = vmul.f32 %v6560, %v7008
    %v7073 = vmul.f32 %v6561, %v7009
    %v7074 = vmul.f32 %v6562, %v7010
    %v7075 = vmul.f32 %v6563, %v7011
    %v7076 = vmul.f32 %v6564, %v7012
    %v7077 = vmul.f32 %v6565, %v7013
    %v7078 = vmul.f32 %v6566, %v7014
    %v7079 = vmul.f32 %v6567, %v7015
    %v7080 = vmul.f32 %v6568, %v7016
    %v7081 = vmul.f32 %v6569, %v7017
    %v7082 = vmul.f32 %v6570, %v7018
    %v7083 = vmul.f32 %v6571, %v7019
    %v7084 = vmul.f32 %v6572, %v7020
    %v7085 = vmul.f32 %v6573, %v7021
    %v7086 = vmul.f32 %v6574, %v7022
    %v7087 = vmul.f32 %v6575, %v7023
    %v7088 = vmul.f32 %v6576, %v7024
    %v7089 = vmul.f32 %v6577, %v7025
    %v7090 = vmul.f32 %v6578, %v7026
    %v7091 = vmul.f32 %v6579, %v7027
    %v7092 = vmul.f32 %v6580, %v7028
    %v7093 = vmul.f32 %v6581, %v7029
    %v7094 = vmul.f32 %v6582, %v7030
    %v7095 = vmul.f32 %v6583, %v7031
    %v7096 = vmul.f32 %v6584, %v7032
    %v7097 = vmul.f32 %v6585, %v7033
    %v7098 = vpack.c.bf16 %v7036, %v7034
    %v7099 = vpack.c.bf16 %v7037, %v7035
    %v7100 = vpack.c.bf16 %v7040, %v7038
    %v7101 = vpack.c.bf16 %v7041, %v7039
    %v7102 = vpack.c.bf16 %v7044, %v7042
    %v7103 = vpack.c.bf16 %v7045, %v7043
    %v7104 = vpack.c.bf16 %v7048, %v7046
    %v7105 = vpack.c.bf16 %v7049, %v7047
    %v7106 = vpack.c.bf16 %v7052, %v7050
    %v7107 = vpack.c.bf16 %v7053, %v7051
    %v7108 = vpack.c.bf16 %v7056, %v7054
    %v7109 = vpack.c.bf16 %v7057, %v7055
    %v7110 = vpack.c.bf16 %v7060, %v7058
    %v7111 = vpack.c.bf16 %v7061, %v7059
    %v7112 = vpack.c.bf16 %v7064, %v7062
    %v7113 = vpack.c.bf16 %v7065, %v7063
    %v7114 = vpack.c.bf16 %v7068, %v7066
    %v7115 = vpack.c.bf16 %v7069, %v7067
    %v7116 = vpack.c.bf16 %v7072, %v7070
    %v7117 = vpack.c.bf16 %v7073, %v7071
    %v7118 = vpack.c.bf16 %v7076, %v7074
    %v7119 = vpack.c.bf16 %v7077, %v7075
    %v7120 = vpack.c.bf16 %v7080, %v7078
    %v7121 = vpack.c.bf16 %v7081, %v7079
    %v7122 = vpack.c.bf16 %v7084, %v7082
    %v7123 = vpack.c.bf16 %v7085, %v7083
    %v7124 = vpack.c.bf16 %v7088, %v7086
    %v7125 = vpack.c.bf16 %v7089, %v7087
    %v7126 = vpack.c.bf16 %v7092, %v7090
    %v7127 = vpack.c.bf16 %v7093, %v7091
    %v7128 = vpack.c.bf16 %v7096, %v7094
    %v7129 = vpack.c.bf16 %v7097, %v7095
    %s7130 = scalar_lea.vmem %s3, 256
    %v7131 = vld [vmem:[%s7130] sm:$0xf]
    %v7132 = vld [vmem:[%s7130 + $0x4] sm:$0xf]
    %v7133 = vld [vmem:[%s7130 + $0x8] sm:$0xf]
    %v7134 = vld [vmem:[%s7130 + $0xc] sm:$0xf]
    %v7135 = vld [vmem:[%s7130 + $0x10] sm:$0xf]
    %v7136 = vld [vmem:[%s7130 + $0x14] sm:$0xf]
    %v7137 = vld [vmem:[%s7130 + $0x18] sm:$0xf]
    %v7138 = vld [vmem:[%s7130 + $0x1c] sm:$0xf]
    %v7139 = vld [vmem:[%s7130 + $0x20] sm:$0xf]
    %v7140 = vld [vmem:[%s7130 + $0x24] sm:$0xf]
    %v7141 = vld [vmem:[%s7130 + $0x28] sm:$0xf]
    %v7142 = vld [vmem:[%s7130 + $0x2c] sm:$0xf]
    %v7143 = vld [vmem:[%s7130 + $0x30] sm:$0xf]
    %v7144 = vld [vmem:[%s7130 + $0x34] sm:$0xf]
    %v7145 = vld [vmem:[%s7130 + $0x38] sm:$0xf]
    %v7146 = vld [vmem:[%s7130 + $0x3c] sm:$0xf]
    %v7147 = vld [vmem:[%s7130 + $0x40] sm:$0xf]
    %v7148 = vld [vmem:[%s7130 + $0x44] sm:$0xf]
    %v7149 = vld [vmem:[%s7130 + $0x48] sm:$0xf]
    %v7150 = vld [vmem:[%s7130 + $0x4c] sm:$0xf]
    %v7151 = vld [vmem:[%s7130 + $0x50] sm:$0xf]
    %v7152 = vld [vmem:[%s7130 + $0x54] sm:$0xf]
    %v7153 = vld [vmem:[%s7130 + $0x58] sm:$0xf]
    %v7154 = vld [vmem:[%s7130 + $0x5c] sm:$0xf]
    %v7155 = vld [vmem:[%s7130 + $0x60] sm:$0xf]
    %v7156 = vld [vmem:[%s7130 + $0x64] sm:$0xf]
    %v7157 = vld [vmem:[%s7130 + $0x68] sm:$0xf]
    %v7158 = vld [vmem:[%s7130 + $0x6c] sm:$0xf]
    %v7159 = vld [vmem:[%s7130 + $0x70] sm:$0xf]
    %v7160 = vld [vmem:[%s7130 + $0x74] sm:$0xf]
    %v7161 = vld [vmem:[%s7130 + $0x78] sm:$0xf]
    %v7162 = vld [vmem:[%s7130 + $0x7c] sm:$0xf]
    %v7195 = vunpack.c.l.b16 %v7131
    %v7196 = vunpack.c.l.b16 %v7132
    %v7197 = vunpack.c.l.b16 %v7133
    %v7198 = vunpack.c.l.b16 %v7134
    %v7199 = vunpack.c.l.b16 %v7135
    %v7200 = vunpack.c.l.b16 %v7136
    %v7201 = vunpack.c.l.b16 %v7137
    %v7202 = vunpack.c.l.b16 %v7138
    %v7203 = vunpack.c.l.b16 %v7139
    %v7204 = vunpack.c.l.b16 %v7140
    %v7205 = vunpack.c.l.b16 %v7141
    %v7206 = vunpack.c.l.b16 %v7142
    %v7207 = vunpack.c.l.b16 %v7143
    %v7208 = vunpack.c.l.b16 %v7144
    %v7209 = vunpack.c.l.b16 %v7145
    %v7210 = vunpack.c.l.b16 %v7146
    %v7211 = vunpack.c.l.b16 %v7147
    %v7212 = vunpack.c.l.b16 %v7148
    %v7213 = vunpack.c.l.b16 %v7149
    %v7214 = vunpack.c.l.b16 %v7150
    %v7215 = vunpack.c.l.b16 %v7151
    %v7216 = vunpack.c.l.b16 %v7152
    %v7217 = vunpack.c.l.b16 %v7153
    %v7218 = vunpack.c.l.b16 %v7154
    %v7219 = vunpack.c.l.b16 %v7155
    %v7220 = vunpack.c.l.b16 %v7156
    %v7221 = vunpack.c.l.b16 %v7157
    %v7222 = vunpack.c.l.b16 %v7158
    %v7223 = vunpack.c.l.b16 %v7159
    %v7224 = vunpack.c.l.b16 %v7160
    %v7225 = vunpack.c.l.b16 %v7161
    %v7226 = vunpack.c.l.b16 %v7162
    %v7227 = vpack.c.b16 %v7196, %v7195
    %v7228 = vpack.c.b16 %v7198, %v7197
    %v7229 = vpack.c.b16 %v7200, %v7199
    %v7230 = vpack.c.b16 %v7202, %v7201
    %v7231 = vpack.c.b16 %v7204, %v7203
    %v7232 = vpack.c.b16 %v7206, %v7205
    %v7233 = vpack.c.b16 %v7208, %v7207
    %v7234 = vpack.c.b16 %v7210, %v7209
    %v7235 = vpack.c.b16 %v7212, %v7211
    %v7236 = vpack.c.b16 %v7214, %v7213
    %v7237 = vpack.c.b16 %v7216, %v7215
    %v7238 = vpack.c.b16 %v7218, %v7217
    %v7239 = vpack.c.b16 %v7220, %v7219
    %v7240 = vpack.c.b16 %v7222, %v7221
    %v7241 = vpack.c.b16 %v7224, %v7223
    %v7242 = vpack.c.b16 %v7226, %v7225
    %7259 = vmatprep.subr.bf16.mxu0 0
    %7260 = vmatpush1.bf16.msra.mxu0 %v7227
    %7261 = vmatprep.subr.bf16.mxu0 0
    %7262 = vmatpush1.bf16.msra.mxu0 %v7228
    %7263 = vmatprep.subr.bf16.mxu0 0
    %7264 = vmatpush1.bf16.msra.mxu0 %v7229
    %7265 = vmatprep.subr.bf16.mxu0 0
    %7266 = vmatpush1.bf16.msra.mxu0 %v7230
    %7267 = vmatprep.subr.bf16.mxu0 0
    %7268 = vmatpush1.bf16.msra.mxu0 %v7231
    %7269 = vmatprep.subr.bf16.mxu0 0
    %7270 = vmatpush1.bf16.msra.mxu0 %v7232
    %7271 = vmatprep.subr.bf16.mxu0 0
    %7272 = vmatpush1.bf16.msra.mxu0 %v7233
    %7273 = vmatprep.subr.bf16.mxu0 0
    %7274 = vmatpush1.bf16.msra.mxu0 %v7234
    %7275 = vmatprep.subr.bf16.mxu0 0
    %7276 = vmatpush1.bf16.msra.mxu0 %v7235
    %7277 = vmatprep.subr.bf16.mxu0 0
    %7278 = vmatpush1.bf16.msra.mxu0 %v7236
    %7279 = vmatprep.subr.bf16.mxu0 0
    %7280 = vmatpush1.bf16.msra.mxu0 %v7237
    %7281 = vmatprep.subr.bf16.mxu0 0
    %7282 = vmatpush1.bf16.msra.mxu0 %v7238
    %7283 = vmatprep.subr.bf16.mxu0 0
    %7284 = vmatpush1.bf16.msra.mxu0 %v7239
    %7285 = vmatprep.subr.bf16.mxu0 0
    %7286 = vmatpush1.bf16.msra.mxu0 %v7240
    %7287 = vmatprep.subr.bf16.mxu0 0
    %7288 = vmatpush1.bf16.msra.mxu0 %v7241
    %7289 = vmatprep.subr.bf16.mxu0 0
    %7290 = vmatpush1.bf16.msra.mxu0 %v7242
    %7291 = vmatprep.mubr.bf16.mxu0 %v7099
    %7292 = vmatmul.mubr.bf16.gmra.mrb[0].mxu0 %v7098
    %v7293 = vpop.f32.mrb[0].mxu0
    %v7294 = vadd.f32 0.0, %v7293
    %v7295 = vpop.f32.mrb[0].mxu0
    %v7296 = vpop.f32.mrb[0].mxu0
    %v7297 = vadd.f32 0.0, %v7296
    %v7298 = vpop.f32.mrb[0].mxu0
    %7299 = vmatprep.mubr.bf16.mxu0 %v7101
    %7300 = vmatmul.mubr.bf16.gmra.mrb[0].mxu0 %v7100
    %v7301 = vpop.f32.mrb[0].mxu0
    %v7302 = vadd.f32 0.0, %v7301
    %v7303 = vpop.f32.mrb[0].mxu0
    %v7304 = vpop.f32.mrb[0].mxu0
    %v7305 = vadd.f32 0.0, %v7304
    %v7306 = vpop.f32.mrb[0].mxu0
    %7307 = vmatprep.mubr.bf16.mxu0 %v7103
    %7308 = vmatmul.mubr.bf16.gmra.mrb[0].mxu0 %v7102
    %v7309 = vpop.f32.mrb[0].mxu0
    %v7310 = vadd.f32 0.0, %v7309
    %v7311 = vpop.f32.mrb[0].mxu0
    %v7312 = vpop.f32.mrb[0].mxu0
    %v7313 = vadd.f32 0.0, %v7312
    %v7314 = vpop.f32.mrb[0].mxu0
    %7315 = vmatprep.mubr.bf16.mxu0 %v7105
    %7316 = vmatmul.mubr.bf16.gmra.mrb[0].mxu0 %v7104
    %v7317 = vpop.f32.mrb[0].mxu0
    %v7318 = vadd.f32 0.0, %v7317
    %v7319 = vpop.f32.mrb[0].mxu0
    %v7320 = vpop.f32.mrb[0].mxu0
    %v7321 = vadd.f32 0.0, %v7320
    %v7322 = vpop.f32.mrb[0].mxu0
    %7323 = vmatprep.mubr.bf16.mxu0 %v7107
    %7324 = vmatmul.mubr.bf16.gmra.mrb[0].mxu0 %v7106
    %v7325 = vpop.f32.mrb[0].mxu0
    %v7326 = vadd.f32 0.0, %v7325
    %v7327 = vpop.f32.mrb[0].mxu0
    %v7328 = vpop.f32.mrb[0].mxu0
    %v7329 = vadd.f32 0.0, %v7328
    %v7330 = vpop.f32.mrb[0].mxu0
    %7331 = vmatprep.mubr.bf16.mxu0 %v7109
    %7332 = vmatmul.mubr.bf16.gmra.mrb[0].mxu0 %v7108
    %v7333 = vpop.f32.mrb[0].mxu0
    %v7334 = vadd.f32 0.0, %v7333
    %v7335 = vpop.f32.mrb[0].mxu0
    %v7336 = vpop.f32.mrb[0].mxu0
    %v7337 = vadd.f32 0.0, %v7336
    %v7338 = vpop.f32.mrb[0].mxu0
    %7339 = vmatprep.mubr.bf16.mxu0 %v7111
    %7340 = vmatmul.mubr.bf16.gmra.mrb[0].mxu0 %v7110
    %v7341 = vpop.f32.mrb[0].mxu0
    %v7342 = vadd.f32 0.0, %v7341
    %v7343 = vpop.f32.mrb[0].mxu0
    %v7344 = vpop.f32.mrb[0].mxu0
    %v7345 = vadd.f32 0.0, %v7344
    %v7346 = vpop.f32.mrb[0].mxu0
    %7347 = vmatprep.mubr.bf16.mxu0 %v7113
    %7348 = vmatmul.mubr.bf16.gmra.mrb[0].mxu0 %v7112
    %v7349 = vpop.f32.mrb[0].mxu0
    %v7350 = vadd.f32 0.0, %v7349
    %v7351 = vpop.f32.mrb[0].mxu0
    %v7352 = vpop.f32.mrb[0].mxu0
    %v7353 = vadd.f32 0.0, %v7352
    %v7354 = vpop.f32.mrb[0].mxu0
    %7355 = vmatprep.mubr.bf16.mxu0 %v7115
    %7356 = vmatmul.mubr.bf16.gmra.mrb[0].mxu0 %v7114
    %v7357 = vpop.f32.mrb[0].mxu0
    %v7358 = vadd.f32 0.0, %v7357
    %v7359 = vpop.f32.mrb[0].mxu0
    %v7360 = vpop.f32.mrb[0].mxu0
    %v7361 = vadd.f32 0.0, %v7360
    %v7362 = vpop.f32.mrb[0].mxu0
    %7363 = vmatprep.mubr.bf16.mxu0 %v7117
    %7364 = vmatmul.mubr.bf16.gmra.mrb[0].mxu0 %v7116
    %v7365 = vpop.f32.mrb[0].mxu0
    %v7366 = vadd.f32 0.0, %v7365
    %v7367 = vpop.f32.mrb[0].mxu0
    %v7368 = vpop.f32.mrb[0].mxu0
    %v7369 = vadd.f32 0.0, %v7368
    %v7370 = vpop.f32.mrb[0].mxu0
    %7371 = vmatprep.mubr.bf16.mxu0 %v7119
    %7372 = vmatmul.mubr.bf16.gmra.mrb[0].mxu0 %v7118
    %v7373 = vpop.f32.mrb[0].mxu0
    %v7374 = vadd.f32 0.0, %v7373
    %v7375 = vpop.f32.mrb[0].mxu0
    %v7376 = vpop.f32.mrb[0].mxu0
    %v7377 = vadd.f32 0.0, %v7376
    %v7378 = vpop.f32.mrb[0].mxu0
    %7379 = vmatprep.mubr.bf16.mxu0 %v7121
    %7380 = vmatmul.mubr.bf16.gmra.mrb[0].mxu0 %v7120
    %v7381 = vpop.f32.mrb[0].mxu0
    %v7382 = vadd.f32 0.0, %v7381
    %v7383 = vpop.f32.mrb[0].mxu0
    %v7384 = vpop.f32.mrb[0].mxu0
    %v7385 = vadd.f32 0.0, %v7384
    %v7386 = vpop.f32.mrb[0].mxu0
    %7387 = vmatprep.mubr.bf16.mxu0 %v7123
    %7388 = vmatmul.mubr.bf16.gmra.mrb[0].mxu0 %v7122
    %v7389 = vpop.f32.mrb[0].mxu0
    %v7390 = vadd.f32 0.0, %v7389
    %v7391 = vpop.f32.mrb[0].mxu0
    %v7392 = vpop.f32.mrb[0].mxu0
    %v7393 = vadd.f32 0.0, %v7392
    %v7394 = vpop.f32.mrb[0].mxu0
    %7395 = vmatprep.mubr.bf16.mxu0 %v7125
    %7396 = vmatmul.mubr.bf16.gmra.mrb[0].mxu0 %v7124
    %v7397 = vpop.f32.mrb[0].mxu0
    %v7398 = vadd.f32 0.0, %v7397
    %v7399 = vpop.f32.mrb[0].mxu0
    %v7400 = vpop.f32.mrb[0].mxu0
    %v7401 = vadd.f32 0.0, %v7400
    %v7402 = vpop.f32.mrb[0].mxu0
    %7403 = vmatprep.mubr.bf16.mxu0 %v7127
    %7404 = vmatmul.mubr.bf16.gmra.mrb[0].mxu0 %v7126
    %v7405 = vpop.f32.mrb[0].mxu0
    %v7406 = vadd.f32 0.0, %v7405
    %v7407 = vpop.f32.mrb[0].mxu0
    %v7408 = vpop.f32.mrb[0].mxu0
    %v7409 = vadd.f32 0.0, %v7408
    %v7410 = vpop.f32.mrb[0].mxu0
    %7411 = vmatprep.mubr.bf16.mxu0 %v7129
    %7412 = vmatmul.mubr.bf16.gmra.mrb[0].mxu0 %v7128
    %v7413 = vpop.f32.mrb[0].mxu0
    %v7414 = vadd.f32 0.0, %v7413
    %v7415 = vpop.f32.mrb[0].mxu0
    %v7416 = vpop.f32.mrb[0].mxu0
    %v7417 = vadd.f32 0.0, %v7416
    %v7418 = vpop.f32.mrb[0].mxu0
    %7419 = vdwg.mxu0
    %v7420 = vadd.f32 %v6187, %v7294
    %v7421 = vadd.f32 %v6188, %v7297
    %v7422 = vadd.f32 %v6189, %v7302
    %v7423 = vadd.f32 %v6190, %v7305
    %v7424 = vadd.f32 %v6191, %v7310
    %v7425 = vadd.f32 %v6192, %v7313
    %v7426 = vadd.f32 %v6193, %v7318
    %v7427 = vadd.f32 %v6194, %v7321
    %v7428 = vadd.f32 %v6195, %v7326
    %v7429 = vadd.f32 %v6196, %v7329
    %v7430 = vadd.f32 %v6197, %v7334
    %v7431 = vadd.f32 %v6198, %v7337
    %v7432 = vadd.f32 %v6199, %v7342
    %v7433 = vadd.f32 %v6200, %v7345
    %v7434 = vadd.f32 %v6201, %v7350
    %v7435 = vadd.f32 %v6202, %v7353
    %v7436 = vadd.f32 %v6203, %v7358
    %v7437 = vadd.f32 %v6204, %v7361
    %v7438 = vadd.f32 %v6205, %v7366
    %v7439 = vadd.f32 %v6206, %v7369
    %v7440 = vadd.f32 %v6207, %v7374
    %v7441 = vadd.f32 %v6208, %v7377
    %v7442 = vadd.f32 %v6209, %v7382
    %v7443 = vadd.f32 %v6210, %v7385
    %v7444 = vadd.f32 %v6211, %v7390
    %v7445 = vadd.f32 %v6212, %v7393
    %v7446 = vadd.f32 %v6213, %v7398
    %v7447 = vadd.f32 %v6214, %v7401
    %v7448 = vadd.f32 %v6215, %v7406
    %v7449 = vadd.f32 %v6216, %v7409
    %v7450 = vadd.f32 %v6217, %v7414
    %v7451 = vadd.f32 %v6218, %v7417
    %v7452 = vld [vmem:[%s6219 + $0x8] sm:$0xff]
    %v7453 = vld [vmem:[%s6219 + $0x18] sm:$0xff]
    %v7454 = vld [vmem:[%s6219 + $0x28] sm:$0xff]
    %v7455 = vld [vmem:[%s6219 + $0x38] sm:$0xff]
    %v7456 = vld [vmem:[%s6219 + $0x48] sm:$0xff]
    %v7457 = vld [vmem:[%s6219 + $0x58] sm:$0xff]
    %v7458 = vld [vmem:[%s6219 + $0x68] sm:$0xff]
    %v7459 = vld [vmem:[%s6219 + $0x78] sm:$0xff]
    %v7460 = vld [vmem:[%s6219 + $0x88] sm:$0xff]
    %v7461 = vld [vmem:[%s6219 + $0x98] sm:$0xff]
    %v7462 = vld [vmem:[%s6219 + $0xa8] sm:$0xff]
    %v7463 = vld [vmem:[%s6219 + $0xb8] sm:$0xff]
    %v7464 = vld [vmem:[%s6219 + $0xc8] sm:$0xff]
    %v7465 = vld [vmem:[%s6219 + $0xd8] sm:$0xff]
    %v7466 = vld [vmem:[%s6219 + $0xe8] sm:$0xff]
    %v7467 = vld [vmem:[%s6219 + $0xf8] sm:$0xff]
    %s7468 = scalar_lea.vmem %s4, 5
    %v7469 = vld [vmem:[%s7468] ss:$2 sm:$0x3]
    %v7471 = vlaneseq
    %v7472 = vshrl.u32 %v7471, 7
    %v7473 = vsub.s32 0, %v7472
    %v7474 = vrot.slane %v7469, %v7473
    %v7475 = vlaneseq
    %v7476 = vshrl.u32 %v7475, 7
    %v7477 = vsub.s32 1, %v7476
    %v7478 = vrot.slane %v7469, %v7477
    %v7497 = vunpack.c.l.b16 %v7452
    %v7498 = vunpack.c.h.b16 %v7452
    %v7499 = vunpack.c.l.b16 %v7453
    %v7500 = vunpack.c.h.b16 %v7453
    %v7501 = vunpack.c.l.b16 %v7454
    %v7502 = vunpack.c.h.b16 %v7454
    %v7503 = vunpack.c.l.b16 %v7455
    %v7504 = vunpack.c.h.b16 %v7455
    %v7505 = vunpack.c.l.b16 %v7456
    %v7506 = vunpack.c.h.b16 %v7456
    %v7507 = vunpack.c.l.b16 %v7457
    %v7508 = vunpack.c.h.b16 %v7457
    %v7509 = vunpack.c.l.b16 %v7458
    %v7510 = vunpack.c.h.b16 %v7458
    %v7511 = vunpack.c.l.b16 %v7459
    %v7512 = vunpack.c.h.b16 %v7459
    %v7513 = vunpack.c.l.b16 %v7460
    %v7514 = vunpack.c.h.b16 %v7460
    %v7515 = vunpack.c.l.b16 %v7461
    %v7516 = vunpack.c.h.b16 %v7461
    %v7517 = vunpack.c.l.b16 %v7462
    %v7518 = vunpack.c.h.b16 %v7462
    %v7519 = vunpack.c.l.b16 %v7463
    %v7520 = vunpack.c.h.b16 %v7463
    %v7521 = vunpack.c.l.b16 %v7464
    %v7522 = vunpack.c.h.b16 %v7464
    %v7523 = vunpack.c.l.b16 %v7465
    %v7524 = vunpack.c.h.b16 %v7465
    %v7525 = vunpack.c.l.b16 %v7466
    %v7526 = vunpack.c.h.b16 %v7466
    %v7527 = vunpack.c.l.b16 %v7467
    %v7528 = vunpack.c.h.b16 %v7467
    %v7529 = vpack.c.b16 %v7499, %v7497
    %v7530 = vpack.c.b16 %v7500, %v7498
    %v7531 = vpack.c.b16 %v7503, %v7501
    %v7532 = vpack.c.b16 %v7504, %v7502
    %v7533 = vpack.c.b16 %v7507, %v7505
    %v7534 = vpack.c.b16 %v7508, %v7506
    %v7535 = vpack.c.b16 %v7511, %v7509
    %v7536 = vpack.c.b16 %v7512, %v7510
    %v7537 = vpack.c.b16 %v7515, %v7513
    %v7538 = vpack.c.b16 %v7516, %v7514
    %v7539 = vpack.c.b16 %v7519, %v7517
    %v7540 = vpack.c.b16 %v7520, %v7518
    %v7541 = vpack.c.b16 %v7523, %v7521
    %v7542 = vpack.c.b16 %v7524, %v7522
    %v7543 = vpack.c.b16 %v7527, %v7525
    %v7544 = vpack.c.b16 %v7528, %v7526
    %7561 = vmatprep.subr.bf16.mxu0 %v7530
    %7562 = vmatpush1.bf16.msra.mxu0 %v7529
    %7563 = vmatprep.subr.bf16.mxu0 %v7532
    %7564 = vmatpush1.bf16.msra.mxu0 %v7531
    %7565 = vmatprep.subr.bf16.mxu0 %v7534
    %7566 = vmatpush1.bf16.msra.mxu0 %v7533
    %7567 = vmatprep.subr.bf16.mxu0 %v7536
    %7568 = vmatpush1.bf16.msra.mxu0 %v7535
    %7569 = vmatprep.subr.bf16.mxu0 %v7538
    %7570 = vmatpush1.bf16.msra.mxu0 %v7537
    %7571 = vmatprep.subr.bf16.mxu0 %v7540
    %7572 = vmatpush1.bf16.msra.mxu0 %v7539
    %7573 = vmatprep.subr.bf16.mxu0 %v7542
    %7574 = vmatpush1.bf16.msra.mxu0 %v7541
    %7575 = vmatprep.subr.bf16.mxu0 %v7544
    %7576 = vmatpush1.bf16.msra.mxu0 %v7543
    %7577 = vmatprep.subr.bf16.mxu0 0
    %7578 = vmatpush1.bf16.msra.mxu0 0
    %7579 = vmatprep.subr.bf16.mxu0 0
    %7580 = vmatpush1.bf16.msra.mxu0 0
    %7581 = vmatprep.subr.bf16.mxu0 0
    %7582 = vmatpush1.bf16.msra.mxu0 0
    %7583 = vmatprep.subr.bf16.mxu0 0
    %7584 = vmatpush1.bf16.msra.mxu0 0
    %7585 = vmatprep.subr.bf16.mxu0 0
    %7586 = vmatpush1.bf16.msra.mxu0 0
    %7587 = vmatprep.subr.bf16.mxu0 0
    %7588 = vmatpush1.bf16.msra.mxu0 0
    %7589 = vmatprep.subr.bf16.mxu0 0
    %7590 = vmatpush1.bf16.msra.mxu0 0
    %7591 = vmatprep.subr.bf16.mxu0 0
    %7592 = vmatpush1.bf16.msra.mxu0 0
    %7593 = vmatprep.mubr.bf16.mxu0 0
    %7594 = vmatmul.mubr.bf16.gmra.mrb[0].mxu0 %v6166
    %v7595 = vpop.f32.mrb[0].mxu0
    %v7596 = vadd.f32 %v7474, %v7595
    %v7597 = vpop.f32.mrb[0].mxu0
    %v7598 = vadd.f32 %v7478, %v7597
    %v7599 = vpop.f32.mrb[0].mxu0
    %v7600 = vadd.f32 %v7474, %v7599
    %v7601 = vpop.f32.mrb[0].mxu0
    %v7602 = vadd.f32 %v7478, %v7601
    %7603 = vmatprep.mubr.bf16.mxu0 0
    %7604 = vmatmul.mubr.bf16.gmra.mrb[0].mxu0 %v6167
    %v7605 = vpop.f32.mrb[0].mxu0
    %v7606 = vadd.f32 %v7474, %v7605
    %v7607 = vpop.f32.mrb[0].mxu0
    %v7608 = vadd.f32 %v7478, %v7607
    %v7609 = vpop.f32.mrb[0].mxu0
    %v7610 = vadd.f32 %v7474, %v7609
    %v7611 = vpop.f32.mrb[0].mxu0
    %v7612 = vadd.f32 %v7478, %v7611
    %7613 = vmatprep.mubr.bf16.mxu0 0
    %7614 = vmatmul.mubr.bf16.gmra.mrb[0].mxu0 %v6168
    %v7615 = vpop.f32.mrb[0].mxu0
    %v7616 = vadd.f32 %v7474, %v7615
    %v7617 = vpop.f32.mrb[0].mxu0
    %v7618 = vadd.f32 %v7478, %v7617
    %v7619 = vpop.f32.mrb[0].mxu0
    %v7620 = vadd.f32 %v7474, %v7619
    %v7621 = vpop.f32.mrb[0].mxu0
    %v7622 = vadd.f32 %v7478, %v7621
    %7623 = vmatprep.mubr.bf16.mxu0 0
    %7624 = vmatmul.mubr.bf16.gmra.mrb[0].mxu0 %v6169
    %v7625 = vpop.f32.mrb[0].mxu0
    %v7626 = vadd.f32 %v7474, %v7625
    %v7627 = vpop.f32.mrb[0].mxu0
    %v7628 = vadd.f32 %v7478, %v7627
    %v7629 = vpop.f32.mrb[0].mxu0
    %v7630 = vadd.f32 %v7474, %v7629
    %v7631 = vpop.f32.mrb[0].mxu0
    %v7632 = vadd.f32 %v7478, %v7631
    %7633 = vmatprep.mubr.bf16.mxu0 0
    %7634 = vmatmul.mubr.bf16.gmra.mrb[0].mxu0 %v6170
    %v7635 = vpop.f32.mrb[0].mxu0
    %v7636 = vadd.f32 %v7474, %v7635
    %v7637 = vpop.f32.mrb[0].mxu0
    %v7638 = vadd.f32 %v7478, %v7637
    %v7639 = vpop.f32.mrb[0].mxu0
    %v7640 = vadd.f32 %v7474, %v7639
    %v7641 = vpop.f32.mrb[0].mxu0
    %v7642 = vadd.f32 %v7478, %v7641
    %7643 = vmatprep.mubr.bf16.mxu0 0
    %7644 = vmatmul.mubr.bf16.gmra.mrb[0].mxu0 %v6171
    %v7645 = vpop.f32.mrb[0].mxu0
    %v7646 = vadd.f32 %v7474, %v7645
    %v7647 = vpop.f32.mrb[0].mxu0
    %v7648 = vadd.f32 %v7478, %v7647
    %v7649 = vpop.f32.mrb[0].mxu0
    %v7650 = vadd.f32 %v7474, %v7649
    %v7651 = vpop.f32.mrb[0].mxu0
    %v7652 = vadd.f32 %v7478, %v7651
    %7653 = vmatprep.mubr.bf16.mxu0 0
    %7654 = vmatmul.mubr.bf16.gmra.mrb[0].mxu0 %v6172
    %v7655 = vpop.f32.mrb[0].mxu0
    %v7656 = vadd.f32 %v7474, %v7655
    %v7657 = vpop.f32.mrb[0].mxu0
    %v7658 = vadd.f32 %v7478, %v7657
    %v7659 = vpop.f32.mrb[0].mxu0
    %v7660 = vadd.f32 %v7474, %v7659
    %v7661 = vpop.f32.mrb[0].mxu0
    %v7662 = vadd.f32 %v7478, %v7661
    %7663 = vmatprep.mubr.bf16.mxu0 0
    %7664 = vmatmul.mubr.bf16.gmra.mrb[0].mxu0 %v6173
    %v7665 = vpop.f32.mrb[0].mxu0
    %v7666 = vadd.f32 %v7474, %v7665
    %v7667 = vpop.f32.mrb[0].mxu0
    %v7668 = vadd.f32 %v7478, %v7667
    %v7669 = vpop.f32.mrb[0].mxu0
    %v7670 = vadd.f32 %v7474, %v7669
    %v7671 = vpop.f32.mrb[0].mxu0
    %v7672 = vadd.f32 %v7478, %v7671
    %7673 = vmatprep.mubr.bf16.mxu0 0
    %7674 = vmatmul.mubr.bf16.gmra.mrb[0].mxu0 %v6174
    %v7675 = vpop.f32.mrb[0].mxu0
    %v7676 = vadd.f32 %v7474, %v7675
    %v7677 = vpop.f32.mrb[0].mxu0
    %v7678 = vadd.f32 %v7478, %v7677
    %v7679 = vpop.f32.mrb[0].mxu0
    %v7680 = vadd.f32 %v7474, %v7679
    %v7681 = vpop.f32.mrb[0].mxu0
    %v7682 = vadd.f32 %v7478, %v7681
    %7683 = vmatprep.mubr.bf16.mxu0 0
    %7684 = vmatmul.mubr.bf16.gmra.mrb[0].mxu0 %v6175
    %v7685 = vpop.f32.mrb[0].mxu0
    %v7686 = vadd.f32 %v7474, %v7685
    %v7687 = vpop.f32.mrb[0].mxu0
    %v7688 = vadd.f32 %v7478, %v7687
    %v7689 = vpop.f32.mrb[0].mxu0
    %v7690 = vadd.f32 %v7474, %v7689
    %v7691 = vpop.f32.mrb[0].mxu0
    %v7692 = vadd.f32 %v7478, %v7691
    %7693 = vmatprep.mubr.bf16.mxu0 0
    %7694 = vmatmul.mubr.bf16.gmra.mrb[0].mxu0 %v6176
    %v7695 = vpop.f32.mrb[0].mxu0
    %v7696 = vadd.f32 %v7474, %v7695
    %v7697 = vpop.f32.mrb[0].mxu0
    %v7698 = vadd.f32 %v7478, %v7697
    %v7699 = vpop.f32.mrb[0].mxu0
    %v7700 = vadd.f32 %v7474, %v7699
    %v7701 = vpop.f32.mrb[0].mxu0
    %v7702 = vadd.f32 %v7478, %v7701
    %7703 = vmatprep.mubr.bf16.mxu0 0
    %7704 = vmatmul.mubr.bf16.gmra.mrb[0].mxu0 %v6177
    %v7705 = vpop.f32.mrb[0].mxu0
    %v7706 = vadd.f32 %v7474, %v7705
    %v7707 = vpop.f32.mrb[0].mxu0
    %v7708 = vadd.f32 %v7478, %v7707
    %v7709 = vpop.f32.mrb[0].mxu0
    %v7710 = vadd.f32 %v7474, %v7709
    %v7711 = vpop.f32.mrb[0].mxu0
    %v7712 = vadd.f32 %v7478, %v7711
    %7713 = vmatprep.mubr.bf16.mxu0 0
    %7714 = vmatmul.mubr.bf16.gmra.mrb[0].mxu0 %v6178
    %v7715 = vpop.f32.mrb[0].mxu0
    %v7716 = vadd.f32 %v7474, %v7715
    %v7717 = vpop.f32.mrb[0].mxu0
    %v7718 = vadd.f32 %v7478, %v7717
    %v7719 = vpop.f32.mrb[0].mxu0
    %v7720 = vadd.f32 %v7474, %v7719
    %v7721 = vpop.f32.mrb[0].mxu0
    %v7722 = vadd.f32 %v7478, %v7721
    %7723 = vmatprep.mubr.bf16.mxu0 0
    %7724 = vmatmul.mubr.bf16.gmra.mrb[0].mxu0 %v6179
    %v7725 = vpop.f32.mrb[0].mxu0
    %v7726 = vadd.f32 %v7474, %v7725
    %v7727 = vpop.f32.mrb[0].mxu0
    %v7728 = vadd.f32 %v7478, %v7727
    %v7729 = vpop.f32.mrb[0].mxu0
    %v7730 = vadd.f32 %v7474, %v7729
    %v7731 = vpop.f32.mrb[0].mxu0
    %v7732 = vadd.f32 %v7478, %v7731
    %7733 = vmatprep.mubr.bf16.mxu0 0
    %7734 = vmatmul.mubr.bf16.gmra.mrb[0].mxu0 %v6180
    %v7735 = vpop.f32.mrb[0].mxu0
    %v7736 = vadd.f32 %v7474, %v7735
    %v7737 = vpop.f32.mrb[0].mxu0
    %v7738 = vadd.f32 %v7478, %v7737
    %v7739 = vpop.f32.mrb[0].mxu0
    %v7740 = vadd.f32 %v7474, %v7739
    %v7741 = vpop.f32.mrb[0].mxu0
    %v7742 = vadd.f32 %v7478, %v7741
    %7743 = vmatprep.mubr.bf16.mxu0 0
    %7744 = vmatmul.mubr.bf16.gmra.mrb[0].mxu0 %v6181
    %v7745 = vpop.f32.mrb[0].mxu0
    %v7746 = vadd.f32 %v7474, %v7745
    %v7747 = vpop.f32.mrb[0].mxu0
    %v7748 = vadd.f32 %v7478, %v7747
    %v7749 = vpop.f32.mrb[0].mxu0
    %v7750 = vadd.f32 %v7474, %v7749
    %v7751 = vpop.f32.mrb[0].mxu0
    %v7752 = vadd.f32 %v7478, %v7751
    %7753 = vdwg.mxu0
    %v7754 = vmul.f32 %v7596, 0.5
    %v7755 = vmul.f32 %v7598, 0.5
    %v7756 = vmul.f32 %v7600, 0.5
    %v7757 = vmul.f32 %v7602, 0.5
    %v7758 = vmul.f32 %v7606, 0.5
    %v7759 = vmul.f32 %v7608, 0.5
    %v7760 = vmul.f32 %v7610, 0.5
    %v7761 = vmul.f32 %v7612, 0.5
    %v7762 = vmul.f32 %v7616, 0.5
    %v7763 = vmul.f32 %v7618, 0.5
    %v7764 = vmul.f32 %v7620, 0.5
    %v7765 = vmul.f32 %v7622, 0.5
    %v7766 = vmul.f32 %v7626, 0.5
    %v7767 = vmul.f32 %v7628, 0.5
    %v7768 = vmul.f32 %v7630, 0.5
    %v7769 = vmul.f32 %v7632, 0.5
    %v7770 = vmul.f32 %v7636, 0.5
    %v7771 = vmul.f32 %v7638, 0.5
    %v7772 = vmul.f32 %v7640, 0.5
    %v7773 = vmul.f32 %v7642, 0.5
    %v7774 = vmul.f32 %v7646, 0.5
    %v7775 = vmul.f32 %v7648, 0.5
    %v7776 = vmul.f32 %v7650, 0.5
    %v7777 = vmul.f32 %v7652, 0.5
    %v7778 = vmul.f32 %v7656, 0.5
    %v7779 = vmul.f32 %v7658, 0.5
    %v7780 = vmul.f32 %v7660, 0.5
    %v7781 = vmul.f32 %v7662, 0.5
    %v7782 = vmul.f32 %v7666, 0.5
    %v7783 = vmul.f32 %v7668, 0.5
    %v7784 = vmul.f32 %v7670, 0.5
    %v7785 = vmul.f32 %v7672, 0.5
    %v7786 = vmul.f32 %v7676, 0.5
    %v7787 = vmul.f32 %v7678, 0.5
    %v7788 = vmul.f32 %v7680, 0.5
    %v7789 = vmul.f32 %v7682, 0.5
    %v7790 = vmul.f32 %v7686, 0.5
    %v7791 = vmul.f32 %v7688, 0.5
    %v7792 = vmul.f32 %v7690, 0.5
    %v7793 = vmul.f32 %v7692, 0.5
    %v7794 = vmul.f32 %v7696, 0.5
    %v7795 = vmul.f32 %v7698, 0.5
    %v7796 = vmul.f32 %v7700, 0.5
    %v7797 = vmul.f32 %v7702, 0.5
    %v7798 = vmul.f32 %v7706, 0.5
    %v7799 = vmul.f32 %v7708, 0.5
    %v7800 = vmul.f32 %v7710, 0.5
    %v7801 = vmul.f32 %v7712, 0.5
    %v7802 = vmul.f32 %v7716, 0.5
    %v7803 = vmul.f32 %v7718, 0.5
    %v7804 = vmul.f32 %v7720, 0.5
    %v7805 = vmul.f32 %v7722, 0.5
    %v7806 = vmul.f32 %v7726, 0.5
    %v7807 = vmul.f32 %v7728, 0.5
    %v7808 = vmul.f32 %v7730, 0.5
    %v7809 = vmul.f32 %v7732, 0.5
    %v7810 = vmul.f32 %v7736, 0.5
    %v7811 = vmul.f32 %v7738, 0.5
    %v7812 = vmul.f32 %v7740, 0.5
    %v7813 = vmul.f32 %v7742, 0.5
    %v7814 = vmul.f32 %v7746, 0.5
    %v7815 = vmul.f32 %v7748, 0.5
    %v7816 = vmul.f32 %v7750, 0.5
    %v7817 = vmul.f32 %v7752, 0.5
    %v7818 = vmul.f32 %v7596, 0.044715
    %v7819 = vmul.f32 %v7598, 0.044715
    %v7820 = vmul.f32 %v7600, 0.044715
    %v7821 = vmul.f32 %v7602, 0.044715
    %v7822 = vmul.f32 %v7606, 0.044715
    %v7823 = vmul.f32 %v7608, 0.044715
    %v7824 = vmul.f32 %v7610, 0.044715
    %v7825 = vmul.f32 %v7612, 0.044715
    %v7826 = vmul.f32 %v7616, 0.044715
    %v7827 = vmul.f32 %v7618, 0.044715
    %v7828 = vmul.f32 %v7620, 0.044715
    %v7829 = vmul.f32 %v7622, 0.044715
    %v7830 = vmul.f32 %v7626, 0.044715
    %v7831 = vmul.f32 %v7628, 0.044715
    %v7832 = vmul.f32 %v7630, 0.044715
    %v7833 = vmul.f32 %v7632, 0.044715
    %v7834 = vmul.f32 %v7636, 0.044715
    %v7835 = vmul.f32 %v7638, 0.044715
    %v7836 = vmul.f32 %v7640, 0.044715
    %v7837 = vmul.f32 %v7642, 0.044715
    %v7838 = vmul.f32 %v7646, 0.044715
    %v7839 = vmul.f32 %v7648, 0.044715
    %v7840 = vmul.f32 %v7650, 0.044715
    %v7841 = vmul.f32 %v7652, 0.044715
    %v7842 = vmul.f32 %v7656, 0.044715
    %v7843 = vmul.f32 %v7658, 0.044715
    %v7844 = vmul.f32 %v7660, 0.044715
    %v7845 = vmul.f32 %v7662, 0.044715
    %v7846 = vmul.f32 %v7666, 0.044715
    %v7847 = vmul.f32 %v7668, 0.044715
    %v7848 = vmul.f32 %v7670, 0.044715
    %v7849 = vmul.f32 %v7672, 0.044715
    %v7850 = vmul.f32 %v7676, 0.044715
    %v7851 = vmul.f32 %v7678, 0.044715
    %v7852 = vmul.f32 %v7680, 0.044715
    %v7853 = vmul.f32 %v7682, 0.044715
    %v7854 = vmul.f32 %v7686, 0.044715
    %v7855 = vmul.f32 %v7688, 0.044715
    %v7856 = vmul.f32 %v7690, 0.044715
    %v7857 = vmul.f32 %v7692, 0.044715
    %v7858 = vmul.f32 %v7696, 0.044715
    %v7859 = vmul.f32 %v7698, 0.044715
    %v7860 = vmul.f32 %v7700, 0.044715
    %v7861 = vmul.f32 %v7702, 0.044715
    %v7862 = vmul.f32 %v7706, 0.044715
    %v7863 = vmul.f32 %v7708, 0.044715
    %v7864 = vmul.f32 %v7710, 0.044715
    %v7865 = vmul.f32 %v7712, 0.044715
    %v7866 = vmul.f32 %v7716, 0.044715
    %v7867 = vmul.f32 %v7718, 0.044715
    %v7868 = vmul.f32 %v7720, 0.044715
    %v7869 = vmul.f32 %v7722, 0.044715
    %v7870 = vmul.f32 %v7726, 0.044715
    %v7871 = vmul.f32 %v7728, 0.044715
    %v7872 = vmul.f32 %v7730, 0.044715
    %v7873 = vmul.f32 %v7732, 0.044715
    %v7874 = vmul.f32 %v7736, 0.044715
    %v7875 = vmul.f32 %v7738, 0.044715
    %v7876 = vmul.f32 %v7740, 0.044715
    %v7877 = vmul.f32 %v7742, 0.044715
    %v7878 = vmul.f32 %v7746, 0.044715
    %v7879 = vmul.f32 %v7748, 0.044715
    %v7880 = vmul.f32 %v7750, 0.044715
    %v7881 = vmul.f32 %v7752, 0.044715
    %v7882 = vmul.f32 %v7818, %v7596
    %v7883 = vmul.f32 %v7819, %v7598
    %v7884 = vmul.f32 %v7820, %v7600
    %v7885 = vmul.f32 %v7821, %v7602
    %v7886 = vmul.f32 %v7822, %v7606
    %v7887 = vmul.f32 %v7823, %v7608
    %v7888 = vmul.f32 %v7824, %v7610
    %v7889 = vmul.f32 %v7825, %v7612
    %v7890 = vmul.f32 %v7826, %v7616
    %v7891 = vmul.f32 %v7827, %v7618
    %v7892 = vmul.f32 %v7828, %v7620
    %v7893 = vmul.f32 %v7829, %v7622
    %v7894 = vmul.f32 %v7830, %v7626
    %v7895 = vmul.f32 %v7831, %v7628
    %v7896 = vmul.f32 %v7832, %v7630
    %v7897 = vmul.f32 %v7833, %v7632
    %v7898 = vmul.f32 %v7834, %v7636
    %v7899 = vmul.f32 %v7835, %v7638
    %v7900 = vmul.f32 %v7836, %v7640
    %v7901 = vmul.f32 %v7837, %v7642
    %v7902 = vmul.f32 %v7838, %v7646
    %v7903 = vmul.f32 %v7839, %v7648
    %v7904 = vmul.f32 %v7840, %v7650
    %v7905 = vmul.f32 %v7841, %v7652
    %v7906 = vmul.f32 %v7842, %v7656
    %v7907 = vmul.f32 %v7843, %v7658
    %v7908 = vmul.f32 %v7844, %v7660
    %v7909 = vmul.f32 %v7845, %v7662
    %v7910 = vmul.f32 %v7846, %v7666
    %v7911 = vmul.f32 %v7847, %v7668
    %v7912 = vmul.f32 %v7848, %v7670
    %v7913 = vmul.f32 %v7849, %v7672
    %v7914 = vmul.f32 %v7850, %v7676
    %v7915 = vmul.f32 %v7851, %v7678
    %v7916 = vmul.f32 %v7852, %v7680
    %v7917 = vmul.f32 %v7853, %v7682
    %v7918 = vmul.f32 %v7854, %v7686
    %v7919 = vmul.f32 %v7855, %v7688
    %v7920 = vmul.f32 %v7856, %v7690
    %v7921 = vmul.f32 %v7857, %v7692
    %v7922 = vmul.f32 %v7858, %v7696
    %v7923 = vmul.f32 %v7859, %v7698
    %v7924 = vmul.f32 %v7860, %v7700
    %v7925 = vmul.f32 %v7861, %v7702
    %v7926 = vmul.f32 %v7862, %v7706
    %v7927 = vmul.f32 %v7863, %v7708
    %v7928 = vmul.f32 %v7864, %v7710
    %v7929 = vmul.f32 %v7865, %v7712
    %v7930 = vmul.f32 %v7866, %v7716
    %v7931 = vmul.f32 %v7867, %v7718
    %v7932 = vmul.f32 %v7868, %v7720
    %v7933 = vmul.f32 %v7869, %v7722
    %v7934 = vmul.f32 %v7870, %v7726
    %v7935 = vmul.f32 %v7871, %v7728
    %v7936 = vmul.f32 %v7872, %v7730
    %v7937 = vmul.f32 %v7873, %v7732
    %v7938 = vmul.f32 %v7874, %v7736
    %v7939 = vmul.f32 %v7875, %v7738
    %v7940 = vmul.f32 %v7876, %v7740
    %v7941 = vmul.f32 %v7877, %v7742
    %v7942 = vmul.f32 %v7878, %v7746
    %v7943 = vmul.f32 %v7879, %v7748
    %v7944 = vmul.f32 %v7880, %v7750
    %v7945 = vmul.f32 %v7881, %v7752
    %v7946 = vmul.f32 %v7882, %v7596
    %v7947 = vmul.f32 %v7883, %v7598
    %v7948 = vmul.f32 %v7884, %v7600
    %v7949 = vmul.f32 %v7885, %v7602
    %v7950 = vmul.f32 %v7886, %v7606
    %v7951 = vmul.f32 %v7887, %v7608
    %v7952 = vmul.f32 %v7888, %v7610
    %v7953 = vmul.f32 %v7889, %v7612
    %v7954 = vmul.f32 %v7890, %v7616
    %v7955 = vmul.f32 %v7891, %v7618
    %v7956 = vmul.f32 %v7892, %v7620
    %v7957 = vmul.f32 %v7893, %v7622
    %v7958 = vmul.f32 %v7894, %v7626
    %v7959 = vmul.f32 %v7895, %v7628
    %v7960 = vmul.f32 %v7896, %v7630
    %v7961 = vmul.f32 %v7897, %v7632
    %v7962 = vmul.f32 %v7898, %v7636
    %v7963 = vmul.f32 %v7899, %v7638
    %v7964 = vmul.f32 %v7900, %v7640
    %v7965 = vmul.f32 %v7901, %v7642
    %v7966 = vmul.f32 %v7902, %v7646
    %v7967 = vmul.f32 %v7903, %v7648
    %v7968 = vmul.f32 %v7904, %v7650
    %v7969 = vmul.f32 %v7905, %v7652
    %v7970 = vmul.f32 %v7906, %v7656
    %v7971 = vmul.f32 %v7907, %v7658
    %v7972 = vmul.f32 %v7908, %v7660
    %v7973 = vmul.f32 %v7909, %v7662
    %v7974 = vmul.f32 %v7910, %v7666
    %v7975 = vmul.f32 %v7911, %v7668
    %v7976 = vmul.f32 %v7912, %v7670
    %v7977 = vmul.f32 %v7913, %v7672
    %v7978 = vmul.f32 %v7914, %v7676
    %v7979 = vmul.f32 %v7915, %v7678
    %v7980 = vmul.f32 %v7916, %v7680
    %v7981 = vmul.f32 %v7917, %v7682
    %v7982 = vmul.f32 %v7918, %v7686
    %v7983 = vmul.f32 %v7919, %v7688
    %v7984 = vmul.f32 %v7920, %v7690
    %v7985 = vmul.f32 %v7921, %v7692
    %v7986 = vmul.f32 %v7922, %v7696
    %v7987 = vmul.f32 %v7923, %v7698
    %v7988 = vmul.f32 %v7924, %v7700
    %v7989 = vmul.f32 %v7925, %v7702
    %v7990 = vmul.f32 %v7926, %v7706
    %v7991 = vmul.f32 %v7927, %v7708
    %v7992 = vmul.f32 %v7928, %v7710
    %v7993 = vmul.f32 %v7929, %v7712
    %v7994 = vmul.f32 %v7930, %v7716
    %v7995 = vmul.f32 %v7931, %v7718
    %v7996 = vmul.f32 %v7932, %v7720
    %v7997 = vmul.f32 %v7933, %v7722
    %v7998 = vmul.f32 %v7934, %v7726
    %v7999 = vmul.f32 %v7935, %v7728
    %v8000 = vmul.f32 %v7936, %v7730
    %v8001 = vmul.f32 %v7937, %v7732
    %v8002 = vmul.f32 %v7938, %v7736
    %v8003 = vmul.f32 %v7939, %v7738
    %v8004 = vmul.f32 %v7940, %v7740
    %v8005 = vmul.f32 %v7941, %v7742
    %v8006 = vmul.f32 %v7942, %v7746
    %v8007 = vmul.f32 %v7943, %v7748
    %v8008 = vmul.f32 %v7944, %v7750
    %v8009 = vmul.f32 %v7945, %v7752
    %v8010 = vadd.f32 %v7596, %v7946
    %v8011 = vadd.f32 %v7598, %v7947
    %v8012 = vadd.f32 %v7600, %v7948
    %v8013 = vadd.f32 %v7602, %v7949
    %v8014 = vadd.f32 %v7606, %v7950
    %v8015 = vadd.f32 %v7608, %v7951
    %v8016 = vadd.f32 %v7610, %v7952
    %v8017 = vadd.f32 %v7612, %v7953
    %v8018 = vadd.f32 %v7616, %v7954
    %v8019 = vadd.f32 %v7618, %v7955
    %v8020 = vadd.f32 %v7620, %v7956
    %v8021 = vadd.f32 %v7622, %v7957
    %v8022 = vadd.f32 %v7626, %v7958
    %v8023 = vadd.f32 %v7628, %v7959
    %v8024 = vadd.f32 %v7630, %v7960
    %v8025 = vadd.f32 %v7632, %v7961
    %v8026 = vadd.f32 %v7636, %v7962
    %v8027 = vadd.f32 %v7638, %v7963
    %v8028 = vadd.f32 %v7640, %v7964
    %v8029 = vadd.f32 %v7642, %v7965
    %v8030 = vadd.f32 %v7646, %v7966
    %v8031 = vadd.f32 %v7648, %v7967
    %v8032 = vadd.f32 %v7650, %v7968
    %v8033 = vadd.f32 %v7652, %v7969
    %v8034 = vadd.f32 %v7656, %v7970
    %v8035 = vadd.f32 %v7658, %v7971
    %v8036 = vadd.f32 %v7660, %v7972
    %v8037 = vadd.f32 %v7662, %v7973
    %v8038 = vadd.f32 %v7666, %v7974
    %v8039 = vadd.f32 %v7668, %v7975
    %v8040 = vadd.f32 %v7670, %v7976
    %v8041 = vadd.f32 %v7672, %v7977
    %v8042 = vadd.f32 %v7676, %v7978
    %v8043 = vadd.f32 %v7678, %v7979
    %v8044 = vadd.f32 %v7680, %v7980
    %v8045 = vadd.f32 %v7682, %v7981
    %v8046 = vadd.f32 %v7686, %v7982
    %v8047 = vadd.f32 %v7688, %v7983
    %v8048 = vadd.f32 %v7690, %v7984
    %v8049 = vadd.f32 %v7692, %v7985
    %v8050 = vadd.f32 %v7696, %v7986
    %v8051 = vadd.f32 %v7698, %v7987
    %v8052 = vadd.f32 %v7700, %v7988
    %v8053 = vadd.f32 %v7702, %v7989
    %v8054 = vadd.f32 %v7706, %v7990
    %v8055 = vadd.f32 %v7708, %v7991
    %v8056 = vadd.f32 %v7710, %v7992
    %v8057 = vadd.f32 %v7712, %v7993
    %v8058 = vadd.f32 %v7716, %v7994
    %v8059 = vadd.f32 %v7718, %v7995
    %v8060 = vadd.f32 %v7720, %v7996
    %v8061 = vadd.f32 %v7722, %v7997
    %v8062 = vadd.f32 %v7726, %v7998
    %v8063 = vadd.f32 %v7728, %v7999
    %v8064 = vadd.f32 %v7730, %v8000
    %v8065 = vadd.f32 %v7732, %v8001
    %v8066 = vadd.f32 %v7736, %v8002
    %v8067 = vadd.f32 %v7738, %v8003
    %v8068 = vadd.f32 %v7740, %v8004
    %v8069 = vadd.f32 %v7742, %v8005
    %v8070 = vadd.f32 %v7746, %v8006
    %v8071 = vadd.f32 %v7748, %v8007
    %v8072 = vadd.f32 %v7750, %v8008
    %v8073 = vadd.f32 %v7752, %v8009
    %v8074 = vmul.f32 %v8010, 0.7978846
    %v8075 = vmul.f32 %v8011, 0.7978846
    %v8076 = vmul.f32 %v8012, 0.7978846
    %v8077 = vmul.f32 %v8013, 0.7978846
    %v8078 = vmul.f32 %v8014, 0.7978846
    %v8079 = vmul.f32 %v8015, 0.7978846
    %v8080 = vmul.f32 %v8016, 0.7978846
    %v8081 = vmul.f32 %v8017, 0.7978846
    %v8082 = vmul.f32 %v8018, 0.7978846
    %v8083 = vmul.f32 %v8019, 0.7978846
    %v8084 = vmul.f32 %v8020, 0.7978846
    %v8085 = vmul.f32 %v8021, 0.7978846
    %v8086 = vmul.f32 %v8022, 0.7978846
    %v8087 = vmul.f32 %v8023, 0.7978846
    %v8088 = vmul.f32 %v8024, 0.7978846
    %v8089 = vmul.f32 %v8025, 0.7978846
    %v8090 = vmul.f32 %v8026, 0.7978846
    %v8091 = vmul.f32 %v8027, 0.7978846
    %v8092 = vmul.f32 %v8028, 0.7978846
    %v8093 = vmul.f32 %v8029, 0.7978846
    %v8094 = vmul.f32 %v8030, 0.7978846
    %v8095 = vmul.f32 %v8031, 0.7978846
    %v8096 = vmul.f32 %v8032, 0.7978846
    %v8097 = vmul.f32 %v8033, 0.7978846
    %v8098 = vmul.f32 %v8034, 0.7978846
    %v8099 = vmul.f32 %v8035, 0.7978846
    %v8100 = vmul.f32 %v8036, 0.7978846
    %v8101 = vmul.f32 %v8037, 0.7978846
    %v8102 = vmul.f32 %v8038, 0.7978846
    %v8103 = vmul.f32 %v8039, 0.7978846
    %v8104 = vmul.f32 %v8040, 0.7978846
    %v8105 = vmul.f32 %v8041, 0.7978846
    %v8106 = vmul.f32 %v8042, 0.7978846
    %v8107 = vmul.f32 %v8043, 0.7978846
    %v8108 = vmul.f32 %v8044, 0.7978846
    %v8109 = vmul.f32 %v8045, 0.7978846
    %v8110 = vmul.f32 %v8046, 0.7978846
    %v8111 = vmul.f32 %v8047, 0.7978846
    %v8112 = vmul.f32 %v8048, 0.7978846
    %v8113 = vmul.f32 %v8049, 0.7978846
    %v8114 = vmul.f32 %v8050, 0.7978846
    %v8115 = vmul.f32 %v8051, 0.7978846
    %v8116 = vmul.f32 %v8052, 0.7978846
    %v8117 = vmul.f32 %v8053, 0.7978846
    %v8118 = vmul.f32 %v8054, 0.7978846
    %v8119 = vmul.f32 %v8055, 0.7978846
    %v8120 = vmul.f32 %v8056, 0.7978846
    %v8121 = vmul.f32 %v8057, 0.7978846
    %v8122 = vmul.f32 %v8058, 0.7978846
    %v8123 = vmul.f32 %v8059, 0.7978846
    %v8124 = vmul.f32 %v8060, 0.7978846
    %v8125 = vmul.f32 %v8061, 0.7978846
    %v8126 = vmul.f32 %v8062, 0.7978846
    %v8127 = vmul.f32 %v8063, 0.7978846
    %v8128 = vmul.f32 %v8064, 0.7978846
    %v8129 = vmul.f32 %v8065, 0.7978846
    %v8130 = vmul.f32 %v8066, 0.7978846
    %v8131 = vmul.f32 %v8067, 0.7978846
    %v8132 = vmul.f32 %v8068, 0.7978846
    %v8133 = vmul.f32 %v8069, 0.7978846
    %v8134 = vmul.f32 %v8070, 0.7978846
    %v8135 = vmul.f32 %v8071, 0.7978846
    %v8136 = vmul.f32 %v8072, 0.7978846
    %v8137 = vmul.f32 %v8073, 0.7978846
    %v8138 = vtanh.pop %v8074
    %v8139 = vtanh.pop %v8075
    %v8140 = vtanh.pop %v8076
    %v8141 = vtanh.pop %v8077
    %v8142 = vtanh.pop %v8078
    %v8143 = vtanh.pop %v8079
    %v8144 = vtanh.pop %v8080
    %v8145 = vtanh.pop %v8081
    %v8146 = vtanh.pop %v8082
    %v8147 = vtanh.pop %v8083
    %v8148 = vtanh.pop %v8084
    %v8149 = vtanh.pop %v8085
    %v8150 = vtanh.pop %v8086
    %v8151 = vtanh.pop %v8087
    %v8152 = vtanh.pop %v8088
    %v8153 = vtanh.pop %v8089
    %v8154 = vtanh.pop %v8090
    %v8155 = vtanh.pop %v8091
    %v8156 = vtanh.pop %v8092
    %v8157 = vtanh.pop %v8093
    %v8158 = vtanh.pop %v8094
    %v8159 = vtanh.pop %v8095
    %v8160 = vtanh.pop %v8096
    %v8161 = vtanh.pop %v8097
    %v8162 = vtanh.pop %v8098
    %v8163 = vtanh.pop %v8099
    %v8164 = vtanh.pop %v8100
    %v8165 = vtanh.pop %v8101
    %v8166 = vtanh.pop %v8102
    %v8167 = vtanh.pop %v8103
    %v8168 = vtanh.pop %v8104
    %v8169 = vtanh.pop %v8105
    %v8170 = vtanh.pop %v8106
    %v8171 = vtanh.pop %v8107
    %v8172 = vtanh.pop %v8108
    %v8173 = vtanh.pop %v8109
    %v8174 = vtanh.pop %v8110
    %v8175 = vtanh.pop %v8111
    %v8176 = vtanh.pop %v8112
    %v8177 = vtanh.pop %v8113
    %v8178 = vtanh.pop %v8114
    %v8179 = vtanh.pop %v8115
    %v8180 = vtanh.pop %v8116
    %v8181 = vtanh.pop %v8117
    %v8182 = vtanh.pop %v8118
    %v8183 = vtanh.pop %v8119
    %v8184 = vtanh.pop %v8120
    %v8185 = vtanh.pop %v8121
    %v8186 = vtanh.pop %v8122
    %v8187 = vtanh.pop %v8123
    %v8188 = vtanh.pop %v8124
    %v8189 = vtanh.pop %v8125
    %v8190 = vtanh.pop %v8126
    %v8191 = vtanh.pop %v8127
    %v8192 = vtanh.pop %v8128
    %v8193 = vtanh.pop %v8129
    %v8194 = vtanh.pop %v8130
    %v8195 = vtanh.pop %v8131
    %v8196 = vtanh.pop %v8132
    %v8197 = vtanh.pop %v8133
    %v8198 = vtanh.pop %v8134
    %v8199 = vtanh.pop %v8135
    %v8200 = vtanh.pop %v8136
    %v8201 = vtanh.pop %v8137
    %v8202 = vadd.f32 %v8138, 1.0
    %v8203 = vadd.f32 %v8139, 1.0
    %v8204 = vadd.f32 %v8140, 1.0
    %v8205 = vadd.f32 %v8141, 1.0
    %v8206 = vadd.f32 %v8142, 1.0
    %v8207 = vadd.f32 %v8143, 1.0
    %v8208 = vadd.f32 %v8144, 1.0
    %v8209 = vadd.f32 %v8145, 1.0
    %v8210 = vadd.f32 %v8146, 1.0
    %v8211 = vadd.f32 %v8147, 1.0
    %v8212 = vadd.f32 %v8148, 1.0
    %v8213 = vadd.f32 %v8149, 1.0
    %v8214 = vadd.f32 %v8150, 1.0
    %v8215 = vadd.f32 %v8151, 1.0
    %v8216 = vadd.f32 %v8152, 1.0
    %v8217 = vadd.f32 %v8153, 1.0
    %v8218 = vadd.f32 %v8154, 1.0
    %v8219 = vadd.f32 %v8155, 1.0
    %v8220 = vadd.f32 %v8156, 1.0
    %v8221 = vadd.f32 %v8157, 1.0
    %v8222 = vadd.f32 %v8158, 1.0
    %v8223 = vadd.f32 %v8159, 1.0
    %v8224 = vadd.f32 %v8160, 1.0
    %v8225 = vadd.f32 %v8161, 1.0
    %v8226 = vadd.f32 %v8162, 1.0
    %v8227 = vadd.f32 %v8163, 1.0
    %v8228 = vadd.f32 %v8164, 1.0
    %v8229 = vadd.f32 %v8165, 1.0
    %v8230 = vadd.f32 %v8166, 1.0
    %v8231 = vadd.f32 %v8167, 1.0
    %v8232 = vadd.f32 %v8168, 1.0
    %v8233 = vadd.f32 %v8169, 1.0
    %v8234 = vadd.f32 %v8170, 1.0
    %v8235 = vadd.f32 %v8171, 1.0
    %v8236 = vadd.f32 %v8172, 1.0
    %v8237 = vadd.f32 %v8173, 1.0
    %v8238 = vadd.f32 %v8174, 1.0
    %v8239 = vadd.f32 %v8175, 1.0
    %v8240 = vadd.f32 %v8176, 1.0
    %v8241 = vadd.f32 %v8177, 1.0
    %v8242 = vadd.f32 %v8178, 1.0
    %v8243 = vadd.f32 %v8179, 1.0
    %v8244 = vadd.f32 %v8180, 1.0
    %v8245 = vadd.f32 %v8181, 1.0
    %v8246 = vadd.f32 %v8182, 1.0
    %v8247 = vadd.f32 %v8183, 1.0
    %v8248 = vadd.f32 %v8184, 1.0
    %v8249 = vadd.f32 %v8185, 1.0
    %v8250 = vadd.f32 %v8186, 1.0
    %v8251 = vadd.f32 %v8187, 1.0
    %v8252 = vadd.f32 %v8188, 1.0
    %v8253 = vadd.f32 %v8189, 1.0
    %v8254 = vadd.f32 %v8190, 1.0
    %v8255 = vadd.f32 %v8191, 1.0
    %v8256 = vadd.f32 %v8192, 1.0
    %v8257 = vadd.f32 %v8193, 1.0
    %v8258 = vadd.f32 %v8194, 1.0
    %v8259 = vadd.f32 %v8195, 1.0
    %v8260 = vadd.f32 %v8196, 1.0
    %v8261 = vadd.f32 %v8197, 1.0
    %v8262 = vadd.f32 %v8198, 1.0
    %v8263 = vadd.f32 %v8199, 1.0
    %v8264 = vadd.f32 %v8200, 1.0
    %v8265 = vadd.f32 %v8201, 1.0
    %v8266 = vmul.f32 %v7754, %v8202
    %v8267 = vmul.f32 %v7755, %v8203
    %v8268 = vmul.f32 %v7756, %v8204
    %v8269 = vmul.f32 %v7757, %v8205
    %v8270 = vmul.f32 %v7758, %v8206
    %v8271 = vmul.f32 %v7759, %v8207
    %v8272 = vmul.f32 %v7760, %v8208
    %v8273 = vmul.f32 %v7761, %v8209
    %v8274 = vmul.f32 %v7762, %v8210
    %v8275 = vmul.f32 %v7763, %v8211
    %v8276 = vmul.f32 %v7764, %v8212
    %v8277 = vmul.f32 %v7765, %v8213
    %v8278 = vmul.f32 %v7766, %v8214
    %v8279 = vmul.f32 %v7767, %v8215
    %v8280 = vmul.f32 %v7768, %v8216
    %v8281 = vmul.f32 %v7769, %v8217
    %v8282 = vmul.f32 %v7770, %v8218
    %v8283 = vmul.f32 %v7771, %v8219
    %v8284 = vmul.f32 %v7772, %v8220
    %v8285 = vmul.f32 %v7773, %v8221
    %v8286 = vmul.f32 %v7774, %v8222
    %v8287 = vmul.f32 %v7775, %v8223
    %v8288 = vmul.f32 %v7776, %v8224
    %v8289 = vmul.f32 %v7777, %v8225
    %v8290 = vmul.f32 %v7778, %v8226
    %v8291 = vmul.f32 %v7779, %v8227
    %v8292 = vmul.f32 %v7780, %v8228
    %v8293 = vmul.f32 %v7781, %v8229
    %v8294 = vmul.f32 %v7782, %v8230
    %v8295 = vmul.f32 %v7783, %v8231
    %v8296 = vmul.f32 %v7784, %v8232
    %v8297 = vmul.f32 %v7785, %v8233
    %v8298 = vmul.f32 %v7786, %v8234
    %v8299 = vmul.f32 %v7787, %v8235
    %v8300 = vmul.f32 %v7788, %v8236
    %v8301 = vmul.f32 %v7789, %v8237
    %v8302 = vmul.f32 %v7790, %v8238
    %v8303 = vmul.f32 %v7791, %v8239
    %v8304 = vmul.f32 %v7792, %v8240
    %v8305 = vmul.f32 %v7793, %v8241
    %v8306 = vmul.f32 %v7794, %v8242
    %v8307 = vmul.f32 %v7795, %v8243
    %v8308 = vmul.f32 %v7796, %v8244
    %v8309 = vmul.f32 %v7797, %v8245
    %v8310 = vmul.f32 %v7798, %v8246
    %v8311 = vmul.f32 %v7799, %v8247
    %v8312 = vmul.f32 %v7800, %v8248
    %v8313 = vmul.f32 %v7801, %v8249
    %v8314 = vmul.f32 %v7802, %v8250
    %v8315 = vmul.f32 %v7803, %v8251
    %v8316 = vmul.f32 %v7804, %v8252
    %v8317 = vmul.f32 %v7805, %v8253
    %v8318 = vmul.f32 %v7806, %v8254
    %v8319 = vmul.f32 %v7807, %v8255
    %v8320 = vmul.f32 %v7808, %v8256
    %v8321 = vmul.f32 %v7809, %v8257
    %v8322 = vmul.f32 %v7810, %v8258
    %v8323 = vmul.f32 %v7811, %v8259
    %v8324 = vmul.f32 %v7812, %v8260
    %v8325 = vmul.f32 %v7813, %v8261
    %v8326 = vmul.f32 %v7814, %v8262
    %v8327 = vmul.f32 %v7815, %v8263
    %v8328 = vmul.f32 %v7816, %v8264
    %v8329 = vmul.f32 %v7817, %v8265
    %v8330 = vpack.c.bf16 %v8268, %v8266
    %v8331 = vpack.c.bf16 %v8269, %v8267
    %v8332 = vpack.c.bf16 %v8272, %v8270
    %v8333 = vpack.c.bf16 %v8273, %v8271
    %v8334 = vpack.c.bf16 %v8276, %v8274
    %v8335 = vpack.c.bf16 %v8277, %v8275
    %v8336 = vpack.c.bf16 %v8280, %v8278
    %v8337 = vpack.c.bf16 %v8281, %v8279
    %v8338 = vpack.c.bf16 %v8284, %v8282
    %v8339 = vpack.c.bf16 %v8285, %v8283
    %v8340 = vpack.c.bf16 %v8288, %v8286
    %v8341 = vpack.c.bf16 %v8289, %v8287
    %v8342 = vpack.c.bf16 %v8292, %v8290
    %v8343 = vpack.c.bf16 %v8293, %v8291
    %v8344 = vpack.c.bf16 %v8296, %v8294
    %v8345 = vpack.c.bf16 %v8297, %v8295
    %v8346 = vpack.c.bf16 %v8300, %v8298
    %v8347 = vpack.c.bf16 %v8301, %v8299
    %v8348 = vpack.c.bf16 %v8304, %v8302
    %v8349 = vpack.c.bf16 %v8305, %v8303
    %v8350 = vpack.c.bf16 %v8308, %v8306
    %v8351 = vpack.c.bf16 %v8309, %v8307
    %v8352 = vpack.c.bf16 %v8312, %v8310
    %v8353 = vpack.c.bf16 %v8313, %v8311
    %v8354 = vpack.c.bf16 %v8316, %v8314
    %v8355 = vpack.c.bf16 %v8317, %v8315
    %v8356 = vpack.c.bf16 %v8320, %v8318
    %v8357 = vpack.c.bf16 %v8321, %v8319
    %v8358 = vpack.c.bf16 %v8324, %v8322
    %v8359 = vpack.c.bf16 %v8325, %v8323
    %v8360 = vpack.c.bf16 %v8328, %v8326
    %v8361 = vpack.c.bf16 %v8329, %v8327
    %v8362 = vld [vmem:[%s7130 + $0x80] sm:$0xf]
    %v8363 = vld [vmem:[%s7130 + $0x84] sm:$0xf]
    %v8364 = vld [vmem:[%s7130 + $0x88] sm:$0xf]
    %v8365 = vld [vmem:[%s7130 + $0x8c] sm:$0xf]
    %v8366 = vld [vmem:[%s7130 + $0x90] sm:$0xf]
    %v8367 = vld [vmem:[%s7130 + $0x94] sm:$0xf]
    %v8368 = vld [vmem:[%s7130 + $0x98] sm:$0xf]
    %v8369 = vld [vmem:[%s7130 + $0x9c] sm:$0xf]
    %v8370 = vld [vmem:[%s7130 + $0xa0] sm:$0xf]
    %v8371 = vld [vmem:[%s7130 + $0xa4] sm:$0xf]
    %v8372 = vld [vmem:[%s7130 + $0xa8] sm:$0xf]
    %v8373 = vld [vmem:[%s7130 + $0xac] sm:$0xf]
    %v8374 = vld [vmem:[%s7130 + $0xb0] sm:$0xf]
    %v8375 = vld [vmem:[%s7130 + $0xb4] sm:$0xf]
    %v8376 = vld [vmem:[%s7130 + $0xb8] sm:$0xf]
    %v8377 = vld [vmem:[%s7130 + $0xbc] sm:$0xf]
    %v8378 = vld [vmem:[%s7130 + $0xc0] sm:$0xf]
    %v8379 = vld [vmem:[%s7130 + $0xc4] sm:$0xf]
    %v8380 = vld [vmem:[%s7130 + $0xc8] sm:$0xf]
    %v8381 = vld [vmem:[%s7130 + $0xcc] sm:$0xf]
    %v8382 = vld [vmem:[%s7130 + $0xd0] sm:$0xf]
    %v8383 = vld [vmem:[%s7130 + $0xd4] sm:$0xf]
    %v8384 = vld [vmem:[%s7130 + $0xd8] sm:$0xf]
    %v8385 = vld [vmem:[%s7130 + $0xdc] sm:$0xf]
    %v8386 = vld [vmem:[%s7130 + $0xe0] sm:$0xf]
    %v8387 = vld [vmem:[%s7130 + $0xe4] sm:$0xf]
    %v8388 = vld [vmem:[%s7130 + $0xe8] sm:$0xf]
    %v8389 = vld [vmem:[%s7130 + $0xec] sm:$0xf]
    %v8390 = vld [vmem:[%s7130 + $0xf0] sm:$0xf]
    %v8391 = vld [vmem:[%s7130 + $0xf4] sm:$0xf]
    %v8392 = vld [vmem:[%s7130 + $0xf8] sm:$0xf]
    %v8393 = vld [vmem:[%s7130 + $0xfc] sm:$0xf]
    %v8426 = vunpack.c.l.b16 %v8362
    %v8427 = vunpack.c.l.b16 %v8363
    %v8428 = vunpack.c.l.b16 %v8364
    %v8429 = vunpack.c.l.b16 %v8365
    %v8430 = vunpack.c.l.b16 %v8366
    %v8431 = vunpack.c.l.b16 %v8367
    %v8432 = vunpack.c.l.b16 %v8368
    %v8433 = vunpack.c.l.b16 %v8369
    %v8434 = vunpack.c.l.b16 %v8370
    %v8435 = vunpack.c.l.b16 %v8371
    %v8436 = vunpack.c.l.b16 %v8372
    %v8437 = vunpack.c.l.b16 %v8373
    %v8438 = vunpack.c.l.b16 %v8374
    %v8439 = vunpack.c.l.b16 %v8375
    %v8440 = vunpack.c.l.b16 %v8376
    %v8441 = vunpack.c.l.b16 %v8377
    %v8442 = vunpack.c.l.b16 %v8378
    %v8443 = vunpack.c.l.b16 %v8379
    %v8444 = vunpack.c.l.b16 %v8380
    %v8445 = vunpack.c.l.b16 %v8381
    %v8446 = vunpack.c.l.b16 %v8382
    %v8447 = vunpack.c.l.b16 %v8383
    %v8448 = vunpack.c.l.b16 %v8384
    %v8449 = vunpack.c.l.b16 %v8385
    %v8450 = vunpack.c.l.b16 %v8386
    %v8451 = vunpack.c.l.b16 %v8387
    %v8452 = vunpack.c.l.b16 %v8388
    %v8453 = vunpack.c.l.b16 %v8389
    %v8454 = vunpack.c.l.b16 %v8390
    %v8455 = vunpack.c.l.b16 %v8391
    %v8456 = vunpack.c.l.b16 %v8392
    %v8457 = vunpack.c.l.b16 %v8393
    %v8458 = vpack.c.b16 %v8427, %v8426
    %v8459 = vpack.c.b16 %v8429, %v8428
    %v8460 = vpack.c.b16 %v8431, %v8430
    %v8461 = vpack.c.b16 %v8433, %v8432
    %v8462 = vpack.c.b16 %v8435, %v8434
    %v8463 = vpack.c.b16 %v8437, %v8436
    %v8464 = vpack.c.b16 %v8439, %v8438
    %v8465 = vpack.c.b16 %v8441, %v8440
    %v8466 = vpack.c.b16 %v8443, %v8442
    %v8467 = vpack.c.b16 %v8445, %v8444
    %v8468 = vpack.c.b16 %v8447, %v8446
    %v8469 = vpack.c.b16 %v8449, %v8448
    %v8470 = vpack.c.b16 %v8451, %v8450
    %v8471 = vpack.c.b16 %v8453, %v8452
    %v8472 = vpack.c.b16 %v8455, %v8454
    %v8473 = vpack.c.b16 %v8457, %v8456
    %8490 = vmatprep.subr.bf16.mxu0 0
    %8491 = vmatpush1.bf16.msra.mxu0 %v8458
    %8492 = vmatprep.subr.bf16.mxu0 0
    %8493 = vmatpush1.bf16.msra.mxu0 %v8459
    %8494 = vmatprep.subr.bf16.mxu0 0
    %8495 = vmatpush1.bf16.msra.mxu0 %v8460
    %8496 = vmatprep.subr.bf16.mxu0 0
    %8497 = vmatpush1.bf16.msra.mxu0 %v8461
    %8498 = vmatprep.subr.bf16.mxu0 0
    %8499 = vmatpush1.bf16.msra.mxu0 %v8462
    %8500 = vmatprep.subr.bf16.mxu0 0
    %8501 = vmatpush1.bf16.msra.mxu0 %v8463
    %8502 = vmatprep.subr.bf16.mxu0 0
    %8503 = vmatpush1.bf16.msra.mxu0 %v8464
    %8504 = vmatprep.subr.bf16.mxu0 0
    %8505 = vmatpush1.bf16.msra.mxu0 %v8465
    %8506 = vmatprep.subr.bf16.mxu0 0
    %8507 = vmatpush1.bf16.msra.mxu0 %v8466
    %8508 = vmatprep.subr.bf16.mxu0 0
    %8509 = vmatpush1.bf16.msra.mxu0 %v8467
    %8510 = vmatprep.subr.bf16.mxu0 0
    %8511 = vmatpush1.bf16.msra.mxu0 %v8468
    %8512 = vmatprep.subr.bf16.mxu0 0
    %8513 = vmatpush1.bf16.msra.mxu0 %v8469
    %8514 = vmatprep.subr.bf16.mxu0 0
    %8515 = vmatpush1.bf16.msra.mxu0 %v8470
    %8516 = vmatprep.subr.bf16.mxu0 0
    %8517 = vmatpush1.bf16.msra.mxu0 %v8471
    %8518 = vmatprep.subr.bf16.mxu0 0
    %8519 = vmatpush1.bf16.msra.mxu0 %v8472
    %8520 = vmatprep.subr.bf16.mxu0 0
    %8521 = vmatpush1.bf16.msra.mxu0 %v8473
    %8522 = vmatprep.mubr.bf16.mxu0 %v8331
    %8523 = vmatmul.mubr.bf16.gmra.mrb[0].mxu0 %v8330
    %v8524 = vpop.f32.mrb[0].mxu0
    %v8525 = vadd.f32 0.0, %v8524
    %v8526 = vpop.f32.mrb[0].mxu0
    %v8527 = vpop.f32.mrb[0].mxu0
    %v8528 = vadd.f32 0.0, %v8527
    %v8529 = vpop.f32.mrb[0].mxu0
    %8530 = vmatprep.mubr.bf16.mxu0 %v8333
    %8531 = vmatmul.mubr.bf16.gmra.mrb[0].mxu0 %v8332
    %v8532 = vpop.f32.mrb[0].mxu0
    %v8533 = vadd.f32 0.0, %v8532
    %v8534 = vpop.f32.mrb[0].mxu0
    %v8535 = vpop.f32.mrb[0].mxu0
    %v8536 = vadd.f32 0.0, %v8535
    %v8537 = vpop.f32.mrb[0].mxu0
    %8538 = vmatprep.mubr.bf16.mxu0 %v8335
    %8539 = vmatmul.mubr.bf16.gmra.mrb[0].mxu0 %v8334
    %v8540 = vpop.f32.mrb[0].mxu0
    %v8541 = vadd.f32 0.0, %v8540
    %v8542 = vpop.f32.mrb[0].mxu0
    %v8543 = vpop.f32.mrb[0].mxu0
    %v8544 = vadd.f32 0.0, %v8543
    %v8545 = vpop.f32.mrb[0].mxu0
    %8546 = vmatprep.mubr.bf16.mxu0 %v8337
    %8547 = vmatmul.mubr.bf16.gmra.mrb[0].mxu0 %v8336
    %v8548 = vpop.f32.mrb[0].mxu0
    %v8549 = vadd.f32 0.0, %v8548
    %v8550 = vpop.f32.mrb[0].mxu0
    %v8551 = vpop.f32.mrb[0].mxu0
    %v8552 = vadd.f32 0.0, %v8551
    %v8553 = vpop.f32.mrb[0].mxu0
    %8554 = vmatprep.mubr.bf16.mxu0 %v8339
    %8555 = vmatmul.mubr.bf16.gmra.mrb[0].mxu0 %v8338
    %v8556 = vpop.f32.mrb[0].mxu0
    %v8557 = vadd.f32 0.0, %v8556
    %v8558 = vpop.f32.mrb[0].mxu0
    %v8559 = vpop.f32.mrb[0].mxu0
    %v8560 = vadd.f32 0.0, %v8559
    %v8561 = vpop.f32.mrb[0].mxu0
    %8562 = vmatprep.mubr.bf16.mxu0 %v8341
    %8563 = vmatmul.mubr.bf16.gmra.mrb[0].mxu0 %v8340
    %v8564 = vpop.f32.mrb[0].mxu0
    %v8565 = vadd.f32 0.0, %v8564
    %v8566 = vpop.f32.mrb[0].mxu0
    %v8567 = vpop.f32.mrb[0].mxu0
    %v8568 = vadd.f32 0.0, %v8567
    %v8569 = vpop.f32.mrb[0].mxu0
    %8570 = vmatprep.mubr.bf16.mxu0 %v8343
    %8571 = vmatmul.mubr.bf16.gmra.mrb[0].mxu0 %v8342
    %v8572 = vpop.f32.mrb[0].mxu0
    %v8573 = vadd.f32 0.0, %v8572
    %v8574 = vpop.f32.mrb[0].mxu0
    %v8575 = vpop.f32.mrb[0].mxu0
    %v8576 = vadd.f32 0.0, %v8575
    %v8577 = vpop.f32.mrb[0].mxu0
    %8578 = vmatprep.mubr.bf16.mxu0 %v8345
    %8579 = vmatmul.mubr.bf16.gmra.mrb[0].mxu0 %v8344
    %v8580 = vpop.f32.mrb[0].mxu0
    %v8581 = vadd.f32 0.0, %v8580
    %v8582 = vpop.f32.mrb[0].mxu0
    %v8583 = vpop.f32.mrb[0].mxu0
    %v8584 = vadd.f32 0.0, %v8583
    %v8585 = vpop.f32.mrb[0].mxu0
    %8586 = vmatprep.mubr.bf16.mxu0 %v8347
    %8587 = vmatmul.mubr.bf16.gmra.mrb[0].mxu0 %v8346
    %v8588 = vpop.f32.mrb[0].mxu0
    %v8589 = vadd.f32 0.0, %v8588
    %v8590 = vpop.f32.mrb[0].mxu0
    %v8591 = vpop.f32.mrb[0].mxu0
    %v8592 = vadd.f32 0.0, %v8591
    %v8593 = vpop.f32.mrb[0].mxu0
    %8594 = vmatprep.mubr.bf16.mxu0 %v8349
    %8595 = vmatmul.mubr.bf16.gmra.mrb[0].mxu0 %v8348
    %v8596 = vpop.f32.mrb[0].mxu0
    %v8597 = vadd.f32 0.0, %v8596
    %v8598 = vpop.f32.mrb[0].mxu0
    %v8599 = vpop.f32.mrb[0].mxu0
    %v8600 = vadd.f32 0.0, %v8599
    %v8601 = vpop.f32.mrb[0].mxu0
    %8602 = vmatprep.mubr.bf16.mxu0 %v8351
    %8603 = vmatmul.mubr.bf16.gmra.mrb[0].mxu0 %v8350
    %v8604 = vpop.f32.mrb[0].mxu0
    %v8605 = vadd.f32 0.0, %v8604
    %v8606 = vpop.f32.mrb[0].mxu0
    %v8607 = vpop.f32.mrb[0].mxu0
    %v8608 = vadd.f32 0.0, %v8607
    %v8609 = vpop.f32.mrb[0].mxu0
    %8610 = vmatprep.mubr.bf16.mxu0 %v8353
    %8611 = vmatmul.mubr.bf16.gmra.mrb[0].mxu0 %v8352
    %v8612 = vpop.f32.mrb[0].mxu0
    %v8613 = vadd.f32 0.0, %v8612
    %v8614 = vpop.f32.mrb[0].mxu0
    %v8615 = vpop.f32.mrb[0].mxu0
    %v8616 = vadd.f32 0.0, %v8615
    %v8617 = vpop.f32.mrb[0].mxu0
    %8618 = vmatprep.mubr.bf16.mxu0 %v8355
    %8619 = vmatmul.mubr.bf16.gmra.mrb[0].mxu0 %v8354
    %v8620 = vpop.f32.mrb[0].mxu0
    %v8621 = vadd.f32 0.0, %v8620
    %v8622 = vpop.f32.mrb[0].mxu0
    %v8623 = vpop.f32.mrb[0].mxu0
    %v8624 = vadd.f32 0.0, %v8623
    %v8625 = vpop.f32.mrb[0].mxu0
    %8626 = vmatprep.mubr.bf16.mxu0 %v8357
    %8627 = vmatmul.mubr.bf16.gmra.mrb[0].mxu0 %v8356
    %v8628 = vpop.f32.mrb[0].mxu0
    %v8629 = vadd.f32 0.0, %v8628
    %v8630 = vpop.f32.mrb[0].mxu0
    %v8631 = vpop.f32.mrb[0].mxu0
    %v8632 = vadd.f32 0.0, %v8631
    %v8633 = vpop.f32.mrb[0].mxu0
    %8634 = vmatprep.mubr.bf16.mxu0 %v8359
    %8635 = vmatmul.mubr.bf16.gmra.mrb[0].mxu0 %v8358
    %v8636 = vpop.f32.mrb[0].mxu0
    %v8637 = vadd.f32 0.0, %v8636
    %v8638 = vpop.f32.mrb[0].mxu0
    %v8639 = vpop.f32.mrb[0].mxu0
    %v8640 = vadd.f32 0.0, %v8639
    %v8641 = vpop.f32.mrb[0].mxu0
    %8642 = vmatprep.mubr.bf16.mxu0 %v8361
    %8643 = vmatmul.mubr.bf16.gmra.mrb[0].mxu0 %v8360
    %v8644 = vpop.f32.mrb[0].mxu0
    %v8645 = vadd.f32 0.0, %v8644
    %v8646 = vpop.f32.mrb[0].mxu0
    %v8647 = vpop.f32.mrb[0].mxu0
    %v8648 = vadd.f32 0.0, %v8647
    %v8649 = vpop.f32.mrb[0].mxu0
    %8650 = vdwg.mxu0
    %v8651 = vadd.f32 %v7420, %v8525
    %v8652 = vadd.f32 %v7421, %v8528
    %v8653 = vadd.f32 %v7422, %v8533
    %v8654 = vadd.f32 %v7423, %v8536
    %v8655 = vadd.f32 %v7424, %v8541
    %v8656 = vadd.f32 %v7425, %v8544
    %v8657 = vadd.f32 %v7426, %v8549
    %v8658 = vadd.f32 %v7427, %v8552
    %v8659 = vadd.f32 %v7428, %v8557
    %v8660 = vadd.f32 %v7429, %v8560
    %v8661 = vadd.f32 %v7430, %v8565
    %v8662 = vadd.f32 %v7431, %v8568
    %v8663 = vadd.f32 %v7432, %v8573
    %v8664 = vadd.f32 %v7433, %v8576
    %v8665 = vadd.f32 %v7434, %v8581
    %v8666 = vadd.f32 %v7435, %v8584
    %v8667 = vadd.f32 %v7436, %v8589
    %v8668 = vadd.f32 %v7437, %v8592
    %v8669 = vadd.f32 %v7438, %v8597
    %v8670 = vadd.f32 %v7439, %v8600
    %v8671 = vadd.f32 %v7440, %v8605
    %v8672 = vadd.f32 %v7441, %v8608
    %v8673 = vadd.f32 %v7442, %v8613
    %v8674 = vadd.f32 %v7443, %v8616
    %v8675 = vadd.f32 %v7444, %v8621
    %v8676 = vadd.f32 %v7445, %v8624
    %v8677 = vadd.f32 %v7446, %v8629
    %v8678 = vadd.f32 %v7447, %v8632
    %v8679 = vadd.f32 %v7448, %v8637
    %v8680 = vadd.f32 %v7449, %v8640
    %v8681 = vadd.f32 %v7450, %v8645
    %v8682 = vadd.f32 %v7451, %v8648
    %v8683 = vadd.f32 %v8651, %v8652
    %v8684 = vadd.f32 %v8683, %v8653
    %v8685 = vadd.f32 %v8684, %v8654
    %v8686 = vadd.f32 %v8685, %v8655
    %v8687 = vadd.f32 %v8686, %v8656
    %v8688 = vadd.f32 %v8687, %v8657
    %v8689 = vadd.f32 %v8688, %v8658
    %v8690 = vadd.f32 %v8689, %v8659
    %v8691 = vadd.f32 %v8690, %v8660
    %v8692 = vadd.f32 %v8691, %v8661
    %v8693 = vadd.f32 %v8692, %v8662
    %v8694 = vadd.f32 %v8693, %v8663
    %v8695 = vadd.f32 %v8694, %v8664
    %v8696 = vadd.f32 %v8695, %v8665
    %v8697 = vadd.f32 %v8696, %v8666
    %v8698 = vrot.slane %v8697, 4
    %v8699 = vadd.f32 %v8697, %v8698
    %v8700 = vrot.slane %v8699, 2
    %v8701 = vadd.f32 %v8699, %v8700
    %v8702 = vrot.slane %v8701, 1
    %v8703 = vadd.f32 %v8701, %v8702
    %v8704 = vmul.f32 %v8703, %v449
    %v8705 = vadd.f32 %v8667, %v8668
    %v8706 = vadd.f32 %v8705, %v8669
    %v8707 = vadd.f32 %v8706, %v8670
    %v8708 = vadd.f32 %v8707, %v8671
    %v8709 = vadd.f32 %v8708, %v8672
    %v8710 = vadd.f32 %v8709, %v8673
    %v8711 = vadd.f32 %v8710, %v8674
    %v8712 = vadd.f32 %v8711, %v8675
    %v8713 = vadd.f32 %v8712, %v8676
    %v8714 = vadd.f32 %v8713, %v8677
    %v8715 = vadd.f32 %v8714, %v8678
    %v8716 = vadd.f32 %v8715, %v8679
    %v8717 = vadd.f32 %v8716, %v8680
    %v8718 = vadd.f32 %v8717, %v8681
    %v8719 = vadd.f32 %v8718, %v8682
    %v8720 = vrot.slane %v8719, 4
    %v8721 = vadd.f32 %v8719, %v8720
    %v8722 = vrot.slane %v8721, 2
    %v8723 = vadd.f32 %v8721, %v8722
    %v8724 = vrot.slane %v8723, 1
    %v8725 = vadd.f32 %v8723, %v8724
    %v8726 = vmul.f32 %v8725, %v449
    %vm8727 = vcmask 1040384
    %v8728 = vsel %vm8727, %v8704, %v8726
    %v8729 = vld [vmem:[%s5 + $0xf] sm:$0x1]
    %v8730 = vld [vmem:[%s5 + $0x10] sm:$0x1]
    %vm8731 = vcmask 1041408
    %v8732 = vsel %vm8731, %v8728, 0.0
    %8733 = vadd.xlane.f32.xlu0 %v8732
    %v8734 = vpop.xlane.xlu0 %8733
    %v8735 = vmul.f32 %v8734, %v449
    %v8736 = vsub.f32 %v8728, %v8735
    %v8737 = vmul.f32 %v8736, %v8736
    %v8738 = vsel %vm8731, %v8737, 0.0
    %8739 = vadd.xlane.f32.xlu0 %v8738
    %v8740 = vpop.xlane.xlu0 %8739
    %v8741 = vmul.f32 %v8740, %v449
    %v8742 = vadd.f32 %v8741, 1e-05
    %v8743 = vrsqrt.pop %v8742
    %v8744 = vmul.f32 %v8736, %v8743
    %v8745 = vlaneseq
    %v8746 = vshrl.u32 %v8745, 7
    %v8747 = vsub.s32 0, %v8746
    %v8748 = vrot.slane %v8729, %v8747
    %v8749 = vmul.f32 %v8744, %v8748
    %v8750 = vlaneseq
    %v8751 = vshrl.u32 %v8750, 7
    %v8752 = vsub.s32 0, %v8751
    %v8753 = vrot.slane %v8730, %v8752
    %v8754 = vadd.f32 %v8749, %v8753
    %v8755 = vpack.c.bf16 %v8754, %v8754
    %s8756 = scalar_lea.vmem %s1, 320
    %v8757 = vld [vmem:[%s8756] sm:$0xf]
    %v8758 = vld [vmem:[%s8756 + $0x4] sm:$0xf]
    %v8759 = vld [vmem:[%s8756 + $0x8] sm:$0xf]
    %v8760 = vld [vmem:[%s8756 + $0xc] sm:$0xf]
    %v8761 = vld [vmem:[%s8756 + $0x10] sm:$0xf]
    %v8762 = vld [vmem:[%s8756 + $0x14] sm:$0xf]
    %v8763 = vld [vmem:[%s8756 + $0x18] sm:$0xf]
    %v8764 = vld [vmem:[%s8756 + $0x1c] sm:$0xf]
    %v8765 = vld [vmem:[%s8756 + $0x20] sm:$0xf]
    %v8766 = vld [vmem:[%s8756 + $0x24] sm:$0xf]
    %v8767 = vld [vmem:[%s8756 + $0x28] sm:$0xf]
    %v8768 = vld [vmem:[%s8756 + $0x2c] sm:$0xf]
    %v8769 = vld [vmem:[%s8756 + $0x30] sm:$0xf]
    %v8770 = vld [vmem:[%s8756 + $0x34] sm:$0xf]
    %v8771 = vld [vmem:[%s8756 + $0x38] sm:$0xf]
    %v8772 = vld [vmem:[%s8756 + $0x3c] sm:$0xf]
    %v8773 = vld [vmem:[%s5 + $0x11] sm:$0x1]
    %v8774 = vlaneseq
    %v8775 = vshrl.u32 %v8774, 7
    %v8776 = vsub.s32 0, %v8775
    %v8777 = vrot.slane %v8773, %v8776
    %v8794 = vunpack.c.l.b16 %v8757
    %v8795 = vunpack.c.l.b16 %v8758
    %v8796 = vunpack.c.l.b16 %v8759
    %v8797 = vunpack.c.l.b16 %v8760
    %v8798 = vunpack.c.l.b16 %v8761
    %v8799 = vunpack.c.l.b16 %v8762
    %v8800 = vunpack.c.l.b16 %v8763
    %v8801 = vunpack.c.l.b16 %v8764
    %v8802 = vunpack.c.l.b16 %v8765
    %v8803 = vunpack.c.l.b16 %v8766
    %v8804 = vunpack.c.l.b16 %v8767
    %v8805 = vunpack.c.l.b16 %v8768
    %v8806 = vunpack.c.l.b16 %v8769
    %v8807 = vunpack.c.l.b16 %v8770
    %v8808 = vunpack.c.l.b16 %v8771
    %v8809 = vunpack.c.l.b16 %v8772
    %v8810 = vpack.c.b16 %v8795, %v8794
    %v8811 = vpack.c.b16 %v8797, %v8796
    %v8812 = vpack.c.b16 %v8799, %v8798
    %v8813 = vpack.c.b16 %v8801, %v8800
    %v8814 = vpack.c.b16 %v8803, %v8802
    %v8815 = vpack.c.b16 %v8805, %v8804
    %v8816 = vpack.c.b16 %v8807, %v8806
    %v8817 = vpack.c.b16 %v8809, %v8808
    %8826 = vmatprep.subr.bf16.mxu0 0
    %8827 = vmatpush1.bf16.msra.mxu0 %v8810
    %8828 = vmatprep.subr.bf16.mxu0 0
    %8829 = vmatpush1.bf16.msra.mxu0 %v8811
    %8830 = vmatprep.subr.bf16.mxu0 0
    %8831 = vmatpush1.bf16.msra.mxu0 %v8812
    %8832 = vmatprep.subr.bf16.mxu0 0
    %8833 = vmatpush1.bf16.msra.mxu0 %v8813
    %8834 = vmatprep.subr.bf16.mxu0 0
    %8835 = vmatpush1.bf16.msra.mxu0 %v8814
    %8836 = vmatprep.subr.bf16.mxu0 0
    %8837 = vmatpush1.bf16.msra.mxu0 %v8815
    %8838 = vmatprep.subr.bf16.mxu0 0
    %8839 = vmatpush1.bf16.msra.mxu0 %v8816
    %8840 = vmatprep.subr.bf16.mxu0 0
    %8841 = vmatpush1.bf16.msra.mxu0 %v8817
    %8842 = vmatprep.subr.bf16.mxu0 0
    %8843 = vmatpush1.bf16.msra.mxu0 0
    %8844 = vmatprep.subr.bf16.mxu0 0
    %8845 = vmatpush1.bf16.msra.mxu0 0
    %8846 = vmatprep.subr.bf16.mxu0 0
    %8847 = vmatpush1.bf16.msra.mxu0 0
    %8848 = vmatprep.subr.bf16.mxu0 0
    %8849 = vmatpush1.bf16.msra.mxu0 0
    %8850 = vmatprep.subr.bf16.mxu0 0
    %8851 = vmatpush1.bf16.msra.mxu0 0
    %8852 = vmatprep.subr.bf16.mxu0 0
    %8853 = vmatpush1.bf16.msra.mxu0 0
    %8854 = vmatprep.subr.bf16.mxu0 0
    %8855 = vmatpush1.bf16.msra.mxu0 0
    %8856 = vmatprep.subr.bf16.mxu0 0
    %8857 = vmatpush1.bf16.msra.mxu0 0
    %8858 = vmatprep.mubr.bf16.mxu0 0
    %8859 = vmatmul.mubr.bf16.gmra.mrb[0].mxu0 %v8755
    %v8860 = vpop.f32.mrb[0].mxu0
    %v8861 = vadd.f32 %v8777, %v8860
    %v8862 = vpop.f32.mrb[0].mxu0
    %v8863 = vpop.f32.mrb[0].mxu0
    %v8864 = vpop.f32.mrb[0].mxu0
    %8865 = vdwg.mxu0
    %8866 = vst [vmem:[#allocation2] sm:$0x1] %v8861
    %s8867 = scalar_lea.vmem [#allocation2], 1
    %8868 = vst [vmem:[%s8867 - $0x1] sm:$0x2] %v8861
    // Predicated region
    $region26: #{forward.1} parent=1 // pred_check
      _
    $region27: #{forward.1} parent=1 // pred_check_branch
      %8870 = sbr.rel (0) target = $region29
    $region28: #{forward.1} parent=1 // pred_region
      %s8872 = ssub.s32 32, 32
      %8873 = vsyncadd [#allocation3], %s8872
      %s8874 = sshll.u32 [#allocation2], 4
      %s8875 = int_to_ptr.vmem [resolvable:$true] %s8874
      %8880 = dma.vmem_to_hbm [thread:$0]  %s8875, 32, %s6, [#allocation3], 16, 16, 1
    $region29: #{forward.1} parent=1 // pred_fallthru
      _
    // Predicated region
    $region30: #{forward.1} parent=1 // pred_check
      _
    $region31: #{forward.1} parent=1 // pred_check_branch
      %8882 = sbr.rel (0) target = $region33
    $region32: #{forward.1} parent=1 // pred_region
      %8883 = dma.done [#allocation3], 32
    $region33: #{forward.1} parent=1 // pred_fallthru
      _
    %8884 = vsyncpa [#allocation3], 1

</llo_original>
